<compile_context>
chip_gen: v5e
topology: v5e:2x2
jax: 0.10.0
libtpu: 0.0.40
codegen_flags: <defaults>
</compile_context>

<pallas_src>
import functools

import numpy as np
import jax
import jax.numpy as jnp
from jax.experimental import pallas as pl
from jax.experimental.pallas import tpu as pltpu


def _round_up(x, m):
    return ((x + m - 1) // m) * m


def _full_spec(shape):
    nd = len(shape)
    return pl.BlockSpec(shape, lambda i, _nd=nd: (0,) * _nd)


# ----------------------------------------------------------------------------
# Kernels
# ----------------------------------------------------------------------------
def _epilogue(y, act, relu_rows):
    if relu_rows is not None:
        rows = jax.lax.broadcasted_iota(jnp.int32, y.shape, 0)
        return jnp.where(rows < relu_rows, jnp.maximum(y, 0.0), y)
    if act == "relu":
        return jnp.maximum(y, 0.0)
    if act == "tanh":
        return jnp.tanh(y)
    return y


def _dconv_kernel(x_ref, w_ref, b_ref, o_ref, kbuf, *, offsets, cin_pad, act,
                  relu_rows):
    """Spatial conv as a single big-K matmul.

    x_ref : [cin_pad, Lin]  bf16  flattened (phase-decomposed for stride 2)
    w_ref : [cout_pad, ntaps*cin_pad] bf16, BN scale already folded in
    kbuf  : VMEM scratch [ntaps*cin_pad, Lout] bf16
    out   : [cout_pad, Lout]   (lane-dense)
    """
    lout = o_ref.shape[1]
    for idx, off in enumerate(offsets):                       # static unroll
        kbuf[pl.ds(idx * cin_pad, cin_pad), :] = x_ref[:, pl.ds(off, lout)]
    acc = jnp.dot(w_ref[...], kbuf[...], preferred_element_type=jnp.float32)
    y = acc + b_ref[...]
    o_ref[...] = _epilogue(y, act, relu_rows).astype(o_ref.dtype)


def _mm_kernel(*refs, n_pre, has_post, act, relu_rows):
    """1x1 conv: act((w @ sum_i x_i [+ post]) + bias).  Lane-dense output."""
    if n_pre == 1:
        xb = refs[0][...]
    else:
        xs = refs[0][...].astype(jnp.float32)
        for i in range(1, n_pre):
            xs = xs + refs[i][...].astype(jnp.float32)
        xb = xs.astype(jnp.bfloat16)
    w_ref = refs[n_pre]
    acc = jnp.dot(w_ref[...], xb, preferred_element_type=jnp.float32)
    k = n_pre + 1
    if has_post:
        acc = acc + refs[k][...].astype(jnp.float32)
        k += 1
    b_ref, o_ref = refs[k], refs[k + 1]
    o_ref[...] = _epilogue(acc + b_ref[...], act, relu_rows).astype(o_ref.dtype)


# ----------------------------------------------------------------------------
# Conv wrappers (single grid step; operands fully VMEM-resident at these sizes)
# ----------------------------------------------------------------------------
_CP = pltpu.CompilerParams(dimension_semantics=("arbitrary",))


def conv2d_lane(x, p, kh, kw, *, stride=1, padding=0, pad_mode="reflect",
                act="none", relu_rows=None, out_dtype=jnp.bfloat16):
    """x: [Cin, B, H, W] bf16.  Returns [Cout, B, Ho, Wo]."""
    cin, b_, _, _ = x.shape
    cin_pad, cout, cout_pad, ntaps = (p["cin_pad"], p["cout"], p["cout_pad"],
                                      p["ntaps"])
    assert ntaps == kh * kw
    if padding:
        x = jnp.pad(x, ((0, 0), (0, 0), (padding, padding), (padding, padding)),
                    mode=pad_mode)
    if cin_pad > cin:
        x = jnp.pad(x, ((0, cin_pad - cin), (0, 0), (0, 0), (0, 0)))
    hp, wp = x.shape[2], x.shape[3]
    ho = (hp - kh) // stride + 1
    wo = (wp - kw) // stride + 1

    if stride == 1:
        gh, gw = hp, wp
        flat = x.reshape(cin_pad, b_ * hp * wp)
        offsets = tuple(i * wp + j for i in range(kh) for j in range(kw))
    else:
        assert stride == 2 and hp % 2 == 0 and wp % 2 == 0
        gh, gw = hp // 2, wp // 2
        phases = [x[:, :, pi::2, pj::2] for pi in (0, 1) for pj in (0, 1)]
        flat = jnp.stack(phases, axis=1).reshape(cin_pad, 4 * b_ * gh * gw)
        blk = b_ * gh * gw
        offsets = tuple(((i % 2) * 2 + (j % 2)) * blk + (i // 2) * gw + (j // 2)
                        for i in range(kh) for j in range(kw))

    n_out = b_ * gh * gw
    lout = _round_up(n_out, 128)
    lin = _round_up(max(offsets) + lout, 128)
    flat = jnp.pad(flat, ((0, 0), (0, lin - flat.shape[1])))

    out = pl.pallas_call(
        functools.partial(_dconv_kernel, offsets=offsets, cin_pad=cin_pad,
                          act=act, relu_rows=relu_rows),
        out_shape=jax.ShapeDtypeStruct((cout_pad, lout), out_dtype),
        grid=(1,),
        in_specs=[_full_spec((cin_pad, lin)),
                  _full_spec(tuple(p["w"].shape)),
                  _full_spec((cout_pad, 1))],
        out_specs=_full_spec((cout_pad, lout)),
        scratch_shapes=[pltpu.VMEM((ntaps * cin_pad, lout), jnp.bfloat16)],
        compiler_params=_CP,
    )(flat, p["w"], p["b"])
    out = out[:cout, :n_out].reshape(cout, b_, gh, gw)
    return out[:, :, :ho, :wo]


def conv1x1_lane(xs_list, p, *, post=None, act="none", relu_rows=None,
                 out_dtype=jnp.bfloat16):
    """act((w @ sum(xs) [+ post]) + bias).  xs entries: [Cin, B, H, W] bf16."""
    _, b_, h, w_ = xs_list[0].shape
    cout, cout_pad = p["cout"], p["cout_pad"]
    m = b_ * h * w_
    mp = _round_up(m, 128)
    ins = [jnp.pad(x.reshape(x.shape[0], m), ((0, 0), (0, mp - m)))
           for x in xs_list]
    args = list(ins) + [p["w"]]
    specs = [_full_spec(tuple(a.shape)) for a in ins] + \
            [_full_spec(tuple(p["w"].shape))]
    if post is not None:
        pc = post.shape[0]
        post_f = jnp.zeros((cout_pad, mp), post.dtype).at[:pc, :m].set(
            post.reshape(pc, m))
        args.append(post_f)
        specs.append(_full_spec((cout_pad, mp)))
    args.append(p["b"])
    specs.append(_full_spec((cout_pad, 1)))
    out = pl.pallas_call(
        functools.partial(_mm_kernel, n_pre=len(ins),
                          has_post=post is not None, act=act,
                          relu_rows=relu_rows),
        out_shape=jax.ShapeDtypeStruct((cout_pad, mp), out_dtype),
        grid=(1,),
        in_specs=specs,
        out_specs=_full_spec((cout_pad, mp)),
        compiler_params=_CP,
    )(*args)
    return out[:cout, :m].reshape(cout, b_, h, w_)


# ----------------------------------------------------------------------------
# Parameter construction (synthetic, BN folded, packed lane-dense layouts)
# ----------------------------------------------------------------------------
class _Keys:
    def __init__(self, seed):
        self._key = jax.random.PRNGKey(seed)

    def __call__(self):
        self._key, sub = jax.random.split(self._key)
        return sub


def _bn_affine(kg, c):
    gamma = 1.0 + 0.1 * jax.random.normal(kg(), (c,), jnp.float32)
    beta = 0.1 * jax.random.normal(kg(), (c,), jnp.float32)
    mean = 0.1 * jax.random.normal(kg(), (c,), jnp.float32)
    var = 1.0 + 0.1 * jnp.abs(jax.random.normal(kg(), (c,), jnp.float32))
    scale = gamma / jnp.sqrt(var + 1e-5)
    bias = beta - mean * scale
    return scale, bias


def _pack_bias(bias, cout_pad):
    cout = bias.shape[0]
    return jnp.zeros((cout_pad, 1), jnp.float32).at[:cout, 0].set(bias)


def _pack_spatial(w, scale, cin_pad, cout_pad):
    # w: [ntaps, cout, cin] f32; K index in the packed weight = tap*cin_pad + c
    ntaps, cout, cin = w.shape
    if scale is not None:
        w = w * scale[None, :, None]
    wp = jnp.zeros((cout_pad, ntaps, cin_pad), jnp.float32)
    wp = wp.at[:cout, :, :cin].set(jnp.transpose(w, (1, 0, 2)))
    return wp.reshape(cout_pad, ntaps * cin_pad).astype(jnp.bfloat16)


def _spatial_layer(w, scale, bias):
    ntaps, cout, cin = w.shape
    cin_pad = _round_up(cin, 8)
    cout_pad = _round_up(cout, 8)
    return dict(w=_pack_spatial(w, scale, cin_pad, cout_pad),
                b=_pack_bias(bias, cout_pad),
                cout=cout, cin_pad=cin_pad, cout_pad=cout_pad, ntaps=ntaps)


def _mat_layer(w, scale, bias):
    cout, cin = w.shape
    if scale is not None:
        w = w * scale[:, None]
    cout_pad = _round_up(cout, 8)
    wp = jnp.zeros((cout_pad, cin), jnp.float32).at[:cout].set(w)
    return dict(w=wp.astype(jnp.bfloat16), b=_pack_bias(bias, cout_pad),
                cout=cout, cout_pad=cout_pad)


def _transpose_layer(wt, conv_b, scale, bn_b):
    """ConvTranspose2d(k=3,s=2,p=1,op=1) packed as a 2x2 stride-1 conv with
    4x output channels (one block per output phase ee/eo/oe/oo)."""
    _, _, cout, cin = wt.shape
    eff_b = scale * conv_b + bn_b

    def blk(i, j):
        return wt[i, j] * scale[:, None]

    z = jnp.zeros((cout, cin), jnp.float32)
    w4 = jnp.stack([
        jnp.concatenate([blk(1, 1), blk(1, 2), blk(2, 1), blk(2, 2)], axis=0),
        jnp.concatenate([z,         blk(1, 0), z,         blk(2, 0)], axis=0),
        jnp.concatenate([z,         z,         blk(0, 1), blk(0, 2)], axis=0),
        jnp.concatenate([z,         z,         z,         blk(0, 0)], axis=0),
    ], axis=0)                                         # [4 taps, 4*cout, cin]
    b4 = jnp.tile(eff_b, 4)
    return dict(layer=_spatial_layer(w4, None, b4), cout=cout)


def make_generator_params(seed, input_nc=4, output_nc=3, ngf=8,
                          n_downsampling=2, n_blocks=2, ratio_g=0.75,
                          max_features=1024):
    kg = _Keys(seed)

    def rand_taps(k, cout, cin):
        return (jax.random.normal(kg(), (k * k, cout, cin), jnp.float32)
                / np.sqrt(k * k * cin))

    def rand_mat(cout, cin):
        return jax.random.normal(kg(), (cout, cin), jnp.float32) / np.sqrt(cin)

    P = {}
    s, b = _bn_affine(kg, ngf)
    P["init"] = _spatial_layer(rand_taps(7, ngf, input_nc), s, b)

    downs = []
    for i in range(n_downsampling):
        cin = min(max_features, ngf * 2 ** i)
        cout = min(max_features, ngf * 2 ** (i + 1))
        if i == n_downsampling - 1:
            cg = int(cout * ratio_g)
            cl = cout - cg
            sl, bl = _bn_affine(kg, cl)
            sg, bg = _bn_affine(kg, cg)
            downs.append(dict(layer=_spatial_layer(
                rand_taps(3, cout, cin),
                jnp.concatenate([sl, sg]), jnp.concatenate([bl, bg])), cl=cl))
        else:
            s, bb = _bn_affine(kg, cout)
            downs.append(dict(layer=_spatial_layer(rand_taps(3, cout, cin),
                                                   s, bb)))
    P["downs"] = downs

    feat = min(max_features, ngf * 2 ** n_downsampling)
    cg = int(feat * ratio_g)
    cl = feat - cg
    P["cl"], P["cg"] = cl, cg

    def ffc_layer():
        w_l2l = rand_taps(3, cl, cl)
        w_g2l = rand_taps(3, cl, cg)
        w_l2g = rand_taps(3, cg, cl)
        sl, bl = _bn_affine(kg, cl)
        half = cg // 2
        conv1_w = rand_mat(half, cg)
        s1, b1 = _bn_affine(kg, half)
        fu_w = rand_mat(2 * half, 2 * half)
        sfu, bfu = _bn_affine(kg, 2 * half)
        lfu_w = rand_mat(2 * half, 2 * half)
        slf, blf = _bn_affine(kg, 2 * half)
        conv2_w = rand_mat(cg, half)
        sg, bg = _bn_affine(kg, cg)
        # fused local conv: rows [ BN_l-folded (l2l|g2l) ; BN_g-folded (l2g|0) ]
        top = jnp.concatenate([w_l2l, w_g2l], axis=2) * sl[None, :, None]
        bot = jnp.concatenate(
            [w_l2g, jnp.zeros((9, cg, cg), jnp.float32)], axis=2) * sg[None, :, None]
        w_all = jnp.concatenate([top, bot], axis=1)
        b_all = jnp.concatenate([bl, jnp.zeros((cg,), jnp.float32)])
        return dict(local=_spatial_layer(w_all, None, b_all),
                    conv1=_mat_layer(conv1_w, s1, b1),
                    fu=_mat_layer(fu_w, sfu, bfu),
                    lfu=_mat_layer(lfu_w, slf, blf),
                    conv2=_mat_layer(conv2_w, sg, bg))

    P["blocks"] = [dict(c1=ffc_layer(), c2=ffc_layer()) for _ in range(n_blocks)]

    ups = []
    for i in range(n_downsampling):
        cin = min(max_features, ngf * 2 ** (n_downsampling - i))
        cout = min(max_features, int(ngf * 2 ** (n_downsampling - i) / 2))
        wt = (jax.random.normal(kg(), (3, 3, cout, cin), jnp.float32)
              / np.sqrt(9 * cin))
        cb = 0.1 * jax.random.normal(kg(), (cout,), jnp.float32)
        s, bb = _bn_affine(kg, cout)
        ups.append(_transpose_layer(wt, cb, s, bb))
    P["ups"] = ups

    ob = 0.1 * jax.random.normal(kg(), (output_nc,), jnp.float32)
    P["out"] = _spatial_layer(rand_taps(7, output_nc, ngf), None, ob)
    return P


# ----------------------------------------------------------------------------
# Forward pass (internal layout: [C, B, H, W] bf16)
# ----------------------------------------------------------------------------
def fourier_unit(x, p):
    # TODO(synk): rfft2/irfft2 have no Pallas primitive; the FFTs run in XLA.
    c, b_, h, w_ = x.shape
    f = jnp.fft.rfft2(x.astype(jnp.float32), axes=(-2, -1), norm="ortho")
    wf = f.shape[-1]
    y = jnp.stack((f.real, f.imag), axis=1).reshape(2 * c, b_, h, wf)
    y = conv1x1_lane([y.astype(jnp.bfloat16)], p, act="relu")
    y = y.astype(jnp.float32).reshape(c, 2, b_, h, wf)
    fc = jax.lax.complex(y[:, 0], y[:, 1])
    out = jnp.fft.irfft2(fc, s=(h, w_), axes=(-2, -1), norm="ortho")
    return out.astype(jnp.bfloat16)


def spectral_out_g(x_g, p, l2g):
    """ReLU(BN_g(l2g + conv2(x1 + fu(x1) + lfu_tiled))) as one fused kernel."""
    x1 = conv1x1_lane([x_g], p["conv1"], act="relu")
    fu = fourier_unit(x1, p["fu"])
    c, _, h, _ = x1.shape
    ss = h // 2
    xs = x1[:c // 4]
    xs = jnp.concatenate([xs[:, :, :ss], xs[:, :, ss:]], axis=0)
    xs = jnp.concatenate([xs[:, :, :, :ss], xs[:, :, :, ss:]], axis=0)
    xs = fourier_unit(xs, p["lfu"])
    xs = jnp.tile(xs, (1, 1, 2, 2))
    return conv1x1_lane([x1, fu, xs], p["conv2"], post=l2g, act="relu")


def ffc_bn_act(x_l, x_g, p, cl):
    # one fused 3x3 conv: rows [out_l (BN_l+ReLU in-kernel) | l2g (raw)]
    x_cat = jnp.concatenate([x_l, x_g], axis=0)
    y = conv2d_lane(x_cat, p["local"], 3, 3, padding=1, pad_mode="reflect",
                    act="none", relu_rows=cl)
    out_l, l2g = y[:cl], y[cl:]
    out_g = spectral_out_g(x_g, p, l2g)
    return out_l, out_g


def conv_transpose_up(x, up):
    c, b_, h, w_ = x.shape
    xp = jnp.pad(x, ((0, 0), (0, 0), (0, 1), (0, 1)))     # structural zero pad
    y = conv2d_lane(xp, up["layer"], 2, 2, act="relu")    # [4*cout, B, h, w]
    cout = up["cout"]
    y = y.reshape(2, 2, cout, b_, h, w_)
    y = jnp.transpose(y, (2, 3, 4, 0, 5, 1))              # [cout,B,h,2,w,2]
    return y.reshape(cout, b_, 2 * h, 2 * w_)


def ffc_resnet_generator(x_nchw, P):
    x = jnp.transpose(x_nchw, (1, 0, 2, 3)).astype(jnp.bfloat16)

    # ReflectionPad2d(3) + 7x7 conv + BN + ReLU
    x = jnp.pad(x, ((0, 0), (0, 0), (3, 3), (3, 3)), mode="reflect")
    x_l = conv2d_lane(x, P["init"], 7, 7, act="relu")
    x_g = None

    # stride-2 downsamples (reflect padding_mode), phase-decomposed
    for d in P["downs"]:
        y = conv2d_lane(x_l, d["layer"], 3, 3, stride=2, padding=1,
                        pad_mode="reflect", act="relu")
        if "cl" in d:
            x_l, x_g = y[:d["cl"]], y[d["cl"]:]
        else:
            x_l = y

    # FFC resnet blocks
    cl = P["cl"]
    for blk in P["blocks"]:
        id_l, id_g = x_l, x_g
        x_l, x_g = ffc_bn_act(x_l, x_g, blk["c1"], cl)
        x_l, x_g = ffc_bn_act(x_l, x_g, blk["c2"], cl)
        x_l, x_g = id_l + x_l, id_g + x_g

    # ConcatTupleLayer
    x = jnp.concatenate([x_l, x_g], axis=0)

    # ConvTranspose2d + BN + ReLU (phase-decomposed)
    for up in P["ups"]:
        x = conv_transpose_up(x, up)

    # ReflectionPad2d(3) + 7x7 conv (bias) + tanh
    x = jnp.pad(x, ((0, 0), (0, 0), (3, 3), (3, 3)), mode="reflect")
    y = conv2d_lane(x, P["out"], 7, 7, act="tanh", out_dtype=jnp.float32)
    return jnp.transpose(y, (1, 0, 2, 3))


if __name__ == "__main__":
    key = jax.random.PRNGKey(0)
    x = jax.random.normal(key, (2, 4, 16, 16), jnp.float32)   # NCHW like torch
    params = make_generator_params(seed=0, input_nc=4, output_nc=3, ngf=8,
                                   n_downsampling=2, n_blocks=2)
    fwd = jax.jit(lambda inp: ffc_resnet_generator(inp, params))
    y = fwd(x)
    jax.block_until_ready(y)
    assert y.shape == (2, 3, 16, 16), y.shape
    assert bool(jnp.all(jnp.isfinite(y)))
    assert bool(jnp.all(jnp.abs(y) <= 1.0))   # tanh output
    print("KERNEL_OK")
</pallas_src>

<mosaic_0001>
module attributes {stable_mosaic.version = 11 : i64} {
  func.func @_dconv_kernel(%arg0: i32, %arg1: memref<8x1280xbf16, #tpu.memory_space<vmem>>, %arg2: memref<8x392xbf16, #tpu.memory_space<vmem>>, %arg3: memref<8x1xf32, #tpu.memory_space<vmem>>, %arg4: memref<8x1024xbf16, #tpu.memory_space<vmem>>, %arg5: memref<392x1024xbf16, #tpu.memory_space<vmem>>) attributes {dimension_semantics = [#tpu.dimension_semantics<arbitrary>], iteration_bounds = array<i64: 1>, scalar_prefetch = 0 : i64, scratch_operands = 1 : i64, tpu.core_type = #tpu.core_type<tc>, window_params = [{pipeline_mode = #tpu.pipeline_mode<synchronous>, transform_indices = @transform_0, window_bounds = array<i64: 8, 1280>}, {pipeline_mode = #tpu.pipeline_mode<synchronous>, transform_indices = @transform_1, window_bounds = array<i64: 8, 392>}, {pipeline_mode = #tpu.pipeline_mode<synchronous>, transform_indices = @transform_2, window_bounds = array<i64: 8, 1>}, {pipeline_mode = #tpu.pipeline_mode<synchronous>, transform_indices = @transform_3, window_bounds = array<i64: 8, 1024>}]} {
    %c0 = arith.constant 0 : index
    %c0_0 = arith.constant 0 : index
    %0 = vector.load %arg1[%c0, %c0_0] : memref<8x1280xbf16, #tpu.memory_space<vmem>>, vector<8x1024xbf16>
    %c0_1 = arith.constant 0 : index
    %c0_2 = arith.constant 0 : index
    %1 = vector.load %arg5[%c0_1, %c0_2] : memref<392x1024xbf16, #tpu.memory_space<vmem>>, vector<8x1024xbf16>
    tpu.vector_store %arg5[%c0_1, %c0_2], %0 {strides = array<i32>} : memref<392x1024xbf16, #tpu.memory_space<vmem>>, vector<8x1024xbf16>,
    %c0_3 = arith.constant 0 : index
    %c1 = arith.constant 1 : index
    %2 = vector.load %arg1[%c0_3, %c1] : memref<8x1280xbf16, #tpu.memory_space<vmem>>, vector<8x1024xbf16>
    %c8 = arith.constant 8 : index
    %c0_4 = arith.constant 0 : index
    %3 = vector.load %arg5[%c8, %c0_4] : memref<392x1024xbf16, #tpu.memory_space<vmem>>, vector<8x1024xbf16>
    tpu.vector_store %arg5[%c8, %c0_4], %2 {strides = array<i32>} : memref<392x1024xbf16, #tpu.memory_space<vmem>>, vector<8x1024xbf16>,
    %c0_5 = arith.constant 0 : index
    %c2 = arith.constant 2 : index
    %4 = vector.load %arg1[%c0_5, %c2] : memref<8x1280xbf16, #tpu.memory_space<vmem>>, vector<8x1024xbf16>
    %c16 = arith.constant 16 : index
    %c0_6 = arith.constant 0 : index
    %5 = vector.load %arg5[%c16, %c0_6] : memref<392x1024xbf16, #tpu.memory_space<vmem>>, vector<8x1024xbf16>
    tpu.vector_store %arg5[%c16, %c0_6], %4 {strides = array<i32>} : memref<392x1024xbf16, #tpu.memory_space<vmem>>, vector<8x1024xbf16>,
    %c0_7 = arith.constant 0 : index
    %c3 = arith.constant 3 : index
    %6 = vector.load %arg1[%c0_7, %c3] : memref<8x1280xbf16, #tpu.memory_space<vmem>>, vector<8x1024xbf16>
    %c24 = arith.constant 24 : index
    %c0_8 = arith.constant 0 : index
    %7 = vector.load %arg5[%c24, %c0_8] : memref<392x1024xbf16, #tpu.memory_space<vmem>>, vector<8x1024xbf16>
    tpu.vector_store %arg5[%c24, %c0_8], %6 {strides = array<i32>} : memref<392x1024xbf16, #tpu.memory_space<vmem>>, vector<8x1024xbf16>,
    %c0_9 = arith.constant 0 : index
    %c4 = arith.constant 4 : index
    %8 = vector.load %arg1[%c0_9, %c4] : memref<8x1280xbf16, #tpu.memory_space<vmem>>, vector<8x1024xbf16>
    %c32 = arith.constant 32 : index
    %c0_10 = arith.constant 0 : index
    %9 = vector.load %arg5[%c32, %c0_10] : memref<392x1024xbf16, #tpu.memory_space<vmem>>, vector<8x1024xbf16>
    tpu.vector_store %arg5[%c32, %c0_10], %8 {strides = array<i32>} : memref<392x1024xbf16, #tpu.memory_space<vmem>>, vector<8x1024xbf16>,
    %c0_11 = arith.constant 0 : index
    %c5 = arith.constant 5 : index
    %10 = vector.load %arg1[%c0_11, %c5] : memref<8x1280xbf16, #tpu.memory_space<vmem>>, vector<8x1024xbf16>
    %c40 = arith.constant 40 : index
    %c0_12 = arith.constant 0 : index
    %11 = vector.load %arg5[%c40, %c0_12] : memref<392x1024xbf16, #tpu.memory_space<vmem>>, vector<8x1024xbf16>
    tpu.vector_store %arg5[%c40, %c0_12], %10 {strides = array<i32>} : memref<392x1024xbf16, #tpu.memory_space<vmem>>, vector<8x1024xbf16>,
    %c0_13 = arith.constant 0 : index
    %c6 = arith.constant 6 : index
    %12 = vector.load %arg1[%c0_13, %c6] : memref<8x1280xbf16, #tpu.memory_space<vmem>>, vector<8x1024xbf16>
    %c48 = arith.constant 48 : index
    %c0_14 = arith.constant 0 : index
    %13 = vector.load %arg5[%c48, %c0_14] : memref<392x1024xbf16, #tpu.memory_space<vmem>>, vector<8x1024xbf16>
    tpu.vector_store %arg5[%c48, %c0_14], %12 {strides = array<i32>} : memref<392x1024xbf16, #tpu.memory_space<vmem>>, vector<8x1024xbf16>,
    %c0_15 = arith.constant 0 : index
    %c22 = arith.constant 22 : index
    %14 = vector.load %arg1[%c0_15, %c22] : memref<8x1280xbf16, #tpu.memory_space<vmem>>, vector<8x1024xbf16>
    %c56 = arith.constant 56 : index
    %c0_16 = arith.constant 0 : index
    %15 = vector.load %arg5[%c56, %c0_16] : memref<392x1024xbf16, #tpu.memory_space<vmem>>, vector<8x1024xbf16>
    tpu.vector_store %arg5[%c56, %c0_16], %14 {strides = array<i32>} : memref<392x1024xbf16, #tpu.memory_space<vmem>>, vector<8x1024xbf16>,
    %c0_17 = arith.constant 0 : index
    %c23 = arith.constant 23 : index
    %16 = vector.load %arg1[%c0_17, %c23] : memref<8x1280xbf16, #tpu.memory_space<vmem>>, vector<8x1024xbf16>
    %c64 = arith.constant 64 : index
    %c0_18 = arith.constant 0 : index
    %17 = vector.load %arg5[%c64, %c0_18] : memref<392x1024xbf16, #tpu.memory_space<vmem>>, vector<8x1024xbf16>
    tpu.vector_store %arg5[%c64, %c0_18], %16 {strides = array<i32>} : memref<392x1024xbf16, #tpu.memory_space<vmem>>, vector<8x1024xbf16>,
    %c0_19 = arith.constant 0 : index
    %c24_20 = arith.constant 24 : index
    %18 = vector.load %arg1[%c0_19, %c24_20] : memref<8x1280xbf16, #tpu.memory_space<vmem>>, vector<8x1024xbf16>
    %c72 = arith.constant 72 : index
    %c0_21 = arith.constant 0 : index
    %19 = vector.load %arg5[%c72, %c0_21] : memref<392x1024xbf16, #tpu.memory_space<vmem>>, vector<8x1024xbf16>
    tpu.vector_store %arg5[%c72, %c0_21], %18 {strides = array<i32>} : memref<392x1024xbf16, #tpu.memory_space<vmem>>, vector<8x1024xbf16>,
    %c0_22 = arith.constant 0 : index
    %c25 = arith.constant 25 : index
    %20 = vector.load %arg1[%c0_22, %c25] : memref<8x1280xbf16, #tpu.memory_space<vmem>>, vector<8x1024xbf16>
    %c80 = arith.constant 80 : index
    %c0_23 = arith.constant 0 : index
    %21 = vector.load %arg5[%c80, %c0_23] : memref<392x1024xbf16, #tpu.memory_space<vmem>>, vector<8x1024xbf16>
    tpu.vector_store %arg5[%c80, %c0_23], %20 {strides = array<i32>} : memref<392x1024xbf16, #tpu.memory_space<vmem>>, vector<8x1024xbf16>,
    %c0_24 = arith.constant 0 : index
    %c26 = arith.constant 26 : index
    %22 = vector.load %arg1[%c0_24, %c26] : memref<8x1280xbf16, #tpu.memory_space<vmem>>, vector<8x1024xbf16>
    %c88 = arith.constant 88 : index
    %c0_25 = arith.constant 0 : index
    %23 = vector.load %arg5[%c88, %c0_25] : memref<392x1024xbf16, #tpu.memory_space<vmem>>, vector<8x1024xbf16>
    tpu.vector_store %arg5[%c88, %c0_25], %22 {strides = array<i32>} : memref<392x1024xbf16, #tpu.memory_space<vmem>>, vector<8x1024xbf16>,
    %c0_26 = arith.constant 0 : index
    %c27 = arith.constant 27 : index
    %24 = vector.load %arg1[%c0_26, %c27] : memref<8x1280xbf16, #tpu.memory_space<vmem>>, vector<8x1024xbf16>
    %c96 = arith.constant 96 : index
    %c0_27 = arith.constant 0 : index
    %25 = vector.load %arg5[%c96, %c0_27] : memref<392x1024xbf16, #tpu.memory_space<vmem>>, vector<8x1024xbf16>
    tpu.vector_store %arg5[%c96, %c0_27], %24 {strides = array<i32>} : memref<392x1024xbf16, #tpu.memory_space<vmem>>, vector<8x1024xbf16>,
    %c0_28 = arith.constant 0 : index
    %c28 = arith.constant 28 : index
    %26 = vector.load %arg1[%c0_28, %c28] : memref<8x1280xbf16, #tpu.memory_space<vmem>>, vector<8x1024xbf16>
    %c104 = arith.constant 104 : index
    %c0_29 = arith.constant 0 : index
    %27 = vector.load %arg5[%c104, %c0_29] : memref<392x1024xbf16, #tpu.memory_space<vmem>>, vector<8x1024xbf16>
    tpu.vector_store %arg5[%c104, %c0_29], %26 {strides = array<i32>} : memref<392x1024xbf16, #tpu.memory_space<vmem>>, vector<8x1024xbf16>,
    %c0_30 = arith.constant 0 : index
    %c44 = arith.constant 44 : index
    %28 = vector.load %arg1[%c0_30, %c44] : memref<8x1280xbf16, #tpu.memory_space<vmem>>, vector<8x1024xbf16>
    %c112 = arith.constant 112 : index
    %c0_31 = arith.constant 0 : index
    %29 = vector.load %arg5[%c112, %c0_31] : memref<392x1024xbf16, #tpu.memory_space<vmem>>, vector<8x1024xbf16>
    tpu.vector_store %arg5[%c112, %c0_31], %28 {strides = array<i32>} : memref<392x1024xbf16, #tpu.memory_space<vmem>>, vector<8x1024xbf16>,
    %c0_32 = arith.constant 0 : index
    %c45 = arith.constant 45 : index
    %30 = vector.load %arg1[%c0_32, %c45] : memref<8x1280xbf16, #tpu.memory_space<vmem>>, vector<8x1024xbf16>
    %c120 = arith.constant 120 : index
    %c0_33 = arith.constant 0 : index
    %31 = vector.load %arg5[%c120, %c0_33] : memref<392x1024xbf16, #tpu.memory_space<vmem>>, vector<8x1024xbf16>
    tpu.vector_store %arg5[%c120, %c0_33], %30 {strides = array<i32>} : memref<392x1024xbf16, #tpu.memory_space<vmem>>, vector<8x1024xbf16>,
    %c0_34 = arith.constant 0 : index
    %c46 = arith.constant 46 : index
    %32 = vector.load %arg1[%c0_34, %c46] : memref<8x1280xbf16, #tpu.memory_space<vmem>>, vector<8x1024xbf16>
    %c128 = arith.constant 128 : index
    %c0_35 = arith.constant 0 : index
    %33 = vector.load %arg5[%c128, %c0_35] : memref<392x1024xbf16, #tpu.memory_space<vmem>>, vector<8x1024xbf16>
    tpu.vector_store %arg5[%c128, %c0_35], %32 {strides = array<i32>} : memref<392x1024xbf16, #tpu.memory_space<vmem>>, vector<8x1024xbf16>,
    %c0_36 = arith.constant 0 : index
    %c47 = arith.constant 47 : index
    %34 = vector.load %arg1[%c0_36, %c47] : memref<8x1280xbf16, #tpu.memory_space<vmem>>, vector<8x1024xbf16>
    %c136 = arith.constant 136 : index
    %c0_37 = arith.constant 0 : index
    %35 = vector.load %arg5[%c136, %c0_37] : memref<392x1024xbf16, #tpu.memory_space<vmem>>, vector<8x1024xbf16>
    tpu.vector_store %arg5[%c136, %c0_37], %34 {strides = array<i32>} : memref<392x1024xbf16, #tpu.memory_space<vmem>>, vector<8x1024xbf16>,
    %c0_38 = arith.constant 0 : index
    %c48_39 = arith.constant 48 : index
    %36 = vector.load %arg1[%c0_38, %c48_39] : memref<8x1280xbf16, #tpu.memory_space<vmem>>, vector<8x1024xbf16>
    %c144 = arith.constant 144 : index
    %c0_40 = arith.constant 0 : index
    %37 = vector.load %arg5[%c144, %c0_40] : memref<392x1024xbf16, #tpu.memory_space<vmem>>, vector<8x1024xbf16>
    tpu.vector_store %arg5[%c144, %c0_40], %36 {strides = array<i32>} : memref<392x1024xbf16, #tpu.memory_space<vmem>>, vector<8x1024xbf16>,
    %c0_41 = arith.constant 0 : index
    %c49 = arith.constant 49 : index
    %38 = vector.load %arg1[%c0_41, %c49] : memref<8x1280xbf16, #tpu.memory_space<vmem>>, vector<8x1024xbf16>
    %c152 = arith.constant 152 : index
    %c0_42 = arith.constant 0 : index
    %39 = vector.load %arg5[%c152, %c0_42] : memref<392x1024xbf16, #tpu.memory_space<vmem>>, vector<8x1024xbf16>
    tpu.vector_store %arg5[%c152, %c0_42], %38 {strides = array<i32>} : memref<392x1024xbf16, #tpu.memory_space<vmem>>, vector<8x1024xbf16>,
    %c0_43 = arith.constant 0 : index
    %c50 = arith.constant 50 : index
    %40 = vector.load %arg1[%c0_43, %c50] : memref<8x1280xbf16, #tpu.memory_space<vmem>>, vector<8x1024xbf16>
    %c160 = arith.constant 160 : index
    %c0_44 = arith.constant 0 : index
    %41 = vector.load %arg5[%c160, %c0_44] : memref<392x1024xbf16, #tpu.memory_space<vmem>>, vector<8x1024xbf16>
    tpu.vector_store %arg5[%c160, %c0_44], %40 {strides = array<i32>} : memref<392x1024xbf16, #tpu.memory_space<vmem>>, vector<8x1024xbf16>,
    %c0_45 = arith.constant 0 : index
    %c66 = arith.constant 66 : index
    %42 = vector.load %arg1[%c0_45, %c66] : memref<8x1280xbf16, #tpu.memory_space<vmem>>, vector<8x1024xbf16>
    %c168 = arith.constant 168 : index
    %c0_46 = arith.constant 0 : index
    %43 = vector.load %arg5[%c168, %c0_46] : memref<392x1024xbf16, #tpu.memory_space<vmem>>, vector<8x1024xbf16>
    tpu.vector_store %arg5[%c168, %c0_46], %42 {strides = array<i32>} : memref<392x1024xbf16, #tpu.memory_space<vmem>>, vector<8x1024xbf16>,
    %c0_47 = arith.constant 0 : index
    %c67 = arith.constant 67 : index
    %44 = vector.load %arg1[%c0_47, %c67] : memref<8x1280xbf16, #tpu.memory_space<vmem>>, vector<8x1024xbf16>
    %c176 = arith.constant 176 : index
    %c0_48 = arith.constant 0 : index
    %45 = vector.load %arg5[%c176, %c0_48] : memref<392x1024xbf16, #tpu.memory_space<vmem>>, vector<8x1024xbf16>
    tpu.vector_store %arg5[%c176, %c0_48], %44 {strides = array<i32>} : memref<392x1024xbf16, #tpu.memory_space<vmem>>, vector<8x1024xbf16>,
    %c0_49 = arith.constant 0 : index
    %c68 = arith.constant 68 : index
    %46 = vector.load %arg1[%c0_49, %c68] : memref<8x1280xbf16, #tpu.memory_space<vmem>>, vector<8x1024xbf16>
    %c184 = arith.constant 184 : index
    %c0_50 = arith.constant 0 : index
    %47 = vector.load %arg5[%c184, %c0_50] : memref<392x1024xbf16, #tpu.memory_space<vmem>>, vector<8x1024xbf16>
    tpu.vector_store %arg5[%c184, %c0_50], %46 {strides = array<i32>} : memref<392x1024xbf16, #tpu.memory_space<vmem>>, vector<8x1024xbf16>,
    %c0_51 = arith.constant 0 : index
    %c69 = arith.constant 69 : index
    %48 = vector.load %arg1[%c0_51, %c69] : memref<8x1280xbf16, #tpu.memory_space<vmem>>, vector<8x1024xbf16>
    %c192 = arith.constant 192 : index
    %c0_52 = arith.constant 0 : index
    %49 = vector.load %arg5[%c192, %c0_52] : memref<392x1024xbf16, #tpu.memory_space<vmem>>, vector<8x1024xbf16>
    tpu.vector_store %arg5[%c192, %c0_52], %48 {strides = array<i32>} : memref<392x1024xbf16, #tpu.memory_space<vmem>>, vector<8x1024xbf16>,
    %c0_53 = arith.constant 0 : index
    %c70 = arith.constant 70 : index
    %50 = vector.load %arg1[%c0_53, %c70] : memref<8x1280xbf16, #tpu.memory_space<vmem>>, vector<8x1024xbf16>
    %c200 = arith.constant 200 : index
    %c0_54 = arith.constant 0 : index
    %51 = vector.load %arg5[%c200, %c0_54] : memref<392x1024xbf16, #tpu.memory_space<vmem>>, vector<8x1024xbf16>
    tpu.vector_store %arg5[%c200, %c0_54], %50 {strides = array<i32>} : memref<392x1024xbf16, #tpu.memory_space<vmem>>, vector<8x1024xbf16>,
    %c0_55 = arith.constant 0 : index
    %c71 = arith.constant 71 : index
    %52 = vector.load %arg1[%c0_55, %c71] : memref<8x1280xbf16, #tpu.memory_space<vmem>>, vector<8x1024xbf16>
    %c208 = arith.constant 208 : index
    %c0_56 = arith.constant 0 : index
    %53 = vector.load %arg5[%c208, %c0_56] : memref<392x1024xbf16, #tpu.memory_space<vmem>>, vector<8x1024xbf16>
    tpu.vector_store %arg5[%c208, %c0_56], %52 {strides = array<i32>} : memref<392x1024xbf16, #tpu.memory_space<vmem>>, vector<8x1024xbf16>,
    %c0_57 = arith.constant 0 : index
    %c72_58 = arith.constant 72 : index
    %54 = vector.load %arg1[%c0_57, %c72_58] : memref<8x1280xbf16, #tpu.memory_space<vmem>>, vector<8x1024xbf16>
    %c216 = arith.constant 216 : index
    %c0_59 = arith.constant 0 : index
    %55 = vector.load %arg5[%c216, %c0_59] : memref<392x1024xbf16, #tpu.memory_space<vmem>>, vector<8x1024xbf16>
    tpu.vector_store %arg5[%c216, %c0_59], %54 {strides = array<i32>} : memref<392x1024xbf16, #tpu.memory_space<vmem>>, vector<8x1024xbf16>,
    %c0_60 = arith.constant 0 : index
    %c88_61 = arith.constant 88 : index
    %56 = vector.load %arg1[%c0_60, %c88_61] : memref<8x1280xbf16, #tpu.memory_space<vmem>>, vector<8x1024xbf16>
    %c224 = arith.constant 224 : index
    %c0_62 = arith.constant 0 : index
    %57 = vector.load %arg5[%c224, %c0_62] : memref<392x1024xbf16, #tpu.memory_space<vmem>>, vector<8x1024xbf16>
    tpu.vector_store %arg5[%c224, %c0_62], %56 {strides = array<i32>} : memref<392x1024xbf16, #tpu.memory_space<vmem>>, vector<8x1024xbf16>,
    %c0_63 = arith.constant 0 : index
    %c89 = arith.constant 89 : index
    %58 = vector.load %arg1[%c0_63, %c89] : memref<8x1280xbf16, #tpu.memory_space<vmem>>, vector<8x1024xbf16>
    %c232 = arith.constant 232 : index
    %c0_64 = arith.constant 0 : index
    %59 = vector.load %arg5[%c232, %c0_64] : memref<392x1024xbf16, #tpu.memory_space<vmem>>, vector<8x1024xbf16>
    tpu.vector_store %arg5[%c232, %c0_64], %58 {strides = array<i32>} : memref<392x1024xbf16, #tpu.memory_space<vmem>>, vector<8x1024xbf16>,
    %c0_65 = arith.constant 0 : index
    %c90 = arith.constant 90 : index
    %60 = vector.load %arg1[%c0_65, %c90] : memref<8x1280xbf16, #tpu.memory_space<vmem>>, vector<8x1024xbf16>
    %c240 = arith.constant 240 : index
    %c0_66 = arith.constant 0 : index
    %61 = vector.load %arg5[%c240, %c0_66] : memref<392x1024xbf16, #tpu.memory_space<vmem>>, vector<8x1024xbf16>
    tpu.vector_store %arg5[%c240, %c0_66], %60 {strides = array<i32>} : memref<392x1024xbf16, #tpu.memory_space<vmem>>, vector<8x1024xbf16>,
    %c0_67 = arith.constant 0 : index
    %c91 = arith.constant 91 : index
    %62 = vector.load %arg1[%c0_67, %c91] : memref<8x1280xbf16, #tpu.memory_space<vmem>>, vector<8x1024xbf16>
    %c248 = arith.constant 248 : index
    %c0_68 = arith.constant 0 : index
    %63 = vector.load %arg5[%c248, %c0_68] : memref<392x1024xbf16, #tpu.memory_space<vmem>>, vector<8x1024xbf16>
    tpu.vector_store %arg5[%c248, %c0_68], %62 {strides = array<i32>} : memref<392x1024xbf16, #tpu.memory_space<vmem>>, vector<8x1024xbf16>,
    %c0_69 = arith.constant 0 : index
    %c92 = arith.constant 92 : index
    %64 = vector.load %arg1[%c0_69, %c92] : memref<8x1280xbf16, #tpu.memory_space<vmem>>, vector<8x1024xbf16>
    %c256 = arith.constant 256 : index
    %c0_70 = arith.constant 0 : index
    %65 = vector.load %arg5[%c256, %c0_70] : memref<392x1024xbf16, #tpu.memory_space<vmem>>, vector<8x1024xbf16>
    tpu.vector_store %arg5[%c256, %c0_70], %64 {strides = array<i32>} : memref<392x1024xbf16, #tpu.memory_space<vmem>>, vector<8x1024xbf16>,
    %c0_71 = arith.constant 0 : index
    %c93 = arith.constant 93 : index
    %66 = vector.load %arg1[%c0_71, %c93] : memref<8x1280xbf16, #tpu.memory_space<vmem>>, vector<8x1024xbf16>
    %c264 = arith.constant 264 : index
    %c0_72 = arith.constant 0 : index
    %67 = vector.load %arg5[%c264, %c0_72] : memref<392x1024xbf16, #tpu.memory_space<vmem>>, vector<8x1024xbf16>
    tpu.vector_store %arg5[%c264, %c0_72], %66 {strides = array<i32>} : memref<392x1024xbf16, #tpu.memory_space<vmem>>, vector<8x1024xbf16>,
    %c0_73 = arith.constant 0 : index
    %c94 = arith.constant 94 : index
    %68 = vector.load %arg1[%c0_73, %c94] : memref<8x1280xbf16, #tpu.memory_space<vmem>>, vector<8x1024xbf16>
    %c272 = arith.constant 272 : index
    %c0_74 = arith.constant 0 : index
    %69 = vector.load %arg5[%c272, %c0_74] : memref<392x1024xbf16, #tpu.memory_space<vmem>>, vector<8x1024xbf16>
    tpu.vector_store %arg5[%c272, %c0_74], %68 {strides = array<i32>} : memref<392x1024xbf16, #tpu.memory_space<vmem>>, vector<8x1024xbf16>,
    %c0_75 = arith.constant 0 : index
    %c110 = arith.constant 110 : index
    %70 = vector.load %arg1[%c0_75, %c110] : memref<8x1280xbf16, #tpu.memory_space<vmem>>, vector<8x1024xbf16>
    %c280 = arith.constant 280 : index
    %c0_76 = arith.constant 0 : index
    %71 = vector.load %arg5[%c280, %c0_76] : memref<392x1024xbf16, #tpu.memory_space<vmem>>, vector<8x1024xbf16>
    tpu.vector_store %arg5[%c280, %c0_76], %70 {strides = array<i32>} : memref<392x1024xbf16, #tpu.memory_space<vmem>>, vector<8x1024xbf16>,
    %c0_77 = arith.constant 0 : index
    %c111 = arith.constant 111 : index
    %72 = vector.load %arg1[%c0_77, %c111] : memref<8x1280xbf16, #tpu.memory_space<vmem>>, vector<8x1024xbf16>
    %c288 = arith.constant 288 : index
    %c0_78 = arith.constant 0 : index
    %73 = vector.load %arg5[%c288, %c0_78] : memref<392x1024xbf16, #tpu.memory_space<vmem>>, vector<8x1024xbf16>
    tpu.vector_store %arg5[%c288, %c0_78], %72 {strides = array<i32>} : memref<392x1024xbf16, #tpu.memory_space<vmem>>, vector<8x1024xbf16>,
    %c0_79 = arith.constant 0 : index
    %c112_80 = arith.constant 112 : index
    %74 = vector.load %arg1[%c0_79, %c112_80] : memref<8x1280xbf16, #tpu.memory_space<vmem>>, vector<8x1024xbf16>
    %c296 = arith.constant 296 : index
    %c0_81 = arith.constant 0 : index
    %75 = vector.load %arg5[%c296, %c0_81] : memref<392x1024xbf16, #tpu.memory_space<vmem>>, vector<8x1024xbf16>
    tpu.vector_store %arg5[%c296, %c0_81], %74 {strides = array<i32>} : memref<392x1024xbf16, #tpu.memory_space<vmem>>, vector<8x1024xbf16>,
    %c0_82 = arith.constant 0 : index
    %c113 = arith.constant 113 : index
    %76 = vector.load %arg1[%c0_82, %c113] : memref<8x1280xbf16, #tpu.memory_space<vmem>>, vector<8x1024xbf16>
    %c304 = arith.constant 304 : index
    %c0_83 = arith.constant 0 : index
    %77 = vector.load %arg5[%c304, %c0_83] : memref<392x1024xbf16, #tpu.memory_space<vmem>>, vector<8x1024xbf16>
    tpu.vector_store %arg5[%c304, %c0_83], %76 {strides = array<i32>} : memref<392x1024xbf16, #tpu.memory_space<vmem>>, vector<8x1024xbf16>,
    %c0_84 = arith.constant 0 : index
    %c114 = arith.constant 114 : index
    %78 = vector.load %arg1[%c0_84, %c114] : memref<8x1280xbf16, #tpu.memory_space<vmem>>, vector<8x1024xbf16>
    %c312 = arith.constant 312 : index
    %c0_85 = arith.constant 0 : index
    %79 = vector.load %arg5[%c312, %c0_85] : memref<392x1024xbf16, #tpu.memory_space<vmem>>, vector<8x1024xbf16>
    tpu.vector_store %arg5[%c312, %c0_85], %78 {strides = array<i32>} : memref<392x1024xbf16, #tpu.memory_space<vmem>>, vector<8x1024xbf16>,
    %c0_86 = arith.constant 0 : index
    %c115 = arith.constant 115 : index
    %80 = vector.load %arg1[%c0_86, %c115] : memref<8x1280xbf16, #tpu.memory_space<vmem>>, vector<8x1024xbf16>
    %c320 = arith.constant 320 : index
    %c0_87 = arith.constant 0 : index
    %81 = vector.load %arg5[%c320, %c0_87] : memref<392x1024xbf16, #tpu.memory_space<vmem>>, vector<8x1024xbf16>
    tpu.vector_store %arg5[%c320, %c0_87], %80 {strides = array<i32>} : memref<392x1024xbf16, #tpu.memory_space<vmem>>, vector<8x1024xbf16>,
    %c0_88 = arith.constant 0 : index
    %c116 = arith.constant 116 : index
    %82 = vector.load %arg1[%c0_88, %c116] : memref<8x1280xbf16, #tpu.memory_space<vmem>>, vector<8x1024xbf16>
    %c328 = arith.constant 328 : index
    %c0_89 = arith.constant 0 : index
    %83 = vector.load %arg5[%c328, %c0_89] : memref<392x1024xbf16, #tpu.memory_space<vmem>>, vector<8x1024xbf16>
    tpu.vector_store %arg5[%c328, %c0_89], %82 {strides = array<i32>} : memref<392x1024xbf16, #tpu.memory_space<vmem>>, vector<8x1024xbf16>,
    %c0_90 = arith.constant 0 : index
    %c132 = arith.constant 132 : index
    %84 = vector.load %arg1[%c0_90, %c132] : memref<8x1280xbf16, #tpu.memory_space<vmem>>, vector<8x1024xbf16>
    %c336 = arith.constant 336 : index
    %c0_91 = arith.constant 0 : index
    %85 = vector.load %arg5[%c336, %c0_91] : memref<392x1024xbf16, #tpu.memory_space<vmem>>, vector<8x1024xbf16>
    tpu.vector_store %arg5[%c336, %c0_91], %84 {strides = array<i32>} : memref<392x1024xbf16, #tpu.memory_space<vmem>>, vector<8x1024xbf16>,
    %c0_92 = arith.constant 0 : index
    %c133 = arith.constant 133 : index
    %86 = vector.load %arg1[%c0_92, %c133] : memref<8x1280xbf16, #tpu.memory_space<vmem>>, vector<8x1024xbf16>
    %c344 = arith.constant 344 : index
    %c0_93 = arith.constant 0 : index
    %87 = vector.load %arg5[%c344, %c0_93] : memref<392x1024xbf16, #tpu.memory_space<vmem>>, vector<8x1024xbf16>
    tpu.vector_store %arg5[%c344, %c0_93], %86 {strides = array<i32>} : memref<392x1024xbf16, #tpu.memory_space<vmem>>, vector<8x1024xbf16>,
    %c0_94 = arith.constant 0 : index
    %c134 = arith.constant 134 : index
    %88 = vector.load %arg1[%c0_94, %c134] : memref<8x1280xbf16, #tpu.memory_space<vmem>>, vector<8x1024xbf16>
    %c352 = arith.constant 352 : index
    %c0_95 = arith.constant 0 : index
    %89 = vector.load %arg5[%c352, %c0_95] : memref<392x1024xbf16, #tpu.memory_space<vmem>>, vector<8x1024xbf16>
    tpu.vector_store %arg5[%c352, %c0_95], %88 {strides = array<i32>} : memref<392x1024xbf16, #tpu.memory_space<vmem>>, vector<8x1024xbf16>,
    %c0_96 = arith.constant 0 : index
    %c135 = arith.constant 135 : index
    %90 = vector.load %arg1[%c0_96, %c135] : memref<8x1280xbf16, #tpu.memory_space<vmem>>, vector<8x1024xbf16>
    %c360 = arith.constant 360 : index
    %c0_97 = arith.constant 0 : index
    %91 = vector.load %arg5[%c360, %c0_97] : memref<392x1024xbf16, #tpu.memory_space<vmem>>, vector<8x1024xbf16>
    tpu.vector_store %arg5[%c360, %c0_97], %90 {strides = array<i32>} : memref<392x1024xbf16, #tpu.memory_space<vmem>>, vector<8x1024xbf16>,
    %c0_98 = arith.constant 0 : index
    %c136_99 = arith.constant 136 : index
    %92 = vector.load %arg1[%c0_98, %c136_99] : memref<8x1280xbf16, #tpu.memory_space<vmem>>, vector<8x1024xbf16>
    %c368 = arith.constant 368 : index
    %c0_100 = arith.constant 0 : index
    %93 = vector.load %arg5[%c368, %c0_100] : memref<392x1024xbf16, #tpu.memory_space<vmem>>, vector<8x1024xbf16>
    tpu.vector_store %arg5[%c368, %c0_100], %92 {strides = array<i32>} : memref<392x1024xbf16, #tpu.memory_space<vmem>>, vector<8x1024xbf16>,
    %c0_101 = arith.constant 0 : index
    %c137 = arith.constant 137 : index
    %94 = vector.load %arg1[%c0_101, %c137] : memref<8x1280xbf16, #tpu.memory_space<vmem>>, vector<8x1024xbf16>
    %c376 = arith.constant 376 : index
    %c0_102 = arith.constant 0 : index
    %95 = vector.load %arg5[%c376, %c0_102] : memref<392x1024xbf16, #tpu.memory_space<vmem>>, vector<8x1024xbf16>
    tpu.vector_store %arg5[%c376, %c0_102], %94 {strides = array<i32>} : memref<392x1024xbf16, #tpu.memory_space<vmem>>, vector<8x1024xbf16>,
    %c0_103 = arith.constant 0 : index
    %c138 = arith.constant 138 : index
    %96 = vector.load %arg1[%c0_103, %c138] : memref<8x1280xbf16, #tpu.memory_space<vmem>>, vector<8x1024xbf16>
    %c384 = arith.constant 384 : index
    %c0_104 = arith.constant 0 : index
    %97 = vector.load %arg5[%c384, %c0_104] : memref<392x1024xbf16, #tpu.memory_space<vmem>>, vector<8x1024xbf16>
    tpu.vector_store %arg5[%c384, %c0_104], %96 {strides = array<i32>} : memref<392x1024xbf16, #tpu.memory_space<vmem>>, vector<8x1024xbf16>,
    %c0_105 = arith.constant 0 : index
    %c0_106 = arith.constant 0 : index
    %98 = vector.load %arg2[%c0_105, %c0_106] : memref<8x392xbf16, #tpu.memory_space<vmem>>, vector<8x392xbf16>
    %c0_107 = arith.constant 0 : index
    %c0_108 = arith.constant 0 : index
    %99 = vector.load %arg5[%c0_107, %c0_108] : memref<392x1024xbf16, #tpu.memory_space<vmem>>, vector<392x1024xbf16>
    %cst = arith.constant dense<0.000000e+00> : vector<8x1024xf32>
    %100 = tpu.matmul %98, %99, %cst {dimension_numbers = #tpu.dot_dimension_numbers<[1], [0], [0], [1], [0, 0, 1, 1], [], []>} : vector<8x392xbf16>, vector<392x1024xbf16>, vector<8x1024xf32> -> vector<8x1024xf32>
    %c0_109 = arith.constant 0 : index
    %c0_110 = arith.constant 0 : index
    %101 = vector.load %arg3[%c0_109, %c0_110] : memref<8x1xf32, #tpu.memory_space<vmem>>, vector<8x1xf32>
    %102 = vector.broadcast %101 : vector<8x1xf32> to vector<8x1024xf32>
    %103 = arith.addf %100, %102 : vector<8x1024xf32>
    %cst_111 = arith.constant 0.000000e+00 : f32
    %104 = vector.broadcast %cst_111 : f32 to vector<8x1024xf32>
    %105 = arith.maximumf %103, %104 : vector<8x1024xf32>
    %106 = arith.truncf %105 : vector<8x1024xf32> to vector<8x1024xbf16>
    %c0_112 = arith.constant 0 : index
    %c0_113 = arith.constant 0 : index
    %107 = vector.load %arg4[%c0_112, %c0_113] : memref<8x1024xbf16, #tpu.memory_space<vmem>>, vector<8x1024xbf16>
    tpu.vector_store %arg4[%c0_112, %c0_113], %106 {strides = array<i32>} : memref<8x1024xbf16, #tpu.memory_space<vmem>>, vector<8x1024xbf16>,
    return
  }
  func.func @transform_0(%arg0: i32) -> (i32, i32) {
    %c0_i32 = arith.constant 0 : i32
    %c0_i32_0 = arith.constant 0 : i32
    %c0_i32_1 = arith.constant 0 : i32
    return %c0_i32, %c0_i32_0 : i32, i32
  }
  func.func @transform_1(%arg0: i32) -> (i32, i32) {
    %c0_i32 = arith.constant 0 : i32
    %c0_i32_0 = arith.constant 0 : i32
    %c0_i32_1 = arith.constant 0 : i32
    return %c0_i32, %c0_i32_0 : i32, i32
  }
  func.func @transform_2(%arg0: i32) -> (i32, i32) {
    %c0_i32 = arith.constant 0 : i32
    %c0_i32_0 = arith.constant 0 : i32
    %c0_i32_1 = arith.constant 0 : i32
    return %c0_i32, %c0_i32_0 : i32, i32
  }
  func.func @transform_3(%arg0: i32) -> (i32, i32) {
    %c0_i32 = arith.constant 0 : i32
    %c0_i32_0 = arith.constant 0 : i32
    %c0_i32_1 = arith.constant 0 : i32
    return %c0_i32, %c0_i32_0 : i32, i32
  }
}

module attributes {stable_mosaic.version = 11 : i64} {
  func.func @_dconv_kernel(%arg0: i32, %arg1: memref<8x768xbf16, #tpu.memory_space<vmem>>, %arg2: memref<16x72xbf16, #tpu.memory_space<vmem>>, %arg3: memref<16x1xf32, #tpu.memory_space<vmem>>, %arg4: memref<16x256xbf16, #tpu.memory_space<vmem>>, %arg5: memref<72x256xbf16, #tpu.memory_space<vmem>>) attributes {dimension_semantics = [#tpu.dimension_semantics<arbitrary>], iteration_bounds = array<i64: 1>, scalar_prefetch = 0 : i64, scratch_operands = 1 : i64, tpu.core_type = #tpu.core_type<tc>, window_params = [{pipeline_mode = #tpu.pipeline_mode<synchronous>, transform_indices = @transform_0, window_bounds = array<i64: 8, 768>}, {pipeline_mode = #tpu.pipeline_mode<synchronous>, transform_indices = @transform_1, window_bounds = array<i64: 16, 72>}, {pipeline_mode = #tpu.pipeline_mode<synchronous>, transform_indices = @transform_2, window_bounds = array<i64: 16, 1>}, {pipeline_mode = #tpu.pipeline_mode<synchronous>, transform_indices = @transform_3, window_bounds = array<i64: 16, 256>}]} {
    %c0 = arith.constant 0 : index
    %c0_0 = arith.constant 0 : index
    %0 = vector.load %arg1[%c0, %c0_0] : memref<8x768xbf16, #tpu.memory_space<vmem>>, vector<8x256xbf16>
    %c0_1 = arith.constant 0 : index
    %c0_2 = arith.constant 0 : index
    %1 = vector.load %arg5[%c0_1, %c0_2] : memref<72x256xbf16, #tpu.memory_space<vmem>>, vector<8x256xbf16>
    tpu.vector_store %arg5[%c0_1, %c0_2], %0 {strides = array<i32>} : memref<72x256xbf16, #tpu.memory_space<vmem>>, vector<8x256xbf16>,
    %c0_3 = arith.constant 0 : index
    %c162 = arith.constant 162 : index
    %2 = vector.load %arg1[%c0_3, %c162] : memref<8x768xbf16, #tpu.memory_space<vmem>>, vector<8x256xbf16>
    %c8 = arith.constant 8 : index
    %c0_4 = arith.constant 0 : index
    %3 = vector.load %arg5[%c8, %c0_4] : memref<72x256xbf16, #tpu.memory_space<vmem>>, vector<8x256xbf16>
    tpu.vector_store %arg5[%c8, %c0_4], %2 {strides = array<i32>} : memref<72x256xbf16, #tpu.memory_space<vmem>>, vector<8x256xbf16>,
    %c0_5 = arith.constant 0 : index
    %c1 = arith.constant 1 : index
    %4 = vector.load %arg1[%c0_5, %c1] : memref<8x768xbf16, #tpu.memory_space<vmem>>, vector<8x256xbf16>
    %c16 = arith.constant 16 : index
    %c0_6 = arith.constant 0 : index
    %5 = vector.load %arg5[%c16, %c0_6] : memref<72x256xbf16, #tpu.memory_space<vmem>>, vector<8x256xbf16>
    tpu.vector_store %arg5[%c16, %c0_6], %4 {strides = array<i32>} : memref<72x256xbf16, #tpu.memory_space<vmem>>, vector<8x256xbf16>,
    %c0_7 = arith.constant 0 : index
    %c324 = arith.constant 324 : index
    %6 = vector.load %arg1[%c0_7, %c324] : memref<8x768xbf16, #tpu.memory_space<vmem>>, vector<8x256xbf16>
    %c24 = arith.constant 24 : index
    %c0_8 = arith.constant 0 : index
    %7 = vector.load %arg5[%c24, %c0_8] : memref<72x256xbf16, #tpu.memory_space<vmem>>, vector<8x256xbf16>
    tpu.vector_store %arg5[%c24, %c0_8], %6 {strides = array<i32>} : memref<72x256xbf16, #tpu.memory_space<vmem>>, vector<8x256xbf16>,
    %c0_9 = arith.constant 0 : index
    %c486 = arith.constant 486 : index
    %8 = vector.load %arg1[%c0_9, %c486] : memref<8x768xbf16, #tpu.memory_space<vmem>>, vector<8x256xbf16>
    %c32 = arith.constant 32 : index
    %c0_10 = arith.constant 0 : index
    %9 = vector.load %arg5[%c32, %c0_10] : memref<72x256xbf16, #tpu.memory_space<vmem>>, vector<8x256xbf16>
    tpu.vector_store %arg5[%c32, %c0_10], %8 {strides = array<i32>} : memref<72x256xbf16, #tpu.memory_space<vmem>>, vector<8x256xbf16>,
    %c0_11 = arith.constant 0 : index
    %c325 = arith.constant 325 : index
    %10 = vector.load %arg1[%c0_11, %c325] : memref<8x768xbf16, #tpu.memory_space<vmem>>, vector<8x256xbf16>
    %c40 = arith.constant 40 : index
    %c0_12 = arith.constant 0 : index
    %11 = vector.load %arg5[%c40, %c0_12] : memref<72x256xbf16, #tpu.memory_space<vmem>>, vector<8x256xbf16>
    tpu.vector_store %arg5[%c40, %c0_12], %10 {strides = array<i32>} : memref<72x256xbf16, #tpu.memory_space<vmem>>, vector<8x256xbf16>,
    %c0_13 = arith.constant 0 : index
    %c9 = arith.constant 9 : index
    %12 = vector.load %arg1[%c0_13, %c9] : memref<8x768xbf16, #tpu.memory_space<vmem>>, vector<8x256xbf16>
    %c48 = arith.constant 48 : index
    %c0_14 = arith.constant 0 : index
    %13 = vector.load %arg5[%c48, %c0_14] : memref<72x256xbf16, #tpu.memory_space<vmem>>, vector<8x256xbf16>
    tpu.vector_store %arg5[%c48, %c0_14], %12 {strides = array<i32>} : memref<72x256xbf16, #tpu.memory_space<vmem>>, vector<8x256xbf16>,
    %c0_15 = arith.constant 0 : index
    %c171 = arith.constant 171 : index
    %14 = vector.load %arg1[%c0_15, %c171] : memref<8x768xbf16, #tpu.memory_space<vmem>>, vector<8x256xbf16>
    %c56 = arith.constant 56 : index
    %c0_16 = arith.constant 0 : index
    %15 = vector.load %arg5[%c56, %c0_16] : memref<72x256xbf16, #tpu.memory_space<vmem>>, vector<8x256xbf16>
    tpu.vector_store %arg5[%c56, %c0_16], %14 {strides = array<i32>} : memref<72x256xbf16, #tpu.memory_space<vmem>>, vector<8x256xbf16>,
    %c0_17 = arith.constant 0 : index
    %c10 = arith.constant 10 : index
    %16 = vector.load %arg1[%c0_17, %c10] : memref<8x768xbf16, #tpu.memory_space<vmem>>, vector<8x256xbf16>
    %c64 = arith.constant 64 : index
    %c0_18 = arith.constant 0 : index
    %17 = vector.load %arg5[%c64, %c0_18] : memref<72x256xbf16, #tpu.memory_space<vmem>>, vector<8x256xbf16>
    tpu.vector_store %arg5[%c64, %c0_18], %16 {strides = array<i32>} : memref<72x256xbf16, #tpu.memory_space<vmem>>, vector<8x256xbf16>,
    %c0_19 = arith.constant 0 : index
    %c0_20 = arith.constant 0 : index
    %18 = vector.load %arg2[%c0_19, %c0_20] : memref<16x72xbf16, #tpu.memory_space<vmem>>, vector<16x72xbf16>
    %c0_21 = arith.constant 0 : index
    %c0_22 = arith.constant 0 : index
    %19 = vector.load %arg5[%c0_21, %c0_22] : memref<72x256xbf16, #tpu.memory_space<vmem>>, vector<72x256xbf16>
    %cst = arith.constant dense<0.000000e+00> : vector<16x256xf32>
    %20 = tpu.matmul %18, %19, %cst {dimension_numbers = #tpu.dot_dimension_numbers<[1], [0], [0], [1], [0, 0, 1, 1], [], []>} : vector<16x72xbf16>, vector<72x256xbf16>, vector<16x256xf32> -> vector<16x256xf32>
    %c0_23 = arith.constant 0 : index
    %c0_24 = arith.constant 0 : index
    %21 = vector.load %arg3[%c0_23, %c0_24] : memref<16x1xf32, #tpu.memory_space<vmem>>, vector<16x1xf32>
    %22 = vector.broadcast %21 : vector<16x1xf32> to vector<16x256xf32>
    %23 = arith.addf %20, %22 : vector<16x256xf32>
    %cst_25 = arith.constant 0.000000e+00 : f32
    %24 = vector.broadcast %cst_25 : f32 to vector<16x256xf32>
    %25 = arith.maximumf %23, %24 : vector<16x256xf32>
    %26 = arith.truncf %25 : vector<16x256xf32> to vector<16x256xbf16>
    %c0_26 = arith.constant 0 : index
    %c0_27 = arith.constant 0 : index
    %27 = vector.load %arg4[%c0_26, %c0_27] : memref<16x256xbf16, #tpu.memory_space<vmem>>, vector<16x256xbf16>
    tpu.vector_store %arg4[%c0_26, %c0_27], %26 {strides = array<i32>} : memref<16x256xbf16, #tpu.memory_space<vmem>>, vector<16x256xbf16>,
    return
  }
  func.func @transform_0(%arg0: i32) -> (i32, i32) {
    %c0_i32 = arith.constant 0 : i32
    %c0_i32_0 = arith.constant 0 : i32
    %c0_i32_1 = arith.constant 0 : i32
    return %c0_i32, %c0_i32_0 : i32, i32
  }
  func.func @transform_1(%arg0: i32) -> (i32, i32) {
    %c0_i32 = arith.constant 0 : i32
    %c0_i32_0 = arith.constant 0 : i32
    %c0_i32_1 = arith.constant 0 : i32
    return %c0_i32, %c0_i32_0 : i32, i32
  }
  func.func @transform_2(%arg0: i32) -> (i32, i32) {
    %c0_i32 = arith.constant 0 : i32
    %c0_i32_0 = arith.constant 0 : i32
    %c0_i32_1 = arith.constant 0 : i32
    return %c0_i32, %c0_i32_0 : i32, i32
  }
  func.func @transform_3(%arg0: i32) -> (i32, i32) {
    %c0_i32 = arith.constant 0 : i32
    %c0_i32_0 = arith.constant 0 : i32
    %c0_i32_1 = arith.constant 0 : i32
    return %c0_i32, %c0_i32_0 : i32, i32
  }
}

module attributes {stable_mosaic.version = 11 : i64} {
  func.func @_dconv_kernel(%arg0: i32, %arg1: memref<16x384xbf16, #tpu.memory_space<vmem>>, %arg2: memref<32x144xbf16, #tpu.memory_space<vmem>>, %arg3: memref<32x1xf32, #tpu.memory_space<vmem>>, %arg4: memref<32x128xbf16, #tpu.memory_space<vmem>>, %arg5: memref<144x128xbf16, #tpu.memory_space<vmem>>) attributes {dimension_semantics = [#tpu.dimension_semantics<arbitrary>], iteration_bounds = array<i64: 1>, scalar_prefetch = 0 : i64, scratch_operands = 1 : i64, tpu.core_type = #tpu.core_type<tc>, window_params = [{pipeline_mode = #tpu.pipeline_mode<synchronous>, transform_indices = @transform_0, window_bounds = array<i64: 16, 384>}, {pipeline_mode = #tpu.pipeline_mode<synchronous>, transform_indices = @transform_1, window_bounds = array<i64: 32, 144>}, {pipeline_mode = #tpu.pipeline_mode<synchronous>, transform_indices = @transform_2, window_bounds = array<i64: 32, 1>}, {pipeline_mode = #tpu.pipeline_mode<synchronous>, transform_indices = @transform_3, window_bounds = array<i64: 32, 128>}]} {
    %c0 = arith.constant 0 : index
    %c0_0 = arith.constant 0 : index
    %0 = vector.load %arg1[%c0, %c0_0] : memref<16x384xbf16, #tpu.memory_space<vmem>>, vector<16x128xbf16>
    %c0_1 = arith.constant 0 : index
    %c0_2 = arith.constant 0 : index
    %1 = vector.load %arg5[%c0_1, %c0_2] : memref<144x128xbf16, #tpu.memory_space<vmem>>, vector<16x128xbf16>
    tpu.vector_store %arg5[%c0_1, %c0_2], %0 {strides = array<i32>} : memref<144x128xbf16, #tpu.memory_space<vmem>>, vector<16x128xbf16>,
    %c0_3 = arith.constant 0 : index
    %c50 = arith.constant 50 : index
    %2 = vector.load %arg1[%c0_3, %c50] : memref<16x384xbf16, #tpu.memory_space<vmem>>, vector<16x128xbf16>
    %c16 = arith.constant 16 : index
    %c0_4 = arith.constant 0 : index
    %3 = vector.load %arg5[%c16, %c0_4] : memref<144x128xbf16, #tpu.memory_space<vmem>>, vector<16x128xbf16>
    tpu.vector_store %arg5[%c16, %c0_4], %2 {strides = array<i32>} : memref<144x128xbf16, #tpu.memory_space<vmem>>, vector<16x128xbf16>,
    %c0_5 = arith.constant 0 : index
    %c1 = arith.constant 1 : index
    %4 = vector.load %arg1[%c0_5, %c1] : memref<16x384xbf16, #tpu.memory_space<vmem>>, vector<16x128xbf16>
    %c32 = arith.constant 32 : index
    %c0_6 = arith.constant 0 : index
    %5 = vector.load %arg5[%c32, %c0_6] : memref<144x128xbf16, #tpu.memory_space<vmem>>, vector<16x128xbf16>
    tpu.vector_store %arg5[%c32, %c0_6], %4 {strides = array<i32>} : memref<144x128xbf16, #tpu.memory_space<vmem>>, vector<16x128xbf16>,
    %c0_7 = arith.constant 0 : index
    %c100 = arith.constant 100 : index
    %6 = vector.load %arg1[%c0_7, %c100] : memref<16x384xbf16, #tpu.memory_space<vmem>>, vector<16x128xbf16>
    %c48 = arith.constant 48 : index
    %c0_8 = arith.constant 0 : index
    %7 = vector.load %arg5[%c48, %c0_8] : memref<144x128xbf16, #tpu.memory_space<vmem>>, vector<16x128xbf16>
    tpu.vector_store %arg5[%c48, %c0_8], %6 {strides = array<i32>} : memref<144x128xbf16, #tpu.memory_space<vmem>>, vector<16x128xbf16>,
    %c0_9 = arith.constant 0 : index
    %c150 = arith.constant 150 : index
    %8 = vector.load %arg1[%c0_9, %c150] : memref<16x384xbf16, #tpu.memory_space<vmem>>, vector<16x128xbf16>
    %c64 = arith.constant 64 : index
    %c0_10 = arith.constant 0 : index
    %9 = vector.load %arg5[%c64, %c0_10] : memref<144x128xbf16, #tpu.memory_space<vmem>>, vector<16x128xbf16>
    tpu.vector_store %arg5[%c64, %c0_10], %8 {strides = array<i32>} : memref<144x128xbf16, #tpu.memory_space<vmem>>, vector<16x128xbf16>,
    %c0_11 = arith.constant 0 : index
    %c101 = arith.constant 101 : index
    %10 = vector.load %arg1[%c0_11, %c101] : memref<16x384xbf16, #tpu.memory_space<vmem>>, vector<16x128xbf16>
    %c80 = arith.constant 80 : index
    %c0_12 = arith.constant 0 : index
    %11 = vector.load %arg5[%c80, %c0_12] : memref<144x128xbf16, #tpu.memory_space<vmem>>, vector<16x128xbf16>
    tpu.vector_store %arg5[%c80, %c0_12], %10 {strides = array<i32>} : memref<144x128xbf16, #tpu.memory_space<vmem>>, vector<16x128xbf16>,
    %c0_13 = arith.constant 0 : index
    %c5 = arith.constant 5 : index
    %12 = vector.load %arg1[%c0_13, %c5] : memref<16x384xbf16, #tpu.memory_space<vmem>>, vector<16x128xbf16>
    %c96 = arith.constant 96 : index
    %c0_14 = arith.constant 0 : index
    %13 = vector.load %arg5[%c96, %c0_14] : memref<144x128xbf16, #tpu.memory_space<vmem>>, vector<16x128xbf16>
    tpu.vector_store %arg5[%c96, %c0_14], %12 {strides = array<i32>} : memref<144x128xbf16, #tpu.memory_space<vmem>>, vector<16x128xbf16>,
    %c0_15 = arith.constant 0 : index
    %c55 = arith.constant 55 : index
    %14 = vector.load %arg1[%c0_15, %c55] : memref<16x384xbf16, #tpu.memory_space<vmem>>, vector<16x128xbf16>
    %c112 = arith.constant 112 : index
    %c0_16 = arith.constant 0 : index
    %15 = vector.load %arg5[%c112, %c0_16] : memref<144x128xbf16, #tpu.memory_space<vmem>>, vector<16x128xbf16>
    tpu.vector_store %arg5[%c112, %c0_16], %14 {strides = array<i32>} : memref<144x128xbf16, #tpu.memory_space<vmem>>, vector<16x128xbf16>,
    %c0_17 = arith.constant 0 : index
    %c6 = arith.constant 6 : index
    %16 = vector.load %arg1[%c0_17, %c6] : memref<16x384xbf16, #tpu.memory_space<vmem>>, vector<16x128xbf16>
    %c128 = arith.constant 128 : index
    %c0_18 = arith.constant 0 : index
    %17 = vector.load %arg5[%c128, %c0_18] : memref<144x128xbf16, #tpu.memory_space<vmem>>, vector<16x128xbf16>
    tpu.vector_store %arg5[%c128, %c0_18], %16 {strides = array<i32>} : memref<144x128xbf16, #tpu.memory_space<vmem>>, vector<16x128xbf16>,
    %c0_19 = arith.constant 0 : index
    %c0_20 = arith.constant 0 : index
    %18 = vector.load %arg2[%c0_19, %c0_20] : memref<32x144xbf16, #tpu.memory_space<vmem>>, vector<32x144xbf16>
    %c0_21 = arith.constant 0 : index
    %c0_22 = arith.constant 0 : index
    %19 = vector.load %arg5[%c0_21, %c0_22] : memref<144x128xbf16, #tpu.memory_space<vmem>>, vector<144x128xbf16>
    %cst = arith.constant dense<0.000000e+00> : vector<32x128xf32>
    %20 = tpu.matmul %18, %19, %cst {dimension_numbers = #tpu.dot_dimension_numbers<[1], [0], [0], [1], [0, 0, 1, 1], [], []>} : vector<32x144xbf16>, vector<144x128xbf16>, vector<32x128xf32> -> vector<32x128xf32>
    %c0_23 = arith.constant 0 : index
    %c0_24 = arith.constant 0 : index
    %21 = vector.load %arg3[%c0_23, %c0_24] : memref<32x1xf32, #tpu.memory_space<vmem>>, vector<32x1xf32>
    %22 = vector.broadcast %21 : vector<32x1xf32> to vector<32x128xf32>
    %23 = arith.addf %20, %22 : vector<32x128xf32>
    %cst_25 = arith.constant 0.000000e+00 : f32
    %24 = vector.broadcast %cst_25 : f32 to vector<32x128xf32>
    %25 = arith.maximumf %23, %24 : vector<32x128xf32>
    %26 = arith.truncf %25 : vector<32x128xf32> to vector<32x128xbf16>
    %c0_26 = arith.constant 0 : index
    %c0_27 = arith.constant 0 : index
    %27 = vector.load %arg4[%c0_26, %c0_27] : memref<32x128xbf16, #tpu.memory_space<vmem>>, vector<32x128xbf16>
    tpu.vector_store %arg4[%c0_26, %c0_27], %26 {strides = array<i32>} : memref<32x128xbf16, #tpu.memory_space<vmem>>, vector<32x128xbf16>,
    return
  }
  func.func @transform_0(%arg0: i32) -> (i32, i32) {
    %c0_i32 = arith.constant 0 : i32
    %c0_i32_0 = arith.constant 0 : i32
    %c0_i32_1 = arith.constant 0 : i32
    return %c0_i32, %c0_i32_0 : i32, i32
  }
  func.func @transform_1(%arg0: i32) -> (i32, i32) {
    %c0_i32 = arith.constant 0 : i32
    %c0_i32_0 = arith.constant 0 : i32
    %c0_i32_1 = arith.constant 0 : i32
    return %c0_i32, %c0_i32_0 : i32, i32
  }
  func.func @transform_2(%arg0: i32) -> (i32, i32) {
    %c0_i32 = arith.constant 0 : i32
    %c0_i32_0 = arith.constant 0 : i32
    %c0_i32_1 = arith.constant 0 : i32
    return %c0_i32, %c0_i32_0 : i32, i32
  }
  func.func @transform_3(%arg0: i32) -> (i32, i32) {
    %c0_i32 = arith.constant 0 : i32
    %c0_i32_0 = arith.constant 0 : i32
    %c0_i32_1 = arith.constant 0 : i32
    return %c0_i32, %c0_i32_0 : i32, i32
  }
}

module attributes {stable_mosaic.version = 11 : i64} {
  func.func @_dconv_kernel(%arg0: i32, %arg1: memref<32x256xbf16, #tpu.memory_space<vmem>>, %arg2: memref<32x288xbf16, #tpu.memory_space<vmem>>, %arg3: memref<32x1xf32, #tpu.memory_space<vmem>>, %arg4: memref<32x128xbf16, #tpu.memory_space<vmem>>, %arg5: memref<288x128xbf16, #tpu.memory_space<vmem>>) attributes {dimension_semantics = [#tpu.dimension_semantics<arbitrary>], iteration_bounds = array<i64: 1>, scalar_prefetch = 0 : i64, scratch_operands = 1 : i64, tpu.core_type = #tpu.core_type<tc>, window_params = [{pipeline_mode = #tpu.pipeline_mode<synchronous>, transform_indices = @transform_0, window_bounds = array<i64: 32, 256>}, {pipeline_mode = #tpu.pipeline_mode<synchronous>, transform_indices = @transform_1, window_bounds = array<i64: 32, 288>}, {pipeline_mode = #tpu.pipeline_mode<synchronous>, transform_indices = @transform_2, window_bounds = array<i64: 32, 1>}, {pipeline_mode = #tpu.pipeline_mode<synchronous>, transform_indices = @transform_3, window_bounds = array<i64: 32, 128>}]} {
    %c0 = arith.constant 0 : index
    %c0_0 = arith.constant 0 : index
    %0 = vector.load %arg1[%c0, %c0_0] : memref<32x256xbf16, #tpu.memory_space<vmem>>, vector<32x128xbf16>
    %c0_1 = arith.constant 0 : index
    %c0_2 = arith.constant 0 : index
    %1 = vector.load %arg5[%c0_1, %c0_2] : memref<288x128xbf16, #tpu.memory_space<vmem>>, vector<32x128xbf16>
    tpu.vector_store %arg5[%c0_1, %c0_2], %0 {strides = array<i32>} : memref<288x128xbf16, #tpu.memory_space<vmem>>, vector<32x128xbf16>,
    %c0_3 = arith.constant 0 : index
    %c1 = arith.constant 1 : index
    %2 = vector.load %arg1[%c0_3, %c1] : memref<32x256xbf16, #tpu.memory_space<vmem>>, vector<32x128xbf16>
    %c32 = arith.constant 32 : index
    %c0_4 = arith.constant 0 : index
    %3 = vector.load %arg5[%c32, %c0_4] : memref<288x128xbf16, #tpu.memory_space<vmem>>, vector<32x128xbf16>
    tpu.vector_store %arg5[%c32, %c0_4], %2 {strides = array<i32>} : memref<288x128xbf16, #tpu.memory_space<vmem>>, vector<32x128xbf16>,
    %c0_5 = arith.constant 0 : index
    %c2 = arith.constant 2 : index
    %4 = vector.load %arg1[%c0_5, %c2] : memref<32x256xbf16, #tpu.memory_space<vmem>>, vector<32x128xbf16>
    %c64 = arith.constant 64 : index
    %c0_6 = arith.constant 0 : index
    %5 = vector.load %arg5[%c64, %c0_6] : memref<288x128xbf16, #tpu.memory_space<vmem>>, vector<32x128xbf16>
    tpu.vector_store %arg5[%c64, %c0_6], %4 {strides = array<i32>} : memref<288x128xbf16, #tpu.memory_space<vmem>>, vector<32x128xbf16>,
    %c0_7 = arith.constant 0 : index
    %c6 = arith.constant 6 : index
    %6 = vector.load %arg1[%c0_7, %c6] : memref<32x256xbf16, #tpu.memory_space<vmem>>, vector<32x128xbf16>
    %c96 = arith.constant 96 : index
    %c0_8 = arith.constant 0 : index
    %7 = vector.load %arg5[%c96, %c0_8] : memref<288x128xbf16, #tpu.memory_space<vmem>>, vector<32x128xbf16>
    tpu.vector_store %arg5[%c96, %c0_8], %6 {strides = array<i32>} : memref<288x128xbf16, #tpu.memory_space<vmem>>, vector<32x128xbf16>,
    %c0_9 = arith.constant 0 : index
    %c7 = arith.constant 7 : index
    %8 = vector.load %arg1[%c0_9, %c7] : memref<32x256xbf16, #tpu.memory_space<vmem>>, vector<32x128xbf16>
    %c128 = arith.constant 128 : index
    %c0_10 = arith.constant 0 : index
    %9 = vector.load %arg5[%c128, %c0_10] : memref<288x128xbf16, #tpu.memory_space<vmem>>, vector<32x128xbf16>
    tpu.vector_store %arg5[%c128, %c0_10], %8 {strides = array<i32>} : memref<288x128xbf16, #tpu.memory_space<vmem>>, vector<32x128xbf16>,
    %c0_11 = arith.constant 0 : index
    %c8 = arith.constant 8 : index
    %10 = vector.load %arg1[%c0_11, %c8] : memref<32x256xbf16, #tpu.memory_space<vmem>>, vector<32x128xbf16>
    %c160 = arith.constant 160 : index
    %c0_12 = arith.constant 0 : index
    %11 = vector.load %arg5[%c160, %c0_12] : memref<288x128xbf16, #tpu.memory_space<vmem>>, vector<32x128xbf16>
    tpu.vector_store %arg5[%c160, %c0_12], %10 {strides = array<i32>} : memref<288x128xbf16, #tpu.memory_space<vmem>>, vector<32x128xbf16>,
    %c0_13 = arith.constant 0 : index
    %c12 = arith.constant 12 : index
    %12 = vector.load %arg1[%c0_13, %c12] : memref<32x256xbf16, #tpu.memory_space<vmem>>, vector<32x128xbf16>
    %c192 = arith.constant 192 : index
    %c0_14 = arith.constant 0 : index
    %13 = vector.load %arg5[%c192, %c0_14] : memref<288x128xbf16, #tpu.memory_space<vmem>>, vector<32x128xbf16>
    tpu.vector_store %arg5[%c192, %c0_14], %12 {strides = array<i32>} : memref<288x128xbf16, #tpu.memory_space<vmem>>, vector<32x128xbf16>,
    %c0_15 = arith.constant 0 : index
    %c13 = arith.constant 13 : index
    %14 = vector.load %arg1[%c0_15, %c13] : memref<32x256xbf16, #tpu.memory_space<vmem>>, vector<32x128xbf16>
    %c224 = arith.constant 224 : index
    %c0_16 = arith.constant 0 : index
    %15 = vector.load %arg5[%c224, %c0_16] : memref<288x128xbf16, #tpu.memory_space<vmem>>, vector<32x128xbf16>
    tpu.vector_store %arg5[%c224, %c0_16], %14 {strides = array<i32>} : memref<288x128xbf16, #tpu.memory_space<vmem>>, vector<32x128xbf16>,
    %c0_17 = arith.constant 0 : index
    %c14 = arith.constant 14 : index
    %16 = vector.load %arg1[%c0_17, %c14] : memref<32x256xbf16, #tpu.memory_space<vmem>>, vector<32x128xbf16>
    %c256 = arith.constant 256 : index
    %c0_18 = arith.constant 0 : index
    %17 = vector.load %arg5[%c256, %c0_18] : memref<288x128xbf16, #tpu.memory_space<vmem>>, vector<32x128xbf16>
    tpu.vector_store %arg5[%c256, %c0_18], %16 {strides = array<i32>} : memref<288x128xbf16, #tpu.memory_space<vmem>>, vector<32x128xbf16>,
    %c0_19 = arith.constant 0 : index
    %c0_20 = arith.constant 0 : index
    %18 = vector.load %arg2[%c0_19, %c0_20] : memref<32x288xbf16, #tpu.memory_space<vmem>>, vector<32x288xbf16>
    %c0_21 = arith.constant 0 : index
    %c0_22 = arith.constant 0 : index
    %19 = vector.load %arg5[%c0_21, %c0_22] : memref<288x128xbf16, #tpu.memory_space<vmem>>, vector<288x128xbf16>
    %cst = arith.constant dense<0.000000e+00> : vector<32x128xf32>
    %20 = tpu.matmul %18, %19, %cst {dimension_numbers = #tpu.dot_dimension_numbers<[1], [0], [0], [1], [0, 0, 1, 1], [], []>} : vector<32x288xbf16>, vector<288x128xbf16>, vector<32x128xf32> -> vector<32x128xf32>
    %c0_23 = arith.constant 0 : index
    %c0_24 = arith.constant 0 : index
    %21 = vector.load %arg3[%c0_23, %c0_24] : memref<32x1xf32, #tpu.memory_space<vmem>>, vector<32x1xf32>
    %22 = vector.broadcast %21 : vector<32x1xf32> to vector<32x128xf32>
    %23 = arith.addf %20, %22 : vector<32x128xf32>
    %24 = tpu.iota {dimensions = array<i32: 0>} : vector<32x128xi32>
    %c8_i32 = arith.constant 8 : i32
    %25 = vector.broadcast %c8_i32 : i32 to vector<32x128xi32>
    %26 = arith.cmpi slt, %24, %25 : vector<32x128xi32>
    %cst_25 = arith.constant 0.000000e+00 : f32
    %27 = vector.broadcast %cst_25 : f32 to vector<32x128xf32>
    %28 = arith.maximumf %23, %27 : vector<32x128xf32>
    %29 = arith.select %26, %28, %23 : vector<32x128xi1>, vector<32x128xf32>
    %30 = arith.truncf %29 : vector<32x128xf32> to vector<32x128xbf16>
    %c0_26 = arith.constant 0 : index
    %c0_27 = arith.constant 0 : index
    %31 = vector.load %arg4[%c0_26, %c0_27] : memref<32x128xbf16, #tpu.memory_space<vmem>>, vector<32x128xbf16>
    tpu.vector_store %arg4[%c0_26, %c0_27], %30 {strides = array<i32>} : memref<32x128xbf16, #tpu.memory_space<vmem>>, vector<32x128xbf16>,
    return
  }
  func.func @transform_0(%arg0: i32) -> (i32, i32) {
    %c0_i32 = arith.constant 0 : i32
    %c0_i32_0 = arith.constant 0 : i32
    %c0_i32_1 = arith.constant 0 : i32
    return %c0_i32, %c0_i32_0 : i32, i32
  }
  func.func @transform_1(%arg0: i32) -> (i32, i32) {
    %c0_i32 = arith.constant 0 : i32
    %c0_i32_0 = arith.constant 0 : i32
    %c0_i32_1 = arith.constant 0 : i32
    return %c0_i32, %c0_i32_0 : i32, i32
  }
  func.func @transform_2(%arg0: i32) -> (i32, i32) {
    %c0_i32 = arith.constant 0 : i32
    %c0_i32_0 = arith.constant 0 : i32
    %c0_i32_1 = arith.constant 0 : i32
    return %c0_i32, %c0_i32_0 : i32, i32
  }
  func.func @transform_3(%arg0: i32) -> (i32, i32) {
    %c0_i32 = arith.constant 0 : i32
    %c0_i32_0 = arith.constant 0 : i32
    %c0_i32_1 = arith.constant 0 : i32
    return %c0_i32, %c0_i32_0 : i32, i32
  }
}

module attributes {stable_mosaic.version = 11 : i64} {
  func.func @_mm_kernel(%arg0: i32, %arg1: memref<24x128xbf16, #tpu.memory_space<vmem>>, %arg2: memref<16x24xbf16, #tpu.memory_space<vmem>>, %arg3: memref<16x1xf32, #tpu.memory_space<vmem>>, %arg4: memref<16x128xbf16, #tpu.memory_space<vmem>>) attributes {dimension_semantics = [#tpu.dimension_semantics<arbitrary>], iteration_bounds = array<i64: 1>, scalar_prefetch = 0 : i64, scratch_operands = 0 : i64, tpu.core_type = #tpu.core_type<tc>, window_params = [{pipeline_mode = #tpu.pipeline_mode<synchronous>, transform_indices = @transform_0, window_bounds = array<i64: 24, 128>}, {pipeline_mode = #tpu.pipeline_mode<synchronous>, transform_indices = @transform_1, window_bounds = array<i64: 16, 24>}, {pipeline_mode = #tpu.pipeline_mode<synchronous>, transform_indices = @transform_2, window_bounds = array<i64: 16, 1>}, {pipeline_mode = #tpu.pipeline_mode<synchronous>, transform_indices = @transform_3, window_bounds = array<i64: 16, 128>}]} {
    %c0 = arith.constant 0 : index
    %c0_0 = arith.constant 0 : index
    %0 = vector.load %arg1[%c0, %c0_0] : memref<24x128xbf16, #tpu.memory_space<vmem>>, vector<24x128xbf16>
    %c0_1 = arith.constant 0 : index
    %c0_2 = arith.constant 0 : index
    %1 = vector.load %arg2[%c0_1, %c0_2] : memref<16x24xbf16, #tpu.memory_space<vmem>>, vector<16x24xbf16>
    %cst = arith.constant dense<0.000000e+00> : vector<16x128xf32>
    %2 = tpu.matmul %1, %0, %cst {dimension_numbers = #tpu.dot_dimension_numbers<[1], [0], [0], [1], [0, 0, 1, 1], [], []>} : vector<16x24xbf16>, vector<24x128xbf16>, vector<16x128xf32> -> vector<16x128xf32>
    %c0_3 = arith.constant 0 : index
    %c0_4 = arith.constant 0 : index
    %3 = vector.load %arg3[%c0_3, %c0_4] : memref<16x1xf32, #tpu.memory_space<vmem>>, vector<16x1xf32>
    %4 = vector.broadcast %3 : vector<16x1xf32> to vector<16x128xf32>
    %5 = arith.addf %2, %4 : vector<16x128xf32>
    %cst_5 = arith.constant 0.000000e+00 : f32
    %6 = vector.broadcast %cst_5 : f32 to vector<16x128xf32>
    %7 = arith.maximumf %5, %6 : vector<16x128xf32>
    %8 = arith.truncf %7 : vector<16x128xf32> to vector<16x128xbf16>
    %c0_6 = arith.constant 0 : index
    %c0_7 = arith.constant 0 : index
    %9 = vector.load %arg4[%c0_6, %c0_7] : memref<16x128xbf16, #tpu.memory_space<vmem>>, vector<16x128xbf16>
    tpu.vector_store %arg4[%c0_6, %c0_7], %8 {strides = array<i32>} : memref<16x128xbf16, #tpu.memory_space<vmem>>, vector<16x128xbf16>,
    return
  }
  func.func @transform_0(%arg0: i32) -> (i32, i32) {
    %c0_i32 = arith.constant 0 : i32
    %c0_i32_0 = arith.constant 0 : i32
    %c0_i32_1 = arith.constant 0 : i32
    return %c0_i32, %c0_i32_0 : i32, i32
  }
  func.func @transform_1(%arg0: i32) -> (i32, i32) {
    %c0_i32 = arith.constant 0 : i32
    %c0_i32_0 = arith.constant 0 : i32
    %c0_i32_1 = arith.constant 0 : i32
    return %c0_i32, %c0_i32_0 : i32, i32
  }
  func.func @transform_2(%arg0: i32) -> (i32, i32) {
    %c0_i32 = arith.constant 0 : i32
    %c0_i32_0 = arith.constant 0 : i32
    %c0_i32_1 = arith.constant 0 : i32
    return %c0_i32, %c0_i32_0 : i32, i32
  }
  func.func @transform_3(%arg0: i32) -> (i32, i32) {
    %c0_i32 = arith.constant 0 : i32
    %c0_i32_0 = arith.constant 0 : i32
    %c0_i32_1 = arith.constant 0 : i32
    return %c0_i32, %c0_i32_0 : i32, i32
  }
}

module attributes {stable_mosaic.version = 11 : i64} {
  func.func @_mm_kernel(%arg0: i32, %arg1: memref<24x128xbf16, #tpu.memory_space<vmem>>, %arg2: memref<24x24xbf16, #tpu.memory_space<vmem>>, %arg3: memref<24x1xf32, #tpu.memory_space<vmem>>, %arg4: memref<24x128xbf16, #tpu.memory_space<vmem>>) attributes {dimension_semantics = [#tpu.dimension_semantics<arbitrary>], iteration_bounds = array<i64: 1>, scalar_prefetch = 0 : i64, scratch_operands = 0 : i64, tpu.core_type = #tpu.core_type<tc>, window_params = [{pipeline_mode = #tpu.pipeline_mode<synchronous>, transform_indices = @transform_0, window_bounds = array<i64: 24, 128>}, {pipeline_mode = #tpu.pipeline_mode<synchronous>, transform_indices = @transform_1, window_bounds = array<i64: 24, 24>}, {pipeline_mode = #tpu.pipeline_mode<synchronous>, transform_indices = @transform_2, window_bounds = array<i64: 24, 1>}, {pipeline_mode = #tpu.pipeline_mode<synchronous>, transform_indices = @transform_3, window_bounds = array<i64: 24, 128>}]} {
    %c0 = arith.constant 0 : index
    %c0_0 = arith.constant 0 : index
    %0 = vector.load %arg1[%c0, %c0_0] : memref<24x128xbf16, #tpu.memory_space<vmem>>, vector<24x128xbf16>
    %c0_1 = arith.constant 0 : index
    %c0_2 = arith.constant 0 : index
    %1 = vector.load %arg2[%c0_1, %c0_2] : memref<24x24xbf16, #tpu.memory_space<vmem>>, vector<24x24xbf16>
    %cst = arith.constant dense<0.000000e+00> : vector<24x128xf32>
    %2 = tpu.matmul %1, %0, %cst {dimension_numbers = #tpu.dot_dimension_numbers<[1], [0], [0], [1], [0, 0, 1, 1], [], []>} : vector<24x24xbf16>, vector<24x128xbf16>, vector<24x128xf32> -> vector<24x128xf32>
    %c0_3 = arith.constant 0 : index
    %c0_4 = arith.constant 0 : index
    %3 = vector.load %arg3[%c0_3, %c0_4] : memref<24x1xf32, #tpu.memory_space<vmem>>, vector<24x1xf32>
    %4 = vector.broadcast %3 : vector<24x1xf32> to vector<24x128xf32>
    %5 = arith.addf %2, %4 : vector<24x128xf32>
    %cst_5 = arith.constant 0.000000e+00 : f32
    %6 = vector.broadcast %cst_5 : f32 to vector<24x128xf32>
    %7 = arith.maximumf %5, %6 : vector<24x128xf32>
    %8 = arith.truncf %7 : vector<24x128xf32> to vector<24x128xbf16>
    %c0_6 = arith.constant 0 : index
    %c0_7 = arith.constant 0 : index
    %9 = vector.load %arg4[%c0_6, %c0_7] : memref<24x128xbf16, #tpu.memory_space<vmem>>, vector<24x128xbf16>
    tpu.vector_store %arg4[%c0_6, %c0_7], %8 {strides = array<i32>} : memref<24x128xbf16, #tpu.memory_space<vmem>>, vector<24x128xbf16>,
    return
  }
  func.func @transform_0(%arg0: i32) -> (i32, i32) {
    %c0_i32 = arith.constant 0 : i32
    %c0_i32_0 = arith.constant 0 : i32
    %c0_i32_1 = arith.constant 0 : i32
    return %c0_i32, %c0_i32_0 : i32, i32
  }
  func.func @transform_1(%arg0: i32) -> (i32, i32) {
    %c0_i32 = arith.constant 0 : i32
    %c0_i32_0 = arith.constant 0 : i32
    %c0_i32_1 = arith.constant 0 : i32
    return %c0_i32, %c0_i32_0 : i32, i32
  }
  func.func @transform_2(%arg0: i32) -> (i32, i32) {
    %c0_i32 = arith.constant 0 : i32
    %c0_i32_0 = arith.constant 0 : i32
    %c0_i32_1 = arith.constant 0 : i32
    return %c0_i32, %c0_i32_0 : i32, i32
  }
  func.func @transform_3(%arg0: i32) -> (i32, i32) {
    %c0_i32 = arith.constant 0 : i32
    %c0_i32_0 = arith.constant 0 : i32
    %c0_i32_1 = arith.constant 0 : i32
    return %c0_i32, %c0_i32_0 : i32, i32
  }
}

module attributes {stable_mosaic.version = 11 : i64} {
  func.func @_mm_kernel(%arg0: i32, %arg1: memref<12x128xbf16, #tpu.memory_space<vmem>>, %arg2: memref<12x128xbf16, #tpu.memory_space<vmem>>, %arg3: memref<12x128xbf16, #tpu.memory_space<vmem>>, %arg4: memref<24x12xbf16, #tpu.memory_space<vmem>>, %arg5: memref<24x128xbf16, #tpu.memory_space<vmem>>, %arg6: memref<24x1xf32, #tpu.memory_space<vmem>>, %arg7: memref<24x128xbf16, #tpu.memory_space<vmem>>) attributes {dimension_semantics = [#tpu.dimension_semantics<arbitrary>], iteration_bounds = array<i64: 1>, scalar_prefetch = 0 : i64, scratch_operands = 0 : i64, tpu.core_type = #tpu.core_type<tc>, window_params = [{pipeline_mode = #tpu.pipeline_mode<synchronous>, transform_indices = @transform_0, window_bounds = array<i64: 12, 128>}, {pipeline_mode = #tpu.pipeline_mode<synchronous>, transform_indices = @transform_1, window_bounds = array<i64: 12, 128>}, {pipeline_mode = #tpu.pipeline_mode<synchronous>, transform_indices = @transform_2, window_bounds = array<i64: 12, 128>}, {pipeline_mode = #tpu.pipeline_mode<synchronous>, transform_indices = @transform_3, window_bounds = array<i64: 24, 12>}, {pipeline_mode = #tpu.pipeline_mode<synchronous>, transform_indices = @transform_4, window_bounds = array<i64: 24, 128>}, {pipeline_mode = #tpu.pipeline_mode<synchronous>, transform_indices = @transform_5, window_bounds = array<i64: 24, 1>}, {pipeline_mode = #tpu.pipeline_mode<synchronous>, transform_indices = @transform_6, window_bounds = array<i64: 24, 128>}]} {
    %c0 = arith.constant 0 : index
    %c0_0 = arith.constant 0 : index
    %0 = vector.load %arg1[%c0, %c0_0] : memref<12x128xbf16, #tpu.memory_space<vmem>>, vector<12x128xbf16>
    %1 = arith.extf %0 : vector<12x128xbf16> to vector<12x128xf32>
    %c0_1 = arith.constant 0 : index
    %c0_2 = arith.constant 0 : index
    %2 = vector.load %arg2[%c0_1, %c0_2] : memref<12x128xbf16, #tpu.memory_space<vmem>>, vector<12x128xbf16>
    %3 = arith.extf %2 : vector<12x128xbf16> to vector<12x128xf32>
    %4 = arith.addf %1, %3 : vector<12x128xf32>
    %c0_3 = arith.constant 0 : index
    %c0_4 = arith.constant 0 : index
    %5 = vector.load %arg3[%c0_3, %c0_4] : memref<12x128xbf16, #tpu.memory_space<vmem>>, vector<12x128xbf16>
    %6 = arith.extf %5 : vector<12x128xbf16> to vector<12x128xf32>
    %7 = arith.addf %4, %6 : vector<12x128xf32>
    %8 = arith.truncf %7 : vector<12x128xf32> to vector<12x128xbf16>
    %c0_5 = arith.constant 0 : index
    %c0_6 = arith.constant 0 : index
    %9 = vector.load %arg4[%c0_5, %c0_6] : memref<24x12xbf16, #tpu.memory_space<vmem>>, vector<24x12xbf16>
    %cst = arith.constant dense<0.000000e+00> : vector<24x128xf32>
    %10 = tpu.matmul %9, %8, %cst {dimension_numbers = #tpu.dot_dimension_numbers<[1], [0], [0], [1], [0, 0, 1, 1], [], []>} : vector<24x12xbf16>, vector<12x128xbf16>, vector<24x128xf32> -> vector<24x128xf32>
    %c0_7 = arith.constant 0 : index
    %c0_8 = arith.constant 0 : index
    %11 = vector.load %arg5[%c0_7, %c0_8] : memref<24x128xbf16, #tpu.memory_space<vmem>>, vector<24x128xbf16>
    %12 = arith.extf %11 : vector<24x128xbf16> to vector<24x128xf32>
    %13 = arith.addf %10, %12 : vector<24x128xf32>
    %c0_9 = arith.constant 0 : index
    %c0_10 = arith.constant 0 : index
    %14 = vector.load %arg6[%c0_9, %c0_10] : memref<24x1xf32, #tpu.memory_space<vmem>>, vector<24x1xf32>
    %15 = vector.broadcast %14 : vector<24x1xf32> to vector<24x128xf32>
    %16 = arith.addf %13, %15 : vector<24x128xf32>
    %cst_11 = arith.constant 0.000000e+00 : f32
    %17 = vector.broadcast %cst_11 : f32 to vector<24x128xf32>
    %18 = arith.maximumf %16, %17 : vector<24x128xf32>
    %19 = arith.truncf %18 : vector<24x128xf32> to vector<24x128xbf16>
    %c0_12 = arith.constant 0 : index
    %c0_13 = arith.constant 0 : index
    %20 = vector.load %arg7[%c0_12, %c0_13] : memref<24x128xbf16, #tpu.memory_space<vmem>>, vector<24x128xbf16>
    tpu.vector_store %arg7[%c0_12, %c0_13], %19 {strides = array<i32>} : memref<24x128xbf16, #tpu.memory_space<vmem>>, vector<24x128xbf16>,
    return
  }
  func.func @transform_0(%arg0: i32) -> (i32, i32) {
    %c0_i32 = arith.constant 0 : i32
    %c0_i32_0 = arith.constant 0 : i32
    %c0_i32_1 = arith.constant 0 : i32
    return %c0_i32, %c0_i32_0 : i32, i32
  }
  func.func @transform_1(%arg0: i32) -> (i32, i32) {
    %c0_i32 = arith.constant 0 : i32
    %c0_i32_0 = arith.constant 0 : i32
    %c0_i32_1 = arith.constant 0 : i32
    return %c0_i32, %c0_i32_0 : i32, i32
  }
  func.func @transform_2(%arg0: i32) -> (i32, i32) {
    %c0_i32 = arith.constant 0 : i32
    %c0_i32_0 = arith.constant 0 : i32
    %c0_i32_1 = arith.constant 0 : i32
    return %c0_i32, %c0_i32_0 : i32, i32
  }
  func.func @transform_3(%arg0: i32) -> (i32, i32) {
    %c0_i32 = arith.constant 0 : i32
    %c0_i32_0 = arith.constant 0 : i32
    %c0_i32_1 = arith.constant 0 : i32
    return %c0_i32, %c0_i32_0 : i32, i32
  }
  func.func @transform_4(%arg0: i32) -> (i32, i32) {
    %c0_i32 = arith.constant 0 : i32
    %c0_i32_0 = arith.constant 0 : i32
    %c0_i32_1 = arith.constant 0 : i32
    return %c0_i32, %c0_i32_0 : i32, i32
  }
  func.func @transform_5(%arg0: i32) -> (i32, i32) {
    %c0_i32 = arith.constant 0 : i32
    %c0_i32_0 = arith.constant 0 : i32
    %c0_i32_1 = arith.constant 0 : i32
    return %c0_i32, %c0_i32_0 : i32, i32
  }
  func.func @transform_6(%arg0: i32) -> (i32, i32) {
    %c0_i32 = arith.constant 0 : i32
    %c0_i32_0 = arith.constant 0 : i32
    %c0_i32_1 = arith.constant 0 : i32
    return %c0_i32, %c0_i32_0 : i32, i32
  }
}

module attributes {stable_mosaic.version = 11 : i64} {
  func.func @_dconv_kernel(%arg0: i32, %arg1: memref<32x256xbf16, #tpu.memory_space<vmem>>, %arg2: memref<64x128xbf16, #tpu.memory_space<vmem>>, %arg3: memref<64x1xf32, #tpu.memory_space<vmem>>, %arg4: memref<64x128xbf16, #tpu.memory_space<vmem>>, %arg5: memref<128x128xbf16, #tpu.memory_space<vmem>>) attributes {dimension_semantics = [#tpu.dimension_semantics<arbitrary>], iteration_bounds = array<i64: 1>, scalar_prefetch = 0 : i64, scratch_operands = 1 : i64, tpu.core_type = #tpu.core_type<tc>, window_params = [{pipeline_mode = #tpu.pipeline_mode<synchronous>, transform_indices = @transform_0, window_bounds = array<i64: 32, 256>}, {pipeline_mode = #tpu.pipeline_mode<synchronous>, transform_indices = @transform_1, window_bounds = array<i64: 64, 128>}, {pipeline_mode = #tpu.pipeline_mode<synchronous>, transform_indices = @transform_2, window_bounds = array<i64: 64, 1>}, {pipeline_mode = #tpu.pipeline_mode<synchronous>, transform_indices = @transform_3, window_bounds = array<i64: 64, 128>}]} {
    %c0 = arith.constant 0 : index
    %c0_0 = arith.constant 0 : index
    %0 = vector.load %arg1[%c0, %c0_0] : memref<32x256xbf16, #tpu.memory_space<vmem>>, vector<32x128xbf16>
    %c0_1 = arith.constant 0 : index
    %c0_2 = arith.constant 0 : index
    %1 = vector.load %arg5[%c0_1, %c0_2] : memref<128x128xbf16, #tpu.memory_space<vmem>>, vector<32x128xbf16>
    tpu.vector_store %arg5[%c0_1, %c0_2], %0 {strides = array<i32>} : memref<128x128xbf16, #tpu.memory_space<vmem>>, vector<32x128xbf16>,
    %c0_3 = arith.constant 0 : index
    %c1 = arith.constant 1 : index
    %2 = vector.load %arg1[%c0_3, %c1] : memref<32x256xbf16, #tpu.memory_space<vmem>>, vector<32x128xbf16>
    %c32 = arith.constant 32 : index
    %c0_4 = arith.constant 0 : index
    %3 = vector.load %arg5[%c32, %c0_4] : memref<128x128xbf16, #tpu.memory_space<vmem>>, vector<32x128xbf16>
    tpu.vector_store %arg5[%c32, %c0_4], %2 {strides = array<i32>} : memref<128x128xbf16, #tpu.memory_space<vmem>>, vector<32x128xbf16>,
    %c0_5 = arith.constant 0 : index
    %c5 = arith.constant 5 : index
    %4 = vector.load %arg1[%c0_5, %c5] : memref<32x256xbf16, #tpu.memory_space<vmem>>, vector<32x128xbf16>
    %c64 = arith.constant 64 : index
    %c0_6 = arith.constant 0 : index
    %5 = vector.load %arg5[%c64, %c0_6] : memref<128x128xbf16, #tpu.memory_space<vmem>>, vector<32x128xbf16>
    tpu.vector_store %arg5[%c64, %c0_6], %4 {strides = array<i32>} : memref<128x128xbf16, #tpu.memory_space<vmem>>, vector<32x128xbf16>,
    %c0_7 = arith.constant 0 : index
    %c6 = arith.constant 6 : index
    %6 = vector.load %arg1[%c0_7, %c6] : memref<32x256xbf16, #tpu.memory_space<vmem>>, vector<32x128xbf16>
    %c96 = arith.constant 96 : index
    %c0_8 = arith.constant 0 : index
    %7 = vector.load %arg5[%c96, %c0_8] : memref<128x128xbf16, #tpu.memory_space<vmem>>, vector<32x128xbf16>
    tpu.vector_store %arg5[%c96, %c0_8], %6 {strides = array<i32>} : memref<128x128xbf16, #tpu.memory_space<vmem>>, vector<32x128xbf16>,
    %c0_9 = arith.constant 0 : index
    %c0_10 = arith.constant 0 : index
    %8 = vector.load %arg2[%c0_9, %c0_10] : memref<64x128xbf16, #tpu.memory_space<vmem>>, vector<64x128xbf16>
    %c0_11 = arith.constant 0 : index
    %c0_12 = arith.constant 0 : index
    %9 = vector.load %arg5[%c0_11, %c0_12] : memref<128x128xbf16, #tpu.memory_space<vmem>>, vector<128x128xbf16>
    %cst = arith.constant dense<0.000000e+00> : vector<64x128xf32>
    %10 = tpu.matmul %8, %9, %cst {dimension_numbers = #tpu.dot_dimension_numbers<[1], [0], [0], [1], [0, 0, 1, 1], [], []>} : vector<64x128xbf16>, vector<128x128xbf16>, vector<64x128xf32> -> vector<64x128xf32>
    %c0_13 = arith.constant 0 : index
    %c0_14 = arith.constant 0 : index
    %11 = vector.load %arg3[%c0_13, %c0_14] : memref<64x1xf32, #tpu.memory_space<vmem>>, vector<64x1xf32>
    %12 = vector.broadcast %11 : vector<64x1xf32> to vector<64x128xf32>
    %13 = arith.addf %10, %12 : vector<64x128xf32>
    %cst_15 = arith.constant 0.000000e+00 : f32
    %14 = vector.broadcast %cst_15 : f32 to vector<64x128xf32>
    %15 = arith.maximumf %13, %14 : vector<64x128xf32>
    %16 = arith.truncf %15 : vector<64x128xf32> to vector<64x128xbf16>
    %c0_16 = arith.constant 0 : index
    %c0_17 = arith.constant 0 : index
    %17 = vector.load %arg4[%c0_16, %c0_17] : memref<64x128xbf16, #tpu.memory_space<vmem>>, vector<64x128xbf16>
    tpu.vector_store %arg4[%c0_16, %c0_17], %16 {strides = array<i32>} : memref<64x128xbf16, #tpu.memory_space<vmem>>, vector<64x128xbf16>,
    return
  }
  func.func @transform_0(%arg0: i32) -> (i32, i32) {
    %c0_i32 = arith.constant 0 : i32
    %c0_i32_0 = arith.constant 0 : i32
    %c0_i32_1 = arith.constant 0 : i32
    return %c0_i32, %c0_i32_0 : i32, i32
  }
  func.func @transform_1(%arg0: i32) -> (i32, i32) {
    %c0_i32 = arith.constant 0 : i32
    %c0_i32_0 = arith.constant 0 : i32
    %c0_i32_1 = arith.constant 0 : i32
    return %c0_i32, %c0_i32_0 : i32, i32
  }
  func.func @transform_2(%arg0: i32) -> (i32, i32) {
    %c0_i32 = arith.constant 0 : i32
    %c0_i32_0 = arith.constant 0 : i32
    %c0_i32_1 = arith.constant 0 : i32
    return %c0_i32, %c0_i32_0 : i32, i32
  }
  func.func @transform_3(%arg0: i32) -> (i32, i32) {
    %c0_i32 = arith.constant 0 : i32
    %c0_i32_0 = arith.constant 0 : i32
    %c0_i32_1 = arith.constant 0 : i32
    return %c0_i32, %c0_i32_0 : i32, i32
  }
}

module attributes {stable_mosaic.version = 11 : i64} {
  func.func @_dconv_kernel(%arg0: i32, %arg1: memref<16x384xbf16, #tpu.memory_space<vmem>>, %arg2: memref<32x64xbf16, #tpu.memory_space<vmem>>, %arg3: memref<32x1xf32, #tpu.memory_space<vmem>>, %arg4: memref<32x256xbf16, #tpu.memory_space<vmem>>, %arg5: memref<64x256xbf16, #tpu.memory_space<vmem>>) attributes {dimension_semantics = [#tpu.dimension_semantics<arbitrary>], iteration_bounds = array<i64: 1>, scalar_prefetch = 0 : i64, scratch_operands = 1 : i64, tpu.core_type = #tpu.core_type<tc>, window_params = [{pipeline_mode = #tpu.pipeline_mode<synchronous>, transform_indices = @transform_0, window_bounds = array<i64: 16, 384>}, {pipeline_mode = #tpu.pipeline_mode<synchronous>, transform_indices = @transform_1, window_bounds = array<i64: 32, 64>}, {pipeline_mode = #tpu.pipeline_mode<synchronous>, transform_indices = @transform_2, window_bounds = array<i64: 32, 1>}, {pipeline_mode = #tpu.pipeline_mode<synchronous>, transform_indices = @transform_3, window_bounds = array<i64: 32, 256>}]} {
    %c0 = arith.constant 0 : index
    %c0_0 = arith.constant 0 : index
    %0 = vector.load %arg1[%c0, %c0_0] : memref<16x384xbf16, #tpu.memory_space<vmem>>, vector<16x256xbf16>
    %c0_1 = arith.constant 0 : index
    %c0_2 = arith.constant 0 : index
    %1 = vector.load %arg5[%c0_1, %c0_2] : memref<64x256xbf16, #tpu.memory_space<vmem>>, vector<16x256xbf16>
    tpu.vector_store %arg5[%c0_1, %c0_2], %0 {strides = array<i32>} : memref<64x256xbf16, #tpu.memory_space<vmem>>, vector<16x256xbf16>,
    %c0_3 = arith.constant 0 : index
    %c1 = arith.constant 1 : index
    %2 = vector.load %arg1[%c0_3, %c1] : memref<16x384xbf16, #tpu.memory_space<vmem>>, vector<16x256xbf16>
    %c16 = arith.constant 16 : index
    %c0_4 = arith.constant 0 : index
    %3 = vector.load %arg5[%c16, %c0_4] : memref<64x256xbf16, #tpu.memory_space<vmem>>, vector<16x256xbf16>
    tpu.vector_store %arg5[%c16, %c0_4], %2 {strides = array<i32>} : memref<64x256xbf16, #tpu.memory_space<vmem>>, vector<16x256xbf16>,
    %c0_5 = arith.constant 0 : index
    %c9 = arith.constant 9 : index
    %4 = vector.load %arg1[%c0_5, %c9] : memref<16x384xbf16, #tpu.memory_space<vmem>>, vector<16x256xbf16>
    %c32 = arith.constant 32 : index
    %c0_6 = arith.constant 0 : index
    %5 = vector.load %arg5[%c32, %c0_6] : memref<64x256xbf16, #tpu.memory_space<vmem>>, vector<16x256xbf16>
    tpu.vector_store %arg5[%c32, %c0_6], %4 {strides = array<i32>} : memref<64x256xbf16, #tpu.memory_space<vmem>>, vector<16x256xbf16>,
    %c0_7 = arith.constant 0 : index
    %c10 = arith.constant 10 : index
    %6 = vector.load %arg1[%c0_7, %c10] : memref<16x384xbf16, #tpu.memory_space<vmem>>, vector<16x256xbf16>
    %c48 = arith.constant 48 : index
    %c0_8 = arith.constant 0 : index
    %7 = vector.load %arg5[%c48, %c0_8] : memref<64x256xbf16, #tpu.memory_space<vmem>>, vector<16x256xbf16>
    tpu.vector_store %arg5[%c48, %c0_8], %6 {strides = array<i32>} : memref<64x256xbf16, #tpu.memory_space<vmem>>, vector<16x256xbf16>,
    %c0_9 = arith.constant 0 : index
    %c0_10 = arith.constant 0 : index
    %8 = vector.load %arg2[%c0_9, %c0_10] : memref<32x64xbf16, #tpu.memory_space<vmem>>, vector<32x64xbf16>
    %c0_11 = arith.constant 0 : index
    %c0_12 = arith.constant 0 : index
    %9 = vector.load %arg5[%c0_11, %c0_12] : memref<64x256xbf16, #tpu.memory_space<vmem>>, vector<64x256xbf16>
    %cst = arith.constant dense<0.000000e+00> : vector<32x256xf32>
    %10 = tpu.matmul %8, %9, %cst {dimension_numbers = #tpu.dot_dimension_numbers<[1], [0], [0], [1], [0, 0, 1, 1], [], []>} : vector<32x64xbf16>, vector<64x256xbf16>, vector<32x256xf32> -> vector<32x256xf32>
    %c0_13 = arith.constant 0 : index
    %c0_14 = arith.constant 0 : index
    %11 = vector.load %arg3[%c0_13, %c0_14] : memref<32x1xf32, #tpu.memory_space<vmem>>, vector<32x1xf32>
    %12 = vector.broadcast %11 : vector<32x1xf32> to vector<32x256xf32>
    %13 = arith.addf %10, %12 : vector<32x256xf32>
    %cst_15 = arith.constant 0.000000e+00 : f32
    %14 = vector.broadcast %cst_15 : f32 to vector<32x256xf32>
    %15 = arith.maximumf %13, %14 : vector<32x256xf32>
    %16 = arith.truncf %15 : vector<32x256xf32> to vector<32x256xbf16>
    %c0_16 = arith.constant 0 : index
    %c0_17 = arith.constant 0 : index
    %17 = vector.load %arg4[%c0_16, %c0_17] : memref<32x256xbf16, #tpu.memory_space<vmem>>, vector<32x256xbf16>
    tpu.vector_store %arg4[%c0_16, %c0_17], %16 {strides = array<i32>} : memref<32x256xbf16, #tpu.memory_space<vmem>>, vector<32x256xbf16>,
    return
  }
  func.func @transform_0(%arg0: i32) -> (i32, i32) {
    %c0_i32 = arith.constant 0 : i32
    %c0_i32_0 = arith.constant 0 : i32
    %c0_i32_1 = arith.constant 0 : i32
    return %c0_i32, %c0_i32_0 : i32, i32
  }
  func.func @transform_1(%arg0: i32) -> (i32, i32) {
    %c0_i32 = arith.constant 0 : i32
    %c0_i32_0 = arith.constant 0 : i32
    %c0_i32_1 = arith.constant 0 : i32
    return %c0_i32, %c0_i32_0 : i32, i32
  }
  func.func @transform_2(%arg0: i32) -> (i32, i32) {
    %c0_i32 = arith.constant 0 : i32
    %c0_i32_0 = arith.constant 0 : i32
    %c0_i32_1 = arith.constant 0 : i32
    return %c0_i32, %c0_i32_0 : i32, i32
  }
  func.func @transform_3(%arg0: i32) -> (i32, i32) {
    %c0_i32 = arith.constant 0 : i32
    %c0_i32_0 = arith.constant 0 : i32
    %c0_i32_1 = arith.constant 0 : i32
    return %c0_i32, %c0_i32_0 : i32, i32
  }
}

module attributes {stable_mosaic.version = 11 : i64} {
  func.func @_dconv_kernel(%arg0: i32, %arg1: memref<8x1280xbf16, #tpu.memory_space<vmem>>, %arg2: memref<8x392xbf16, #tpu.memory_space<vmem>>, %arg3: memref<8x1xf32, #tpu.memory_space<vmem>>, %arg4: memref<8x1024xf32, #tpu.memory_space<vmem>>, %arg5: memref<392x1024xbf16, #tpu.memory_space<vmem>>) attributes {dimension_semantics = [#tpu.dimension_semantics<arbitrary>], iteration_bounds = array<i64: 1>, scalar_prefetch = 0 : i64, scratch_operands = 1 : i64, tpu.core_type = #tpu.core_type<tc>, window_params = [{pipeline_mode = #tpu.pipeline_mode<synchronous>, transform_indices = @transform_0, window_bounds = array<i64: 8, 1280>}, {pipeline_mode = #tpu.pipeline_mode<synchronous>, transform_indices = @transform_1, window_bounds = array<i64: 8, 392>}, {pipeline_mode = #tpu.pipeline_mode<synchronous>, transform_indices = @transform_2, window_bounds = array<i64: 8, 1>}, {pipeline_mode = #tpu.pipeline_mode<synchronous>, transform_indices = @transform_3, window_bounds = array<i64: 8, 1024>}]} {
    %c0 = arith.constant 0 : index
    %c0_0 = arith.constant 0 : index
    %0 = vector.load %arg1[%c0, %c0_0] : memref<8x1280xbf16, #tpu.memory_space<vmem>>, vector<8x1024xbf16>
    %c0_1 = arith.constant 0 : index
    %c0_2 = arith.constant 0 : index
    %1 = vector.load %arg5[%c0_1, %c0_2] : memref<392x1024xbf16, #tpu.memory_space<vmem>>, vector<8x1024xbf16>
    tpu.vector_store %arg5[%c0_1, %c0_2], %0 {strides = array<i32>} : memref<392x1024xbf16, #tpu.memory_space<vmem>>, vector<8x1024xbf16>,
    %c0_3 = arith.constant 0 : index
    %c1 = arith.constant 1 : index
    %2 = vector.load %arg1[%c0_3, %c1] : memref<8x1280xbf16, #tpu.memory_space<vmem>>, vector<8x1024xbf16>
    %c8 = arith.constant 8 : index
    %c0_4 = arith.constant 0 : index
    %3 = vector.load %arg5[%c8, %c0_4] : memref<392x1024xbf16, #tpu.memory_space<vmem>>, vector<8x1024xbf16>
    tpu.vector_store %arg5[%c8, %c0_4], %2 {strides = array<i32>} : memref<392x1024xbf16, #tpu.memory_space<vmem>>, vector<8x1024xbf16>,
    %c0_5 = arith.constant 0 : index
    %c2 = arith.constant 2 : index
    %4 = vector.load %arg1[%c0_5, %c2] : memref<8x1280xbf16, #tpu.memory_space<vmem>>, vector<8x1024xbf16>
    %c16 = arith.constant 16 : index
    %c0_6 = arith.constant 0 : index
    %5 = vector.load %arg5[%c16, %c0_6] : memref<392x1024xbf16, #tpu.memory_space<vmem>>, vector<8x1024xbf16>
    tpu.vector_store %arg5[%c16, %c0_6], %4 {strides = array<i32>} : memref<392x1024xbf16, #tpu.memory_space<vmem>>, vector<8x1024xbf16>,
    %c0_7 = arith.constant 0 : index
    %c3 = arith.constant 3 : index
    %6 = vector.load %arg1[%c0_7, %c3] : memref<8x1280xbf16, #tpu.memory_space<vmem>>, vector<8x1024xbf16>
    %c24 = arith.constant 24 : index
    %c0_8 = arith.constant 0 : index
    %7 = vector.load %arg5[%c24, %c0_8] : memref<392x1024xbf16, #tpu.memory_space<vmem>>, vector<8x1024xbf16>
    tpu.vector_store %arg5[%c24, %c0_8], %6 {strides = array<i32>} : memref<392x1024xbf16, #tpu.memory_space<vmem>>, vector<8x1024xbf16>,
    %c0_9 = arith.constant 0 : index
    %c4 = arith.constant 4 : index
    %8 = vector.load %arg1[%c0_9, %c4] : memref<8x1280xbf16, #tpu.memory_space<vmem>>, vector<8x1024xbf16>
    %c32 = arith.constant 32 : index
    %c0_10 = arith.constant 0 : index
    %9 = vector.load %arg5[%c32, %c0_10] : memref<392x1024xbf16, #tpu.memory_space<vmem>>, vector<8x1024xbf16>
    tpu.vector_store %arg5[%c32, %c0_10], %8 {strides = array<i32>} : memref<392x1024xbf16, #tpu.memory_space<vmem>>, vector<8x1024xbf16>,
    %c0_11 = arith.constant 0 : index
    %c5 = arith.constant 5 : index
    %10 = vector.load %arg1[%c0_11, %c5] : memref<8x1280xbf16, #tpu.memory_space<vmem>>, vector<8x1024xbf16>
    %c40 = arith.constant 40 : index
    %c0_12 = arith.constant 0 : index
    %11 = vector.load %arg5[%c40, %c0_12] : memref<392x1024xbf16, #tpu.memory_space<vmem>>, vector<8x1024xbf16>
    tpu.vector_store %arg5[%c40, %c0_12], %10 {strides = array<i32>} : memref<392x1024xbf16, #tpu.memory_space<vmem>>, vector<8x1024xbf16>,
    %c0_13 = arith.constant 0 : index
    %c6 = arith.constant 6 : index
    %12 = vector.load %arg1[%c0_13, %c6] : memref<8x1280xbf16, #tpu.memory_space<vmem>>, vector<8x1024xbf16>
    %c48 = arith.constant 48 : index
    %c0_14 = arith.constant 0 : index
    %13 = vector.load %arg5[%c48, %c0_14] : memref<392x1024xbf16, #tpu.memory_space<vmem>>, vector<8x1024xbf16>
    tpu.vector_store %arg5[%c48, %c0_14], %12 {strides = array<i32>} : memref<392x1024xbf16, #tpu.memory_space<vmem>>, vector<8x1024xbf16>,
    %c0_15 = arith.constant 0 : index
    %c22 = arith.constant 22 : index
    %14 = vector.load %arg1[%c0_15, %c22] : memref<8x1280xbf16, #tpu.memory_space<vmem>>, vector<8x1024xbf16>
    %c56 = arith.constant 56 : index
    %c0_16 = arith.constant 0 : index
    %15 = vector.load %arg5[%c56, %c0_16] : memref<392x1024xbf16, #tpu.memory_space<vmem>>, vector<8x1024xbf16>
    tpu.vector_store %arg5[%c56, %c0_16], %14 {strides = array<i32>} : memref<392x1024xbf16, #tpu.memory_space<vmem>>, vector<8x1024xbf16>,
    %c0_17 = arith.constant 0 : index
    %c23 = arith.constant 23 : index
    %16 = vector.load %arg1[%c0_17, %c23] : memref<8x1280xbf16, #tpu.memory_space<vmem>>, vector<8x1024xbf16>
    %c64 = arith.constant 64 : index
    %c0_18 = arith.constant 0 : index
    %17 = vector.load %arg5[%c64, %c0_18] : memref<392x1024xbf16, #tpu.memory_space<vmem>>, vector<8x1024xbf16>
    tpu.vector_store %arg5[%c64, %c0_18], %16 {strides = array<i32>} : memref<392x1024xbf16, #tpu.memory_space<vmem>>, vector<8x1024xbf16>,
    %c0_19 = arith.constant 0 : index
    %c24_20 = arith.constant 24 : index
    %18 = vector.load %arg1[%c0_19, %c24_20] : memref<8x1280xbf16, #tpu.memory_space<vmem>>, vector<8x1024xbf16>
    %c72 = arith.constant 72 : index
    %c0_21 = arith.constant 0 : index
    %19 = vector.load %arg5[%c72, %c0_21] : memref<392x1024xbf16, #tpu.memory_space<vmem>>, vector<8x1024xbf16>
    tpu.vector_store %arg5[%c72, %c0_21], %18 {strides = array<i32>} : memref<392x1024xbf16, #tpu.memory_space<vmem>>, vector<8x1024xbf16>,
    %c0_22 = arith.constant 0 : index
    %c25 = arith.constant 25 : index
    %20 = vector.load %arg1[%c0_22, %c25] : memref<8x1280xbf16, #tpu.memory_space<vmem>>, vector<8x1024xbf16>
    %c80 = arith.constant 80 : index
    %c0_23 = arith.constant 0 : index
    %21 = vector.load %arg5[%c80, %c0_23] : memref<392x1024xbf16, #tpu.memory_space<vmem>>, vector<8x1024xbf16>
    tpu.vector_store %arg5[%c80, %c0_23], %20 {strides = array<i32>} : memref<392x1024xbf16, #tpu.memory_space<vmem>>, vector<8x1024xbf16>,
    %c0_24 = arith.constant 0 : index
    %c26 = arith.constant 26 : index
    %22 = vector.load %arg1[%c0_24, %c26] : memref<8x1280xbf16, #tpu.memory_space<vmem>>, vector<8x1024xbf16>
    %c88 = arith.constant 88 : index
    %c0_25 = arith.constant 0 : index
    %23 = vector.load %arg5[%c88, %c0_25] : memref<392x1024xbf16, #tpu.memory_space<vmem>>, vector<8x1024xbf16>
    tpu.vector_store %arg5[%c88, %c0_25], %22 {strides = array<i32>} : memref<392x1024xbf16, #tpu.memory_space<vmem>>, vector<8x1024xbf16>,
    %c0_26 = arith.constant 0 : index
    %c27 = arith.constant 27 : index
    %24 = vector.load %arg1[%c0_26, %c27] : memref<8x1280xbf16, #tpu.memory_space<vmem>>, vector<8x1024xbf16>
    %c96 = arith.constant 96 : index
    %c0_27 = arith.constant 0 : index
    %25 = vector.load %arg5[%c96, %c0_27] : memref<392x1024xbf16, #tpu.memory_space<vmem>>, vector<8x1024xbf16>
    tpu.vector_store %arg5[%c96, %c0_27], %24 {strides = array<i32>} : memref<392x1024xbf16, #tpu.memory_space<vmem>>, vector<8x1024xbf16>,
    %c0_28 = arith.constant 0 : index
    %c28 = arith.constant 28 : index
    %26 = vector.load %arg1[%c0_28, %c28] : memref<8x1280xbf16, #tpu.memory_space<vmem>>, vector<8x1024xbf16>
    %c104 = arith.constant 104 : index
    %c0_29 = arith.constant 0 : index
    %27 = vector.load %arg5[%c104, %c0_29] : memref<392x1024xbf16, #tpu.memory_space<vmem>>, vector<8x1024xbf16>
    tpu.vector_store %arg5[%c104, %c0_29], %26 {strides = array<i32>} : memref<392x1024xbf16, #tpu.memory_space<vmem>>, vector<8x1024xbf16>,
    %c0_30 = arith.constant 0 : index
    %c44 = arith.constant 44 : index
    %28 = vector.load %arg1[%c0_30, %c44] : memref<8x1280xbf16, #tpu.memory_space<vmem>>, vector<8x1024xbf16>
    %c112 = arith.constant 112 : index
    %c0_31 = arith.constant 0 : index
    %29 = vector.load %arg5[%c112, %c0_31] : memref<392x1024xbf16, #tpu.memory_space<vmem>>, vector<8x1024xbf16>
    tpu.vector_store %arg5[%c112, %c0_31], %28 {strides = array<i32>} : memref<392x1024xbf16, #tpu.memory_space<vmem>>, vector<8x1024xbf16>,
    %c0_32 = arith.constant 0 : index
    %c45 = arith.constant 45 : index
    %30 = vector.load %arg1[%c0_32, %c45] : memref<8x1280xbf16, #tpu.memory_space<vmem>>, vector<8x1024xbf16>
    %c120 = arith.constant 120 : index
    %c0_33 = arith.constant 0 : index
    %31 = vector.load %arg5[%c120, %c0_33] : memref<392x1024xbf16, #tpu.memory_space<vmem>>, vector<8x1024xbf16>
    tpu.vector_store %arg5[%c120, %c0_33], %30 {strides = array<i32>} : memref<392x1024xbf16, #tpu.memory_space<vmem>>, vector<8x1024xbf16>,
    %c0_34 = arith.constant 0 : index
    %c46 = arith.constant 46 : index
    %32 = vector.load %arg1[%c0_34, %c46] : memref<8x1280xbf16, #tpu.memory_space<vmem>>, vector<8x1024xbf16>
    %c128 = arith.constant 128 : index
    %c0_35 = arith.constant 0 : index
    %33 = vector.load %arg5[%c128, %c0_35] : memref<392x1024xbf16, #tpu.memory_space<vmem>>, vector<8x1024xbf16>
    tpu.vector_store %arg5[%c128, %c0_35], %32 {strides = array<i32>} : memref<392x1024xbf16, #tpu.memory_space<vmem>>, vector<8x1024xbf16>,
    %c0_36 = arith.constant 0 : index
    %c47 = arith.constant 47 : index
    %34 = vector.load %arg1[%c0_36, %c47] : memref<8x1280xbf16, #tpu.memory_space<vmem>>, vector<8x1024xbf16>
    %c136 = arith.constant 136 : index
    %c0_37 = arith.constant 0 : index
    %35 = vector.load %arg5[%c136, %c0_37] : memref<392x1024xbf16, #tpu.memory_space<vmem>>, vector<8x1024xbf16>
    tpu.vector_store %arg5[%c136, %c0_37], %34 {strides = array<i32>} : memref<392x1024xbf16, #tpu.memory_space<vmem>>, vector<8x1024xbf16>,
    %c0_38 = arith.constant 0 : index
    %c48_39 = arith.constant 48 : index
    %36 = vector.load %arg1[%c0_38, %c48_39] : memref<8x1280xbf16, #tpu.memory_space<vmem>>, vector<8x1024xbf16>
    %c144 = arith.constant 144 : index
    %c0_40 = arith.constant 0 : index
    %37 = vector.load %arg5[%c144, %c0_40] : memref<392x1024xbf16, #tpu.memory_space<vmem>>, vector<8x1024xbf16>
    tpu.vector_store %arg5[%c144, %c0_40], %36 {strides = array<i32>} : memref<392x1024xbf16, #tpu.memory_space<vmem>>, vector<8x1024xbf16>,
    %c0_41 = arith.constant 0 : index
    %c49 = arith.constant 49 : index
    %38 = vector.load %arg1[%c0_41, %c49] : memref<8x1280xbf16, #tpu.memory_space<vmem>>, vector<8x1024xbf16>
    %c152 = arith.constant 152 : index
    %c0_42 = arith.constant 0 : index
    %39 = vector.load %arg5[%c152, %c0_42] : memref<392x1024xbf16, #tpu.memory_space<vmem>>, vector<8x1024xbf16>
    tpu.vector_store %arg5[%c152, %c0_42], %38 {strides = array<i32>} : memref<392x1024xbf16, #tpu.memory_space<vmem>>, vector<8x1024xbf16>,
    %c0_43 = arith.constant 0 : index
    %c50 = arith.constant 50 : index
    %40 = vector.load %arg1[%c0_43, %c50] : memref<8x1280xbf16, #tpu.memory_space<vmem>>, vector<8x1024xbf16>
    %c160 = arith.constant 160 : index
    %c0_44 = arith.constant 0 : index
    %41 = vector.load %arg5[%c160, %c0_44] : memref<392x1024xbf16, #tpu.memory_space<vmem>>, vector<8x1024xbf16>
    tpu.vector_store %arg5[%c160, %c0_44], %40 {strides = array<i32>} : memref<392x1024xbf16, #tpu.memory_space<vmem>>, vector<8x1024xbf16>,
    %c0_45 = arith.constant 0 : index
    %c66 = arith.constant 66 : index
    %42 = vector.load %arg1[%c0_45, %c66] : memref<8x1280xbf16, #tpu.memory_space<vmem>>, vector<8x1024xbf16>
    %c168 = arith.constant 168 : index
    %c0_46 = arith.constant 0 : index
    %43 = vector.load %arg5[%c168, %c0_46] : memref<392x1024xbf16, #tpu.memory_space<vmem>>, vector<8x1024xbf16>
    tpu.vector_store %arg5[%c168, %c0_46], %42 {strides = array<i32>} : memref<392x1024xbf16, #tpu.memory_space<vmem>>, vector<8x1024xbf16>,
    %c0_47 = arith.constant 0 : index
    %c67 = arith.constant 67 : index
    %44 = vector.load %arg1[%c0_47, %c67] : memref<8x1280xbf16, #tpu.memory_space<vmem>>, vector<8x1024xbf16>
    %c176 = arith.constant 176 : index
    %c0_48 = arith.constant 0 : index
    %45 = vector.load %arg5[%c176, %c0_48] : memref<392x1024xbf16, #tpu.memory_space<vmem>>, vector<8x1024xbf16>
    tpu.vector_store %arg5[%c176, %c0_48], %44 {strides = array<i32>} : memref<392x1024xbf16, #tpu.memory_space<vmem>>, vector<8x1024xbf16>,
    %c0_49 = arith.constant 0 : index
    %c68 = arith.constant 68 : index
    %46 = vector.load %arg1[%c0_49, %c68] : memref<8x1280xbf16, #tpu.memory_space<vmem>>, vector<8x1024xbf16>
    %c184 = arith.constant 184 : index
    %c0_50 = arith.constant 0 : index
    %47 = vector.load %arg5[%c184, %c0_50] : memref<392x1024xbf16, #tpu.memory_space<vmem>>, vector<8x1024xbf16>
    tpu.vector_store %arg5[%c184, %c0_50], %46 {strides = array<i32>} : memref<392x1024xbf16, #tpu.memory_space<vmem>>, vector<8x1024xbf16>,
    %c0_51 = arith.constant 0 : index
    %c69 = arith.constant 69 : index
    %48 = vector.load %arg1[%c0_51, %c69] : memref<8x1280xbf16, #tpu.memory_space<vmem>>, vector<8x1024xbf16>
    %c192 = arith.constant 192 : index
    %c0_52 = arith.constant 0 : index
    %49 = vector.load %arg5[%c192, %c0_52] : memref<392x1024xbf16, #tpu.memory_space<vmem>>, vector<8x1024xbf16>
    tpu.vector_store %arg5[%c192, %c0_52], %48 {strides = array<i32>} : memref<392x1024xbf16, #tpu.memory_space<vmem>>, vector<8x1024xbf16>,
    %c0_53 = arith.constant 0 : index
    %c70 = arith.constant 70 : index
    %50 = vector.load %arg1[%c0_53, %c70] : memref<8x1280xbf16, #tpu.memory_space<vmem>>, vector<8x1024xbf16>
    %c200 = arith.constant 200 : index
    %c0_54 = arith.constant 0 : index
    %51 = vector.load %arg5[%c200, %c0_54] : memref<392x1024xbf16, #tpu.memory_space<vmem>>, vector<8x1024xbf16>
    tpu.vector_store %arg5[%c200, %c0_54], %50 {strides = array<i32>} : memref<392x1024xbf16, #tpu.memory_space<vmem>>, vector<8x1024xbf16>,
    %c0_55 = arith.constant 0 : index
    %c71 = arith.constant 71 : index
    %52 = vector.load %arg1[%c0_55, %c71] : memref<8x1280xbf16, #tpu.memory_space<vmem>>, vector<8x1024xbf16>
    %c208 = arith.constant 208 : index
    %c0_56 = arith.constant 0 : index
    %53 = vector.load %arg5[%c208, %c0_56] : memref<392x1024xbf16, #tpu.memory_space<vmem>>, vector<8x1024xbf16>
    tpu.vector_store %arg5[%c208, %c0_56], %52 {strides = array<i32>} : memref<392x1024xbf16, #tpu.memory_space<vmem>>, vector<8x1024xbf16>,
    %c0_57 = arith.constant 0 : index
    %c72_58 = arith.constant 72 : index
    %54 = vector.load %arg1[%c0_57, %c72_58] : memref<8x1280xbf16, #tpu.memory_space<vmem>>, vector<8x1024xbf16>
    %c216 = arith.constant 216 : index
    %c0_59 = arith.constant 0 : index
    %55 = vector.load %arg5[%c216, %c0_59] : memref<392x1024xbf16, #tpu.memory_space<vmem>>, vector<8x1024xbf16>
    tpu.vector_store %arg5[%c216, %c0_59], %54 {strides = array<i32>} : memref<392x1024xbf16, #tpu.memory_space<vmem>>, vector<8x1024xbf16>,
    %c0_60 = arith.constant 0 : index
    %c88_61 = arith.constant 88 : index
    %56 = vector.load %arg1[%c0_60, %c88_61] : memref<8x1280xbf16, #tpu.memory_space<vmem>>, vector<8x1024xbf16>
    %c224 = arith.constant 224 : index
    %c0_62 = arith.constant 0 : index
    %57 = vector.load %arg5[%c224, %c0_62] : memref<392x1024xbf16, #tpu.memory_space<vmem>>, vector<8x1024xbf16>
    tpu.vector_store %arg5[%c224, %c0_62], %56 {strides = array<i32>} : memref<392x1024xbf16, #tpu.memory_space<vmem>>, vector<8x1024xbf16>,
    %c0_63 = arith.constant 0 : index
    %c89 = arith.constant 89 : index
    %58 = vector.load %arg1[%c0_63, %c89] : memref<8x1280xbf16, #tpu.memory_space<vmem>>, vector<8x1024xbf16>
    %c232 = arith.constant 232 : index
    %c0_64 = arith.constant 0 : index
    %59 = vector.load %arg5[%c232, %c0_64] : memref<392x1024xbf16, #tpu.memory_space<vmem>>, vector<8x1024xbf16>
    tpu.vector_store %arg5[%c232, %c0_64], %58 {strides = array<i32>} : memref<392x1024xbf16, #tpu.memory_space<vmem>>, vector<8x1024xbf16>,
    %c0_65 = arith.constant 0 : index
    %c90 = arith.constant 90 : index
    %60 = vector.load %arg1[%c0_65, %c90] : memref<8x1280xbf16, #tpu.memory_space<vmem>>, vector<8x1024xbf16>
    %c240 = arith.constant 240 : index
    %c0_66 = arith.constant 0 : index
    %61 = vector.load %arg5[%c240, %c0_66] : memref<392x1024xbf16, #tpu.memory_space<vmem>>, vector<8x1024xbf16>
    tpu.vector_store %arg5[%c240, %c0_66], %60 {strides = array<i32>} : memref<392x1024xbf16, #tpu.memory_space<vmem>>, vector<8x1024xbf16>,
    %c0_67 = arith.constant 0 : index
    %c91 = arith.constant 91 : index
    %62 = vector.load %arg1[%c0_67, %c91] : memref<8x1280xbf16, #tpu.memory_space<vmem>>, vector<8x1024xbf16>
    %c248 = arith.constant 248 : index
    %c0_68 = arith.constant 0 : index
    %63 = vector.load %arg5[%c248, %c0_68] : memref<392x1024xbf16, #tpu.memory_space<vmem>>, vector<8x1024xbf16>
    tpu.vector_store %arg5[%c248, %c0_68], %62 {strides = array<i32>} : memref<392x1024xbf16, #tpu.memory_space<vmem>>, vector<8x1024xbf16>,
    %c0_69 = arith.constant 0 : index
    %c92 = arith.constant 92 : index
    %64 = vector.load %arg1[%c0_69, %c92] : memref<8x1280xbf16, #tpu.memory_space<vmem>>, vector<8x1024xbf16>
    %c256 = arith.constant 256 : index
    %c0_70 = arith.constant 0 : index
    %65 = vector.load %arg5[%c256, %c0_70] : memref<392x1024xbf16, #tpu.memory_space<vmem>>, vector<8x1024xbf16>
    tpu.vector_store %arg5[%c256, %c0_70], %64 {strides = array<i32>} : memref<392x1024xbf16, #tpu.memory_space<vmem>>, vector<8x1024xbf16>,
    %c0_71 = arith.constant 0 : index
    %c93 = arith.constant 93 : index
    %66 = vector.load %arg1[%c0_71, %c93] : memref<8x1280xbf16, #tpu.memory_space<vmem>>, vector<8x1024xbf16>
    %c264 = arith.constant 264 : index
    %c0_72 = arith.constant 0 : index
    %67 = vector.load %arg5[%c264, %c0_72] : memref<392x1024xbf16, #tpu.memory_space<vmem>>, vector<8x1024xbf16>
    tpu.vector_store %arg5[%c264, %c0_72], %66 {strides = array<i32>} : memref<392x1024xbf16, #tpu.memory_space<vmem>>, vector<8x1024xbf16>,
    %c0_73 = arith.constant 0 : index
    %c94 = arith.constant 94 : index
    %68 = vector.load %arg1[%c0_73, %c94] : memref<8x1280xbf16, #tpu.memory_space<vmem>>, vector<8x1024xbf16>
    %c272 = arith.constant 272 : index
    %c0_74 = arith.constant 0 : index
    %69 = vector.load %arg5[%c272, %c0_74] : memref<392x1024xbf16, #tpu.memory_space<vmem>>, vector<8x1024xbf16>
    tpu.vector_store %arg5[%c272, %c0_74], %68 {strides = array<i32>} : memref<392x1024xbf16, #tpu.memory_space<vmem>>, vector<8x1024xbf16>,
    %c0_75 = arith.constant 0 : index
    %c110 = arith.constant 110 : index
    %70 = vector.load %arg1[%c0_75, %c110] : memref<8x1280xbf16, #tpu.memory_space<vmem>>, vector<8x1024xbf16>
    %c280 = arith.constant 280 : index
    %c0_76 = arith.constant 0 : index
    %71 = vector.load %arg5[%c280, %c0_76] : memref<392x1024xbf16, #tpu.memory_space<vmem>>, vector<8x1024xbf16>
    tpu.vector_store %arg5[%c280, %c0_76], %70 {strides = array<i32>} : memref<392x1024xbf16, #tpu.memory_space<vmem>>, vector<8x1024xbf16>,
    %c0_77 = arith.constant 0 : index
    %c111 = arith.constant 111 : index
    %72 = vector.load %arg1[%c0_77, %c111] : memref<8x1280xbf16, #tpu.memory_space<vmem>>, vector<8x1024xbf16>
    %c288 = arith.constant 288 : index
    %c0_78 = arith.constant 0 : index
    %73 = vector.load %arg5[%c288, %c0_78] : memref<392x1024xbf16, #tpu.memory_space<vmem>>, vector<8x1024xbf16>
    tpu.vector_store %arg5[%c288, %c0_78], %72 {strides = array<i32>} : memref<392x1024xbf16, #tpu.memory_space<vmem>>, vector<8x1024xbf16>,
    %c0_79 = arith.constant 0 : index
    %c112_80 = arith.constant 112 : index
    %74 = vector.load %arg1[%c0_79, %c112_80] : memref<8x1280xbf16, #tpu.memory_space<vmem>>, vector<8x1024xbf16>
    %c296 = arith.constant 296 : index
    %c0_81 = arith.constant 0 : index
    %75 = vector.load %arg5[%c296, %c0_81] : memref<392x1024xbf16, #tpu.memory_space<vmem>>, vector<8x1024xbf16>
    tpu.vector_store %arg5[%c296, %c0_81], %74 {strides = array<i32>} : memref<392x1024xbf16, #tpu.memory_space<vmem>>, vector<8x1024xbf16>,
    %c0_82 = arith.constant 0 : index
    %c113 = arith.constant 113 : index
    %76 = vector.load %arg1[%c0_82, %c113] : memref<8x1280xbf16, #tpu.memory_space<vmem>>, vector<8x1024xbf16>
    %c304 = arith.constant 304 : index
    %c0_83 = arith.constant 0 : index
    %77 = vector.load %arg5[%c304, %c0_83] : memref<392x1024xbf16, #tpu.memory_space<vmem>>, vector<8x1024xbf16>
    tpu.vector_store %arg5[%c304, %c0_83], %76 {strides = array<i32>} : memref<392x1024xbf16, #tpu.memory_space<vmem>>, vector<8x1024xbf16>,
    %c0_84 = arith.constant 0 : index
    %c114 = arith.constant 114 : index
    %78 = vector.load %arg1[%c0_84, %c114] : memref<8x1280xbf16, #tpu.memory_space<vmem>>, vector<8x1024xbf16>
    %c312 = arith.constant 312 : index
    %c0_85 = arith.constant 0 : index
    %79 = vector.load %arg5[%c312, %c0_85] : memref<392x1024xbf16, #tpu.memory_space<vmem>>, vector<8x1024xbf16>
    tpu.vector_store %arg5[%c312, %c0_85], %78 {strides = array<i32>} : memref<392x1024xbf16, #tpu.memory_space<vmem>>, vector<8x1024xbf16>,
    %c0_86 = arith.constant 0 : index
    %c115 = arith.constant 115 : index
    %80 = vector.load %arg1[%c0_86, %c115] : memref<8x1280xbf16, #tpu.memory_space<vmem>>, vector<8x1024xbf16>
    %c320 = arith.constant 320 : index
    %c0_87 = arith.constant 0 : index
    %81 = vector.load %arg5[%c320, %c0_87] : memref<392x1024xbf16, #tpu.memory_space<vmem>>, vector<8x1024xbf16>
    tpu.vector_store %arg5[%c320, %c0_87], %80 {strides = array<i32>} : memref<392x1024xbf16, #tpu.memory_space<vmem>>, vector<8x1024xbf16>,
    %c0_88 = arith.constant 0 : index
    %c116 = arith.constant 116 : index
    %82 = vector.load %arg1[%c0_88, %c116] : memref<8x1280xbf16, #tpu.memory_space<vmem>>, vector<8x1024xbf16>
    %c328 = arith.constant 328 : index
    %c0_89 = arith.constant 0 : index
    %83 = vector.load %arg5[%c328, %c0_89] : memref<392x1024xbf16, #tpu.memory_space<vmem>>, vector<8x1024xbf16>
    tpu.vector_store %arg5[%c328, %c0_89], %82 {strides = array<i32>} : memref<392x1024xbf16, #tpu.memory_space<vmem>>, vector<8x1024xbf16>,
    %c0_90 = arith.constant 0 : index
    %c132 = arith.constant 132 : index
    %84 = vector.load %arg1[%c0_90, %c132] : memref<8x1280xbf16, #tpu.memory_space<vmem>>, vector<8x1024xbf16>
    %c336 = arith.constant 336 : index
    %c0_91 = arith.constant 0 : index
    %85 = vector.load %arg5[%c336, %c0_91] : memref<392x1024xbf16, #tpu.memory_space<vmem>>, vector<8x1024xbf16>
    tpu.vector_store %arg5[%c336, %c0_91], %84 {strides = array<i32>} : memref<392x1024xbf16, #tpu.memory_space<vmem>>, vector<8x1024xbf16>,
    %c0_92 = arith.constant 0 : index
    %c133 = arith.constant 133 : index
    %86 = vector.load %arg1[%c0_92, %c133] : memref<8x1280xbf16, #tpu.memory_space<vmem>>, vector<8x1024xbf16>
    %c344 = arith.constant 344 : index
    %c0_93 = arith.constant 0 : index
    %87 = vector.load %arg5[%c344, %c0_93] : memref<392x1024xbf16, #tpu.memory_space<vmem>>, vector<8x1024xbf16>
    tpu.vector_store %arg5[%c344, %c0_93], %86 {strides = array<i32>} : memref<392x1024xbf16, #tpu.memory_space<vmem>>, vector<8x1024xbf16>,
    %c0_94 = arith.constant 0 : index
    %c134 = arith.constant 134 : index
    %88 = vector.load %arg1[%c0_94, %c134] : memref<8x1280xbf16, #tpu.memory_space<vmem>>, vector<8x1024xbf16>
    %c352 = arith.constant 352 : index
    %c0_95 = arith.constant 0 : index
    %89 = vector.load %arg5[%c352, %c0_95] : memref<392x1024xbf16, #tpu.memory_space<vmem>>, vector<8x1024xbf16>
    tpu.vector_store %arg5[%c352, %c0_95], %88 {strides = array<i32>} : memref<392x1024xbf16, #tpu.memory_space<vmem>>, vector<8x1024xbf16>,
    %c0_96 = arith.constant 0 : index
    %c135 = arith.constant 135 : index
    %90 = vector.load %arg1[%c0_96, %c135] : memref<8x1280xbf16, #tpu.memory_space<vmem>>, vector<8x1024xbf16>
    %c360 = arith.constant 360 : index
    %c0_97 = arith.constant 0 : index
    %91 = vector.load %arg5[%c360, %c0_97] : memref<392x1024xbf16, #tpu.memory_space<vmem>>, vector<8x1024xbf16>
    tpu.vector_store %arg5[%c360, %c0_97], %90 {strides = array<i32>} : memref<392x1024xbf16, #tpu.memory_space<vmem>>, vector<8x1024xbf16>,
    %c0_98 = arith.constant 0 : index
    %c136_99 = arith.constant 136 : index
    %92 = vector.load %arg1[%c0_98, %c136_99] : memref<8x1280xbf16, #tpu.memory_space<vmem>>, vector<8x1024xbf16>
    %c368 = arith.constant 368 : index
    %c0_100 = arith.constant 0 : index
    %93 = vector.load %arg5[%c368, %c0_100] : memref<392x1024xbf16, #tpu.memory_space<vmem>>, vector<8x1024xbf16>
    tpu.vector_store %arg5[%c368, %c0_100], %92 {strides = array<i32>} : memref<392x1024xbf16, #tpu.memory_space<vmem>>, vector<8x1024xbf16>,
    %c0_101 = arith.constant 0 : index
    %c137 = arith.constant 137 : index
    %94 = vector.load %arg1[%c0_101, %c137] : memref<8x1280xbf16, #tpu.memory_space<vmem>>, vector<8x1024xbf16>
    %c376 = arith.constant 376 : index
    %c0_102 = arith.constant 0 : index
    %95 = vector.load %arg5[%c376, %c0_102] : memref<392x1024xbf16, #tpu.memory_space<vmem>>, vector<8x1024xbf16>
    tpu.vector_store %arg5[%c376, %c0_102], %94 {strides = array<i32>} : memref<392x1024xbf16, #tpu.memory_space<vmem>>, vector<8x1024xbf16>,
    %c0_103 = arith.constant 0 : index
    %c138 = arith.constant 138 : index
    %96 = vector.load %arg1[%c0_103, %c138] : memref<8x1280xbf16, #tpu.memory_space<vmem>>, vector<8x1024xbf16>
    %c384 = arith.constant 384 : index
    %c0_104 = arith.constant 0 : index
    %97 = vector.load %arg5[%c384, %c0_104] : memref<392x1024xbf16, #tpu.memory_space<vmem>>, vector<8x1024xbf16>
    tpu.vector_store %arg5[%c384, %c0_104], %96 {strides = array<i32>} : memref<392x1024xbf16, #tpu.memory_space<vmem>>, vector<8x1024xbf16>,
    %c0_105 = arith.constant 0 : index
    %c0_106 = arith.constant 0 : index
    %98 = vector.load %arg2[%c0_105, %c0_106] : memref<8x392xbf16, #tpu.memory_space<vmem>>, vector<8x392xbf16>
    %c0_107 = arith.constant 0 : index
    %c0_108 = arith.constant 0 : index
    %99 = vector.load %arg5[%c0_107, %c0_108] : memref<392x1024xbf16, #tpu.memory_space<vmem>>, vector<392x1024xbf16>
    %cst = arith.constant dense<0.000000e+00> : vector<8x1024xf32>
    %100 = tpu.matmul %98, %99, %cst {dimension_numbers = #tpu.dot_dimension_numbers<[1], [0], [0], [1], [0, 0, 1, 1], [], []>} : vector<8x392xbf16>, vector<392x1024xbf16>, vector<8x1024xf32> -> vector<8x1024xf32>
    %c0_109 = arith.constant 0 : index
    %c0_110 = arith.constant 0 : index
    %101 = vector.load %arg3[%c0_109, %c0_110] : memref<8x1xf32, #tpu.memory_space<vmem>>, vector<8x1xf32>
    %102 = vector.broadcast %101 : vector<8x1xf32> to vector<8x1024xf32>
    %103 = arith.addf %100, %102 : vector<8x1024xf32>
    %104 = math.tanh %103 : vector<8x1024xf32>
    %c0_111 = arith.constant 0 : index
    %c0_112 = arith.constant 0 : index
    %105 = vector.load %arg4[%c0_111, %c0_112] : memref<8x1024xf32, #tpu.memory_space<vmem>>, vector<8x1024xf32>
    tpu.vector_store %arg4[%c0_111, %c0_112], %104 {strides = array<i32>} : memref<8x1024xf32, #tpu.memory_space<vmem>>, vector<8x1024xf32>,
    return
  }
  func.func @transform_0(%arg0: i32) -> (i32, i32) {
    %c0_i32 = arith.constant 0 : i32
    %c0_i32_0 = arith.constant 0 : i32
    %c0_i32_1 = arith.constant 0 : i32
    return %c0_i32, %c0_i32_0 : i32, i32
  }
  func.func @transform_1(%arg0: i32) -> (i32, i32) {
    %c0_i32 = arith.constant 0 : i32
    %c0_i32_0 = arith.constant 0 : i32
    %c0_i32_1 = arith.constant 0 : i32
    return %c0_i32, %c0_i32_0 : i32, i32
  }
  func.func @transform_2(%arg0: i32) -> (i32, i32) {
    %c0_i32 = arith.constant 0 : i32
    %c0_i32_0 = arith.constant 0 : i32
    %c0_i32_1 = arith.constant 0 : i32
    return %c0_i32, %c0_i32_0 : i32, i32
  }
  func.func @transform_3(%arg0: i32) -> (i32, i32) {
    %c0_i32 = arith.constant 0 : i32
    %c0_i32_0 = arith.constant 0 : i32
    %c0_i32_1 = arith.constant 0 : i32
    return %c0_i32, %c0_i32_0 : i32, i32
  }
}

</mosaic_0001>

<llo_original>
// kernel: _lambda_.27
$region0: #{_lambda_.27}
  #allocation0 [shape = 'u32[]', space=smem, size = 0x4, offset = 0x4, fixed_abs, tag = 'smem constant byte address 0x4 - core index']
  #allocation1 [shape = 'u32[72,128]{1,0:T(1,128)}', space=vmem, size = 0x9000, scoped, tag = 'internal scratch']
  #allocation2 [shape = 'bf16[72,256]{1,0:T(8,128)(2,1)}', space=vmem, size = 0x9000, scoped, tag = 'scratch operand']
  %s0 = inlined_call_operand.vmem [shape: bf16[8,768], index: 0, kind: input, shape index: {}]
  %s1 = inlined_call_operand.vmem [shape: bf16[16,72], index: 1, kind: input, shape index: {}]
  %s2 = inlined_call_operand.vmem [shape: f32[16,1], index: 2, kind: input, shape index: {}]
  %s3 = inlined_call_operand.vmem [shape: bf16[16,256], index: 3, kind: output, shape index: {}]
  %s4 = sld [smem:[#allocation0]]
  $region22: #{_lambda_.27} parent=0
    _
  %s6 = ssub.s32 1, %s4
  %s7 = scalar_select 0, %s6, %s4
  // Predicated region
  $region2: #{_lambda_.27} parent=0 // pred_check
    _
  $region3: #{_lambda_.27} parent=0 // pred_check_branch
    %9 = sbr.rel (0) target = $region5
  $region4: #{_lambda_.27} parent=0 // pred_region
    _
  $region5: #{_lambda_.27} parent=0 // pred_fallthru
    _
  // Predicated region
  $region6: #{_lambda_.27} parent=0 // pred_check
    _
  $region7: #{_lambda_.27} parent=0 // pred_check_branch
    %11 = sbr.rel (0) target = $region9
  $region8: #{_lambda_.27} parent=0 // pred_region
    _
  $region9: #{_lambda_.27} parent=0 // pred_fallthru
    _
  // Predicated region
  $region10: #{_lambda_.27} parent=0 // pred_check
    _
  $region11: #{_lambda_.27} parent=0 // pred_check_branch
    %13 = sbr.rel (0) target = $region13
  $region12: #{_lambda_.27} parent=0 // pred_region
    _
  $region13: #{_lambda_.27} parent=0 // pred_fallthru
    _
  %v15 = vld [vmem:[%s0] sm:$0xff]
  %16 = vst [vmem:[#allocation2] sm:$0xff] %v15
  %v17 = vld [vmem:[%s0 + $0x4] sm:$0xff]
  %v18 = vld [vmem:[%s0 + $0xc] sm:$0xf]
  %21 = vrot.lane.b32.xlu0 %v17, 94
  %v22 = vpop.permute.xlu0 %21
  %23 = vrot.lane.b32.xlu0 %v18, 94
  %v24 = vpop.permute.xlu0 %23
  %v25 = vrot.slane %v22, 4
  %v26 = vrot.slane %v24, 4
  %vm27 = vcmask 1043456
  %v28 = vsel %vm27, %v25, %v26
  %vm29 = vcmask 769024
  %v30 = vsel %vm29, %v22, %v28
  %32 = vst [vmem:[#allocation2 + $0x8] sm:$0xff] %v30
  %v33 = vld [vmem:[%s0] sm:$0xff]
  %v34 = vld [vmem:[%s0 + $0x8] sm:$0xf]
  %37 = vrot.lane.b32.xlu0 %v33, 127
  %v38 = vpop.permute.xlu0 %37
  %39 = vrot.lane.b32.xlu0 %v34, 127
  %v40 = vpop.permute.xlu0 %39
  %v41 = vrot.slane %v38, 4
  %v42 = vrot.slane %v40, 4
  %v43 = vsel %vm27, %v41, %v42
  %vm44 = vcmask 1039360
  %v45 = vsel %vm44, %v38, %v43
  %47 = vst [vmem:[#allocation2 + $0x10] sm:$0xff] %v45
  %v48 = vld [vmem:[%s0 + $0x8] sm:$0xff]
  %v49 = vld [vmem:[%s0 + $0x10] sm:$0xf]
  %52 = vrot.lane.b32.xlu0 %v48, 60
  %v53 = vpop.permute.xlu0 %52
  %54 = vrot.lane.b32.xlu0 %v49, 60
  %v55 = vpop.permute.xlu0 %54
  %v56 = vrot.slane %v53, 4
  %v57 = vrot.slane %v55, 4
  %v58 = vsel %vm27, %v56, %v57
  %vm59 = vcmask 490496
  %v60 = vsel %vm59, %v53, %v58
  %62 = vst [vmem:[#allocation2 + $0x18] sm:$0xff] %v60
  %v63 = vld [vmem:[%s0 + $0xc] sm:$0xff]
  %v64 = vld [vmem:[%s0 + $0x14] sm:$0xf]
  %67 = vrot.lane.b32.xlu0 %v63, 26
  %v68 = vpop.permute.xlu0 %67
  %69 = vrot.lane.b32.xlu0 %v64, 26
  %v70 = vpop.permute.xlu0 %69
  %v71 = vrot.slane %v68, 4
  %v72 = vrot.slane %v70, 4
  %v73 = vsel %vm27, %v71, %v72
  %vm74 = vcmask 211968
  %v75 = vsel %vm74, %v68, %v73
  %77 = vst [vmem:[#allocation2 + $0x20] sm:$0xff] %v75
  %v78 = vld [vmem:[%s0 + $0x8] sm:$0xff]
  %v79 = vld [vmem:[%s0 + $0x10] sm:$0xf]
  %82 = vrot.lane.b32.xlu0 %v78, 59
  %v83 = vpop.permute.xlu0 %82
  %84 = vrot.lane.b32.xlu0 %v79, 59
  %v85 = vpop.permute.xlu0 %84
  %v86 = vrot.slane %v83, 4
  %v87 = vrot.slane %v85, 4
  %v88 = vsel %vm27, %v86, %v87
  %vm89 = vcmask 482304
  %v90 = vsel %vm89, %v83, %v88
  %92 = vst [vmem:[#allocation2 + $0x28] sm:$0xff] %v90
  %v93 = vld [vmem:[%s0] sm:$0xff]
  %v94 = vld [vmem:[%s0 + $0x8] sm:$0xf]
  %97 = vrot.lane.b32.xlu0 %v93, 119
  %v98 = vpop.permute.xlu0 %97
  %99 = vrot.lane.b32.xlu0 %v94, 119
  %v100 = vpop.permute.xlu0 %99
  %v101 = vrot.slane %v98, 4
  %v102 = vrot.slane %v100, 4
  %v103 = vsel %vm27, %v101, %v102
  %vm104 = vcmask 973824
  %v105 = vsel %vm104, %v98, %v103
  %107 = vst [vmem:[#allocation2 + $0x30] sm:$0xff] %v105
  %v108 = vld [vmem:[%s0 + $0x4] sm:$0xff]
  %v109 = vld [vmem:[%s0 + $0xc] sm:$0xf]
  %112 = vrot.lane.b32.xlu0 %v108, 85
  %v113 = vpop.permute.xlu0 %112
  %114 = vrot.lane.b32.xlu0 %v109, 85
  %v115 = vpop.permute.xlu0 %114
  %v116 = vrot.slane %v113, 4
  %v117 = vrot.slane %v115, 4
  %v118 = vsel %vm27, %v116, %v117
  %vm119 = vcmask 695296
  %v120 = vsel %vm119, %v113, %v118
  %122 = vst [vmem:[#allocation2 + $0x38] sm:$0xff] %v120
  %v123 = vld [vmem:[%s0] sm:$0xff]
  %v124 = vld [vmem:[%s0 + $0x8] sm:$0xf]
  %127 = vrot.lane.b32.xlu0 %v123, 118
  %v128 = vpop.permute.xlu0 %127
  %129 = vrot.lane.b32.xlu0 %v124, 118
  %v130 = vpop.permute.xlu0 %129
  %v131 = vrot.slane %v128, 4
  %v132 = vrot.slane %v130, 4
  %v133 = vsel %vm27, %v131, %v132
  %vm134 = vcmask 965632
  %v135 = vsel %vm134, %v128, %v133
  %137 = vst [vmem:[#allocation2 + $0x40] sm:$0xff] %v135
  %v138 = vld [vmem:[%s1] sm:$0xf]
  %v139 = vld [vmem:[%s1 + $0x4] sm:$0xf]
  %v140 = vld [vmem:[#allocation2] sm:$0xff]
  %v141 = vld [vmem:[#allocation2 + $0x8] sm:$0xff]
  %v142 = vld [vmem:[#allocation2 + $0x10] sm:$0xff]
  %v143 = vld [vmem:[#allocation2 + $0x18] sm:$0xff]
  %v144 = vld [vmem:[#allocation2 + $0x20] sm:$0xff]
  %v145 = vld [vmem:[#allocation2 + $0x28] sm:$0xff]
  %v146 = vld [vmem:[#allocation2 + $0x30] sm:$0xff]
  %v147 = vld [vmem:[#allocation2 + $0x38] sm:$0xff]
  %v148 = vld [vmem:[#allocation2 + $0x40] sm:$0xff]
  %v149 = vld [vmem:[%s2] sm:$0xff]
  %v150 = vld [vmem:[%s2 + $0x8] sm:$0xff]
  %152 = vset.pattern.permute.xlu0 0
  %153 = vperm.xlu0 %152, %v149
  %v154 = vpop.permute.xlu0 %153
  %157 = vset.pattern.permute.xlu0 0
  %158 = vperm.xlu0 %157, %v150
  %v159 = vpop.permute.xlu0 %158
  %v163 = vunpack.c.l.b16 %v138
  %v164 = vunpack.c.l.b16 %v139
  %v165 = vpack.c.b16 %v164, %v163
  %v175 = vunpack.c.l.b16 %v140
  %v176 = vunpack.c.h.b16 %v140
  %v177 = vunpack.c.l.b16 %v141
  %v178 = vunpack.c.h.b16 %v141
  %v179 = vunpack.c.l.b16 %v142
  %v180 = vunpack.c.h.b16 %v142
  %v181 = vunpack.c.l.b16 %v143
  %v182 = vunpack.c.h.b16 %v143
  %v183 = vunpack.c.l.b16 %v144
  %v184 = vunpack.c.h.b16 %v144
  %v185 = vunpack.c.l.b16 %v145
  %v186 = vunpack.c.h.b16 %v145
  %v187 = vunpack.c.l.b16 %v146
  %v188 = vunpack.c.h.b16 %v146
  %v189 = vunpack.c.l.b16 %v147
  %v190 = vunpack.c.h.b16 %v147
  %v191 = vunpack.c.l.b16 %v148
  %v192 = vunpack.c.h.b16 %v148
  %v193 = vpack.c.b16 %v177, %v175
  %v194 = vpack.c.b16 %v178, %v176
  %v195 = vpack.c.b16 %v181, %v179
  %v196 = vpack.c.b16 %v182, %v180
  %v197 = vpack.c.b16 %v185, %v183
  %v198 = vpack.c.b16 %v186, %v184
  %v199 = vpack.c.b16 %v189, %v187
  %v200 = vpack.c.b16 %v190, %v188
  %v201 = vpack.c.b16 %v191, %v191
  %v202 = vpack.c.b16 %v192, %v192
  %vm211 = vcmask 588800
  %v213 = vsel %vm211, %v165, 0
  %vm215 = vcmask 1043456
  %v217 = vsel %vm215, %v201, 0
  %v220 = vsel %vm215, %v202, 0
  %222 = vmatpush.bf16.msra.mxu0 0
  %223 = vmatpush.bf16.msra.mxu0 0
  %224 = vmatpush.bf16.msra.mxu0 0
  %225 = vmatpush.bf16.msra.mxu0 %v217
  %226 = vmatpush.bf16.msra.mxu0 %v199
  %227 = vmatpush.bf16.msra.mxu0 %v197
  %228 = vmatpush.bf16.msra.mxu0 %v195
  %229 = vmatpush.bf16.msra.mxu0 %v193
  %230 = vmatmul.bf16.gmra.mxu0 %v213
  %v231 = vpop.f32.mrf.mxu0
  %v232 = vadd.f32 %v154, %v231
  %v233 = vpop.f32.mrf.mxu0
  %v234 = vadd.f32 %v159, %v233
  %235 = vdwg.mxu0
  %236 = vmatpush.bf16.msra.mxu0 0
  %237 = vmatpush.bf16.msra.mxu0 0
  %238 = vmatpush.bf16.msra.mxu0 0
  %239 = vmatpush.bf16.msra.mxu0 %v220
  %240 = vmatpush.bf16.msra.mxu0 %v200
  %241 = vmatpush.bf16.msra.mxu0 %v198
  %242 = vmatpush.bf16.msra.mxu0 %v196
  %243 = vmatpush.bf16.msra.mxu0 %v194
  %244 = vmatmul.bf16.gmra.mxu0 %v213
  %v245 = vpop.f32.mrf.mxu0
  %v246 = vadd.f32 %v154, %v245
  %v247 = vpop.f32.mrf.mxu0
  %v248 = vadd.f32 %v159, %v247
  %249 = vdwg.mxu0
  %v250 = vmax.f32 %v232, 0.0
  %v251 = vmax.f32 %v246, 0.0
  %v252 = vmax.f32 %v234, 0.0
  %v253 = vmax.f32 %v248, 0.0
  %v254 = vpack.c.bf16 %v251, %v250
  %v255 = vpack.c.bf16 %v253, %v252
  %256 = vst [vmem:[%s3] sm:$0xff] %v254
  %257 = vst [vmem:[%s3 + $0x8] sm:$0xff] %v255
  // Predicated region
  $region14: #{_lambda_.27} parent=0 // pred_check
    _
  $region15: #{_lambda_.27} parent=0 // pred_check_branch
    %259 = sbr.rel (0) target = $region17
  $region16: #{_lambda_.27} parent=0 // pred_region
    _
  $region17: #{_lambda_.27} parent=0 // pred_fallthru
    _
  // Predicated region
  $region18: #{_lambda_.27} parent=0 // pred_check
    _
  $region19: #{_lambda_.27} parent=0 // pred_check_branch
    %261 = sbr.rel (0) target = $region21
  $region20: #{_lambda_.27} parent=0 // pred_region
    _
  $region21: #{_lambda_.27} parent=0 // pred_fallthru
    _

// kernel: _lambda_.26
$region0: #{_lambda_.26}
  #allocation0 [shape = 'u32[]', space=smem, size = 0x4, offset = 0x4, fixed_abs, tag = 'smem constant byte address 0x4 - core index']
  #allocation1 [shape = 'u32[72,128]{1,0:T(1,128)}', space=vmem, size = 0x9000, scoped, tag = 'internal scratch']
  #allocation2 [shape = 'bf16[392,1024]{1,0:T(8,128)(2,1)}', space=vmem, size = 0xc4000, scoped, tag = 'scratch operand']
  %s0 = inlined_call_operand.vmem [shape: bf16[8,1280], index: 0, kind: input, shape index: {}]
  %s1 = inlined_call_operand.vmem [shape: bf16[8,392], index: 1, kind: input, shape index: {}]
  %s2 = inlined_call_operand.vmem [shape: f32[8,1], index: 2, kind: input, shape index: {}]
  %s3 = inlined_call_operand.vmem [shape: bf16[8,1024], index: 3, kind: output, shape index: {}]
  %s4 = sld [smem:[#allocation0]]
  $region22: #{_lambda_.26} parent=0
    _
  %s6 = ssub.s32 1, %s4
  %s7 = scalar_select 0, %s6, %s4
  // Predicated region
  $region2: #{_lambda_.26} parent=0 // pred_check
    _
  $region3: #{_lambda_.26} parent=0 // pred_check_branch
    %9 = sbr.rel (0) target = $region5
  $region4: #{_lambda_.26} parent=0 // pred_region
    _
  $region5: #{_lambda_.26} parent=0 // pred_fallthru
    _
  // Predicated region
  $region6: #{_lambda_.26} parent=0 // pred_check
    _
  $region7: #{_lambda_.26} parent=0 // pred_check_branch
    %11 = sbr.rel (0) target = $region9
  $region8: #{_lambda_.26} parent=0 // pred_region
    _
  $region9: #{_lambda_.26} parent=0 // pred_fallthru
    _
  // Predicated region
  $region10: #{_lambda_.26} parent=0 // pred_check
    _
  $region11: #{_lambda_.26} parent=0 // pred_check_branch
    %13 = sbr.rel (0) target = $region13
  $region12: #{_lambda_.26} parent=0 // pred_region
    _
  $region13: #{_lambda_.26} parent=0 // pred_fallthru
    _
  %v15 = vld [vmem:[%s0] sm:$0xff]
  %v16 = vld [vmem:[%s0 + $0x8] sm:$0xff]
  %v17 = vld [vmem:[%s0 + $0x10] sm:$0xff]
  %v18 = vld [vmem:[%s0 + $0x18] sm:$0xff]
  %19 = vst [vmem:[#allocation2] sm:$0xff] %v15
  %20 = vst [vmem:[#allocation2 + $0x8] sm:$0xff] %v16
  %21 = vst [vmem:[#allocation2 + $0x10] sm:$0xff] %v17
  %22 = vst [vmem:[#allocation2 + $0x18] sm:$0xff] %v18
  %v23 = vld [vmem:[%s0] sm:$0xff]
  %v24 = vld [vmem:[%s0 + $0x8] sm:$0xff]
  %v25 = vld [vmem:[%s0 + $0x10] sm:$0xff]
  %v26 = vld [vmem:[%s0 + $0x18] sm:$0xff]
  %v27 = vld [vmem:[%s0 + $0x20] sm:$0xf]
  %33 = vrot.lane.b32.xlu0 %v23, 127
  %v34 = vpop.permute.xlu0 %33
  %35 = vrot.lane.b32.xlu0 %v24, 127
  %v36 = vpop.permute.xlu0 %35
  %37 = vrot.lane.b32.xlu0 %v25, 127
  %v38 = vpop.permute.xlu0 %37
  %39 = vrot.lane.b32.xlu0 %v26, 127
  %v40 = vpop.permute.xlu0 %39
  %41 = vrot.lane.b32.xlu0 %v27, 127
  %v42 = vpop.permute.xlu0 %41
  %v43 = vrot.slane %v34, 4
  %v44 = vrot.slane %v36, 4
  %v45 = vrot.slane %v38, 4
  %v46 = vrot.slane %v40, 4
  %v47 = vrot.slane %v42, 4
  %vm48 = vcmask 1043456
  %v49 = vsel %vm48, %v43, %v44
  %vm50 = vcmask 1039360
  %v51 = vsel %vm50, %v34, %v49
  %v52 = vsel %vm48, %v44, %v45
  %v53 = vsel %vm50, %v36, %v52
  %v54 = vsel %vm48, %v45, %v46
  %v55 = vsel %vm50, %v38, %v54
  %v56 = vsel %vm48, %v46, %v47
  %v57 = vsel %vm50, %v40, %v56
  %62 = vst [vmem:[#allocation2 + $0x20] sm:$0xff] %v51
  %63 = vst [vmem:[#allocation2 + $0x28] sm:$0xff] %v53
  %64 = vst [vmem:[#allocation2 + $0x30] sm:$0xff] %v55
  %65 = vst [vmem:[#allocation2 + $0x38] sm:$0xff] %v57
  %v66 = vld [vmem:[%s0] sm:$0xff]
  %v67 = vld [vmem:[%s0 + $0x8] sm:$0xff]
  %v68 = vld [vmem:[%s0 + $0x10] sm:$0xff]
  %v69 = vld [vmem:[%s0 + $0x18] sm:$0xff]
  %v70 = vld [vmem:[%s0 + $0x20] sm:$0xf]
  %76 = vrot.lane.b32.xlu0 %v66, 126
  %v77 = vpop.permute.xlu0 %76
  %78 = vrot.lane.b32.xlu0 %v67, 126
  %v79 = vpop.permute.xlu0 %78
  %80 = vrot.lane.b32.xlu0 %v68, 126
  %v81 = vpop.permute.xlu0 %80
  %82 = vrot.lane.b32.xlu0 %v69, 126
  %v83 = vpop.permute.xlu0 %82
  %84 = vrot.lane.b32.xlu0 %v70, 126
  %v85 = vpop.permute.xlu0 %84
  %v86 = vrot.slane %v77, 4
  %v87 = vrot.slane %v79, 4
  %v88 = vrot.slane %v81, 4
  %v89 = vrot.slane %v83, 4
  %v90 = vrot.slane %v85, 4
  %v91 = vsel %vm48, %v86, %v87
  %vm92 = vcmask 1031168
  %v93 = vsel %vm92, %v77, %v91
  %v94 = vsel %vm48, %v87, %v88
  %v95 = vsel %vm92, %v79, %v94
  %v96 = vsel %vm48, %v88, %v89
  %v97 = vsel %vm92, %v81, %v96
  %v98 = vsel %vm48, %v89, %v90
  %v99 = vsel %vm92, %v83, %v98
  %104 = vst [vmem:[#allocation2 + $0x40] sm:$0xff] %v93
  %105 = vst [vmem:[#allocation2 + $0x48] sm:$0xff] %v95
  %106 = vst [vmem:[#allocation2 + $0x50] sm:$0xff] %v97
  %107 = vst [vmem:[#allocation2 + $0x58] sm:$0xff] %v99
  %v108 = vld [vmem:[%s0] sm:$0xff]
  %v109 = vld [vmem:[%s0 + $0x8] sm:$0xff]
  %v110 = vld [vmem:[%s0 + $0x10] sm:$0xff]
  %v111 = vld [vmem:[%s0 + $0x18] sm:$0xff]
  %v112 = vld [vmem:[%s0 + $0x20] sm:$0xf]
  %118 = vrot.lane.b32.xlu0 %v108, 125
  %v119 = vpop.permute.xlu0 %118
  %120 = vrot.lane.b32.xlu0 %v109, 125
  %v121 = vpop.permute.xlu0 %120
  %122 = vrot.lane.b32.xlu0 %v110, 125
  %v123 = vpop.permute.xlu0 %122
  %124 = vrot.lane.b32.xlu0 %v111, 125
  %v125 = vpop.permute.xlu0 %124
  %126 = vrot.lane.b32.xlu0 %v112, 125
  %v127 = vpop.permute.xlu0 %126
  %v128 = vrot.slane %v119, 4
  %v129 = vrot.slane %v121, 4
  %v130 = vrot.slane %v123, 4
  %v131 = vrot.slane %v125, 4
  %v132 = vrot.slane %v127, 4
  %v133 = vsel %vm48, %v128, %v129
  %vm134 = vcmask 1022976
  %v135 = vsel %vm134, %v119, %v133
  %v136 = vsel %vm48, %v129, %v130
  %v137 = vsel %vm134, %v121, %v136
  %v138 = vsel %vm48, %v130, %v131
  %v139 = vsel %vm134, %v123, %v138
  %v140 = vsel %vm48, %v131, %v132
  %v141 = vsel %vm134, %v125, %v140
  %146 = vst [vmem:[#allocation2 + $0x60] sm:$0xff] %v135
  %147 = vst [vmem:[#allocation2 + $0x68] sm:$0xff] %v137
  %148 = vst [vmem:[#allocation2 + $0x70] sm:$0xff] %v139
  %149 = vst [vmem:[#allocation2 + $0x78] sm:$0xff] %v141
  %v150 = vld [vmem:[%s0] sm:$0xff]
  %v151 = vld [vmem:[%s0 + $0x8] sm:$0xff]
  %v152 = vld [vmem:[%s0 + $0x10] sm:$0xff]
  %v153 = vld [vmem:[%s0 + $0x18] sm:$0xff]
  %v154 = vld [vmem:[%s0 + $0x20] sm:$0xf]
  %160 = vrot.lane.b32.xlu0 %v150, 124
  %v161 = vpop.permute.xlu0 %160
  %162 = vrot.lane.b32.xlu0 %v151, 124
  %v163 = vpop.permute.xlu0 %162
  %164 = vrot.lane.b32.xlu0 %v152, 124
  %v165 = vpop.permute.xlu0 %164
  %166 = vrot.lane.b32.xlu0 %v153, 124
  %v167 = vpop.permute.xlu0 %166
  %168 = vrot.lane.b32.xlu0 %v154, 124
  %v169 = vpop.permute.xlu0 %168
  %v170 = vrot.slane %v161, 4
  %v171 = vrot.slane %v163, 4
  %v172 = vrot.slane %v165, 4
  %v173 = vrot.slane %v167, 4
  %v174 = vrot.slane %v169, 4
  %v175 = vsel %vm48, %v170, %v171
  %vm176 = vcmask 1014784
  %v177 = vsel %vm176, %v161, %v175
  %v178 = vsel %vm48, %v171, %v172
  %v179 = vsel %vm176, %v163, %v178
  %v180 = vsel %vm48, %v172, %v173
  %v181 = vsel %vm176, %v165, %v180
  %v182 = vsel %vm48, %v173, %v174
  %v183 = vsel %vm176, %v167, %v182
  %188 = vst [vmem:[#allocation2 + $0x80] sm:$0xff] %v177
  %189 = vst [vmem:[#allocation2 + $0x88] sm:$0xff] %v179
  %190 = vst [vmem:[#allocation2 + $0x90] sm:$0xff] %v181
  %191 = vst [vmem:[#allocation2 + $0x98] sm:$0xff] %v183
  %v192 = vld [vmem:[%s0] sm:$0xff]
  %v193 = vld [vmem:[%s0 + $0x8] sm:$0xff]
  %v194 = vld [vmem:[%s0 + $0x10] sm:$0xff]
  %v195 = vld [vmem:[%s0 + $0x18] sm:$0xff]
  %v196 = vld [vmem:[%s0 + $0x20] sm:$0xf]
  %202 = vrot.lane.b32.xlu0 %v192, 123
  %v203 = vpop.permute.xlu0 %202
  %204 = vrot.lane.b32.xlu0 %v193, 123
  %v205 = vpop.permute.xlu0 %204
  %206 = vrot.lane.b32.xlu0 %v194, 123
  %v207 = vpop.permute.xlu0 %206
  %208 = vrot.lane.b32.xlu0 %v195, 123
  %v209 = vpop.permute.xlu0 %208
  %210 = vrot.lane.b32.xlu0 %v196, 123
  %v211 = vpop.permute.xlu0 %210
  %v212 = vrot.slane %v203, 4
  %v213 = vrot.slane %v205, 4
  %v214 = vrot.slane %v207, 4
  %v215 = vrot.slane %v209, 4
  %v216 = vrot.slane %v211, 4
  %v217 = vsel %vm48, %v212, %v213
  %vm218 = vcmask 1006592
  %v219 = vsel %vm218, %v203, %v217
  %v220 = vsel %vm48, %v213, %v214
  %v221 = vsel %vm218, %v205, %v220
  %v222 = vsel %vm48, %v214, %v215
  %v223 = vsel %vm218, %v207, %v222
  %v224 = vsel %vm48, %v215, %v216
  %v225 = vsel %vm218, %v209, %v224
  %230 = vst [vmem:[#allocation2 + $0xa0] sm:$0xff] %v219
  %231 = vst [vmem:[#allocation2 + $0xa8] sm:$0xff] %v221
  %232 = vst [vmem:[#allocation2 + $0xb0] sm:$0xff] %v223
  %233 = vst [vmem:[#allocation2 + $0xb8] sm:$0xff] %v225
  %v234 = vld [vmem:[%s0] sm:$0xff]
  %v235 = vld [vmem:[%s0 + $0x8] sm:$0xff]
  %v236 = vld [vmem:[%s0 + $0x10] sm:$0xff]
  %v237 = vld [vmem:[%s0 + $0x18] sm:$0xff]
  %v238 = vld [vmem:[%s0 + $0x20] sm:$0xf]
  %244 = vrot.lane.b32.xlu0 %v234, 122
  %v245 = vpop.permute.xlu0 %244
  %246 = vrot.lane.b32.xlu0 %v235, 122
  %v247 = vpop.permute.xlu0 %246
  %248 = vrot.lane.b32.xlu0 %v236, 122
  %v249 = vpop.permute.xlu0 %248
  %250 = vrot.lane.b32.xlu0 %v237, 122
  %v251 = vpop.permute.xlu0 %250
  %252 = vrot.lane.b32.xlu0 %v238, 122
  %v253 = vpop.permute.xlu0 %252
  %v254 = vrot.slane %v245, 4
  %v255 = vrot.slane %v247, 4
  %v256 = vrot.slane %v249, 4
  %v257 = vrot.slane %v251, 4
  %v258 = vrot.slane %v253, 4
  %v259 = vsel %vm48, %v254, %v255
  %vm260 = vcmask 998400
  %v261 = vsel %vm260, %v245, %v259
  %v262 = vsel %vm48, %v255, %v256
  %v263 = vsel %vm260, %v247, %v262
  %v264 = vsel %vm48, %v256, %v257
  %v265 = vsel %vm260, %v249, %v264
  %v266 = vsel %vm48, %v257, %v258
  %v267 = vsel %vm260, %v251, %v266
  %272 = vst [vmem:[#allocation2 + $0xc0] sm:$0xff] %v261
  %273 = vst [vmem:[#allocation2 + $0xc8] sm:$0xff] %v263
  %274 = vst [vmem:[#allocation2 + $0xd0] sm:$0xff] %v265
  %275 = vst [vmem:[#allocation2 + $0xd8] sm:$0xff] %v267
  %v276 = vld [vmem:[%s0] sm:$0xff]
  %v277 = vld [vmem:[%s0 + $0x8] sm:$0xff]
  %v278 = vld [vmem:[%s0 + $0x10] sm:$0xff]
  %v279 = vld [vmem:[%s0 + $0x18] sm:$0xff]
  %v280 = vld [vmem:[%s0 + $0x20] sm:$0xf]
  %286 = vrot.lane.b32.xlu0 %v276, 106
  %v287 = vpop.permute.xlu0 %286
  %288 = vrot.lane.b32.xlu0 %v277, 106
  %v289 = vpop.permute.xlu0 %288
  %290 = vrot.lane.b32.xlu0 %v278, 106
  %v291 = vpop.permute.xlu0 %290
  %292 = vrot.lane.b32.xlu0 %v279, 106
  %v293 = vpop.permute.xlu0 %292
  %294 = vrot.lane.b32.xlu0 %v280, 106
  %v295 = vpop.permute.xlu0 %294
  %v296 = vrot.slane %v287, 4
  %v297 = vrot.slane %v289, 4
  %v298 = vrot.slane %v291, 4
  %v299 = vrot.slane %v293, 4
  %v300 = vrot.slane %v295, 4
  %v301 = vsel %vm48, %v296, %v297
  %vm302 = vcmask 867328
  %v303 = vsel %vm302, %v287, %v301
  %v304 = vsel %vm48, %v297, %v298
  %v305 = vsel %vm302, %v289, %v304
  %v306 = vsel %vm48, %v298, %v299
  %v307 = vsel %vm302, %v291, %v306
  %v308 = vsel %vm48, %v299, %v300
  %v309 = vsel %vm302, %v293, %v308
  %314 = vst [vmem:[#allocation2 + $0xe0] sm:$0xff] %v303
  %315 = vst [vmem:[#allocation2 + $0xe8] sm:$0xff] %v305
  %316 = vst [vmem:[#allocation2 + $0xf0] sm:$0xff] %v307
  %317 = vst [vmem:[#allocation2 + $0xf8] sm:$0xff] %v309
  %v318 = vld [vmem:[%s0] sm:$0xff]
  %v319 = vld [vmem:[%s0 + $0x8] sm:$0xff]
  %v320 = vld [vmem:[%s0 + $0x10] sm:$0xff]
  %v321 = vld [vmem:[%s0 + $0x18] sm:$0xff]
  %v322 = vld [vmem:[%s0 + $0x20] sm:$0xf]
  %328 = vrot.lane.b32.xlu0 %v318, 105
  %v329 = vpop.permute.xlu0 %328
  %330 = vrot.lane.b32.xlu0 %v319, 105
  %v331 = vpop.permute.xlu0 %330
  %332 = vrot.lane.b32.xlu0 %v320, 105
  %v333 = vpop.permute.xlu0 %332
  %334 = vrot.lane.b32.xlu0 %v321, 105
  %v335 = vpop.permute.xlu0 %334
  %336 = vrot.lane.b32.xlu0 %v322, 105
  %v337 = vpop.permute.xlu0 %336
  %v338 = vrot.slane %v329, 4
  %v339 = vrot.slane %v331, 4
  %v340 = vrot.slane %v333, 4
  %v341 = vrot.slane %v335, 4
  %v342 = vrot.slane %v337, 4
  %v343 = vsel %vm48, %v338, %v339
  %vm344 = vcmask 859136
  %v345 = vsel %vm344, %v329, %v343
  %v346 = vsel %vm48, %v339, %v340
  %v347 = vsel %vm344, %v331, %v346
  %v348 = vsel %vm48, %v340, %v341
  %v349 = vsel %vm344, %v333, %v348
  %v350 = vsel %vm48, %v341, %v342
  %v351 = vsel %vm344, %v335, %v350
  %356 = vst [vmem:[#allocation2 + $0x100] sm:$0xff] %v345
  %357 = vst [vmem:[#allocation2 + $0x108] sm:$0xff] %v347
  %358 = vst [vmem:[#allocation2 + $0x110] sm:$0xff] %v349
  %359 = vst [vmem:[#allocation2 + $0x118] sm:$0xff] %v351
  %v360 = vld [vmem:[%s0] sm:$0xff]
  %v361 = vld [vmem:[%s0 + $0x8] sm:$0xff]
  %v362 = vld [vmem:[%s0 + $0x10] sm:$0xff]
  %v363 = vld [vmem:[%s0 + $0x18] sm:$0xff]
  %v364 = vld [vmem:[%s0 + $0x20] sm:$0xf]
  %370 = vrot.lane.b32.xlu0 %v360, 104
  %v371 = vpop.permute.xlu0 %370
  %372 = vrot.lane.b32.xlu0 %v361, 104
  %v373 = vpop.permute.xlu0 %372
  %374 = vrot.lane.b32.xlu0 %v362, 104
  %v375 = vpop.permute.xlu0 %374
  %376 = vrot.lane.b32.xlu0 %v363, 104
  %v377 = vpop.permute.xlu0 %376
  %378 = vrot.lane.b32.xlu0 %v364, 104
  %v379 = vpop.permute.xlu0 %378
  %v380 = vrot.slane %v371, 4
  %v381 = vrot.slane %v373, 4
  %v382 = vrot.slane %v375, 4
  %v383 = vrot.slane %v377, 4
  %v384 = vrot.slane %v379, 4
  %v385 = vsel %vm48, %v380, %v381
  %vm386 = vcmask 850944
  %v387 = vsel %vm386, %v371, %v385
  %v388 = vsel %vm48, %v381, %v382
  %v389 = vsel %vm386, %v373, %v388
  %v390 = vsel %vm48, %v382, %v383
  %v391 = vsel %vm386, %v375, %v390
  %v392 = vsel %vm48, %v383, %v384
  %v393 = vsel %vm386, %v377, %v392
  %398 = vst [vmem:[#allocation2 + $0x120] sm:$0xff] %v387
  %399 = vst [vmem:[#allocation2 + $0x128] sm:$0xff] %v389
  %400 = vst [vmem:[#allocation2 + $0x130] sm:$0xff] %v391
  %401 = vst [vmem:[#allocation2 + $0x138] sm:$0xff] %v393
  %v402 = vld [vmem:[%s0] sm:$0xff]
  %v403 = vld [vmem:[%s0 + $0x8] sm:$0xff]
  %v404 = vld [vmem:[%s0 + $0x10] sm:$0xff]
  %v405 = vld [vmem:[%s0 + $0x18] sm:$0xff]
  %v406 = vld [vmem:[%s0 + $0x20] sm:$0xf]
  %412 = vrot.lane.b32.xlu0 %v402, 103
  %v413 = vpop.permute.xlu0 %412
  %414 = vrot.lane.b32.xlu0 %v403, 103
  %v415 = vpop.permute.xlu0 %414
  %416 = vrot.lane.b32.xlu0 %v404, 103
  %v417 = vpop.permute.xlu0 %416
  %418 = vrot.lane.b32.xlu0 %v405, 103
  %v419 = vpop.permute.xlu0 %418
  %420 = vrot.lane.b32.xlu0 %v406, 103
  %v421 = vpop.permute.xlu0 %420
  %v422 = vrot.slane %v413, 4
  %v423 = vrot.slane %v415, 4
  %v424 = vrot.slane %v417, 4
  %v425 = vrot.slane %v419, 4
  %v426 = vrot.slane %v421, 4
  %v427 = vsel %vm48, %v422, %v423
  %vm428 = vcmask 842752
  %v429 = vsel %vm428, %v413, %v427
  %v430 = vsel %vm48, %v423, %v424
  %v431 = vsel %vm428, %v415, %v430
  %v432 = vsel %vm48, %v424, %v425
  %v433 = vsel %vm428, %v417, %v432
  %v434 = vsel %vm48, %v425, %v426
  %v435 = vsel %vm428, %v419, %v434
  %440 = vst [vmem:[#allocation2 + $0x140] sm:$0xff] %v429
  %441 = vst [vmem:[#allocation2 + $0x148] sm:$0xff] %v431
  %442 = vst [vmem:[#allocation2 + $0x150] sm:$0xff] %v433
  %443 = vst [vmem:[#allocation2 + $0x158] sm:$0xff] %v435
  %v444 = vld [vmem:[%s0] sm:$0xff]
  %v445 = vld [vmem:[%s0 + $0x8] sm:$0xff]
  %v446 = vld [vmem:[%s0 + $0x10] sm:$0xff]
  %v447 = vld [vmem:[%s0 + $0x18] sm:$0xff]
  %v448 = vld [vmem:[%s0 + $0x20] sm:$0xf]
  %454 = vrot.lane.b32.xlu0 %v444, 102
  %v455 = vpop.permute.xlu0 %454
  %456 = vrot.lane.b32.xlu0 %v445, 102
  %v457 = vpop.permute.xlu0 %456
  %458 = vrot.lane.b32.xlu0 %v446, 102
  %v459 = vpop.permute.xlu0 %458
  %460 = vrot.lane.b32.xlu0 %v447, 102
  %v461 = vpop.permute.xlu0 %460
  %462 = vrot.lane.b32.xlu0 %v448, 102
  %v463 = vpop.permute.xlu0 %462
  %v464 = vrot.slane %v455, 4
  %v465 = vrot.slane %v457, 4
  %v466 = vrot.slane %v459, 4
  %v467 = vrot.slane %v461, 4
  %v468 = vrot.slane %v463, 4
  %v469 = vsel %vm48, %v464, %v465
  %vm470 = vcmask 834560
  %v471 = vsel %vm470, %v455, %v469
  %v472 = vsel %vm48, %v465, %v466
  %v473 = vsel %vm470, %v457, %v472
  %v474 = vsel %vm48, %v466, %v467
  %v475 = vsel %vm470, %v459, %v474
  %v476 = vsel %vm48, %v467, %v468
  %v477 = vsel %vm470, %v461, %v476
  %482 = vst [vmem:[#allocation2 + $0x160] sm:$0xff] %v471
  %483 = vst [vmem:[#allocation2 + $0x168] sm:$0xff] %v473
  %484 = vst [vmem:[#allocation2 + $0x170] sm:$0xff] %v475
  %485 = vst [vmem:[#allocation2 + $0x178] sm:$0xff] %v477
  %v486 = vld [vmem:[%s0] sm:$0xff]
  %v487 = vld [vmem:[%s0 + $0x8] sm:$0xff]
  %v488 = vld [vmem:[%s0 + $0x10] sm:$0xff]
  %v489 = vld [vmem:[%s0 + $0x18] sm:$0xff]
  %v490 = vld [vmem:[%s0 + $0x20] sm:$0xf]
  %496 = vrot.lane.b32.xlu0 %v486, 101
  %v497 = vpop.permute.xlu0 %496
  %498 = vrot.lane.b32.xlu0 %v487, 101
  %v499 = vpop.permute.xlu0 %498
  %500 = vrot.lane.b32.xlu0 %v488, 101
  %v501 = vpop.permute.xlu0 %500
  %502 = vrot.lane.b32.xlu0 %v489, 101
  %v503 = vpop.permute.xlu0 %502
  %504 = vrot.lane.b32.xlu0 %v490, 101
  %v505 = vpop.permute.xlu0 %504
  %v506 = vrot.slane %v497, 4
  %v507 = vrot.slane %v499, 4
  %v508 = vrot.slane %v501, 4
  %v509 = vrot.slane %v503, 4
  %v510 = vrot.slane %v505, 4
  %v511 = vsel %vm48, %v506, %v507
  %vm512 = vcmask 826368
  %v513 = vsel %vm512, %v497, %v511
  %v514 = vsel %vm48, %v507, %v508
  %v515 = vsel %vm512, %v499, %v514
  %v516 = vsel %vm48, %v508, %v509
  %v517 = vsel %vm512, %v501, %v516
  %v518 = vsel %vm48, %v509, %v510
  %v519 = vsel %vm512, %v503, %v518
  %524 = vst [vmem:[#allocation2 + $0x180] sm:$0xff] %v513
  %525 = vst [vmem:[#allocation2 + $0x188] sm:$0xff] %v515
  %526 = vst [vmem:[#allocation2 + $0x190] sm:$0xff] %v517
  %527 = vst [vmem:[#allocation2 + $0x198] sm:$0xff] %v519
  %v528 = vld [vmem:[%s0] sm:$0xff]
  %v529 = vld [vmem:[%s0 + $0x8] sm:$0xff]
  %v530 = vld [vmem:[%s0 + $0x10] sm:$0xff]
  %v531 = vld [vmem:[%s0 + $0x18] sm:$0xff]
  %v532 = vld [vmem:[%s0 + $0x20] sm:$0xf]
  %538 = vrot.lane.b32.xlu0 %v528, 100
  %v539 = vpop.permute.xlu0 %538
  %540 = vrot.lane.b32.xlu0 %v529, 100
  %v541 = vpop.permute.xlu0 %540
  %542 = vrot.lane.b32.xlu0 %v530, 100
  %v543 = vpop.permute.xlu0 %542
  %544 = vrot.lane.b32.xlu0 %v531, 100
  %v545 = vpop.permute.xlu0 %544
  %546 = vrot.lane.b32.xlu0 %v532, 100
  %v547 = vpop.permute.xlu0 %546
  %v548 = vrot.slane %v539, 4
  %v549 = vrot.slane %v541, 4
  %v550 = vrot.slane %v543, 4
  %v551 = vrot.slane %v545, 4
  %v552 = vrot.slane %v547, 4
  %v553 = vsel %vm48, %v548, %v549
  %vm554 = vcmask 818176
  %v555 = vsel %vm554, %v539, %v553
  %v556 = vsel %vm48, %v549, %v550
  %v557 = vsel %vm554, %v541, %v556
  %v558 = vsel %vm48, %v550, %v551
  %v559 = vsel %vm554, %v543, %v558
  %v560 = vsel %vm48, %v551, %v552
  %v561 = vsel %vm554, %v545, %v560
  %566 = vst [vmem:[#allocation2 + $0x1a0] sm:$0xff] %v555
  %567 = vst [vmem:[#allocation2 + $0x1a8] sm:$0xff] %v557
  %568 = vst [vmem:[#allocation2 + $0x1b0] sm:$0xff] %v559
  %569 = vst [vmem:[#allocation2 + $0x1b8] sm:$0xff] %v561
  %v570 = vld [vmem:[%s0] sm:$0xff]
  %v571 = vld [vmem:[%s0 + $0x8] sm:$0xff]
  %v572 = vld [vmem:[%s0 + $0x10] sm:$0xff]
  %v573 = vld [vmem:[%s0 + $0x18] sm:$0xff]
  %v574 = vld [vmem:[%s0 + $0x20] sm:$0xf]
  %580 = vrot.lane.b32.xlu0 %v570, 84
  %v581 = vpop.permute.xlu0 %580
  %582 = vrot.lane.b32.xlu0 %v571, 84
  %v583 = vpop.permute.xlu0 %582
  %584 = vrot.lane.b32.xlu0 %v572, 84
  %v585 = vpop.permute.xlu0 %584
  %586 = vrot.lane.b32.xlu0 %v573, 84
  %v587 = vpop.permute.xlu0 %586
  %588 = vrot.lane.b32.xlu0 %v574, 84
  %v589 = vpop.permute.xlu0 %588
  %v590 = vrot.slane %v581, 4
  %v591 = vrot.slane %v583, 4
  %v592 = vrot.slane %v585, 4
  %v593 = vrot.slane %v587, 4
  %v594 = vrot.slane %v589, 4
  %v595 = vsel %vm48, %v590, %v591
  %vm596 = vcmask 687104
  %v597 = vsel %vm596, %v581, %v595
  %v598 = vsel %vm48, %v591, %v592
  %v599 = vsel %vm596, %v583, %v598
  %v600 = vsel %vm48, %v592, %v593
  %v601 = vsel %vm596, %v585, %v600
  %v602 = vsel %vm48, %v593, %v594
  %v603 = vsel %vm596, %v587, %v602
  %608 = vst [vmem:[#allocation2 + $0x1c0] sm:$0xff] %v597
  %609 = vst [vmem:[#allocation2 + $0x1c8] sm:$0xff] %v599
  %610 = vst [vmem:[#allocation2 + $0x1d0] sm:$0xff] %v601
  %611 = vst [vmem:[#allocation2 + $0x1d8] sm:$0xff] %v603
  %v612 = vld [vmem:[%s0] sm:$0xff]
  %v613 = vld [vmem:[%s0 + $0x8] sm:$0xff]
  %v614 = vld [vmem:[%s0 + $0x10] sm:$0xff]
  %v615 = vld [vmem:[%s0 + $0x18] sm:$0xff]
  %v616 = vld [vmem:[%s0 + $0x20] sm:$0xf]
  %622 = vrot.lane.b32.xlu0 %v612, 83
  %v623 = vpop.permute.xlu0 %622
  %624 = vrot.lane.b32.xlu0 %v613, 83
  %v625 = vpop.permute.xlu0 %624
  %626 = vrot.lane.b32.xlu0 %v614, 83
  %v627 = vpop.permute.xlu0 %626
  %628 = vrot.lane.b32.xlu0 %v615, 83
  %v629 = vpop.permute.xlu0 %628
  %630 = vrot.lane.b32.xlu0 %v616, 83
  %v631 = vpop.permute.xlu0 %630
  %v632 = vrot.slane %v623, 4
  %v633 = vrot.slane %v625, 4
  %v634 = vrot.slane %v627, 4
  %v635 = vrot.slane %v629, 4
  %v636 = vrot.slane %v631, 4
  %v637 = vsel %vm48, %v632, %v633
  %vm638 = vcmask 678912
  %v639 = vsel %vm638, %v623, %v637
  %v640 = vsel %vm48, %v633, %v634
  %v641 = vsel %vm638, %v625, %v640
  %v642 = vsel %vm48, %v634, %v635
  %v643 = vsel %vm638, %v627, %v642
  %v644 = vsel %vm48, %v635, %v636
  %v645 = vsel %vm638, %v629, %v644
  %650 = vst [vmem:[#allocation2 + $0x1e0] sm:$0xff] %v639
  %651 = vst [vmem:[#allocation2 + $0x1e8] sm:$0xff] %v641
  %652 = vst [vmem:[#allocation2 + $0x1f0] sm:$0xff] %v643
  %653 = vst [vmem:[#allocation2 + $0x1f8] sm:$0xff] %v645
  %v654 = vld [vmem:[%s0] sm:$0xff]
  %v655 = vld [vmem:[%s0 + $0x8] sm:$0xff]
  %v656 = vld [vmem:[%s0 + $0x10] sm:$0xff]
  %v657 = vld [vmem:[%s0 + $0x18] sm:$0xff]
  %v658 = vld [vmem:[%s0 + $0x20] sm:$0xf]
  %664 = vrot.lane.b32.xlu0 %v654, 82
  %v665 = vpop.permute.xlu0 %664
  %666 = vrot.lane.b32.xlu0 %v655, 82
  %v667 = vpop.permute.xlu0 %666
  %668 = vrot.lane.b32.xlu0 %v656, 82
  %v669 = vpop.permute.xlu0 %668
  %670 = vrot.lane.b32.xlu0 %v657, 82
  %v671 = vpop.permute.xlu0 %670
  %672 = vrot.lane.b32.xlu0 %v658, 82
  %v673 = vpop.permute.xlu0 %672
  %v674 = vrot.slane %v665, 4
  %v675 = vrot.slane %v667, 4
  %v676 = vrot.slane %v669, 4
  %v677 = vrot.slane %v671, 4
  %v678 = vrot.slane %v673, 4
  %v679 = vsel %vm48, %v674, %v675
  %vm680 = vcmask 670720
  %v681 = vsel %vm680, %v665, %v679
  %v682 = vsel %vm48, %v675, %v676
  %v683 = vsel %vm680, %v667, %v682
  %v684 = vsel %vm48, %v676, %v677
  %v685 = vsel %vm680, %v669, %v684
  %v686 = vsel %vm48, %v677, %v678
  %v687 = vsel %vm680, %v671, %v686
  %692 = vst [vmem:[#allocation2 + $0x200] sm:$0xff] %v681
  %693 = vst [vmem:[#allocation2 + $0x208] sm:$0xff] %v683
  %694 = vst [vmem:[#allocation2 + $0x210] sm:$0xff] %v685
  %695 = vst [vmem:[#allocation2 + $0x218] sm:$0xff] %v687
  %v696 = vld [vmem:[%s0] sm:$0xff]
  %v697 = vld [vmem:[%s0 + $0x8] sm:$0xff]
  %v698 = vld [vmem:[%s0 + $0x10] sm:$0xff]
  %v699 = vld [vmem:[%s0 + $0x18] sm:$0xff]
  %v700 = vld [vmem:[%s0 + $0x20] sm:$0xf]
  %706 = vrot.lane.b32.xlu0 %v696, 81
  %v707 = vpop.permute.xlu0 %706
  %708 = vrot.lane.b32.xlu0 %v697, 81
  %v709 = vpop.permute.xlu0 %708
  %710 = vrot.lane.b32.xlu0 %v698, 81
  %v711 = vpop.permute.xlu0 %710
  %712 = vrot.lane.b32.xlu0 %v699, 81
  %v713 = vpop.permute.xlu0 %712
  %714 = vrot.lane.b32.xlu0 %v700, 81
  %v715 = vpop.permute.xlu0 %714
  %v716 = vrot.slane %v707, 4
  %v717 = vrot.slane %v709, 4
  %v718 = vrot.slane %v711, 4
  %v719 = vrot.slane %v713, 4
  %v720 = vrot.slane %v715, 4
  %v721 = vsel %vm48, %v716, %v717
  %vm722 = vcmask 662528
  %v723 = vsel %vm722, %v707, %v721
  %v724 = vsel %vm48, %v717, %v718
  %v725 = vsel %vm722, %v709, %v724
  %v726 = vsel %vm48, %v718, %v719
  %v727 = vsel %vm722, %v711, %v726
  %v728 = vsel %vm48, %v719, %v720
  %v729 = vsel %vm722, %v713, %v728
  %734 = vst [vmem:[#allocation2 + $0x220] sm:$0xff] %v723
  %735 = vst [vmem:[#allocation2 + $0x228] sm:$0xff] %v725
  %736 = vst [vmem:[#allocation2 + $0x230] sm:$0xff] %v727
  %737 = vst [vmem:[#allocation2 + $0x238] sm:$0xff] %v729
  %v738 = vld [vmem:[%s0] sm:$0xff]
  %v739 = vld [vmem:[%s0 + $0x8] sm:$0xff]
  %v740 = vld [vmem:[%s0 + $0x10] sm:$0xff]
  %v741 = vld [vmem:[%s0 + $0x18] sm:$0xff]
  %v742 = vld [vmem:[%s0 + $0x20] sm:$0xf]
  %748 = vrot.lane.b32.xlu0 %v738, 80
  %v749 = vpop.permute.xlu0 %748
  %750 = vrot.lane.b32.xlu0 %v739, 80
  %v751 = vpop.permute.xlu0 %750
  %752 = vrot.lane.b32.xlu0 %v740, 80
  %v753 = vpop.permute.xlu0 %752
  %754 = vrot.lane.b32.xlu0 %v741, 80
  %v755 = vpop.permute.xlu0 %754
  %756 = vrot.lane.b32.xlu0 %v742, 80
  %v757 = vpop.permute.xlu0 %756
  %v758 = vrot.slane %v749, 4
  %v759 = vrot.slane %v751, 4
  %v760 = vrot.slane %v753, 4
  %v761 = vrot.slane %v755, 4
  %v762 = vrot.slane %v757, 4
  %v763 = vsel %vm48, %v758, %v759
  %vm764 = vcmask 654336
  %v765 = vsel %vm764, %v749, %v763
  %v766 = vsel %vm48, %v759, %v760
  %v767 = vsel %vm764, %v751, %v766
  %v768 = vsel %vm48, %v760, %v761
  %v769 = vsel %vm764, %v753, %v768
  %v770 = vsel %vm48, %v761, %v762
  %v771 = vsel %vm764, %v755, %v770
  %776 = vst [vmem:[#allocation2 + $0x240] sm:$0xff] %v765
  %777 = vst [vmem:[#allocation2 + $0x248] sm:$0xff] %v767
  %778 = vst [vmem:[#allocation2 + $0x250] sm:$0xff] %v769
  %779 = vst [vmem:[#allocation2 + $0x258] sm:$0xff] %v771
  %v780 = vld [vmem:[%s0] sm:$0xff]
  %v781 = vld [vmem:[%s0 + $0x8] sm:$0xff]
  %v782 = vld [vmem:[%s0 + $0x10] sm:$0xff]
  %v783 = vld [vmem:[%s0 + $0x18] sm:$0xff]
  %v784 = vld [vmem:[%s0 + $0x20] sm:$0xf]
  %790 = vrot.lane.b32.xlu0 %v780, 79
  %v791 = vpop.permute.xlu0 %790
  %792 = vrot.lane.b32.xlu0 %v781, 79
  %v793 = vpop.permute.xlu0 %792
  %794 = vrot.lane.b32.xlu0 %v782, 79
  %v795 = vpop.permute.xlu0 %794
  %796 = vrot.lane.b32.xlu0 %v783, 79
  %v797 = vpop.permute.xlu0 %796
  %798 = vrot.lane.b32.xlu0 %v784, 79
  %v799 = vpop.permute.xlu0 %798
  %v800 = vrot.slane %v791, 4
  %v801 = vrot.slane %v793, 4
  %v802 = vrot.slane %v795, 4
  %v803 = vrot.slane %v797, 4
  %v804 = vrot.slane %v799, 4
  %v805 = vsel %vm48, %v800, %v801
  %vm806 = vcmask 646144
  %v807 = vsel %vm806, %v791, %v805
  %v808 = vsel %vm48, %v801, %v802
  %v809 = vsel %vm806, %v793, %v808
  %v810 = vsel %vm48, %v802, %v803
  %v811 = vsel %vm806, %v795, %v810
  %v812 = vsel %vm48, %v803, %v804
  %v813 = vsel %vm806, %v797, %v812
  %818 = vst [vmem:[#allocation2 + $0x260] sm:$0xff] %v807
  %819 = vst [vmem:[#allocation2 + $0x268] sm:$0xff] %v809
  %820 = vst [vmem:[#allocation2 + $0x270] sm:$0xff] %v811
  %821 = vst [vmem:[#allocation2 + $0x278] sm:$0xff] %v813
  %v822 = vld [vmem:[%s0] sm:$0xff]
  %v823 = vld [vmem:[%s0 + $0x8] sm:$0xff]
  %v824 = vld [vmem:[%s0 + $0x10] sm:$0xff]
  %v825 = vld [vmem:[%s0 + $0x18] sm:$0xff]
  %v826 = vld [vmem:[%s0 + $0x20] sm:$0xf]
  %832 = vrot.lane.b32.xlu0 %v822, 78
  %v833 = vpop.permute.xlu0 %832
  %834 = vrot.lane.b32.xlu0 %v823, 78
  %v835 = vpop.permute.xlu0 %834
  %836 = vrot.lane.b32.xlu0 %v824, 78
  %v837 = vpop.permute.xlu0 %836
  %838 = vrot.lane.b32.xlu0 %v825, 78
  %v839 = vpop.permute.xlu0 %838
  %840 = vrot.lane.b32.xlu0 %v826, 78
  %v841 = vpop.permute.xlu0 %840
  %v842 = vrot.slane %v833, 4
  %v843 = vrot.slane %v835, 4
  %v844 = vrot.slane %v837, 4
  %v845 = vrot.slane %v839, 4
  %v846 = vrot.slane %v841, 4
  %v847 = vsel %vm48, %v842, %v843
  %vm848 = vcmask 637952
  %v849 = vsel %vm848, %v833, %v847
  %v850 = vsel %vm48, %v843, %v844
  %v851 = vsel %vm848, %v835, %v850
  %v852 = vsel %vm48, %v844, %v845
  %v853 = vsel %vm848, %v837, %v852
  %v854 = vsel %vm48, %v845, %v846
  %v855 = vsel %vm848, %v839, %v854
  %860 = vst [vmem:[#allocation2 + $0x280] sm:$0xff] %v849
  %861 = vst [vmem:[#allocation2 + $0x288] sm:$0xff] %v851
  %862 = vst [vmem:[#allocation2 + $0x290] sm:$0xff] %v853
  %863 = vst [vmem:[#allocation2 + $0x298] sm:$0xff] %v855
  %v864 = vld [vmem:[%s0] sm:$0xff]
  %v865 = vld [vmem:[%s0 + $0x8] sm:$0xff]
  %v866 = vld [vmem:[%s0 + $0x10] sm:$0xff]
  %v867 = vld [vmem:[%s0 + $0x18] sm:$0xff]
  %v868 = vld [vmem:[%s0 + $0x20] sm:$0xf]
  %874 = vrot.lane.b32.xlu0 %v864, 62
  %v875 = vpop.permute.xlu0 %874
  %876 = vrot.lane.b32.xlu0 %v865, 62
  %v877 = vpop.permute.xlu0 %876
  %878 = vrot.lane.b32.xlu0 %v866, 62
  %v879 = vpop.permute.xlu0 %878
  %880 = vrot.lane.b32.xlu0 %v867, 62
  %v881 = vpop.permute.xlu0 %880
  %882 = vrot.lane.b32.xlu0 %v868, 62
  %v883 = vpop.permute.xlu0 %882
  %v884 = vrot.slane %v875, 4
  %v885 = vrot.slane %v877, 4
  %v886 = vrot.slane %v879, 4
  %v887 = vrot.slane %v881, 4
  %v888 = vrot.slane %v883, 4
  %v889 = vsel %vm48, %v884, %v885
  %vm890 = vcmask 506880
  %v891 = vsel %vm890, %v875, %v889
  %v892 = vsel %vm48, %v885, %v886
  %v893 = vsel %vm890, %v877, %v892
  %v894 = vsel %vm48, %v886, %v887
  %v895 = vsel %vm890, %v879, %v894
  %v896 = vsel %vm48, %v887, %v888
  %v897 = vsel %vm890, %v881, %v896
  %902 = vst [vmem:[#allocation2 + $0x2a0] sm:$0xff] %v891
  %903 = vst [vmem:[#allocation2 + $0x2a8] sm:$0xff] %v893
  %904 = vst [vmem:[#allocation2 + $0x2b0] sm:$0xff] %v895
  %905 = vst [vmem:[#allocation2 + $0x2b8] sm:$0xff] %v897
  %v906 = vld [vmem:[%s0] sm:$0xff]
  %v907 = vld [vmem:[%s0 + $0x8] sm:$0xff]
  %v908 = vld [vmem:[%s0 + $0x10] sm:$0xff]
  %v909 = vld [vmem:[%s0 + $0x18] sm:$0xff]
  %v910 = vld [vmem:[%s0 + $0x20] sm:$0xf]
  %916 = vrot.lane.b32.xlu0 %v906, 61
  %v917 = vpop.permute.xlu0 %916
  %918 = vrot.lane.b32.xlu0 %v907, 61
  %v919 = vpop.permute.xlu0 %918
  %920 = vrot.lane.b32.xlu0 %v908, 61
  %v921 = vpop.permute.xlu0 %920
  %922 = vrot.lane.b32.xlu0 %v909, 61
  %v923 = vpop.permute.xlu0 %922
  %924 = vrot.lane.b32.xlu0 %v910, 61
  %v925 = vpop.permute.xlu0 %924
  %v926 = vrot.slane %v917, 4
  %v927 = vrot.slane %v919, 4
  %v928 = vrot.slane %v921, 4
  %v929 = vrot.slane %v923, 4
  %v930 = vrot.slane %v925, 4
  %v931 = vsel %vm48, %v926, %v927
  %vm932 = vcmask 498688
  %v933 = vsel %vm932, %v917, %v931
  %v934 = vsel %vm48, %v927, %v928
  %v935 = vsel %vm932, %v919, %v934
  %v936 = vsel %vm48, %v928, %v929
  %v937 = vsel %vm932, %v921, %v936
  %v938 = vsel %vm48, %v929, %v930
  %v939 = vsel %vm932, %v923, %v938
  %944 = vst [vmem:[#allocation2 + $0x2c0] sm:$0xff] %v933
  %945 = vst [vmem:[#allocation2 + $0x2c8] sm:$0xff] %v935
  %946 = vst [vmem:[#allocation2 + $0x2d0] sm:$0xff] %v937
  %947 = vst [vmem:[#allocation2 + $0x2d8] sm:$0xff] %v939
  %v948 = vld [vmem:[%s0] sm:$0xff]
  %v949 = vld [vmem:[%s0 + $0x8] sm:$0xff]
  %v950 = vld [vmem:[%s0 + $0x10] sm:$0xff]
  %v951 = vld [vmem:[%s0 + $0x18] sm:$0xff]
  %v952 = vld [vmem:[%s0 + $0x20] sm:$0xf]
  %958 = vrot.lane.b32.xlu0 %v948, 60
  %v959 = vpop.permute.xlu0 %958
  %960 = vrot.lane.b32.xlu0 %v949, 60
  %v961 = vpop.permute.xlu0 %960
  %962 = vrot.lane.b32.xlu0 %v950, 60
  %v963 = vpop.permute.xlu0 %962
  %964 = vrot.lane.b32.xlu0 %v951, 60
  %v965 = vpop.permute.xlu0 %964
  %966 = vrot.lane.b32.xlu0 %v952, 60
  %v967 = vpop.permute.xlu0 %966
  %v968 = vrot.slane %v959, 4
  %v969 = vrot.slane %v961, 4
  %v970 = vrot.slane %v963, 4
  %v971 = vrot.slane %v965, 4
  %v972 = vrot.slane %v967, 4
  %v973 = vsel %vm48, %v968, %v969
  %vm974 = vcmask 490496
  %v975 = vsel %vm974, %v959, %v973
  %v976 = vsel %vm48, %v969, %v970
  %v977 = vsel %vm974, %v961, %v976
  %v978 = vsel %vm48, %v970, %v971
  %v979 = vsel %vm974, %v963, %v978
  %v980 = vsel %vm48, %v971, %v972
  %v981 = vsel %vm974, %v965, %v980
  %986 = vst [vmem:[#allocation2 + $0x2e0] sm:$0xff] %v975
  %987 = vst [vmem:[#allocation2 + $0x2e8] sm:$0xff] %v977
  %988 = vst [vmem:[#allocation2 + $0x2f0] sm:$0xff] %v979
  %989 = vst [vmem:[#allocation2 + $0x2f8] sm:$0xff] %v981
  %v990 = vld [vmem:[%s0] sm:$0xff]
  %v991 = vld [vmem:[%s0 + $0x8] sm:$0xff]
  %v992 = vld [vmem:[%s0 + $0x10] sm:$0xff]
  %v993 = vld [vmem:[%s0 + $0x18] sm:$0xff]
  %v994 = vld [vmem:[%s0 + $0x20] sm:$0xf]
  %1000 = vrot.lane.b32.xlu0 %v990, 59
  %v1001 = vpop.permute.xlu0 %1000
  %1002 = vrot.lane.b32.xlu0 %v991, 59
  %v1003 = vpop.permute.xlu0 %1002
  %1004 = vrot.lane.b32.xlu0 %v992, 59
  %v1005 = vpop.permute.xlu0 %1004
  %1006 = vrot.lane.b32.xlu0 %v993, 59
  %v1007 = vpop.permute.xlu0 %1006
  %1008 = vrot.lane.b32.xlu0 %v994, 59
  %v1009 = vpop.permute.xlu0 %1008
  %v1010 = vrot.slane %v1001, 4
  %v1011 = vrot.slane %v1003, 4
  %v1012 = vrot.slane %v1005, 4
  %v1013 = vrot.slane %v1007, 4
  %v1014 = vrot.slane %v1009, 4
  %v1015 = vsel %vm48, %v1010, %v1011
  %vm1016 = vcmask 482304
  %v1017 = vsel %vm1016, %v1001, %v1015
  %v1018 = vsel %vm48, %v1011, %v1012
  %v1019 = vsel %vm1016, %v1003, %v1018
  %v1020 = vsel %vm48, %v1012, %v1013
  %v1021 = vsel %vm1016, %v1005, %v1020
  %v1022 = vsel %vm48, %v1013, %v1014
  %v1023 = vsel %vm1016, %v1007, %v1022
  %1028 = vst [vmem:[#allocation2 + $0x300] sm:$0xff] %v1017
  %1029 = vst [vmem:[#allocation2 + $0x308] sm:$0xff] %v1019
  %1030 = vst [vmem:[#allocation2 + $0x310] sm:$0xff] %v1021
  %1031 = vst [vmem:[#allocation2 + $0x318] sm:$0xff] %v1023
  %v1032 = vld [vmem:[%s0] sm:$0xff]
  %v1033 = vld [vmem:[%s0 + $0x8] sm:$0xff]
  %v1034 = vld [vmem:[%s0 + $0x10] sm:$0xff]
  %v1035 = vld [vmem:[%s0 + $0x18] sm:$0xff]
  %v1036 = vld [vmem:[%s0 + $0x20] sm:$0xf]
  %1042 = vrot.lane.b32.xlu0 %v1032, 58
  %v1043 = vpop.permute.xlu0 %1042
  %1044 = vrot.lane.b32.xlu0 %v1033, 58
  %v1045 = vpop.permute.xlu0 %1044
  %1046 = vrot.lane.b32.xlu0 %v1034, 58
  %v1047 = vpop.permute.xlu0 %1046
  %1048 = vrot.lane.b32.xlu0 %v1035, 58
  %v1049 = vpop.permute.xlu0 %1048
  %1050 = vrot.lane.b32.xlu0 %v1036, 58
  %v1051 = vpop.permute.xlu0 %1050
  %v1052 = vrot.slane %v1043, 4
  %v1053 = vrot.slane %v1045, 4
  %v1054 = vrot.slane %v1047, 4
  %v1055 = vrot.slane %v1049, 4
  %v1056 = vrot.slane %v1051, 4
  %v1057 = vsel %vm48, %v1052, %v1053
  %vm1058 = vcmask 474112
  %v1059 = vsel %vm1058, %v1043, %v1057
  %v1060 = vsel %vm48, %v1053, %v1054
  %v1061 = vsel %vm1058, %v1045, %v1060
  %v1062 = vsel %vm48, %v1054, %v1055
  %v1063 = vsel %vm1058, %v1047, %v1062
  %v1064 = vsel %vm48, %v1055, %v1056
  %v1065 = vsel %vm1058, %v1049, %v1064
  %1070 = vst [vmem:[#allocation2 + $0x320] sm:$0xff] %v1059
  %1071 = vst [vmem:[#allocation2 + $0x328] sm:$0xff] %v1061
  %1072 = vst [vmem:[#allocation2 + $0x330] sm:$0xff] %v1063
  %1073 = vst [vmem:[#allocation2 + $0x338] sm:$0xff] %v1065
  %v1074 = vld [vmem:[%s0] sm:$0xff]
  %v1075 = vld [vmem:[%s0 + $0x8] sm:$0xff]
  %v1076 = vld [vmem:[%s0 + $0x10] sm:$0xff]
  %v1077 = vld [vmem:[%s0 + $0x18] sm:$0xff]
  %v1078 = vld [vmem:[%s0 + $0x20] sm:$0xf]
  %1084 = vrot.lane.b32.xlu0 %v1074, 57
  %v1085 = vpop.permute.xlu0 %1084
  %1086 = vrot.lane.b32.xlu0 %v1075, 57
  %v1087 = vpop.permute.xlu0 %1086
  %1088 = vrot.lane.b32.xlu0 %v1076, 57
  %v1089 = vpop.permute.xlu0 %1088
  %1090 = vrot.lane.b32.xlu0 %v1077, 57
  %v1091 = vpop.permute.xlu0 %1090
  %1092 = vrot.lane.b32.xlu0 %v1078, 57
  %v1093 = vpop.permute.xlu0 %1092
  %v1094 = vrot.slane %v1085, 4
  %v1095 = vrot.slane %v1087, 4
  %v1096 = vrot.slane %v1089, 4
  %v1097 = vrot.slane %v1091, 4
  %v1098 = vrot.slane %v1093, 4
  %v1099 = vsel %vm48, %v1094, %v1095
  %vm1100 = vcmask 465920
  %v1101 = vsel %vm1100, %v1085, %v1099
  %v1102 = vsel %vm48, %v1095, %v1096
  %v1103 = vsel %vm1100, %v1087, %v1102
  %v1104 = vsel %vm48, %v1096, %v1097
  %v1105 = vsel %vm1100, %v1089, %v1104
  %v1106 = vsel %vm48, %v1097, %v1098
  %v1107 = vsel %vm1100, %v1091, %v1106
  %1112 = vst [vmem:[#allocation2 + $0x340] sm:$0xff] %v1101
  %1113 = vst [vmem:[#allocation2 + $0x348] sm:$0xff] %v1103
  %1114 = vst [vmem:[#allocation2 + $0x350] sm:$0xff] %v1105
  %1115 = vst [vmem:[#allocation2 + $0x358] sm:$0xff] %v1107
  %v1116 = vld [vmem:[%s0] sm:$0xff]
  %v1117 = vld [vmem:[%s0 + $0x8] sm:$0xff]
  %v1118 = vld [vmem:[%s0 + $0x10] sm:$0xff]
  %v1119 = vld [vmem:[%s0 + $0x18] sm:$0xff]
  %v1120 = vld [vmem:[%s0 + $0x20] sm:$0xf]
  %1126 = vrot.lane.b32.xlu0 %v1116, 56
  %v1127 = vpop.permute.xlu0 %1126
  %1128 = vrot.lane.b32.xlu0 %v1117, 56
  %v1129 = vpop.permute.xlu0 %1128
  %1130 = vrot.lane.b32.xlu0 %v1118, 56
  %v1131 = vpop.permute.xlu0 %1130
  %1132 = vrot.lane.b32.xlu0 %v1119, 56
  %v1133 = vpop.permute.xlu0 %1132
  %1134 = vrot.lane.b32.xlu0 %v1120, 56
  %v1135 = vpop.permute.xlu0 %1134
  %v1136 = vrot.slane %v1127, 4
  %v1137 = vrot.slane %v1129, 4
  %v1138 = vrot.slane %v1131, 4
  %v1139 = vrot.slane %v1133, 4
  %v1140 = vrot.slane %v1135, 4
  %v1141 = vsel %vm48, %v1136, %v1137
  %vm1142 = vcmask 457728
  %v1143 = vsel %vm1142, %v1127, %v1141
  %v1144 = vsel %vm48, %v1137, %v1138
  %v1145 = vsel %vm1142, %v1129, %v1144
  %v1146 = vsel %vm48, %v1138, %v1139
  %v1147 = vsel %vm1142, %v1131, %v1146
  %v1148 = vsel %vm48, %v1139, %v1140
  %v1149 = vsel %vm1142, %v1133, %v1148
  %1154 = vst [vmem:[#allocation2 + $0x360] sm:$0xff] %v1143
  %1155 = vst [vmem:[#allocation2 + $0x368] sm:$0xff] %v1145
  %1156 = vst [vmem:[#allocation2 + $0x370] sm:$0xff] %v1147
  %1157 = vst [vmem:[#allocation2 + $0x378] sm:$0xff] %v1149
  %v1158 = vld [vmem:[%s0] sm:$0xff]
  %v1159 = vld [vmem:[%s0 + $0x8] sm:$0xff]
  %v1160 = vld [vmem:[%s0 + $0x10] sm:$0xff]
  %v1161 = vld [vmem:[%s0 + $0x18] sm:$0xff]
  %v1162 = vld [vmem:[%s0 + $0x20] sm:$0xf]
  %1168 = vrot.lane.b32.xlu0 %v1158, 40
  %v1169 = vpop.permute.xlu0 %1168
  %1170 = vrot.lane.b32.xlu0 %v1159, 40
  %v1171 = vpop.permute.xlu0 %1170
  %1172 = vrot.lane.b32.xlu0 %v1160, 40
  %v1173 = vpop.permute.xlu0 %1172
  %1174 = vrot.lane.b32.xlu0 %v1161, 40
  %v1175 = vpop.permute.xlu0 %1174
  %1176 = vrot.lane.b32.xlu0 %v1162, 40
  %v1177 = vpop.permute.xlu0 %1176
  %v1178 = vrot.slane %v1169, 4
  %v1179 = vrot.slane %v1171, 4
  %v1180 = vrot.slane %v1173, 4
  %v1181 = vrot.slane %v1175, 4
  %v1182 = vrot.slane %v1177, 4
  %v1183 = vsel %vm48, %v1178, %v1179
  %vm1184 = vcmask 326656
  %v1185 = vsel %vm1184, %v1169, %v1183
  %v1186 = vsel %vm48, %v1179, %v1180
  %v1187 = vsel %vm1184, %v1171, %v1186
  %v1188 = vsel %vm48, %v1180, %v1181
  %v1189 = vsel %vm1184, %v1173, %v1188
  %v1190 = vsel %vm48, %v1181, %v1182
  %v1191 = vsel %vm1184, %v1175, %v1190
  %1196 = vst [vmem:[#allocation2 + $0x380] sm:$0xff] %v1185
  %1197 = vst [vmem:[#allocation2 + $0x388] sm:$0xff] %v1187
  %1198 = vst [vmem:[#allocation2 + $0x390] sm:$0xff] %v1189
  %1199 = vst [vmem:[#allocation2 + $0x398] sm:$0xff] %v1191
  %v1200 = vld [vmem:[%s0] sm:$0xff]
  %v1201 = vld [vmem:[%s0 + $0x8] sm:$0xff]
  %v1202 = vld [vmem:[%s0 + $0x10] sm:$0xff]
  %v1203 = vld [vmem:[%s0 + $0x18] sm:$0xff]
  %v1204 = vld [vmem:[%s0 + $0x20] sm:$0xf]
  %1210 = vrot.lane.b32.xlu0 %v1200, 39
  %v1211 = vpop.permute.xlu0 %1210
  %1212 = vrot.lane.b32.xlu0 %v1201, 39
  %v1213 = vpop.permute.xlu0 %1212
  %1214 = vrot.lane.b32.xlu0 %v1202, 39
  %v1215 = vpop.permute.xlu0 %1214
  %1216 = vrot.lane.b32.xlu0 %v1203, 39
  %v1217 = vpop.permute.xlu0 %1216
  %1218 = vrot.lane.b32.xlu0 %v1204, 39
  %v1219 = vpop.permute.xlu0 %1218
  %v1220 = vrot.slane %v1211, 4
  %v1221 = vrot.slane %v1213, 4
  %v1222 = vrot.slane %v1215, 4
  %v1223 = vrot.slane %v1217, 4
  %v1224 = vrot.slane %v1219, 4
  %v1225 = vsel %vm48, %v1220, %v1221
  %vm1226 = vcmask 318464
  %v1227 = vsel %vm1226, %v1211, %v1225
  %v1228 = vsel %vm48, %v1221, %v1222
  %v1229 = vsel %vm1226, %v1213, %v1228
  %v1230 = vsel %vm48, %v1222, %v1223
  %v1231 = vsel %vm1226, %v1215, %v1230
  %v1232 = vsel %vm48, %v1223, %v1224
  %v1233 = vsel %vm1226, %v1217, %v1232
  %1238 = vst [vmem:[#allocation2 + $0x3a0] sm:$0xff] %v1227
  %1239 = vst [vmem:[#allocation2 + $0x3a8] sm:$0xff] %v1229
  %1240 = vst [vmem:[#allocation2 + $0x3b0] sm:$0xff] %v1231
  %1241 = vst [vmem:[#allocation2 + $0x3b8] sm:$0xff] %v1233
  %v1242 = vld [vmem:[%s0] sm:$0xff]
  %v1243 = vld [vmem:[%s0 + $0x8] sm:$0xff]
  %v1244 = vld [vmem:[%s0 + $0x10] sm:$0xff]
  %v1245 = vld [vmem:[%s0 + $0x18] sm:$0xff]
  %v1246 = vld [vmem:[%s0 + $0x20] sm:$0xf]
  %1252 = vrot.lane.b32.xlu0 %v1242, 38
  %v1253 = vpop.permute.xlu0 %1252
  %1254 = vrot.lane.b32.xlu0 %v1243, 38
  %v1255 = vpop.permute.xlu0 %1254
  %1256 = vrot.lane.b32.xlu0 %v1244, 38
  %v1257 = vpop.permute.xlu0 %1256
  %1258 = vrot.lane.b32.xlu0 %v1245, 38
  %v1259 = vpop.permute.xlu0 %1258
  %1260 = vrot.lane.b32.xlu0 %v1246, 38
  %v1261 = vpop.permute.xlu0 %1260
  %v1262 = vrot.slane %v1253, 4
  %v1263 = vrot.slane %v1255, 4
  %v1264 = vrot.slane %v1257, 4
  %v1265 = vrot.slane %v1259, 4
  %v1266 = vrot.slane %v1261, 4
  %v1267 = vsel %vm48, %v1262, %v1263
  %vm1268 = vcmask 310272
  %v1269 = vsel %vm1268, %v1253, %v1267
  %v1270 = vsel %vm48, %v1263, %v1264
  %v1271 = vsel %vm1268, %v1255, %v1270
  %v1272 = vsel %vm48, %v1264, %v1265
  %v1273 = vsel %vm1268, %v1257, %v1272
  %v1274 = vsel %vm48, %v1265, %v1266
  %v1275 = vsel %vm1268, %v1259, %v1274
  %1280 = vst [vmem:[#allocation2 + $0x3c0] sm:$0xff] %v1269
  %1281 = vst [vmem:[#allocation2 + $0x3c8] sm:$0xff] %v1271
  %1282 = vst [vmem:[#allocation2 + $0x3d0] sm:$0xff] %v1273
  %1283 = vst [vmem:[#allocation2 + $0x3d8] sm:$0xff] %v1275
  %v1284 = vld [vmem:[%s0] sm:$0xff]
  %v1285 = vld [vmem:[%s0 + $0x8] sm:$0xff]
  %v1286 = vld [vmem:[%s0 + $0x10] sm:$0xff]
  %v1287 = vld [vmem:[%s0 + $0x18] sm:$0xff]
  %v1288 = vld [vmem:[%s0 + $0x20] sm:$0xf]
  %1294 = vrot.lane.b32.xlu0 %v1284, 37
  %v1295 = vpop.permute.xlu0 %1294
  %1296 = vrot.lane.b32.xlu0 %v1285, 37
  %v1297 = vpop.permute.xlu0 %1296
  %1298 = vrot.lane.b32.xlu0 %v1286, 37
  %v1299 = vpop.permute.xlu0 %1298
  %1300 = vrot.lane.b32.xlu0 %v1287, 37
  %v1301 = vpop.permute.xlu0 %1300
  %1302 = vrot.lane.b32.xlu0 %v1288, 37
  %v1303 = vpop.permute.xlu0 %1302
  %v1304 = vrot.slane %v1295, 4
  %v1305 = vrot.slane %v1297, 4
  %v1306 = vrot.slane %v1299, 4
  %v1307 = vrot.slane %v1301, 4
  %v1308 = vrot.slane %v1303, 4
  %v1309 = vsel %vm48, %v1304, %v1305
  %vm1310 = vcmask 302080
  %v1311 = vsel %vm1310, %v1295, %v1309
  %v1312 = vsel %vm48, %v1305, %v1306
  %v1313 = vsel %vm1310, %v1297, %v1312
  %v1314 = vsel %vm48, %v1306, %v1307
  %v1315 = vsel %vm1310, %v1299, %v1314
  %v1316 = vsel %vm48, %v1307, %v1308
  %v1317 = vsel %vm1310, %v1301, %v1316
  %1322 = vst [vmem:[#allocation2 + $0x3e0] sm:$0xff] %v1311
  %1323 = vst [vmem:[#allocation2 + $0x3e8] sm:$0xff] %v1313
  %1324 = vst [vmem:[#allocation2 + $0x3f0] sm:$0xff] %v1315
  %1325 = vst [vmem:[#allocation2 + $0x3f8] sm:$0xff] %v1317
  %v1326 = vld [vmem:[%s0] sm:$0xff]
  %v1327 = vld [vmem:[%s0 + $0x8] sm:$0xff]
  %v1328 = vld [vmem:[%s0 + $0x10] sm:$0xff]
  %v1329 = vld [vmem:[%s0 + $0x18] sm:$0xff]
  %v1330 = vld [vmem:[%s0 + $0x20] sm:$0xf]
  %1336 = vrot.lane.b32.xlu0 %v1326, 36
  %v1337 = vpop.permute.xlu0 %1336
  %1338 = vrot.lane.b32.xlu0 %v1327, 36
  %v1339 = vpop.permute.xlu0 %1338
  %1340 = vrot.lane.b32.xlu0 %v1328, 36
  %v1341 = vpop.permute.xlu0 %1340
  %1342 = vrot.lane.b32.xlu0 %v1329, 36
  %v1343 = vpop.permute.xlu0 %1342
  %1344 = vrot.lane.b32.xlu0 %v1330, 36
  %v1345 = vpop.permute.xlu0 %1344
  %v1346 = vrot.slane %v1337, 4
  %v1347 = vrot.slane %v1339, 4
  %v1348 = vrot.slane %v1341, 4
  %v1349 = vrot.slane %v1343, 4
  %v1350 = vrot.slane %v1345, 4
  %v1351 = vsel %vm48, %v1346, %v1347
  %vm1352 = vcmask 293888
  %v1353 = vsel %vm1352, %v1337, %v1351
  %v1354 = vsel %vm48, %v1347, %v1348
  %v1355 = vsel %vm1352, %v1339, %v1354
  %v1356 = vsel %vm48, %v1348, %v1349
  %v1357 = vsel %vm1352, %v1341, %v1356
  %v1358 = vsel %vm48, %v1349, %v1350
  %v1359 = vsel %vm1352, %v1343, %v1358
  %1364 = vst [vmem:[#allocation2 + $0x400] sm:$0xff] %v1353
  %1365 = vst [vmem:[#allocation2 + $0x408] sm:$0xff] %v1355
  %1366 = vst [vmem:[#allocation2 + $0x410] sm:$0xff] %v1357
  %1367 = vst [vmem:[#allocation2 + $0x418] sm:$0xff] %v1359
  %v1368 = vld [vmem:[%s0] sm:$0xff]
  %v1369 = vld [vmem:[%s0 + $0x8] sm:$0xff]
  %v1370 = vld [vmem:[%s0 + $0x10] sm:$0xff]
  %v1371 = vld [vmem:[%s0 + $0x18] sm:$0xff]
  %v1372 = vld [vmem:[%s0 + $0x20] sm:$0xf]
  %1378 = vrot.lane.b32.xlu0 %v1368, 35
  %v1379 = vpop.permute.xlu0 %1378
  %1380 = vrot.lane.b32.xlu0 %v1369, 35
  %v1381 = vpop.permute.xlu0 %1380
  %1382 = vrot.lane.b32.xlu0 %v1370, 35
  %v1383 = vpop.permute.xlu0 %1382
  %1384 = vrot.lane.b32.xlu0 %v1371, 35
  %v1385 = vpop.permute.xlu0 %1384
  %1386 = vrot.lane.b32.xlu0 %v1372, 35
  %v1387 = vpop.permute.xlu0 %1386
  %v1388 = vrot.slane %v1379, 4
  %v1389 = vrot.slane %v1381, 4
  %v1390 = vrot.slane %v1383, 4
  %v1391 = vrot.slane %v1385, 4
  %v1392 = vrot.slane %v1387, 4
  %v1393 = vsel %vm48, %v1388, %v1389
  %vm1394 = vcmask 285696
  %v1395 = vsel %vm1394, %v1379, %v1393
  %v1396 = vsel %vm48, %v1389, %v1390
  %v1397 = vsel %vm1394, %v1381, %v1396
  %v1398 = vsel %vm48, %v1390, %v1391
  %v1399 = vsel %vm1394, %v1383, %v1398
  %v1400 = vsel %vm48, %v1391, %v1392
  %v1401 = vsel %vm1394, %v1385, %v1400
  %1406 = vst [vmem:[#allocation2 + $0x420] sm:$0xff] %v1395
  %1407 = vst [vmem:[#allocation2 + $0x428] sm:$0xff] %v1397
  %1408 = vst [vmem:[#allocation2 + $0x430] sm:$0xff] %v1399
  %1409 = vst [vmem:[#allocation2 + $0x438] sm:$0xff] %v1401
  %v1410 = vld [vmem:[%s0] sm:$0xff]
  %v1411 = vld [vmem:[%s0 + $0x8] sm:$0xff]
  %v1412 = vld [vmem:[%s0 + $0x10] sm:$0xff]
  %v1413 = vld [vmem:[%s0 + $0x18] sm:$0xff]
  %v1414 = vld [vmem:[%s0 + $0x20] sm:$0xf]
  %1420 = vrot.lane.b32.xlu0 %v1410, 34
  %v1421 = vpop.permute.xlu0 %1420
  %1422 = vrot.lane.b32.xlu0 %v1411, 34
  %v1423 = vpop.permute.xlu0 %1422
  %1424 = vrot.lane.b32.xlu0 %v1412, 34
  %v1425 = vpop.permute.xlu0 %1424
  %1426 = vrot.lane.b32.xlu0 %v1413, 34
  %v1427 = vpop.permute.xlu0 %1426
  %1428 = vrot.lane.b32.xlu0 %v1414, 34
  %v1429 = vpop.permute.xlu0 %1428
  %v1430 = vrot.slane %v1421, 4
  %v1431 = vrot.slane %v1423, 4
  %v1432 = vrot.slane %v1425, 4
  %v1433 = vrot.slane %v1427, 4
  %v1434 = vrot.slane %v1429, 4
  %v1435 = vsel %vm48, %v1430, %v1431
  %vm1436 = vcmask 277504
  %v1437 = vsel %vm1436, %v1421, %v1435
  %v1438 = vsel %vm48, %v1431, %v1432
  %v1439 = vsel %vm1436, %v1423, %v1438
  %v1440 = vsel %vm48, %v1432, %v1433
  %v1441 = vsel %vm1436, %v1425, %v1440
  %v1442 = vsel %vm48, %v1433, %v1434
  %v1443 = vsel %vm1436, %v1427, %v1442
  %1448 = vst [vmem:[#allocation2 + $0x440] sm:$0xff] %v1437
  %1449 = vst [vmem:[#allocation2 + $0x448] sm:$0xff] %v1439
  %1450 = vst [vmem:[#allocation2 + $0x450] sm:$0xff] %v1441
  %1451 = vst [vmem:[#allocation2 + $0x458] sm:$0xff] %v1443
  %v1452 = vld [vmem:[%s0] sm:$0xff]
  %v1453 = vld [vmem:[%s0 + $0x8] sm:$0xff]
  %v1454 = vld [vmem:[%s0 + $0x10] sm:$0xff]
  %v1455 = vld [vmem:[%s0 + $0x18] sm:$0xff]
  %v1456 = vld [vmem:[%s0 + $0x20] sm:$0xf]
  %1462 = vrot.lane.b32.xlu0 %v1452, 18
  %v1463 = vpop.permute.xlu0 %1462
  %1464 = vrot.lane.b32.xlu0 %v1453, 18
  %v1465 = vpop.permute.xlu0 %1464
  %1466 = vrot.lane.b32.xlu0 %v1454, 18
  %v1467 = vpop.permute.xlu0 %1466
  %1468 = vrot.lane.b32.xlu0 %v1455, 18
  %v1469 = vpop.permute.xlu0 %1468
  %1470 = vrot.lane.b32.xlu0 %v1456, 18
  %v1471 = vpop.permute.xlu0 %1470
  %v1472 = vrot.slane %v1463, 4
  %v1473 = vrot.slane %v1465, 4
  %v1474 = vrot.slane %v1467, 4
  %v1475 = vrot.slane %v1469, 4
  %v1476 = vrot.slane %v1471, 4
  %v1477 = vsel %vm48, %v1472, %v1473
  %vm1478 = vcmask 146432
  %v1479 = vsel %vm1478, %v1463, %v1477
  %v1480 = vsel %vm48, %v1473, %v1474
  %v1481 = vsel %vm1478, %v1465, %v1480
  %v1482 = vsel %vm48, %v1474, %v1475
  %v1483 = vsel %vm1478, %v1467, %v1482
  %v1484 = vsel %vm48, %v1475, %v1476
  %v1485 = vsel %vm1478, %v1469, %v1484
  %1490 = vst [vmem:[#allocation2 + $0x460] sm:$0xff] %v1479
  %1491 = vst [vmem:[#allocation2 + $0x468] sm:$0xff] %v1481
  %1492 = vst [vmem:[#allocation2 + $0x470] sm:$0xff] %v1483
  %1493 = vst [vmem:[#allocation2 + $0x478] sm:$0xff] %v1485
  %v1494 = vld [vmem:[%s0] sm:$0xff]
  %v1495 = vld [vmem:[%s0 + $0x8] sm:$0xff]
  %v1496 = vld [vmem:[%s0 + $0x10] sm:$0xff]
  %v1497 = vld [vmem:[%s0 + $0x18] sm:$0xff]
  %v1498 = vld [vmem:[%s0 + $0x20] sm:$0xf]
  %1504 = vrot.lane.b32.xlu0 %v1494, 17
  %v1505 = vpop.permute.xlu0 %1504
  %1506 = vrot.lane.b32.xlu0 %v1495, 17
  %v1507 = vpop.permute.xlu0 %1506
  %1508 = vrot.lane.b32.xlu0 %v1496, 17
  %v1509 = vpop.permute.xlu0 %1508
  %1510 = vrot.lane.b32.xlu0 %v1497, 17
  %v1511 = vpop.permute.xlu0 %1510
  %1512 = vrot.lane.b32.xlu0 %v1498, 17
  %v1513 = vpop.permute.xlu0 %1512
  %v1514 = vrot.slane %v1505, 4
  %v1515 = vrot.slane %v1507, 4
  %v1516 = vrot.slane %v1509, 4
  %v1517 = vrot.slane %v1511, 4
  %v1518 = vrot.slane %v1513, 4
  %v1519 = vsel %vm48, %v1514, %v1515
  %vm1520 = vcmask 138240
  %v1521 = vsel %vm1520, %v1505, %v1519
  %v1522 = vsel %vm48, %v1515, %v1516
  %v1523 = vsel %vm1520, %v1507, %v1522
  %v1524 = vsel %vm48, %v1516, %v1517
  %v1525 = vsel %vm1520, %v1509, %v1524
  %v1526 = vsel %vm48, %v1517, %v1518
  %v1527 = vsel %vm1520, %v1511, %v1526
  %1532 = vst [vmem:[#allocation2 + $0x480] sm:$0xff] %v1521
  %1533 = vst [vmem:[#allocation2 + $0x488] sm:$0xff] %v1523
  %1534 = vst [vmem:[#allocation2 + $0x490] sm:$0xff] %v1525
  %1535 = vst [vmem:[#allocation2 + $0x498] sm:$0xff] %v1527
  %v1536 = vld [vmem:[%s0] sm:$0xff]
  %v1537 = vld [vmem:[%s0 + $0x8] sm:$0xff]
  %v1538 = vld [vmem:[%s0 + $0x10] sm:$0xff]
  %v1539 = vld [vmem:[%s0 + $0x18] sm:$0xff]
  %v1540 = vld [vmem:[%s0 + $0x20] sm:$0xf]
  %1546 = vrot.lane.b32.xlu0 %v1536, 16
  %v1547 = vpop.permute.xlu0 %1546
  %1548 = vrot.lane.b32.xlu0 %v1537, 16
  %v1549 = vpop.permute.xlu0 %1548
  %1550 = vrot.lane.b32.xlu0 %v1538, 16
  %v1551 = vpop.permute.xlu0 %1550
  %1552 = vrot.lane.b32.xlu0 %v1539, 16
  %v1553 = vpop.permute.xlu0 %1552
  %1554 = vrot.lane.b32.xlu0 %v1540, 16
  %v1555 = vpop.permute.xlu0 %1554
  %v1556 = vrot.slane %v1547, 4
  %v1557 = vrot.slane %v1549, 4
  %v1558 = vrot.slane %v1551, 4
  %v1559 = vrot.slane %v1553, 4
  %v1560 = vrot.slane %v1555, 4
  %v1561 = vsel %vm48, %v1556, %v1557
  %vm1562 = vcmask 130048
  %v1563 = vsel %vm1562, %v1547, %v1561
  %v1564 = vsel %vm48, %v1557, %v1558
  %v1565 = vsel %vm1562, %v1549, %v1564
  %v1566 = vsel %vm48, %v1558, %v1559
  %v1567 = vsel %vm1562, %v1551, %v1566
  %v1568 = vsel %vm48, %v1559, %v1560
  %v1569 = vsel %vm1562, %v1553, %v1568
  %1574 = vst [vmem:[#allocation2 + $0x4a0] sm:$0xff] %v1563
  %1575 = vst [vmem:[#allocation2 + $0x4a8] sm:$0xff] %v1565
  %1576 = vst [vmem:[#allocation2 + $0x4b0] sm:$0xff] %v1567
  %1577 = vst [vmem:[#allocation2 + $0x4b8] sm:$0xff] %v1569
  %v1578 = vld [vmem:[%s0] sm:$0xff]
  %v1579 = vld [vmem:[%s0 + $0x8] sm:$0xff]
  %v1580 = vld [vmem:[%s0 + $0x10] sm:$0xff]
  %v1581 = vld [vmem:[%s0 + $0x18] sm:$0xff]
  %v1582 = vld [vmem:[%s0 + $0x20] sm:$0xf]
  %1588 = vrot.lane.b32.xlu0 %v1578, 15
  %v1589 = vpop.permute.xlu0 %1588
  %1590 = vrot.lane.b32.xlu0 %v1579, 15
  %v1591 = vpop.permute.xlu0 %1590
  %1592 = vrot.lane.b32.xlu0 %v1580, 15
  %v1593 = vpop.permute.xlu0 %1592
  %1594 = vrot.lane.b32.xlu0 %v1581, 15
  %v1595 = vpop.permute.xlu0 %1594
  %1596 = vrot.lane.b32.xlu0 %v1582, 15
  %v1597 = vpop.permute.xlu0 %1596
  %v1598 = vrot.slane %v1589, 4
  %v1599 = vrot.slane %v1591, 4
  %v1600 = vrot.slane %v1593, 4
  %v1601 = vrot.slane %v1595, 4
  %v1602 = vrot.slane %v1597, 4
  %v1603 = vsel %vm48, %v1598, %v1599
  %vm1604 = vcmask 121856
  %v1605 = vsel %vm1604, %v1589, %v1603
  %v1606 = vsel %vm48, %v1599, %v1600
  %v1607 = vsel %vm1604, %v1591, %v1606
  %v1608 = vsel %vm48, %v1600, %v1601
  %v1609 = vsel %vm1604, %v1593, %v1608
  %v1610 = vsel %vm48, %v1601, %v1602
  %v1611 = vsel %vm1604, %v1595, %v1610
  %1616 = vst [vmem:[#allocation2 + $0x4c0] sm:$0xff] %v1605
  %1617 = vst [vmem:[#allocation2 + $0x4c8] sm:$0xff] %v1607
  %1618 = vst [vmem:[#allocation2 + $0x4d0] sm:$0xff] %v1609
  %1619 = vst [vmem:[#allocation2 + $0x4d8] sm:$0xff] %v1611
  %v1620 = vld [vmem:[%s0] sm:$0xff]
  %v1621 = vld [vmem:[%s0 + $0x8] sm:$0xff]
  %v1622 = vld [vmem:[%s0 + $0x10] sm:$0xff]
  %v1623 = vld [vmem:[%s0 + $0x18] sm:$0xff]
  %v1624 = vld [vmem:[%s0 + $0x20] sm:$0xf]
  %1630 = vrot.lane.b32.xlu0 %v1620, 14
  %v1631 = vpop.permute.xlu0 %1630
  %1632 = vrot.lane.b32.xlu0 %v1621, 14
  %v1633 = vpop.permute.xlu0 %1632
  %1634 = vrot.lane.b32.xlu0 %v1622, 14
  %v1635 = vpop.permute.xlu0 %1634
  %1636 = vrot.lane.b32.xlu0 %v1623, 14
  %v1637 = vpop.permute.xlu0 %1636
  %1638 = vrot.lane.b32.xlu0 %v1624, 14
  %v1639 = vpop.permute.xlu0 %1638
  %v1640 = vrot.slane %v1631, 4
  %v1641 = vrot.slane %v1633, 4
  %v1642 = vrot.slane %v1635, 4
  %v1643 = vrot.slane %v1637, 4
  %v1644 = vrot.slane %v1639, 4
  %v1645 = vsel %vm48, %v1640, %v1641
  %vm1646 = vcmask 113664
  %v1647 = vsel %vm1646, %v1631, %v1645
  %v1648 = vsel %vm48, %v1641, %v1642
  %v1649 = vsel %vm1646, %v1633, %v1648
  %v1650 = vsel %vm48, %v1642, %v1643
  %v1651 = vsel %vm1646, %v1635, %v1650
  %v1652 = vsel %vm48, %v1643, %v1644
  %v1653 = vsel %vm1646, %v1637, %v1652
  %1658 = vst [vmem:[#allocation2 + $0x4e0] sm:$0xff] %v1647
  %1659 = vst [vmem:[#allocation2 + $0x4e8] sm:$0xff] %v1649
  %1660 = vst [vmem:[#allocation2 + $0x4f0] sm:$0xff] %v1651
  %1661 = vst [vmem:[#allocation2 + $0x4f8] sm:$0xff] %v1653
  %v1662 = vld [vmem:[%s0] sm:$0xff]
  %v1663 = vld [vmem:[%s0 + $0x8] sm:$0xff]
  %v1664 = vld [vmem:[%s0 + $0x10] sm:$0xff]
  %v1665 = vld [vmem:[%s0 + $0x18] sm:$0xff]
  %v1666 = vld [vmem:[%s0 + $0x20] sm:$0xf]
  %1672 = vrot.lane.b32.xlu0 %v1662, 13
  %v1673 = vpop.permute.xlu0 %1672
  %1674 = vrot.lane.b32.xlu0 %v1663, 13
  %v1675 = vpop.permute.xlu0 %1674
  %1676 = vrot.lane.b32.xlu0 %v1664, 13
  %v1677 = vpop.permute.xlu0 %1676
  %1678 = vrot.lane.b32.xlu0 %v1665, 13
  %v1679 = vpop.permute.xlu0 %1678
  %1680 = vrot.lane.b32.xlu0 %v1666, 13
  %v1681 = vpop.permute.xlu0 %1680
  %v1682 = vrot.slane %v1673, 4
  %v1683 = vrot.slane %v1675, 4
  %v1684 = vrot.slane %v1677, 4
  %v1685 = vrot.slane %v1679, 4
  %v1686 = vrot.slane %v1681, 4
  %v1687 = vsel %vm48, %v1682, %v1683
  %vm1688 = vcmask 105472
  %v1689 = vsel %vm1688, %v1673, %v1687
  %v1690 = vsel %vm48, %v1683, %v1684
  %v1691 = vsel %vm1688, %v1675, %v1690
  %v1692 = vsel %vm48, %v1684, %v1685
  %v1693 = vsel %vm1688, %v1677, %v1692
  %v1694 = vsel %vm48, %v1685, %v1686
  %v1695 = vsel %vm1688, %v1679, %v1694
  %1700 = vst [vmem:[#allocation2 + $0x500] sm:$0xff] %v1689
  %1701 = vst [vmem:[#allocation2 + $0x508] sm:$0xff] %v1691
  %1702 = vst [vmem:[#allocation2 + $0x510] sm:$0xff] %v1693
  %1703 = vst [vmem:[#allocation2 + $0x518] sm:$0xff] %v1695
  %v1704 = vld [vmem:[%s0] sm:$0xff]
  %v1705 = vld [vmem:[%s0 + $0x8] sm:$0xff]
  %v1706 = vld [vmem:[%s0 + $0x10] sm:$0xff]
  %v1707 = vld [vmem:[%s0 + $0x18] sm:$0xff]
  %v1708 = vld [vmem:[%s0 + $0x20] sm:$0xf]
  %1714 = vrot.lane.b32.xlu0 %v1704, 12
  %v1715 = vpop.permute.xlu0 %1714
  %1716 = vrot.lane.b32.xlu0 %v1705, 12
  %v1717 = vpop.permute.xlu0 %1716
  %1718 = vrot.lane.b32.xlu0 %v1706, 12
  %v1719 = vpop.permute.xlu0 %1718
  %1720 = vrot.lane.b32.xlu0 %v1707, 12
  %v1721 = vpop.permute.xlu0 %1720
  %1722 = vrot.lane.b32.xlu0 %v1708, 12
  %v1723 = vpop.permute.xlu0 %1722
  %v1724 = vrot.slane %v1715, 4
  %v1725 = vrot.slane %v1717, 4
  %v1726 = vrot.slane %v1719, 4
  %v1727 = vrot.slane %v1721, 4
  %v1728 = vrot.slane %v1723, 4
  %v1729 = vsel %vm48, %v1724, %v1725
  %vm1730 = vcmask 97280
  %v1731 = vsel %vm1730, %v1715, %v1729
  %v1732 = vsel %vm48, %v1725, %v1726
  %v1733 = vsel %vm1730, %v1717, %v1732
  %v1734 = vsel %vm48, %v1726, %v1727
  %v1735 = vsel %vm1730, %v1719, %v1734
  %v1736 = vsel %vm48, %v1727, %v1728
  %v1737 = vsel %vm1730, %v1721, %v1736
  %1742 = vst [vmem:[#allocation2 + $0x520] sm:$0xff] %v1731
  %1743 = vst [vmem:[#allocation2 + $0x528] sm:$0xff] %v1733
  %1744 = vst [vmem:[#allocation2 + $0x530] sm:$0xff] %v1735
  %1745 = vst [vmem:[#allocation2 + $0x538] sm:$0xff] %v1737
  %v1746 = vld [vmem:[%s0 + $0x4] sm:$0xff]
  %v1747 = vld [vmem:[%s0 + $0xc] sm:$0xff]
  %v1748 = vld [vmem:[%s0 + $0x14] sm:$0xff]
  %v1749 = vld [vmem:[%s0 + $0x1c] sm:$0xff]
  %v1750 = vld [vmem:[%s0 + $0x24] sm:$0xf]
  %1756 = vrot.lane.b32.xlu0 %v1746, 124
  %v1757 = vpop.permute.xlu0 %1756
  %1758 = vrot.lane.b32.xlu0 %v1747, 124
  %v1759 = vpop.permute.xlu0 %1758
  %1760 = vrot.lane.b32.xlu0 %v1748, 124
  %v1761 = vpop.permute.xlu0 %1760
  %1762 = vrot.lane.b32.xlu0 %v1749, 124
  %v1763 = vpop.permute.xlu0 %1762
  %1764 = vrot.lane.b32.xlu0 %v1750, 124
  %v1765 = vpop.permute.xlu0 %1764
  %v1766 = vrot.slane %v1757, 4
  %v1767 = vrot.slane %v1759, 4
  %v1768 = vrot.slane %v1761, 4
  %v1769 = vrot.slane %v1763, 4
  %v1770 = vrot.slane %v1765, 4
  %v1771 = vsel %vm48, %v1766, %v1767
  %v1772 = vsel %vm176, %v1757, %v1771
  %v1773 = vsel %vm48, %v1767, %v1768
  %v1774 = vsel %vm176, %v1759, %v1773
  %v1775 = vsel %vm48, %v1768, %v1769
  %v1776 = vsel %vm176, %v1761, %v1775
  %v1777 = vsel %vm48, %v1769, %v1770
  %v1778 = vsel %vm176, %v1763, %v1777
  %1783 = vst [vmem:[#allocation2 + $0x540] sm:$0xff] %v1772
  %1784 = vst [vmem:[#allocation2 + $0x548] sm:$0xff] %v1774
  %1785 = vst [vmem:[#allocation2 + $0x550] sm:$0xff] %v1776
  %1786 = vst [vmem:[#allocation2 + $0x558] sm:$0xff] %v1778
  %v1787 = vld [vmem:[%s0 + $0x4] sm:$0xff]
  %v1788 = vld [vmem:[%s0 + $0xc] sm:$0xff]
  %v1789 = vld [vmem:[%s0 + $0x14] sm:$0xff]
  %v1790 = vld [vmem:[%s0 + $0x1c] sm:$0xff]
  %v1791 = vld [vmem:[%s0 + $0x24] sm:$0xf]
  %1797 = vrot.lane.b32.xlu0 %v1787, 123
  %v1798 = vpop.permute.xlu0 %1797
  %1799 = vrot.lane.b32.xlu0 %v1788, 123
  %v1800 = vpop.permute.xlu0 %1799
  %1801 = vrot.lane.b32.xlu0 %v1789, 123
  %v1802 = vpop.permute.xlu0 %1801
  %1803 = vrot.lane.b32.xlu0 %v1790, 123
  %v1804 = vpop.permute.xlu0 %1803
  %1805 = vrot.lane.b32.xlu0 %v1791, 123
  %v1806 = vpop.permute.xlu0 %1805
  %v1807 = vrot.slane %v1798, 4
  %v1808 = vrot.slane %v1800, 4
  %v1809 = vrot.slane %v1802, 4
  %v1810 = vrot.slane %v1804, 4
  %v1811 = vrot.slane %v1806, 4
  %v1812 = vsel %vm48, %v1807, %v1808
  %v1813 = vsel %vm218, %v1798, %v1812
  %v1814 = vsel %vm48, %v1808, %v1809
  %v1815 = vsel %vm218, %v1800, %v1814
  %v1816 = vsel %vm48, %v1809, %v1810
  %v1817 = vsel %vm218, %v1802, %v1816
  %v1818 = vsel %vm48, %v1810, %v1811
  %v1819 = vsel %vm218, %v1804, %v1818
  %1824 = vst [vmem:[#allocation2 + $0x560] sm:$0xff] %v1813
  %1825 = vst [vmem:[#allocation2 + $0x568] sm:$0xff] %v1815
  %1826 = vst [vmem:[#allocation2 + $0x570] sm:$0xff] %v1817
  %1827 = vst [vmem:[#allocation2 + $0x578] sm:$0xff] %v1819
  %v1828 = vld [vmem:[%s0 + $0x4] sm:$0xff]
  %v1829 = vld [vmem:[%s0 + $0xc] sm:$0xff]
  %v1830 = vld [vmem:[%s0 + $0x14] sm:$0xff]
  %v1831 = vld [vmem:[%s0 + $0x1c] sm:$0xff]
  %v1832 = vld [vmem:[%s0 + $0x24] sm:$0xf]
  %1838 = vrot.lane.b32.xlu0 %v1828, 122
  %v1839 = vpop.permute.xlu0 %1838
  %1840 = vrot.lane.b32.xlu0 %v1829, 122
  %v1841 = vpop.permute.xlu0 %1840
  %1842 = vrot.lane.b32.xlu0 %v1830, 122
  %v1843 = vpop.permute.xlu0 %1842
  %1844 = vrot.lane.b32.xlu0 %v1831, 122
  %v1845 = vpop.permute.xlu0 %1844
  %1846 = vrot.lane.b32.xlu0 %v1832, 122
  %v1847 = vpop.permute.xlu0 %1846
  %v1848 = vrot.slane %v1839, 4
  %v1849 = vrot.slane %v1841, 4
  %v1850 = vrot.slane %v1843, 4
  %v1851 = vrot.slane %v1845, 4
  %v1852 = vrot.slane %v1847, 4
  %v1853 = vsel %vm48, %v1848, %v1849
  %v1854 = vsel %vm260, %v1839, %v1853
  %v1855 = vsel %vm48, %v1849, %v1850
  %v1856 = vsel %vm260, %v1841, %v1855
  %v1857 = vsel %vm48, %v1850, %v1851
  %v1858 = vsel %vm260, %v1843, %v1857
  %v1859 = vsel %vm48, %v1851, %v1852
  %v1860 = vsel %vm260, %v1845, %v1859
  %1865 = vst [vmem:[#allocation2 + $0x580] sm:$0xff] %v1854
  %1866 = vst [vmem:[#allocation2 + $0x588] sm:$0xff] %v1856
  %1867 = vst [vmem:[#allocation2 + $0x590] sm:$0xff] %v1858
  %1868 = vst [vmem:[#allocation2 + $0x598] sm:$0xff] %v1860
  %v1869 = vld [vmem:[%s0 + $0x4] sm:$0xff]
  %v1870 = vld [vmem:[%s0 + $0xc] sm:$0xff]
  %v1871 = vld [vmem:[%s0 + $0x14] sm:$0xff]
  %v1872 = vld [vmem:[%s0 + $0x1c] sm:$0xff]
  %v1873 = vld [vmem:[%s0 + $0x24] sm:$0xf]
  %1879 = vrot.lane.b32.xlu0 %v1869, 121
  %v1880 = vpop.permute.xlu0 %1879
  %1881 = vrot.lane.b32.xlu0 %v1870, 121
  %v1882 = vpop.permute.xlu0 %1881
  %1883 = vrot.lane.b32.xlu0 %v1871, 121
  %v1884 = vpop.permute.xlu0 %1883
  %1885 = vrot.lane.b32.xlu0 %v1872, 121
  %v1886 = vpop.permute.xlu0 %1885
  %1887 = vrot.lane.b32.xlu0 %v1873, 121
  %v1888 = vpop.permute.xlu0 %1887
  %v1889 = vrot.slane %v1880, 4
  %v1890 = vrot.slane %v1882, 4
  %v1891 = vrot.slane %v1884, 4
  %v1892 = vrot.slane %v1886, 4
  %v1893 = vrot.slane %v1888, 4
  %v1894 = vsel %vm48, %v1889, %v1890
  %vm1895 = vcmask 990208
  %v1896 = vsel %vm1895, %v1880, %v1894
  %v1897 = vsel %vm48, %v1890, %v1891
  %v1898 = vsel %vm1895, %v1882, %v1897
  %v1899 = vsel %vm48, %v1891, %v1892
  %v1900 = vsel %vm1895, %v1884, %v1899
  %v1901 = vsel %vm48, %v1892, %v1893
  %v1902 = vsel %vm1895, %v1886, %v1901
  %1907 = vst [vmem:[#allocation2 + $0x5a0] sm:$0xff] %v1896
  %1908 = vst [vmem:[#allocation2 + $0x5a8] sm:$0xff] %v1898
  %1909 = vst [vmem:[#allocation2 + $0x5b0] sm:$0xff] %v1900
  %1910 = vst [vmem:[#allocation2 + $0x5b8] sm:$0xff] %v1902
  %v1911 = vld [vmem:[%s0 + $0x4] sm:$0xff]
  %v1912 = vld [vmem:[%s0 + $0xc] sm:$0xff]
  %v1913 = vld [vmem:[%s0 + $0x14] sm:$0xff]
  %v1914 = vld [vmem:[%s0 + $0x1c] sm:$0xff]
  %v1915 = vld [vmem:[%s0 + $0x24] sm:$0xf]
  %1921 = vrot.lane.b32.xlu0 %v1911, 120
  %v1922 = vpop.permute.xlu0 %1921
  %1923 = vrot.lane.b32.xlu0 %v1912, 120
  %v1924 = vpop.permute.xlu0 %1923
  %1925 = vrot.lane.b32.xlu0 %v1913, 120
  %v1926 = vpop.permute.xlu0 %1925
  %1927 = vrot.lane.b32.xlu0 %v1914, 120
  %v1928 = vpop.permute.xlu0 %1927
  %1929 = vrot.lane.b32.xlu0 %v1915, 120
  %v1930 = vpop.permute.xlu0 %1929
  %v1931 = vrot.slane %v1922, 4
  %v1932 = vrot.slane %v1924, 4
  %v1933 = vrot.slane %v1926, 4
  %v1934 = vrot.slane %v1928, 4
  %v1935 = vrot.slane %v1930, 4
  %v1936 = vsel %vm48, %v1931, %v1932
  %vm1937 = vcmask 982016
  %v1938 = vsel %vm1937, %v1922, %v1936
  %v1939 = vsel %vm48, %v1932, %v1933
  %v1940 = vsel %vm1937, %v1924, %v1939
  %v1941 = vsel %vm48, %v1933, %v1934
  %v1942 = vsel %vm1937, %v1926, %v1941
  %v1943 = vsel %vm48, %v1934, %v1935
  %v1944 = vsel %vm1937, %v1928, %v1943
  %1949 = vst [vmem:[#allocation2 + $0x5c0] sm:$0xff] %v1938
  %1950 = vst [vmem:[#allocation2 + $0x5c8] sm:$0xff] %v1940
  %1951 = vst [vmem:[#allocation2 + $0x5d0] sm:$0xff] %v1942
  %1952 = vst [vmem:[#allocation2 + $0x5d8] sm:$0xff] %v1944
  %v1953 = vld [vmem:[%s0 + $0x4] sm:$0xff]
  %v1954 = vld [vmem:[%s0 + $0xc] sm:$0xff]
  %v1955 = vld [vmem:[%s0 + $0x14] sm:$0xff]
  %v1956 = vld [vmem:[%s0 + $0x1c] sm:$0xff]
  %v1957 = vld [vmem:[%s0 + $0x24] sm:$0xf]
  %1963 = vrot.lane.b32.xlu0 %v1953, 119
  %v1964 = vpop.permute.xlu0 %1963
  %1965 = vrot.lane.b32.xlu0 %v1954, 119
  %v1966 = vpop.permute.xlu0 %1965
  %1967 = vrot.lane.b32.xlu0 %v1955, 119
  %v1968 = vpop.permute.xlu0 %1967
  %1969 = vrot.lane.b32.xlu0 %v1956, 119
  %v1970 = vpop.permute.xlu0 %1969
  %1971 = vrot.lane.b32.xlu0 %v1957, 119
  %v1972 = vpop.permute.xlu0 %1971
  %v1973 = vrot.slane %v1964, 4
  %v1974 = vrot.slane %v1966, 4
  %v1975 = vrot.slane %v1968, 4
  %v1976 = vrot.slane %v1970, 4
  %v1977 = vrot.slane %v1972, 4
  %v1978 = vsel %vm48, %v1973, %v1974
  %vm1979 = vcmask 973824
  %v1980 = vsel %vm1979, %v1964, %v1978
  %v1981 = vsel %vm48, %v1974, %v1975
  %v1982 = vsel %vm1979, %v1966, %v1981
  %v1983 = vsel %vm48, %v1975, %v1976
  %v1984 = vsel %vm1979, %v1968, %v1983
  %v1985 = vsel %vm48, %v1976, %v1977
  %v1986 = vsel %vm1979, %v1970, %v1985
  %1991 = vst [vmem:[#allocation2 + $0x5e0] sm:$0xff] %v1980
  %1992 = vst [vmem:[#allocation2 + $0x5e8] sm:$0xff] %v1982
  %1993 = vst [vmem:[#allocation2 + $0x5f0] sm:$0xff] %v1984
  %1994 = vst [vmem:[#allocation2 + $0x5f8] sm:$0xff] %v1986
  %v1995 = vld [vmem:[%s0 + $0x4] sm:$0xff]
  %v1996 = vld [vmem:[%s0 + $0xc] sm:$0xff]
  %v1997 = vld [vmem:[%s0 + $0x14] sm:$0xff]
  %v1998 = vld [vmem:[%s0 + $0x1c] sm:$0xff]
  %v1999 = vld [vmem:[%s0 + $0x24] sm:$0xf]
  %2005 = vrot.lane.b32.xlu0 %v1995, 118
  %v2006 = vpop.permute.xlu0 %2005
  %2007 = vrot.lane.b32.xlu0 %v1996, 118
  %v2008 = vpop.permute.xlu0 %2007
  %2009 = vrot.lane.b32.xlu0 %v1997, 118
  %v2010 = vpop.permute.xlu0 %2009
  %2011 = vrot.lane.b32.xlu0 %v1998, 118
  %v2012 = vpop.permute.xlu0 %2011
  %2013 = vrot.lane.b32.xlu0 %v1999, 118
  %v2014 = vpop.permute.xlu0 %2013
  %v2015 = vrot.slane %v2006, 4
  %v2016 = vrot.slane %v2008, 4
  %v2017 = vrot.slane %v2010, 4
  %v2018 = vrot.slane %v2012, 4
  %v2019 = vrot.slane %v2014, 4
  %v2020 = vsel %vm48, %v2015, %v2016
  %vm2021 = vcmask 965632
  %v2022 = vsel %vm2021, %v2006, %v2020
  %v2023 = vsel %vm48, %v2016, %v2017
  %v2024 = vsel %vm2021, %v2008, %v2023
  %v2025 = vsel %vm48, %v2017, %v2018
  %v2026 = vsel %vm2021, %v2010, %v2025
  %v2027 = vsel %vm48, %v2018, %v2019
  %v2028 = vsel %vm2021, %v2012, %v2027
  %2033 = vst [vmem:[#allocation2 + $0x600] sm:$0xff] %v2022
  %2034 = vst [vmem:[#allocation2 + $0x608] sm:$0xff] %v2024
  %2035 = vst [vmem:[#allocation2 + $0x610] sm:$0xff] %v2026
  %2036 = vst [vmem:[#allocation2 + $0x618] sm:$0xff] %v2028
  %v2037 = vld [vmem:[%s1] sm:$0xff]
  %v2038 = vld [vmem:[%s1 + $0x8] sm:$0xff]
  %v2039 = vld [vmem:[#allocation2] sm:$0xff]
  %v2040 = vld [vmem:[#allocation2 + $0x8] sm:$0xff]
  %v2041 = vld [vmem:[#allocation2 + $0x10] sm:$0xff]
  %v2042 = vld [vmem:[#allocation2 + $0x18] sm:$0xff]
  %v2043 = vld [vmem:[#allocation2 + $0x20] sm:$0xff]
  %v2044 = vld [vmem:[#allocation2 + $0x28] sm:$0xff]
  %v2045 = vld [vmem:[#allocation2 + $0x30] sm:$0xff]
  %v2046 = vld [vmem:[#allocation2 + $0x38] sm:$0xff]
  %v2047 = vld [vmem:[#allocation2 + $0x40] sm:$0xff]
  %v2048 = vld [vmem:[#allocation2 + $0x48] sm:$0xff]
  %v2049 = vld [vmem:[#allocation2 + $0x50] sm:$0xff]
  %v2050 = vld [vmem:[#allocation2 + $0x58] sm:$0xff]
  %v2051 = vld [vmem:[#allocation2 + $0x60] sm:$0xff]
  %v2052 = vld [vmem:[#allocation2 + $0x68] sm:$0xff]
  %v2053 = vld [vmem:[#allocation2 + $0x70] sm:$0xff]
  %v2054 = vld [vmem:[#allocation2 + $0x78] sm:$0xff]
  %v2055 = vld [vmem:[#allocation2 + $0x80] sm:$0xff]
  %v2056 = vld [vmem:[#allocation2 + $0x88] sm:$0xff]
  %v2057 = vld [vmem:[#allocation2 + $0x90] sm:$0xff]
  %v2058 = vld [vmem:[#allocation2 + $0x98] sm:$0xff]
  %v2059 = vld [vmem:[#allocation2 + $0xa0] sm:$0xff]
  %v2060 = vld [vmem:[#allocation2 + $0xa8] sm:$0xff]
  %v2061 = vld [vmem:[#allocation2 + $0xb0] sm:$0xff]
  %v2062 = vld [vmem:[#allocation2 + $0xb8] sm:$0xff]
  %v2063 = vld [vmem:[#allocation2 + $0xc0] sm:$0xff]
  %v2064 = vld [vmem:[#allocation2 + $0xc8] sm:$0xff]
  %v2065 = vld [vmem:[#allocation2 + $0xd0] sm:$0xff]
  %v2066 = vld [vmem:[#allocation2 + $0xd8] sm:$0xff]
  %v2067 = vld [vmem:[#allocation2 + $0xe0] sm:$0xff]
  %v2068 = vld [vmem:[#allocation2 + $0xe8] sm:$0xff]
  %v2069 = vld [vmem:[#allocation2 + $0xf0] sm:$0xff]
  %v2070 = vld [vmem:[#allocation2 + $0xf8] sm:$0xff]
  %v2071 = vld [vmem:[#allocation2 + $0x100] sm:$0xff]
  %v2072 = vld [vmem:[#allocation2 + $0x108] sm:$0xff]
  %v2073 = vld [vmem:[#allocation2 + $0x110] sm:$0xff]
  %v2074 = vld [vmem:[#allocation2 + $0x118] sm:$0xff]
  %v2075 = vld [vmem:[#allocation2 + $0x120] sm:$0xff]
  %v2076 = vld [vmem:[#allocation2 + $0x128] sm:$0xff]
  %v2077 = vld [vmem:[#allocation2 + $0x130] sm:$0xff]
  %v2078 = vld [vmem:[#allocation2 + $0x138] sm:$0xff]
  %v2079 = vld [vmem:[#allocation2 + $0x140] sm:$0xff]
  %v2080 = vld [vmem:[#allocation2 + $0x148] sm:$0xff]
  %v2081 = vld [vmem:[#allocation2 + $0x150] sm:$0xff]
  %v2082 = vld [vmem:[#allocation2 + $0x158] sm:$0xff]
  %v2083 = vld [vmem:[#allocation2 + $0x160] sm:$0xff]
  %v2084 = vld [vmem:[#allocation2 + $0x168] sm:$0xff]
  %v2085 = vld [vmem:[#allocation2 + $0x170] sm:$0xff]
  %v2086 = vld [vmem:[#allocation2 + $0x178] sm:$0xff]
  %v2087 = vld [vmem:[#allocation2 + $0x180] sm:$0xff]
  %v2088 = vld [vmem:[#allocation2 + $0x188] sm:$0xff]
  %v2089 = vld [vmem:[#allocation2 + $0x190] sm:$0xff]
  %v2090 = vld [vmem:[#allocation2 + $0x198] sm:$0xff]
  %v2091 = vld [vmem:[#allocation2 + $0x1a0] sm:$0xff]
  %v2092 = vld [vmem:[#allocation2 + $0x1a8] sm:$0xff]
  %v2093 = vld [vmem:[#allocation2 + $0x1b0] sm:$0xff]
  %v2094 = vld [vmem:[#allocation2 + $0x1b8] sm:$0xff]
  %v2095 = vld [vmem:[#allocation2 + $0x1c0] sm:$0xff]
  %v2096 = vld [vmem:[#allocation2 + $0x1c8] sm:$0xff]
  %v2097 = vld [vmem:[#allocation2 + $0x1d0] sm:$0xff]
  %v2098 = vld [vmem:[#allocation2 + $0x1d8] sm:$0xff]
  %v2099 = vld [vmem:[#allocation2 + $0x1e0] sm:$0xff]
  %v2100 = vld [vmem:[#allocation2 + $0x1e8] sm:$0xff]
  %v2101 = vld [vmem:[#allocation2 + $0x1f0] sm:$0xff]
  %v2102 = vld [vmem:[#allocation2 + $0x1f8] sm:$0xff]
  %v2103 = vld [vmem:[#allocation2 + $0x200] sm:$0xff]
  %v2104 = vld [vmem:[#allocation2 + $0x208] sm:$0xff]
  %v2105 = vld [vmem:[#allocation2 + $0x210] sm:$0xff]
  %v2106 = vld [vmem:[#allocation2 + $0x218] sm:$0xff]
  %v2107 = vld [vmem:[#allocation2 + $0x220] sm:$0xff]
  %v2108 = vld [vmem:[#allocation2 + $0x228] sm:$0xff]
  %v2109 = vld [vmem:[#allocation2 + $0x230] sm:$0xff]
  %v2110 = vld [vmem:[#allocation2 + $0x238] sm:$0xff]
  %v2111 = vld [vmem:[#allocation2 + $0x240] sm:$0xff]
  %v2112 = vld [vmem:[#allocation2 + $0x248] sm:$0xff]
  %v2113 = vld [vmem:[#allocation2 + $0x250] sm:$0xff]
  %v2114 = vld [vmem:[#allocation2 + $0x258] sm:$0xff]
  %v2115 = vld [vmem:[#allocation2 + $0x260] sm:$0xff]
  %v2116 = vld [vmem:[#allocation2 + $0x268] sm:$0xff]
  %v2117 = vld [vmem:[#allocation2 + $0x270] sm:$0xff]
  %v2118 = vld [vmem:[#allocation2 + $0x278] sm:$0xff]
  %v2119 = vld [vmem:[#allocation2 + $0x280] sm:$0xff]
  %v2120 = vld [vmem:[#allocation2 + $0x288] sm:$0xff]
  %v2121 = vld [vmem:[#allocation2 + $0x290] sm:$0xff]
  %v2122 = vld [vmem:[#allocation2 + $0x298] sm:$0xff]
  %v2123 = vld [vmem:[#allocation2 + $0x2a0] sm:$0xff]
  %v2124 = vld [vmem:[#allocation2 + $0x2a8] sm:$0xff]
  %v2125 = vld [vmem:[#allocation2 + $0x2b0] sm:$0xff]
  %v2126 = vld [vmem:[#allocation2 + $0x2b8] sm:$0xff]
  %v2127 = vld [vmem:[#allocation2 + $0x2c0] sm:$0xff]
  %v2128 = vld [vmem:[#allocation2 + $0x2c8] sm:$0xff]
  %v2129 = vld [vmem:[#allocation2 + $0x2d0] sm:$0xff]
  %v2130 = vld [vmem:[#allocation2 + $0x2d8] sm:$0xff]
  %v2131 = vld [vmem:[#allocation2 + $0x2e0] sm:$0xff]
  %v2132 = vld [vmem:[#allocation2 + $0x2e8] sm:$0xff]
  %v2133 = vld [vmem:[#allocation2 + $0x2f0] sm:$0xff]
  %v2134 = vld [vmem:[#allocation2 + $0x2f8] sm:$0xff]
  %v2135 = vld [vmem:[#allocation2 + $0x300] sm:$0xff]
  %v2136 = vld [vmem:[#allocation2 + $0x308] sm:$0xff]
  %v2137 = vld [vmem:[#allocation2 + $0x310] sm:$0xff]
  %v2138 = vld [vmem:[#allocation2 + $0x318] sm:$0xff]
  %v2139 = vld [vmem:[#allocation2 + $0x320] sm:$0xff]
  %v2140 = vld [vmem:[#allocation2 + $0x328] sm:$0xff]
  %v2141 = vld [vmem:[#allocation2 + $0x330] sm:$0xff]
  %v2142 = vld [vmem:[#allocation2 + $0x338] sm:$0xff]
  %v2143 = vld [vmem:[#allocation2 + $0x340] sm:$0xff]
  %v2144 = vld [vmem:[#allocation2 + $0x348] sm:$0xff]
  %v2145 = vld [vmem:[#allocation2 + $0x350] sm:$0xff]
  %v2146 = vld [vmem:[#allocation2 + $0x358] sm:$0xff]
  %v2147 = vld [vmem:[#allocation2 + $0x360] sm:$0xff]
  %v2148 = vld [vmem:[#allocation2 + $0x368] sm:$0xff]
  %v2149 = vld [vmem:[#allocation2 + $0x370] sm:$0xff]
  %v2150 = vld [vmem:[#allocation2 + $0x378] sm:$0xff]
  %v2151 = vld [vmem:[#allocation2 + $0x380] sm:$0xff]
  %v2152 = vld [vmem:[#allocation2 + $0x388] sm:$0xff]
  %v2153 = vld [vmem:[#allocation2 + $0x390] sm:$0xff]
  %v2154 = vld [vmem:[#allocation2 + $0x398] sm:$0xff]
  %v2155 = vld [vmem:[#allocation2 + $0x3a0] sm:$0xff]
  %v2156 = vld [vmem:[#allocation2 + $0x3a8] sm:$0xff]
  %v2157 = vld [vmem:[#allocation2 + $0x3b0] sm:$0xff]
  %v2158 = vld [vmem:[#allocation2 + $0x3b8] sm:$0xff]
  %v2159 = vld [vmem:[#allocation2 + $0x3c0] sm:$0xff]
  %v2160 = vld [vmem:[#allocation2 + $0x3c8] sm:$0xff]
  %v2161 = vld [vmem:[#allocation2 + $0x3d0] sm:$0xff]
  %v2162 = vld [vmem:[#allocation2 + $0x3d8] sm:$0xff]
  %v2163 = vld [vmem:[#allocation2 + $0x3e0] sm:$0xff]
  %v2164 = vld [vmem:[#allocation2 + $0x3e8] sm:$0xff]
  %v2165 = vld [vmem:[#allocation2 + $0x3f0] sm:$0xff]
  %v2166 = vld [vmem:[#allocation2 + $0x3f8] sm:$0xff]
  %v2167 = vld [vmem:[#allocation2 + $0x400] sm:$0xff]
  %v2168 = vld [vmem:[#allocation2 + $0x408] sm:$0xff]
  %v2169 = vld [vmem:[#allocation2 + $0x410] sm:$0xff]
  %v2170 = vld [vmem:[#allocation2 + $0x418] sm:$0xff]
  %v2171 = vld [vmem:[#allocation2 + $0x420] sm:$0xff]
  %v2172 = vld [vmem:[#allocation2 + $0x428] sm:$0xff]
  %v2173 = vld [vmem:[#allocation2 + $0x430] sm:$0xff]
  %v2174 = vld [vmem:[#allocation2 + $0x438] sm:$0xff]
  %v2175 = vld [vmem:[#allocation2 + $0x440] sm:$0xff]
  %v2176 = vld [vmem:[#allocation2 + $0x448] sm:$0xff]
  %v2177 = vld [vmem:[#allocation2 + $0x450] sm:$0xff]
  %v2178 = vld [vmem:[#allocation2 + $0x458] sm:$0xff]
  %v2179 = vld [vmem:[#allocation2 + $0x460] sm:$0xff]
  %v2180 = vld [vmem:[#allocation2 + $0x468] sm:$0xff]
  %v2181 = vld [vmem:[#allocation2 + $0x470] sm:$0xff]
  %v2182 = vld [vmem:[#allocation2 + $0x478] sm:$0xff]
  %v2183 = vld [vmem:[#allocation2 + $0x480] sm:$0xff]
  %v2184 = vld [vmem:[#allocation2 + $0x488] sm:$0xff]
  %v2185 = vld [vmem:[#allocation2 + $0x490] sm:$0xff]
  %v2186 = vld [vmem:[#allocation2 + $0x498] sm:$0xff]
  %v2187 = vld [vmem:[#allocation2 + $0x4a0] sm:$0xff]
  %v2188 = vld [vmem:[#allocation2 + $0x4a8] sm:$0xff]
  %v2189 = vld [vmem:[#allocation2 + $0x4b0] sm:$0xff]
  %v2190 = vld [vmem:[#allocation2 + $0x4b8] sm:$0xff]
  %v2191 = vld [vmem:[#allocation2 + $0x4c0] sm:$0xff]
  %v2192 = vld [vmem:[#allocation2 + $0x4c8] sm:$0xff]
  %v2193 = vld [vmem:[#allocation2 + $0x4d0] sm:$0xff]
  %v2194 = vld [vmem:[#allocation2 + $0x4d8] sm:$0xff]
  %v2195 = vld [vmem:[#allocation2 + $0x4e0] sm:$0xff]
  %v2196 = vld [vmem:[#allocation2 + $0x4e8] sm:$0xff]
  %v2197 = vld [vmem:[#allocation2 + $0x4f0] sm:$0xff]
  %v2198 = vld [vmem:[#allocation2 + $0x4f8] sm:$0xff]
  %v2199 = vld [vmem:[#allocation2 + $0x500] sm:$0xff]
  %v2200 = vld [vmem:[#allocation2 + $0x508] sm:$0xff]
  %v2201 = vld [vmem:[#allocation2 + $0x510] sm:$0xff]
  %v2202 = vld [vmem:[#allocation2 + $0x518] sm:$0xff]
  %v2203 = vld [vmem:[#allocation2 + $0x520] sm:$0xff]
  %v2204 = vld [vmem:[#allocation2 + $0x528] sm:$0xff]
  %v2205 = vld [vmem:[#allocation2 + $0x530] sm:$0xff]
  %v2206 = vld [vmem:[#allocation2 + $0x538] sm:$0xff]
  %v2207 = vld [vmem:[#allocation2 + $0x540] sm:$0xff]
  %v2208 = vld [vmem:[#allocation2 + $0x548] sm:$0xff]
  %v2209 = vld [vmem:[#allocation2 + $0x550] sm:$0xff]
  %v2210 = vld [vmem:[#allocation2 + $0x558] sm:$0xff]
  %v2211 = vld [vmem:[#allocation2 + $0x560] sm:$0xff]
  %v2212 = vld [vmem:[#allocation2 + $0x568] sm:$0xff]
  %v2213 = vld [vmem:[#allocation2 + $0x570] sm:$0xff]
  %v2214 = vld [vmem:[#allocation2 + $0x578] sm:$0xff]
  %v2215 = vld [vmem:[#allocation2 + $0x580] sm:$0xff]
  %v2216 = vld [vmem:[#allocation2 + $0x588] sm:$0xff]
  %v2217 = vld [vmem:[#allocation2 + $0x590] sm:$0xff]
  %v2218 = vld [vmem:[#allocation2 + $0x598] sm:$0xff]
  %v2219 = vld [vmem:[#allocation2 + $0x5a0] sm:$0xff]
  %v2220 = vld [vmem:[#allocation2 + $0x5a8] sm:$0xff]
  %v2221 = vld [vmem:[#allocation2 + $0x5b0] sm:$0xff]
  %v2222 = vld [vmem:[#allocation2 + $0x5b8] sm:$0xff]
  %v2223 = vld [vmem:[#allocation2 + $0x5c0] sm:$0xff]
  %v2224 = vld [vmem:[#allocation2 + $0x5c8] sm:$0xff]
  %v2225 = vld [vmem:[#allocation2 + $0x5d0] sm:$0xff]
  %v2226 = vld [vmem:[#allocation2 + $0x5d8] sm:$0xff]
  %v2227 = vld [vmem:[#allocation2 + $0x5e0] sm:$0xff]
  %v2228 = vld [vmem:[#allocation2 + $0x5e8] sm:$0xff]
  %v2229 = vld [vmem:[#allocation2 + $0x5f0] sm:$0xff]
  %v2230 = vld [vmem:[#allocation2 + $0x5f8] sm:$0xff]
  %v2231 = vld [vmem:[#allocation2 + $0x600] sm:$0xff]
  %v2232 = vld [vmem:[#allocation2 + $0x608] sm:$0xff]
  %v2233 = vld [vmem:[#allocation2 + $0x610] sm:$0xff]
  %v2234 = vld [vmem:[#allocation2 + $0x618] sm:$0xff]
  %v2235 = vld [vmem:[%s2] sm:$0xff]
  %2237 = vset.pattern.permute.xlu0 0
  %2238 = vperm.xlu0 %2237, %v2235
  %v2239 = vpop.permute.xlu0 %2238
  %v2243 = vunpack.c.l.b16 %v2037
  %v2244 = vunpack.c.h.b16 %v2037
  %v2245 = vunpack.c.l.b16 %v2038
  %v2246 = vunpack.c.h.b16 %v2038
  %v2247 = vpack.c.b16 %v2243, %v2243
  %v2248 = vpack.c.b16 %v2244, %v2244
  %v2249 = vpack.c.b16 %v2245, %v2245
  %v2250 = vpack.c.b16 %v2246, %v2246
  %v2450 = vunpack.c.l.b16 %v2039
  %v2451 = vunpack.c.h.b16 %v2039
  %v2452 = vunpack.c.l.b16 %v2040
  %v2453 = vunpack.c.h.b16 %v2040
  %v2454 = vunpack.c.l.b16 %v2041
  %v2455 = vunpack.c.h.b16 %v2041
  %v2456 = vunpack.c.l.b16 %v2042
  %v2457 = vunpack.c.h.b16 %v2042
  %v2458 = vunpack.c.l.b16 %v2043
  %v2459 = vunpack.c.h.b16 %v2043
  %v2460 = vunpack.c.l.b16 %v2044
  %v2461 = vunpack.c.h.b16 %v2044
  %v2462 = vunpack.c.l.b16 %v2045
  %v2463 = vunpack.c.h.b16 %v2045
  %v2464 = vunpack.c.l.b16 %v2046
  %v2465 = vunpack.c.h.b16 %v2046
  %v2466 = vunpack.c.l.b16 %v2047
  %v2467 = vunpack.c.h.b16 %v2047
  %v2468 = vunpack.c.l.b16 %v2048
  %v2469 = vunpack.c.h.b16 %v2048
  %v2470 = vunpack.c.l.b16 %v2049
  %v2471 = vunpack.c.h.b16 %v2049
  %v2472 = vunpack.c.l.b16 %v2050
  %v2473 = vunpack.c.h.b16 %v2050
  %v2474 = vunpack.c.l.b16 %v2051
  %v2475 = vunpack.c.h.b16 %v2051
  %v2476 = vunpack.c.l.b16 %v2052
  %v2477 = vunpack.c.h.b16 %v2052
  %v2478 = vunpack.c.l.b16 %v2053
  %v2479 = vunpack.c.h.b16 %v2053
  %v2480 = vunpack.c.l.b16 %v2054
  %v2481 = vunpack.c.h.b16 %v2054
  %v2482 = vunpack.c.l.b16 %v2055
  %v2483 = vunpack.c.h.b16 %v2055
  %v2484 = vunpack.c.l.b16 %v2056
  %v2485 = vunpack.c.h.b16 %v2056
  %v2486 = vunpack.c.l.b16 %v2057
  %v2487 = vunpack.c.h.b16 %v2057
  %v2488 = vunpack.c.l.b16 %v2058
  %v2489 = vunpack.c.h.b16 %v2058
  %v2490 = vunpack.c.l.b16 %v2059
  %v2491 = vunpack.c.h.b16 %v2059
  %v2492 = vunpack.c.l.b16 %v2060
  %v2493 = vunpack.c.h.b16 %v2060
  %v2494 = vunpack.c.l.b16 %v2061
  %v2495 = vunpack.c.h.b16 %v2061
  %v2496 = vunpack.c.l.b16 %v2062
  %v2497 = vunpack.c.h.b16 %v2062
  %v2498 = vunpack.c.l.b16 %v2063
  %v2499 = vunpack.c.h.b16 %v2063
  %v2500 = vunpack.c.l.b16 %v2064
  %v2501 = vunpack.c.h.b16 %v2064
  %v2502 = vunpack.c.l.b16 %v2065
  %v2503 = vunpack.c.h.b16 %v2065
  %v2504 = vunpack.c.l.b16 %v2066
  %v2505 = vunpack.c.h.b16 %v2066
  %v2506 = vunpack.c.l.b16 %v2067
  %v2507 = vunpack.c.h.b16 %v2067
  %v2508 = vunpack.c.l.b16 %v2068
  %v2509 = vunpack.c.h.b16 %v2068
  %v2510 = vunpack.c.l.b16 %v2069
  %v2511 = vunpack.c.h.b16 %v2069
  %v2512 = vunpack.c.l.b16 %v2070
  %v2513 = vunpack.c.h.b16 %v2070
  %v2514 = vunpack.c.l.b16 %v2071
  %v2515 = vunpack.c.h.b16 %v2071
  %v2516 = vunpack.c.l.b16 %v2072
  %v2517 = vunpack.c.h.b16 %v2072
  %v2518 = vunpack.c.l.b16 %v2073
  %v2519 = vunpack.c.h.b16 %v2073
  %v2520 = vunpack.c.l.b16 %v2074
  %v2521 = vunpack.c.h.b16 %v2074
  %v2522 = vunpack.c.l.b16 %v2075
  %v2523 = vunpack.c.h.b16 %v2075
  %v2524 = vunpack.c.l.b16 %v2076
  %v2525 = vunpack.c.h.b16 %v2076
  %v2526 = vunpack.c.l.b16 %v2077
  %v2527 = vunpack.c.h.b16 %v2077
  %v2528 = vunpack.c.l.b16 %v2078
  %v2529 = vunpack.c.h.b16 %v2078
  %v2530 = vunpack.c.l.b16 %v2079
  %v2531 = vunpack.c.h.b16 %v2079
  %v2532 = vunpack.c.l.b16 %v2080
  %v2533 = vunpack.c.h.b16 %v2080
  %v2534 = vunpack.c.l.b16 %v2081
  %v2535 = vunpack.c.h.b16 %v2081
  %v2536 = vunpack.c.l.b16 %v2082
  %v2537 = vunpack.c.h.b16 %v2082
  %v2538 = vunpack.c.l.b16 %v2083
  %v2539 = vunpack.c.h.b16 %v2083
  %v2540 = vunpack.c.l.b16 %v2084
  %v2541 = vunpack.c.h.b16 %v2084
  %v2542 = vunpack.c.l.b16 %v2085
  %v2543 = vunpack.c.h.b16 %v2085
  %v2544 = vunpack.c.l.b16 %v2086
  %v2545 = vunpack.c.h.b16 %v2086
  %v2546 = vunpack.c.l.b16 %v2087
  %v2547 = vunpack.c.h.b16 %v2087
  %v2548 = vunpack.c.l.b16 %v2088
  %v2549 = vunpack.c.h.b16 %v2088
  %v2550 = vunpack.c.l.b16 %v2089
  %v2551 = vunpack.c.h.b16 %v2089
  %v2552 = vunpack.c.l.b16 %v2090
  %v2553 = vunpack.c.h.b16 %v2090
  %v2554 = vunpack.c.l.b16 %v2091
  %v2555 = vunpack.c.h.b16 %v2091
  %v2556 = vunpack.c.l.b16 %v2092
  %v2557 = vunpack.c.h.b16 %v2092
  %v2558 = vunpack.c.l.b16 %v2093
  %v2559 = vunpack.c.h.b16 %v2093
  %v2560 = vunpack.c.l.b16 %v2094
  %v2561 = vunpack.c.h.b16 %v2094
  %v2562 = vunpack.c.l.b16 %v2095
  %v2563 = vunpack.c.h.b16 %v2095
  %v2564 = vunpack.c.l.b16 %v2096
  %v2565 = vunpack.c.h.b16 %v2096
  %v2566 = vunpack.c.l.b16 %v2097
  %v2567 = vunpack.c.h.b16 %v2097
  %v2568 = vunpack.c.l.b16 %v2098
  %v2569 = vunpack.c.h.b16 %v2098
  %v2570 = vunpack.c.l.b16 %v2099
  %v2571 = vunpack.c.h.b16 %v2099
  %v2572 = vunpack.c.l.b16 %v2100
  %v2573 = vunpack.c.h.b16 %v2100
  %v2574 = vunpack.c.l.b16 %v2101
  %v2575 = vunpack.c.h.b16 %v2101
  %v2576 = vunpack.c.l.b16 %v2102
  %v2577 = vunpack.c.h.b16 %v2102
  %v2578 = vunpack.c.l.b16 %v2103
  %v2579 = vunpack.c.h.b16 %v2103
  %v2580 = vunpack.c.l.b16 %v2104
  %v2581 = vunpack.c.h.b16 %v2104
  %v2582 = vunpack.c.l.b16 %v2105
  %v2583 = vunpack.c.h.b16 %v2105
  %v2584 = vunpack.c.l.b16 %v2106
  %v2585 = vunpack.c.h.b16 %v2106
  %v2586 = vunpack.c.l.b16 %v2107
  %v2587 = vunpack.c.h.b16 %v2107
  %v2588 = vunpack.c.l.b16 %v2108
  %v2589 = vunpack.c.h.b16 %v2108
  %v2590 = vunpack.c.l.b16 %v2109
  %v2591 = vunpack.c.h.b16 %v2109
  %v2592 = vunpack.c.l.b16 %v2110
  %v2593 = vunpack.c.h.b16 %v2110
  %v2594 = vunpack.c.l.b16 %v2111
  %v2595 = vunpack.c.h.b16 %v2111
  %v2596 = vunpack.c.l.b16 %v2112
  %v2597 = vunpack.c.h.b16 %v2112
  %v2598 = vunpack.c.l.b16 %v2113
  %v2599 = vunpack.c.h.b16 %v2113
  %v2600 = vunpack.c.l.b16 %v2114
  %v2601 = vunpack.c.h.b16 %v2114
  %v2602 = vunpack.c.l.b16 %v2115
  %v2603 = vunpack.c.h.b16 %v2115
  %v2604 = vunpack.c.l.b16 %v2116
  %v2605 = vunpack.c.h.b16 %v2116
  %v2606 = vunpack.c.l.b16 %v2117
  %v2607 = vunpack.c.h.b16 %v2117
  %v2608 = vunpack.c.l.b16 %v2118
  %v2609 = vunpack.c.h.b16 %v2118
  %v2610 = vunpack.c.l.b16 %v2119
  %v2611 = vunpack.c.h.b16 %v2119
  %v2612 = vunpack.c.l.b16 %v2120
  %v2613 = vunpack.c.h.b16 %v2120
  %v2614 = vunpack.c.l.b16 %v2121
  %v2615 = vunpack.c.h.b16 %v2121
  %v2616 = vunpack.c.l.b16 %v2122
  %v2617 = vunpack.c.h.b16 %v2122
  %v2618 = vunpack.c.l.b16 %v2123
  %v2619 = vunpack.c.h.b16 %v2123
  %v2620 = vunpack.c.l.b16 %v2124
  %v2621 = vunpack.c.h.b16 %v2124
  %v2622 = vunpack.c.l.b16 %v2125
  %v2623 = vunpack.c.h.b16 %v2125
  %v2624 = vunpack.c.l.b16 %v2126
  %v2625 = vunpack.c.h.b16 %v2126
  %v2626 = vunpack.c.l.b16 %v2127
  %v2627 = vunpack.c.h.b16 %v2127
  %v2628 = vunpack.c.l.b16 %v2128
  %v2629 = vunpack.c.h.b16 %v2128
  %v2630 = vunpack.c.l.b16 %v2129
  %v2631 = vunpack.c.h.b16 %v2129
  %v2632 = vunpack.c.l.b16 %v2130
  %v2633 = vunpack.c.h.b16 %v2130
  %v2634 = vunpack.c.l.b16 %v2131
  %v2635 = vunpack.c.h.b16 %v2131
  %v2636 = vunpack.c.l.b16 %v2132
  %v2637 = vunpack.c.h.b16 %v2132
  %v2638 = vunpack.c.l.b16 %v2133
  %v2639 = vunpack.c.h.b16 %v2133
  %v2640 = vunpack.c.l.b16 %v2134
  %v2641 = vunpack.c.h.b16 %v2134
  %v2642 = vunpack.c.l.b16 %v2135
  %v2643 = vunpack.c.h.b16 %v2135
  %v2644 = vunpack.c.l.b16 %v2136
  %v2645 = vunpack.c.h.b16 %v2136
  %v2646 = vunpack.c.l.b16 %v2137
  %v2647 = vunpack.c.h.b16 %v2137
  %v2648 = vunpack.c.l.b16 %v2138
  %v2649 = vunpack.c.h.b16 %v2138
  %v2650 = vunpack.c.l.b16 %v2139
  %v2651 = vunpack.c.h.b16 %v2139
  %v2652 = vunpack.c.l.b16 %v2140
  %v2653 = vunpack.c.h.b16 %v2140
  %v2654 = vunpack.c.l.b16 %v2141
  %v2655 = vunpack.c.h.b16 %v2141
  %v2656 = vunpack.c.l.b16 %v2142
  %v2657 = vunpack.c.h.b16 %v2142
  %v2658 = vunpack.c.l.b16 %v2143
  %v2659 = vunpack.c.h.b16 %v2143
  %v2660 = vunpack.c.l.b16 %v2144
  %v2661 = vunpack.c.h.b16 %v2144
  %v2662 = vunpack.c.l.b16 %v2145
  %v2663 = vunpack.c.h.b16 %v2145
  %v2664 = vunpack.c.l.b16 %v2146
  %v2665 = vunpack.c.h.b16 %v2146
  %v2666 = vunpack.c.l.b16 %v2147
  %v2667 = vunpack.c.h.b16 %v2147
  %v2668 = vunpack.c.l.b16 %v2148
  %v2669 = vunpack.c.h.b16 %v2148
  %v2670 = vunpack.c.l.b16 %v2149
  %v2671 = vunpack.c.h.b16 %v2149
  %v2672 = vunpack.c.l.b16 %v2150
  %v2673 = vunpack.c.h.b16 %v2150
  %v2674 = vunpack.c.l.b16 %v2151
  %v2675 = vunpack.c.h.b16 %v2151
  %v2676 = vunpack.c.l.b16 %v2152
  %v2677 = vunpack.c.h.b16 %v2152
  %v2678 = vunpack.c.l.b16 %v2153
  %v2679 = vunpack.c.h.b16 %v2153
  %v2680 = vunpack.c.l.b16 %v2154
  %v2681 = vunpack.c.h.b16 %v2154
  %v2682 = vunpack.c.l.b16 %v2155
  %v2683 = vunpack.c.h.b16 %v2155
  %v2684 = vunpack.c.l.b16 %v2156
  %v2685 = vunpack.c.h.b16 %v2156
  %v2686 = vunpack.c.l.b16 %v2157
  %v2687 = vunpack.c.h.b16 %v2157
  %v2688 = vunpack.c.l.b16 %v2158
  %v2689 = vunpack.c.h.b16 %v2158
  %v2690 = vunpack.c.l.b16 %v2159
  %v2691 = vunpack.c.h.b16 %v2159
  %v2692 = vunpack.c.l.b16 %v2160
  %v2693 = vunpack.c.h.b16 %v2160
  %v2694 = vunpack.c.l.b16 %v2161
  %v2695 = vunpack.c.h.b16 %v2161
  %v2696 = vunpack.c.l.b16 %v2162
  %v2697 = vunpack.c.h.b16 %v2162
  %v2698 = vunpack.c.l.b16 %v2163
  %v2699 = vunpack.c.h.b16 %v2163
  %v2700 = vunpack.c.l.b16 %v2164
  %v2701 = vunpack.c.h.b16 %v2164
  %v2702 = vunpack.c.l.b16 %v2165
  %v2703 = vunpack.c.h.b16 %v2165
  %v2704 = vunpack.c.l.b16 %v2166
  %v2705 = vunpack.c.h.b16 %v2166
  %v2706 = vunpack.c.l.b16 %v2167
  %v2707 = vunpack.c.h.b16 %v2167
  %v2708 = vunpack.c.l.b16 %v2168
  %v2709 = vunpack.c.h.b16 %v2168
  %v2710 = vunpack.c.l.b16 %v2169
  %v2711 = vunpack.c.h.b16 %v2169
  %v2712 = vunpack.c.l.b16 %v2170
  %v2713 = vunpack.c.h.b16 %v2170
  %v2714 = vunpack.c.l.b16 %v2171
  %v2715 = vunpack.c.h.b16 %v2171
  %v2716 = vunpack.c.l.b16 %v2172
  %v2717 = vunpack.c.h.b16 %v2172
  %v2718 = vunpack.c.l.b16 %v2173
  %v2719 = vunpack.c.h.b16 %v2173
  %v2720 = vunpack.c.l.b16 %v2174
  %v2721 = vunpack.c.h.b16 %v2174
  %v2722 = vunpack.c.l.b16 %v2175
  %v2723 = vunpack.c.h.b16 %v2175
  %v2724 = vunpack.c.l.b16 %v2176
  %v2725 = vunpack.c.h.b16 %v2176
  %v2726 = vunpack.c.l.b16 %v2177
  %v2727 = vunpack.c.h.b16 %v2177
  %v2728 = vunpack.c.l.b16 %v2178
  %v2729 = vunpack.c.h.b16 %v2178
  %v2730 = vunpack.c.l.b16 %v2179
  %v2731 = vunpack.c.h.b16 %v2179
  %v2732 = vunpack.c.l.b16 %v2180
  %v2733 = vunpack.c.h.b16 %v2180
  %v2734 = vunpack.c.l.b16 %v2181
  %v2735 = vunpack.c.h.b16 %v2181
  %v2736 = vunpack.c.l.b16 %v2182
  %v2737 = vunpack.c.h.b16 %v2182
  %v2738 = vunpack.c.l.b16 %v2183
  %v2739 = vunpack.c.h.b16 %v2183
  %v2740 = vunpack.c.l.b16 %v2184
  %v2741 = vunpack.c.h.b16 %v2184
  %v2742 = vunpack.c.l.b16 %v2185
  %v2743 = vunpack.c.h.b16 %v2185
  %v2744 = vunpack.c.l.b16 %v2186
  %v2745 = vunpack.c.h.b16 %v2186
  %v2746 = vunpack.c.l.b16 %v2187
  %v2747 = vunpack.c.h.b16 %v2187
  %v2748 = vunpack.c.l.b16 %v2188
  %v2749 = vunpack.c.h.b16 %v2188
  %v2750 = vunpack.c.l.b16 %v2189
  %v2751 = vunpack.c.h.b16 %v2189
  %v2752 = vunpack.c.l.b16 %v2190
  %v2753 = vunpack.c.h.b16 %v2190
  %v2754 = vunpack.c.l.b16 %v2191
  %v2755 = vunpack.c.h.b16 %v2191
  %v2756 = vunpack.c.l.b16 %v2192
  %v2757 = vunpack.c.h.b16 %v2192
  %v2758 = vunpack.c.l.b16 %v2193
  %v2759 = vunpack.c.h.b16 %v2193
  %v2760 = vunpack.c.l.b16 %v2194
  %v2761 = vunpack.c.h.b16 %v2194
  %v2762 = vunpack.c.l.b16 %v2195
  %v2763 = vunpack.c.h.b16 %v2195
  %v2764 = vunpack.c.l.b16 %v2196
  %v2765 = vunpack.c.h.b16 %v2196
  %v2766 = vunpack.c.l.b16 %v2197
  %v2767 = vunpack.c.h.b16 %v2197
  %v2768 = vunpack.c.l.b16 %v2198
  %v2769 = vunpack.c.h.b16 %v2198
  %v2770 = vunpack.c.l.b16 %v2199
  %v2771 = vunpack.c.h.b16 %v2199
  %v2772 = vunpack.c.l.b16 %v2200
  %v2773 = vunpack.c.h.b16 %v2200
  %v2774 = vunpack.c.l.b16 %v2201
  %v2775 = vunpack.c.h.b16 %v2201
  %v2776 = vunpack.c.l.b16 %v2202
  %v2777 = vunpack.c.h.b16 %v2202
  %v2778 = vunpack.c.l.b16 %v2203
  %v2779 = vunpack.c.h.b16 %v2203
  %v2780 = vunpack.c.l.b16 %v2204
  %v2781 = vunpack.c.h.b16 %v2204
  %v2782 = vunpack.c.l.b16 %v2205
  %v2783 = vunpack.c.h.b16 %v2205
  %v2784 = vunpack.c.l.b16 %v2206
  %v2785 = vunpack.c.h.b16 %v2206
  %v2786 = vunpack.c.l.b16 %v2207
  %v2787 = vunpack.c.h.b16 %v2207
  %v2788 = vunpack.c.l.b16 %v2208
  %v2789 = vunpack.c.h.b16 %v2208
  %v2790 = vunpack.c.l.b16 %v2209
  %v2791 = vunpack.c.h.b16 %v2209
  %v2792 = vunpack.c.l.b16 %v2210
  %v2793 = vunpack.c.h.b16 %v2210
  %v2794 = vunpack.c.l.b16 %v2211
  %v2795 = vunpack.c.h.b16 %v2211
  %v2796 = vunpack.c.l.b16 %v2212
  %v2797 = vunpack.c.h.b16 %v2212
  %v2798 = vunpack.c.l.b16 %v2213
  %v2799 = vunpack.c.h.b16 %v2213
  %v2800 = vunpack.c.l.b16 %v2214
  %v2801 = vunpack.c.h.b16 %v2214
  %v2802 = vunpack.c.l.b16 %v2215
  %v2803 = vunpack.c.h.b16 %v2215
  %v2804 = vunpack.c.l.b16 %v2216
  %v2805 = vunpack.c.h.b16 %v2216
  %v2806 = vunpack.c.l.b16 %v2217
  %v2807 = vunpack.c.h.b16 %v2217
  %v2808 = vunpack.c.l.b16 %v2218
  %v2809 = vunpack.c.h.b16 %v2218
  %v2810 = vunpack.c.l.b16 %v2219
  %v2811 = vunpack.c.h.b16 %v2219
  %v2812 = vunpack.c.l.b16 %v2220
  %v2813 = vunpack.c.h.b16 %v2220
  %v2814 = vunpack.c.l.b16 %v2221
  %v2815 = vunpack.c.h.b16 %v2221
  %v2816 = vunpack.c.l.b16 %v2222
  %v2817 = vunpack.c.h.b16 %v2222
  %v2818 = vunpack.c.l.b16 %v2223
  %v2819 = vunpack.c.h.b16 %v2223
  %v2820 = vunpack.c.l.b16 %v2224
  %v2821 = vunpack.c.h.b16 %v2224
  %v2822 = vunpack.c.l.b16 %v2225
  %v2823 = vunpack.c.h.b16 %v2225
  %v2824 = vunpack.c.l.b16 %v2226
  %v2825 = vunpack.c.h.b16 %v2226
  %v2826 = vunpack.c.l.b16 %v2227
  %v2827 = vunpack.c.h.b16 %v2227
  %v2828 = vunpack.c.l.b16 %v2228
  %v2829 = vunpack.c.h.b16 %v2228
  %v2830 = vunpack.c.l.b16 %v2229
  %v2831 = vunpack.c.h.b16 %v2229
  %v2832 = vunpack.c.l.b16 %v2230
  %v2833 = vunpack.c.h.b16 %v2230
  %v2834 = vunpack.c.l.b16 %v2231
  %v2835 = vunpack.c.h.b16 %v2231
  %v2836 = vunpack.c.l.b16 %v2232
  %v2837 = vunpack.c.h.b16 %v2232
  %v2838 = vunpack.c.l.b16 %v2233
  %v2839 = vunpack.c.h.b16 %v2233
  %v2840 = vunpack.c.l.b16 %v2234
  %v2841 = vunpack.c.h.b16 %v2234
  %v2842 = vpack.c.b16 %v2458, %v2450
  %v2843 = vpack.c.b16 %v2459, %v2451
  %v2844 = vpack.c.b16 %v2460, %v2452
  %v2845 = vpack.c.b16 %v2461, %v2453
  %v2846 = vpack.c.b16 %v2462, %v2454
  %v2847 = vpack.c.b16 %v2463, %v2455
  %v2848 = vpack.c.b16 %v2464, %v2456
  %v2849 = vpack.c.b16 %v2465, %v2457
  %v2850 = vpack.c.b16 %v2474, %v2466
  %v2851 = vpack.c.b16 %v2475, %v2467
  %v2852 = vpack.c.b16 %v2476, %v2468
  %v2853 = vpack.c.b16 %v2477, %v2469
  %v2854 = vpack.c.b16 %v2478, %v2470
  %v2855 = vpack.c.b16 %v2479, %v2471
  %v2856 = vpack.c.b16 %v2480, %v2472
  %v2857 = vpack.c.b16 %v2481, %v2473
  %v2858 = vpack.c.b16 %v2490, %v2482
  %v2859 = vpack.c.b16 %v2491, %v2483
  %v2860 = vpack.c.b16 %v2492, %v2484
  %v2861 = vpack.c.b16 %v2493, %v2485
  %v2862 = vpack.c.b16 %v2494, %v2486
  %v2863 = vpack.c.b16 %v2495, %v2487
  %v2864 = vpack.c.b16 %v2496, %v2488
  %v2865 = vpack.c.b16 %v2497, %v2489
  %v2866 = vpack.c.b16 %v2506, %v2498
  %v2867 = vpack.c.b16 %v2507, %v2499
  %v2868 = vpack.c.b16 %v2508, %v2500
  %v2869 = vpack.c.b16 %v2509, %v2501
  %v2870 = vpack.c.b16 %v2510, %v2502
  %v2871 = vpack.c.b16 %v2511, %v2503
  %v2872 = vpack.c.b16 %v2512, %v2504
  %v2873 = vpack.c.b16 %v2513, %v2505
  %v2874 = vpack.c.b16 %v2522, %v2514
  %v2875 = vpack.c.b16 %v2523, %v2515
  %v2876 = vpack.c.b16 %v2524, %v2516
  %v2877 = vpack.c.b16 %v2525, %v2517
  %v2878 = vpack.c.b16 %v2526, %v2518
  %v2879 = vpack.c.b16 %v2527, %v2519
  %v2880 = vpack.c.b16 %v2528, %v2520
  %v2881 = vpack.c.b16 %v2529, %v2521
  %v2882 = vpack.c.b16 %v2538, %v2530
  %v2883 = vpack.c.b16 %v2539, %v2531
  %v2884 = vpack.c.b16 %v2540, %v2532
  %v2885 = vpack.c.b16 %v2541, %v2533
  %v2886 = vpack.c.b16 %v2542, %v2534
  %v2887 = vpack.c.b16 %v2543, %v2535
  %v2888 = vpack.c.b16 %v2544, %v2536
  %v2889 = vpack.c.b16 %v2545, %v2537
  %v2890 = vpack.c.b16 %v2554, %v2546
  %v2891 = vpack.c.b16 %v2555, %v2547
  %v2892 = vpack.c.b16 %v2556, %v2548
  %v2893 = vpack.c.b16 %v2557, %v2549
  %v2894 = vpack.c.b16 %v2558, %v2550
  %v2895 = vpack.c.b16 %v2559, %v2551
  %v2896 = vpack.c.b16 %v2560, %v2552
  %v2897 = vpack.c.b16 %v2561, %v2553
  %v2898 = vpack.c.b16 %v2570, %v2562
  %v2899 = vpack.c.b16 %v2571, %v2563
  %v2900 = vpack.c.b16 %v2572, %v2564
  %v2901 = vpack.c.b16 %v2573, %v2565
  %v2902 = vpack.c.b16 %v2574, %v2566
  %v2903 = vpack.c.b16 %v2575, %v2567
  %v2904 = vpack.c.b16 %v2576, %v2568
  %v2905 = vpack.c.b16 %v2577, %v2569
  %v2906 = vpack.c.b16 %v2586, %v2578
  %v2907 = vpack.c.b16 %v2587, %v2579
  %v2908 = vpack.c.b16 %v2588, %v2580
  %v2909 = vpack.c.b16 %v2589, %v2581
  %v2910 = vpack.c.b16 %v2590, %v2582
  %v2911 = vpack.c.b16 %v2591, %v2583
  %v2912 = vpack.c.b16 %v2592, %v2584
  %v2913 = vpack.c.b16 %v2593, %v2585
  %v2914 = vpack.c.b16 %v2602, %v2594
  %v2915 = vpack.c.b16 %v2603, %v2595
  %v2916 = vpack.c.b16 %v2604, %v2596
  %v2917 = vpack.c.b16 %v2605, %v2597
  %v2918 = vpack.c.b16 %v2606, %v2598
  %v2919 = vpack.c.b16 %v2607, %v2599
  %v2920 = vpack.c.b16 %v2608, %v2600
  %v2921 = vpack.c.b16 %v2609, %v2601
  %v2922 = vpack.c.b16 %v2618, %v2610
  %v2923 = vpack.c.b16 %v2619, %v2611
  %v2924 = vpack.c.b16 %v2620, %v2612
  %v2925 = vpack.c.b16 %v2621, %v2613
  %v2926 = vpack.c.b16 %v2622, %v2614
  %v2927 = vpack.c.b16 %v2623, %v2615
  %v2928 = vpack.c.b16 %v2624, %v2616
  %v2929 = vpack.c.b16 %v2625, %v2617
  %v2930 = vpack.c.b16 %v2634, %v2626
  %v2931 = vpack.c.b16 %v2635, %v2627
  %v2932 = vpack.c.b16 %v2636, %v2628
  %v2933 = vpack.c.b16 %v2637, %v2629
  %v2934 = vpack.c.b16 %v2638, %v2630
  %v2935 = vpack.c.b16 %v2639, %v2631
  %v2936 = vpack.c.b16 %v2640, %v2632
  %v2937 = vpack.c.b16 %v2641, %v2633
  %v2938 = vpack.c.b16 %v2650, %v2642
  %v2939 = vpack.c.b16 %v2651, %v2643
  %v2940 = vpack.c.b16 %v2652, %v2644
  %v2941 = vpack.c.b16 %v2653, %v2645
  %v2942 = vpack.c.b16 %v2654, %v2646
  %v2943 = vpack.c.b16 %v2655, %v2647
  %v2944 = vpack.c.b16 %v2656, %v2648
  %v2945 = vpack.c.b16 %v2657, %v2649
  %v2946 = vpack.c.b16 %v2666, %v2658
  %v2947 = vpack.c.b16 %v2667, %v2659
  %v2948 = vpack.c.b16 %v2668, %v2660
  %v2949 = vpack.c.b16 %v2669, %v2661
  %v2950 = vpack.c.b16 %v2670, %v2662
  %v2951 = vpack.c.b16 %v2671, %v2663
  %v2952 = vpack.c.b16 %v2672, %v2664
  %v2953 = vpack.c.b16 %v2673, %v2665
  %v2954 = vpack.c.b16 %v2682, %v2674
  %v2955 = vpack.c.b16 %v2683, %v2675
  %v2956 = vpack.c.b16 %v2684, %v2676
  %v2957 = vpack.c.b16 %v2685, %v2677
  %v2958 = vpack.c.b16 %v2686, %v2678
  %v2959 = vpack.c.b16 %v2687, %v2679
  %v2960 = vpack.c.b16 %v2688, %v2680
  %v2961 = vpack.c.b16 %v2689, %v2681
  %v2962 = vpack.c.b16 %v2698, %v2690
  %v2963 = vpack.c.b16 %v2699, %v2691
  %v2964 = vpack.c.b16 %v2700, %v2692
  %v2965 = vpack.c.b16 %v2701, %v2693
  %v2966 = vpack.c.b16 %v2702, %v2694
  %v2967 = vpack.c.b16 %v2703, %v2695
  %v2968 = vpack.c.b16 %v2704, %v2696
  %v2969 = vpack.c.b16 %v2705, %v2697
  %v2970 = vpack.c.b16 %v2714, %v2706
  %v2971 = vpack.c.b16 %v2715, %v2707
  %v2972 = vpack.c.b16 %v2716, %v2708
  %v2973 = vpack.c.b16 %v2717, %v2709
  %v2974 = vpack.c.b16 %v2718, %v2710
  %v2975 = vpack.c.b16 %v2719, %v2711
  %v2976 = vpack.c.b16 %v2720, %v2712
  %v2977 = vpack.c.b16 %v2721, %v2713
  %v2978 = vpack.c.b16 %v2730, %v2722
  %v2979 = vpack.c.b16 %v2731, %v2723
  %v2980 = vpack.c.b16 %v2732, %v2724
  %v2981 = vpack.c.b16 %v2733, %v2725
  %v2982 = vpack.c.b16 %v2734, %v2726
  %v2983 = vpack.c.b16 %v2735, %v2727
  %v2984 = vpack.c.b16 %v2736, %v2728
  %v2985 = vpack.c.b16 %v2737, %v2729
  %v2986 = vpack.c.b16 %v2746, %v2738
  %v2987 = vpack.c.b16 %v2747, %v2739
  %v2988 = vpack.c.b16 %v2748, %v2740
  %v2989 = vpack.c.b16 %v2749, %v2741
  %v2990 = vpack.c.b16 %v2750, %v2742
  %v2991 = vpack.c.b16 %v2751, %v2743
  %v2992 = vpack.c.b16 %v2752, %v2744
  %v2993 = vpack.c.b16 %v2753, %v2745
  %v2994 = vpack.c.b16 %v2762, %v2754
  %v2995 = vpack.c.b16 %v2763, %v2755
  %v2996 = vpack.c.b16 %v2764, %v2756
  %v2997 = vpack.c.b16 %v2765, %v2757
  %v2998 = vpack.c.b16 %v2766, %v2758
  %v2999 = vpack.c.b16 %v2767, %v2759
  %v3000 = vpack.c.b16 %v2768, %v2760
  %v3001 = vpack.c.b16 %v2769, %v2761
  %v3002 = vpack.c.b16 %v2778, %v2770
  %v3003 = vpack.c.b16 %v2779, %v2771
  %v3004 = vpack.c.b16 %v2780, %v2772
  %v3005 = vpack.c.b16 %v2781, %v2773
  %v3006 = vpack.c.b16 %v2782, %v2774
  %v3007 = vpack.c.b16 %v2783, %v2775
  %v3008 = vpack.c.b16 %v2784, %v2776
  %v3009 = vpack.c.b16 %v2785, %v2777
  %v3010 = vpack.c.b16 %v2794, %v2786
  %v3011 = vpack.c.b16 %v2795, %v2787
  %v3012 = vpack.c.b16 %v2796, %v2788
  %v3013 = vpack.c.b16 %v2797, %v2789
  %v3014 = vpack.c.b16 %v2798, %v2790
  %v3015 = vpack.c.b16 %v2799, %v2791
  %v3016 = vpack.c.b16 %v2800, %v2792
  %v3017 = vpack.c.b16 %v2801, %v2793
  %v3018 = vpack.c.b16 %v2810, %v2802
  %v3019 = vpack.c.b16 %v2811, %v2803
  %v3020 = vpack.c.b16 %v2812, %v2804
  %v3021 = vpack.c.b16 %v2813, %v2805
  %v3022 = vpack.c.b16 %v2814, %v2806
  %v3023 = vpack.c.b16 %v2815, %v2807
  %v3024 = vpack.c.b16 %v2816, %v2808
  %v3025 = vpack.c.b16 %v2817, %v2809
  %v3026 = vpack.c.b16 %v2826, %v2818
  %v3027 = vpack.c.b16 %v2827, %v2819
  %v3028 = vpack.c.b16 %v2828, %v2820
  %v3029 = vpack.c.b16 %v2829, %v2821
  %v3030 = vpack.c.b16 %v2830, %v2822
  %v3031 = vpack.c.b16 %v2831, %v2823
  %v3032 = vpack.c.b16 %v2832, %v2824
  %v3033 = vpack.c.b16 %v2833, %v2825
  %v3034 = vpack.c.b16 %v2834, %v2834
  %v3035 = vpack.c.b16 %v2835, %v2835
  %v3036 = vpack.c.b16 %v2836, %v2836
  %v3037 = vpack.c.b16 %v2837, %v2837
  %v3038 = vpack.c.b16 %v2838, %v2838
  %v3039 = vpack.c.b16 %v2839, %v2839
  %v3040 = vpack.c.b16 %v2840, %v2840
  %v3041 = vpack.c.b16 %v2841, %v2841
  %vm3234 = vcmask 64512
  %v3236 = vsel %vm3234, %v2250, 0
  %vm3238 = vcmask 1043456
  %v3240 = vsel %vm3238, %v3034, 0
  %v3243 = vsel %vm3238, %v3035, 0
  %v3246 = vsel %vm3238, %v3036, 0
  %v3249 = vsel %vm3238, %v3037, 0
  %v3252 = vsel %vm3238, %v3038, 0
  %v3255 = vsel %vm3238, %v3039, 0
  %v3258 = vsel %vm3238, %v3040, 0
  %v3261 = vsel %vm3238, %v3041, 0
  %3263 = vmatpush.bf16.msra.mxu0 %v2898
  %3264 = vmatpush.bf16.msra.mxu0 %v2890
  %3265 = vmatpush.bf16.msra.mxu0 %v2882
  %3266 = vmatpush.bf16.msra.mxu0 %v2874
  %3267 = vmatpush.bf16.msra.mxu0 %v2866
  %3268 = vmatpush.bf16.msra.mxu0 %v2858
  %3269 = vmatpush.bf16.msra.mxu0 %v2850
  %3270 = vmatpush.bf16.msra.mxu0 %v2842
  %3271 = vmatmul.bf16.gmra.mxu0 %v2247
  %v3272 = vpop.f32.mrf.mxu0
  %v3273 = vadd.f32 %v2239, %v3272
  %v3274 = vpop.f32.mrf.mxu0
  %3275 = vdwg.mxu0
  %3276 = vmatpush.bf16.msra.mxu0 %v2962
  %3277 = vmatpush.bf16.msra.mxu0 %v2954
  %3278 = vmatpush.bf16.msra.mxu0 %v2946
  %3279 = vmatpush.bf16.msra.mxu0 %v2938
  %3280 = vmatpush.bf16.msra.mxu0 %v2930
  %3281 = vmatpush.bf16.msra.mxu0 %v2922
  %3282 = vmatpush.bf16.msra.mxu0 %v2914
  %3283 = vmatpush.bf16.msra.mxu0 %v2906
  %3284 = vmatmul.bf16.gmra.mxu0 %v2248
  %v3285 = vpop.f32.mrf.mxu0
  %v3286 = vadd.f32 %v3273, %v3285
  %v3287 = vpop.f32.mrf.mxu0
  %3288 = vdwg.mxu0
  %3289 = vmatpush.bf16.msra.mxu0 %v3026
  %3290 = vmatpush.bf16.msra.mxu0 %v3018
  %3291 = vmatpush.bf16.msra.mxu0 %v3010
  %3292 = vmatpush.bf16.msra.mxu0 %v3002
  %3293 = vmatpush.bf16.msra.mxu0 %v2994
  %3294 = vmatpush.bf16.msra.mxu0 %v2986
  %3295 = vmatpush.bf16.msra.mxu0 %v2978
  %3296 = vmatpush.bf16.msra.mxu0 %v2970
  %3297 = vmatmul.bf16.gmra.mxu0 %v2249
  %v3298 = vpop.f32.mrf.mxu0
  %v3299 = vadd.f32 %v3286, %v3298
  %v3300 = vpop.f32.mrf.mxu0
  %3301 = vdwg.mxu0
  %3302 = vmatpush.bf16.msra.mxu0 0
  %3303 = vmatpush.bf16.msra.mxu0 0
  %3304 = vmatpush.bf16.msra.mxu0 0
  %3305 = vmatpush.bf16.msra.mxu0 0
  %3306 = vmatpush.bf16.msra.mxu0 0
  %3307 = vmatpush.bf16.msra.mxu0 0
  %3308 = vmatpush.bf16.msra.mxu0 0
  %3309 = vmatpush.bf16.msra.mxu0 %v3240
  %3310 = vmatmul.bf16.gmra.mxu0 %v3236
  %v3311 = vpop.f32.mrf.mxu0
  %v3312 = vadd.f32 %v3299, %v3311
  %v3313 = vpop.f32.mrf.mxu0
  %3314 = vdwg.mxu0
  %3315 = vmatpush.bf16.msra.mxu0 %v2899
  %3316 = vmatpush.bf16.msra.mxu0 %v2891
  %3317 = vmatpush.bf16.msra.mxu0 %v2883
  %3318 = vmatpush.bf16.msra.mxu0 %v2875
  %3319 = vmatpush.bf16.msra.mxu0 %v2867
  %3320 = vmatpush.bf16.msra.mxu0 %v2859
  %3321 = vmatpush.bf16.msra.mxu0 %v2851
  %3322 = vmatpush.bf16.msra.mxu0 %v2843
  %3323 = vmatmul.bf16.gmra.mxu0 %v2247
  %v3324 = vpop.f32.mrf.mxu0
  %v3325 = vadd.f32 %v2239, %v3324
  %v3326 = vpop.f32.mrf.mxu0
  %3327 = vdwg.mxu0
  %3328 = vmatpush.bf16.msra.mxu0 %v2963
  %3329 = vmatpush.bf16.msra.mxu0 %v2955
  %3330 = vmatpush.bf16.msra.mxu0 %v2947
  %3331 = vmatpush.bf16.msra.mxu0 %v2939
  %3332 = vmatpush.bf16.msra.mxu0 %v2931
  %3333 = vmatpush.bf16.msra.mxu0 %v2923
  %3334 = vmatpush.bf16.msra.mxu0 %v2915
  %3335 = vmatpush.bf16.msra.mxu0 %v2907
  %3336 = vmatmul.bf16.gmra.mxu0 %v2248
  %v3337 = vpop.f32.mrf.mxu0
  %v3338 = vadd.f32 %v3325, %v3337
  %v3339 = vpop.f32.mrf.mxu0
  %3340 = vdwg.mxu0
  %3341 = vmatpush.bf16.msra.mxu0 %v3027
  %3342 = vmatpush.bf16.msra.mxu0 %v3019
  %3343 = vmatpush.bf16.msra.mxu0 %v3011
  %3344 = vmatpush.bf16.msra.mxu0 %v3003
  %3345 = vmatpush.bf16.msra.mxu0 %v2995
  %3346 = vmatpush.bf16.msra.mxu0 %v2987
  %3347 = vmatpush.bf16.msra.mxu0 %v2979
  %3348 = vmatpush.bf16.msra.mxu0 %v2971
  %3349 = vmatmul.bf16.gmra.mxu0 %v2249
  %v3350 = vpop.f32.mrf.mxu0
  %v3351 = vadd.f32 %v3338, %v3350
  %v3352 = vpop.f32.mrf.mxu0
  %3353 = vdwg.mxu0
  %3354 = vmatpush.bf16.msra.mxu0 0
  %3355 = vmatpush.bf16.msra.mxu0 0
  %3356 = vmatpush.bf16.msra.mxu0 0
  %3357 = vmatpush.bf16.msra.mxu0 0
  %3358 = vmatpush.bf16.msra.mxu0 0
  %3359 = vmatpush.bf16.msra.mxu0 0
  %3360 = vmatpush.bf16.msra.mxu0 0
  %3361 = vmatpush.bf16.msra.mxu0 %v3243
  %3362 = vmatmul.bf16.gmra.mxu0 %v3236
  %v3363 = vpop.f32.mrf.mxu0
  %v3364 = vadd.f32 %v3351, %v3363
  %v3365 = vpop.f32.mrf.mxu0
  %3366 = vdwg.mxu0
  %3367 = vmatpush.bf16.msra.mxu0 %v2900
  %3368 = vmatpush.bf16.msra.mxu0 %v2892
  %3369 = vmatpush.bf16.msra.mxu0 %v2884
  %3370 = vmatpush.bf16.msra.mxu0 %v2876
  %3371 = vmatpush.bf16.msra.mxu0 %v2868
  %3372 = vmatpush.bf16.msra.mxu0 %v2860
  %3373 = vmatpush.bf16.msra.mxu0 %v2852
  %3374 = vmatpush.bf16.msra.mxu0 %v2844
  %3375 = vmatmul.bf16.gmra.mxu0 %v2247
  %v3376 = vpop.f32.mrf.mxu0
  %v3377 = vadd.f32 %v2239, %v3376
  %v3378 = vpop.f32.mrf.mxu0
  %3379 = vdwg.mxu0
  %3380 = vmatpush.bf16.msra.mxu0 %v2964
  %3381 = vmatpush.bf16.msra.mxu0 %v2956
  %3382 = vmatpush.bf16.msra.mxu0 %v2948
  %3383 = vmatpush.bf16.msra.mxu0 %v2940
  %3384 = vmatpush.bf16.msra.mxu0 %v2932
  %3385 = vmatpush.bf16.msra.mxu0 %v2924
  %3386 = vmatpush.bf16.msra.mxu0 %v2916
  %3387 = vmatpush.bf16.msra.mxu0 %v2908
  %3388 = vmatmul.bf16.gmra.mxu0 %v2248
  %v3389 = vpop.f32.mrf.mxu0
  %v3390 = vadd.f32 %v3377, %v3389
  %v3391 = vpop.f32.mrf.mxu0
  %3392 = vdwg.mxu0
  %3393 = vmatpush.bf16.msra.mxu0 %v3028
  %3394 = vmatpush.bf16.msra.mxu0 %v3020
  %3395 = vmatpush.bf16.msra.mxu0 %v3012
  %3396 = vmatpush.bf16.msra.mxu0 %v3004
  %3397 = vmatpush.bf16.msra.mxu0 %v2996
  %3398 = vmatpush.bf16.msra.mxu0 %v2988
  %3399 = vmatpush.bf16.msra.mxu0 %v2980
  %3400 = vmatpush.bf16.msra.mxu0 %v2972
  %3401 = vmatmul.bf16.gmra.mxu0 %v2249
  %v3402 = vpop.f32.mrf.mxu0
  %v3403 = vadd.f32 %v3390, %v3402
  %v3404 = vpop.f32.mrf.mxu0
  %3405 = vdwg.mxu0
  %3406 = vmatpush.bf16.msra.mxu0 0
  %3407 = vmatpush.bf16.msra.mxu0 0
  %3408 = vmatpush.bf16.msra.mxu0 0
  %3409 = vmatpush.bf16.msra.mxu0 0
  %3410 = vmatpush.bf16.msra.mxu0 0
  %3411 = vmatpush.bf16.msra.mxu0 0
  %3412 = vmatpush.bf16.msra.mxu0 0
  %3413 = vmatpush.bf16.msra.mxu0 %v3246
  %3414 = vmatmul.bf16.gmra.mxu0 %v3236
  %v3415 = vpop.f32.mrf.mxu0
  %v3416 = vadd.f32 %v3403, %v3415
  %v3417 = vpop.f32.mrf.mxu0
  %3418 = vdwg.mxu0
  %3419 = vmatpush.bf16.msra.mxu0 %v2901
  %3420 = vmatpush.bf16.msra.mxu0 %v2893
  %3421 = vmatpush.bf16.msra.mxu0 %v2885
  %3422 = vmatpush.bf16.msra.mxu0 %v2877
  %3423 = vmatpush.bf16.msra.mxu0 %v2869
  %3424 = vmatpush.bf16.msra.mxu0 %v2861
  %3425 = vmatpush.bf16.msra.mxu0 %v2853
  %3426 = vmatpush.bf16.msra.mxu0 %v2845
  %3427 = vmatmul.bf16.gmra.mxu0 %v2247
  %v3428 = vpop.f32.mrf.mxu0
  %v3429 = vadd.f32 %v2239, %v3428
  %v3430 = vpop.f32.mrf.mxu0
  %3431 = vdwg.mxu0
  %3432 = vmatpush.bf16.msra.mxu0 %v2965
  %3433 = vmatpush.bf16.msra.mxu0 %v2957
  %3434 = vmatpush.bf16.msra.mxu0 %v2949
  %3435 = vmatpush.bf16.msra.mxu0 %v2941
  %3436 = vmatpush.bf16.msra.mxu0 %v2933
  %3437 = vmatpush.bf16.msra.mxu0 %v2925
  %3438 = vmatpush.bf16.msra.mxu0 %v2917
  %3439 = vmatpush.bf16.msra.mxu0 %v2909
  %3440 = vmatmul.bf16.gmra.mxu0 %v2248
  %v3441 = vpop.f32.mrf.mxu0
  %v3442 = vadd.f32 %v3429, %v3441
  %v3443 = vpop.f32.mrf.mxu0
  %3444 = vdwg.mxu0
  %3445 = vmatpush.bf16.msra.mxu0 %v3029
  %3446 = vmatpush.bf16.msra.mxu0 %v3021
  %3447 = vmatpush.bf16.msra.mxu0 %v3013
  %3448 = vmatpush.bf16.msra.mxu0 %v3005
  %3449 = vmatpush.bf16.msra.mxu0 %v2997
  %3450 = vmatpush.bf16.msra.mxu0 %v2989
  %3451 = vmatpush.bf16.msra.mxu0 %v2981
  %3452 = vmatpush.bf16.msra.mxu0 %v2973
  %3453 = vmatmul.bf16.gmra.mxu0 %v2249
  %v3454 = vpop.f32.mrf.mxu0
  %v3455 = vadd.f32 %v3442, %v3454
  %v3456 = vpop.f32.mrf.mxu0
  %3457 = vdwg.mxu0
  %3458 = vmatpush.bf16.msra.mxu0 0
  %3459 = vmatpush.bf16.msra.mxu0 0
  %3460 = vmatpush.bf16.msra.mxu0 0
  %3461 = vmatpush.bf16.msra.mxu0 0
  %3462 = vmatpush.bf16.msra.mxu0 0
  %3463 = vmatpush.bf16.msra.mxu0 0
  %3464 = vmatpush.bf16.msra.mxu0 0
  %3465 = vmatpush.bf16.msra.mxu0 %v3249
  %3466 = vmatmul.bf16.gmra.mxu0 %v3236
  %v3467 = vpop.f32.mrf.mxu0
  %v3468 = vadd.f32 %v3455, %v3467
  %v3469 = vpop.f32.mrf.mxu0
  %3470 = vdwg.mxu0
  %3471 = vmatpush.bf16.msra.mxu0 %v2902
  %3472 = vmatpush.bf16.msra.mxu0 %v2894
  %3473 = vmatpush.bf16.msra.mxu0 %v2886
  %3474 = vmatpush.bf16.msra.mxu0 %v2878
  %3475 = vmatpush.bf16.msra.mxu0 %v2870
  %3476 = vmatpush.bf16.msra.mxu0 %v2862
  %3477 = vmatpush.bf16.msra.mxu0 %v2854
  %3478 = vmatpush.bf16.msra.mxu0 %v2846
  %3479 = vmatmul.bf16.gmra.mxu0 %v2247
  %v3480 = vpop.f32.mrf.mxu0
  %v3481 = vadd.f32 %v2239, %v3480
  %v3482 = vpop.f32.mrf.mxu0
  %3483 = vdwg.mxu0
  %3484 = vmatpush.bf16.msra.mxu0 %v2966
  %3485 = vmatpush.bf16.msra.mxu0 %v2958
  %3486 = vmatpush.bf16.msra.mxu0 %v2950
  %3487 = vmatpush.bf16.msra.mxu0 %v2942
  %3488 = vmatpush.bf16.msra.mxu0 %v2934
  %3489 = vmatpush.bf16.msra.mxu0 %v2926
  %3490 = vmatpush.bf16.msra.mxu0 %v2918
  %3491 = vmatpush.bf16.msra.mxu0 %v2910
  %3492 = vmatmul.bf16.gmra.mxu0 %v2248
  %v3493 = vpop.f32.mrf.mxu0
  %v3494 = vadd.f32 %v3481, %v3493
  %v3495 = vpop.f32.mrf.mxu0
  %3496 = vdwg.mxu0
  %3497 = vmatpush.bf16.msra.mxu0 %v3030
  %3498 = vmatpush.bf16.msra.mxu0 %v3022
  %3499 = vmatpush.bf16.msra.mxu0 %v3014
  %3500 = vmatpush.bf16.msra.mxu0 %v3006
  %3501 = vmatpush.bf16.msra.mxu0 %v2998
  %3502 = vmatpush.bf16.msra.mxu0 %v2990
  %3503 = vmatpush.bf16.msra.mxu0 %v2982
  %3504 = vmatpush.bf16.msra.mxu0 %v2974
  %3505 = vmatmul.bf16.gmra.mxu0 %v2249
  %v3506 = vpop.f32.mrf.mxu0
  %v3507 = vadd.f32 %v3494, %v3506
  %v3508 = vpop.f32.mrf.mxu0
  %3509 = vdwg.mxu0
  %3510 = vmatpush.bf16.msra.mxu0 0
  %3511 = vmatpush.bf16.msra.mxu0 0
  %3512 = vmatpush.bf16.msra.mxu0 0
  %3513 = vmatpush.bf16.msra.mxu0 0
  %3514 = vmatpush.bf16.msra.mxu0 0
  %3515 = vmatpush.bf16.msra.mxu0 0
  %3516 = vmatpush.bf16.msra.mxu0 0
  %3517 = vmatpush.bf16.msra.mxu0 %v3252
  %3518 = vmatmul.bf16.gmra.mxu0 %v3236
  %v3519 = vpop.f32.mrf.mxu0
  %v3520 = vadd.f32 %v3507, %v3519
  %v3521 = vpop.f32.mrf.mxu0
  %3522 = vdwg.mxu0
  %3523 = vmatpush.bf16.msra.mxu0 %v2903
  %3524 = vmatpush.bf16.msra.mxu0 %v2895
  %3525 = vmatpush.bf16.msra.mxu0 %v2887
  %3526 = vmatpush.bf16.msra.mxu0 %v2879
  %3527 = vmatpush.bf16.msra.mxu0 %v2871
  %3528 = vmatpush.bf16.msra.mxu0 %v2863
  %3529 = vmatpush.bf16.msra.mxu0 %v2855
  %3530 = vmatpush.bf16.msra.mxu0 %v2847
  %3531 = vmatmul.bf16.gmra.mxu0 %v2247
  %v3532 = vpop.f32.mrf.mxu0
  %v3533 = vadd.f32 %v2239, %v3532
  %v3534 = vpop.f32.mrf.mxu0
  %3535 = vdwg.mxu0
  %3536 = vmatpush.bf16.msra.mxu0 %v2967
  %3537 = vmatpush.bf16.msra.mxu0 %v2959
  %3538 = vmatpush.bf16.msra.mxu0 %v2951
  %3539 = vmatpush.bf16.msra.mxu0 %v2943
  %3540 = vmatpush.bf16.msra.mxu0 %v2935
  %3541 = vmatpush.bf16.msra.mxu0 %v2927
  %3542 = vmatpush.bf16.msra.mxu0 %v2919
  %3543 = vmatpush.bf16.msra.mxu0 %v2911
  %3544 = vmatmul.bf16.gmra.mxu0 %v2248
  %v3545 = vpop.f32.mrf.mxu0
  %v3546 = vadd.f32 %v3533, %v3545
  %v3547 = vpop.f32.mrf.mxu0
  %3548 = vdwg.mxu0
  %3549 = vmatpush.bf16.msra.mxu0 %v3031
  %3550 = vmatpush.bf16.msra.mxu0 %v3023
  %3551 = vmatpush.bf16.msra.mxu0 %v3015
  %3552 = vmatpush.bf16.msra.mxu0 %v3007
  %3553 = vmatpush.bf16.msra.mxu0 %v2999
  %3554 = vmatpush.bf16.msra.mxu0 %v2991
  %3555 = vmatpush.bf16.msra.mxu0 %v2983
  %3556 = vmatpush.bf16.msra.mxu0 %v2975
  %3557 = vmatmul.bf16.gmra.mxu0 %v2249
  %v3558 = vpop.f32.mrf.mxu0
  %v3559 = vadd.f32 %v3546, %v3558
  %v3560 = vpop.f32.mrf.mxu0
  %3561 = vdwg.mxu0
  %3562 = vmatpush.bf16.msra.mxu0 0
  %3563 = vmatpush.bf16.msra.mxu0 0
  %3564 = vmatpush.bf16.msra.mxu0 0
  %3565 = vmatpush.bf16.msra.mxu0 0
  %3566 = vmatpush.bf16.msra.mxu0 0
  %3567 = vmatpush.bf16.msra.mxu0 0
  %3568 = vmatpush.bf16.msra.mxu0 0
  %3569 = vmatpush.bf16.msra.mxu0 %v3255
  %3570 = vmatmul.bf16.gmra.mxu0 %v3236
  %v3571 = vpop.f32.mrf.mxu0
  %v3572 = vadd.f32 %v3559, %v3571
  %v3573 = vpop.f32.mrf.mxu0
  %3574 = vdwg.mxu0
  %3575 = vmatpush.bf16.msra.mxu0 %v2904
  %3576 = vmatpush.bf16.msra.mxu0 %v2896
  %3577 = vmatpush.bf16.msra.mxu0 %v2888
  %3578 = vmatpush.bf16.msra.mxu0 %v2880
  %3579 = vmatpush.bf16.msra.mxu0 %v2872
  %3580 = vmatpush.bf16.msra.mxu0 %v2864
  %3581 = vmatpush.bf16.msra.mxu0 %v2856
  %3582 = vmatpush.bf16.msra.mxu0 %v2848
  %3583 = vmatmul.bf16.gmra.mxu0 %v2247
  %v3584 = vpop.f32.mrf.mxu0
  %v3585 = vadd.f32 %v2239, %v3584
  %v3586 = vpop.f32.mrf.mxu0
  %3587 = vdwg.mxu0
  %3588 = vmatpush.bf16.msra.mxu0 %v2968
  %3589 = vmatpush.bf16.msra.mxu0 %v2960
  %3590 = vmatpush.bf16.msra.mxu0 %v2952
  %3591 = vmatpush.bf16.msra.mxu0 %v2944
  %3592 = vmatpush.bf16.msra.mxu0 %v2936
  %3593 = vmatpush.bf16.msra.mxu0 %v2928
  %3594 = vmatpush.bf16.msra.mxu0 %v2920
  %3595 = vmatpush.bf16.msra.mxu0 %v2912
  %3596 = vmatmul.bf16.gmra.mxu0 %v2248
  %v3597 = vpop.f32.mrf.mxu0
  %v3598 = vadd.f32 %v3585, %v3597
  %v3599 = vpop.f32.mrf.mxu0
  %3600 = vdwg.mxu0
  %3601 = vmatpush.bf16.msra.mxu0 %v3032
  %3602 = vmatpush.bf16.msra.mxu0 %v3024
  %3603 = vmatpush.bf16.msra.mxu0 %v3016
  %3604 = vmatpush.bf16.msra.mxu0 %v3008
  %3605 = vmatpush.bf16.msra.mxu0 %v3000
  %3606 = vmatpush.bf16.msra.mxu0 %v2992
  %3607 = vmatpush.bf16.msra.mxu0 %v2984
  %3608 = vmatpush.bf16.msra.mxu0 %v2976
  %3609 = vmatmul.bf16.gmra.mxu0 %v2249
  %v3610 = vpop.f32.mrf.mxu0
  %v3611 = vadd.f32 %v3598, %v3610
  %v3612 = vpop.f32.mrf.mxu0
  %3613 = vdwg.mxu0
  %3614 = vmatpush.bf16.msra.mxu0 0
  %3615 = vmatpush.bf16.msra.mxu0 0
  %3616 = vmatpush.bf16.msra.mxu0 0
  %3617 = vmatpush.bf16.msra.mxu0 0
  %3618 = vmatpush.bf16.msra.mxu0 0
  %3619 = vmatpush.bf16.msra.mxu0 0
  %3620 = vmatpush.bf16.msra.mxu0 0
  %3621 = vmatpush.bf16.msra.mxu0 %v3258
  %3622 = vmatmul.bf16.gmra.mxu0 %v3236
  %v3623 = vpop.f32.mrf.mxu0
  %v3624 = vadd.f32 %v3611, %v3623
  %v3625 = vpop.f32.mrf.mxu0
  %3626 = vdwg.mxu0
  %3627 = vmatpush.bf16.msra.mxu0 %v2905
  %3628 = vmatpush.bf16.msra.mxu0 %v2897
  %3629 = vmatpush.bf16.msra.mxu0 %v2889
  %3630 = vmatpush.bf16.msra.mxu0 %v2881
  %3631 = vmatpush.bf16.msra.mxu0 %v2873
  %3632 = vmatpush.bf16.msra.mxu0 %v2865
  %3633 = vmatpush.bf16.msra.mxu0 %v2857
  %3634 = vmatpush.bf16.msra.mxu0 %v2849
  %3635 = vmatmul.bf16.gmra.mxu0 %v2247
  %v3636 = vpop.f32.mrf.mxu0
  %v3637 = vadd.f32 %v2239, %v3636
  %v3638 = vpop.f32.mrf.mxu0
  %3639 = vdwg.mxu0
  %3640 = vmatpush.bf16.msra.mxu0 %v2969
  %3641 = vmatpush.bf16.msra.mxu0 %v2961
  %3642 = vmatpush.bf16.msra.mxu0 %v2953
  %3643 = vmatpush.bf16.msra.mxu0 %v2945
  %3644 = vmatpush.bf16.msra.mxu0 %v2937
  %3645 = vmatpush.bf16.msra.mxu0 %v2929
  %3646 = vmatpush.bf16.msra.mxu0 %v2921
  %3647 = vmatpush.bf16.msra.mxu0 %v2913
  %3648 = vmatmul.bf16.gmra.mxu0 %v2248
  %v3649 = vpop.f32.mrf.mxu0
  %v3650 = vadd.f32 %v3637, %v3649
  %v3651 = vpop.f32.mrf.mxu0
  %3652 = vdwg.mxu0
  %3653 = vmatpush.bf16.msra.mxu0 %v3033
  %3654 = vmatpush.bf16.msra.mxu0 %v3025
  %3655 = vmatpush.bf16.msra.mxu0 %v3017
  %3656 = vmatpush.bf16.msra.mxu0 %v3009
  %3657 = vmatpush.bf16.msra.mxu0 %v3001
  %3658 = vmatpush.bf16.msra.mxu0 %v2993
  %3659 = vmatpush.bf16.msra.mxu0 %v2985
  %3660 = vmatpush.bf16.msra.mxu0 %v2977
  %3661 = vmatmul.bf16.gmra.mxu0 %v2249
  %v3662 = vpop.f32.mrf.mxu0
  %v3663 = vadd.f32 %v3650, %v3662
  %v3664 = vpop.f32.mrf.mxu0
  %3665 = vdwg.mxu0
  %3666 = vmatpush.bf16.msra.mxu0 0
  %3667 = vmatpush.bf16.msra.mxu0 0
  %3668 = vmatpush.bf16.msra.mxu0 0
  %3669 = vmatpush.bf16.msra.mxu0 0
  %3670 = vmatpush.bf16.msra.mxu0 0
  %3671 = vmatpush.bf16.msra.mxu0 0
  %3672 = vmatpush.bf16.msra.mxu0 0
  %3673 = vmatpush.bf16.msra.mxu0 %v3261
  %3674 = vmatmul.bf16.gmra.mxu0 %v3236
  %v3675 = vpop.f32.mrf.mxu0
  %v3676 = vadd.f32 %v3663, %v3675
  %v3677 = vpop.f32.mrf.mxu0
  %3678 = vdwg.mxu0
  %v3679 = vmax.f32 %v3312, 0.0
  %v3680 = vmax.f32 %v3364, 0.0
  %v3681 = vmax.f32 %v3416, 0.0
  %v3682 = vmax.f32 %v3468, 0.0
  %v3683 = vmax.f32 %v3520, 0.0
  %v3684 = vmax.f32 %v3572, 0.0
  %v3685 = vmax.f32 %v3624, 0.0
  %v3686 = vmax.f32 %v3676, 0.0
  %v3687 = vpack.c.bf16 %v3680, %v3679
  %v3688 = vpack.c.bf16 %v3682, %v3681
  %v3689 = vpack.c.bf16 %v3684, %v3683
  %v3690 = vpack.c.bf16 %v3686, %v3685
  %3691 = vst [vmem:[%s3] sm:$0xff] %v3687
  %3692 = vst [vmem:[%s3 + $0x8] sm:$0xff] %v3688
  %3693 = vst [vmem:[%s3 + $0x10] sm:$0xff] %v3689
  %3694 = vst [vmem:[%s3 + $0x18] sm:$0xff] %v3690
  // Predicated region
  $region14: #{_lambda_.26} parent=0 // pred_check
    _
  $region15: #{_lambda_.26} parent=0 // pred_check_branch
    %3696 = sbr.rel (0) target = $region17
  $region16: #{_lambda_.26} parent=0 // pred_region
    _
  $region17: #{_lambda_.26} parent=0 // pred_fallthru
    _
  // Predicated region
  $region18: #{_lambda_.26} parent=0 // pred_check
    _
  $region19: #{_lambda_.26} parent=0 // pred_check_branch
    %3698 = sbr.rel (0) target = $region21
  $region20: #{_lambda_.26} parent=0 // pred_region
    _
  $region21: #{_lambda_.26} parent=0 // pred_fallthru
    _

// kernel: _lambda_.28
$region0: #{_lambda_.28}
  #allocation0 [shape = 'u32[]', space=smem, size = 0x4, offset = 0x4, fixed_abs, tag = 'smem constant byte address 0x4 - core index']
  #allocation1 [shape = 'u32[72,128]{1,0:T(1,128)}', space=vmem, size = 0x9000, scoped, tag = 'internal scratch']
  #allocation2 [shape = 'bf16[144,128]{1,0:T(8,128)(2,1)}', space=vmem, size = 0x9000, scoped, tag = 'scratch operand']
  %s0 = inlined_call_operand.vmem [shape: bf16[16,384], index: 0, kind: input, shape index: {}]
  %s1 = inlined_call_operand.vmem [shape: bf16[32,144], index: 1, kind: input, shape index: {}]
  %s2 = inlined_call_operand.vmem [shape: f32[32,1], index: 2, kind: input, shape index: {}]
  %s3 = inlined_call_operand.vmem [shape: bf16[32,128], index: 3, kind: output, shape index: {}]
  %s4 = sld [smem:[#allocation0]]
  $region22: #{_lambda_.28} parent=0
    _
  %s6 = ssub.s32 1, %s4
  %s7 = scalar_select 0, %s6, %s4
  // Predicated region
  $region2: #{_lambda_.28} parent=0 // pred_check
    _
  $region3: #{_lambda_.28} parent=0 // pred_check_branch
    %9 = sbr.rel (0) target = $region5
  $region4: #{_lambda_.28} parent=0 // pred_region
    _
  $region5: #{_lambda_.28} parent=0 // pred_fallthru
    _
  // Predicated region
  $region6: #{_lambda_.28} parent=0 // pred_check
    _
  $region7: #{_lambda_.28} parent=0 // pred_check_branch
    %11 = sbr.rel (0) target = $region9
  $region8: #{_lambda_.28} parent=0 // pred_region
    _
  $region9: #{_lambda_.28} parent=0 // pred_fallthru
    _
  // Predicated region
  $region10: #{_lambda_.28} parent=0 // pred_check
    _
  $region11: #{_lambda_.28} parent=0 // pred_check_branch
    %13 = sbr.rel (0) target = $region13
  $region12: #{_lambda_.28} parent=0 // pred_region
    _
  $region13: #{_lambda_.28} parent=0 // pred_fallthru
    _
  %v15 = vld [vmem:[%s0] sm:$0xf]
  %v16 = vld [vmem:[%s0 + $0xc] sm:$0xf]
  %17 = vst [vmem:[#allocation2] sm:$0xf] %v15
  %18 = vst [vmem:[#allocation2 + $0x4] sm:$0xf] %v16
  %v19 = vld [vmem:[%s0] sm:$0xff]
  %v20 = vld [vmem:[%s0 + $0xc] sm:$0xff]
  %23 = vrot.lane.b32.xlu0 %v19, 78
  %v24 = vpop.permute.xlu0 %23
  %25 = vrot.lane.b32.xlu0 %v20, 78
  %v26 = vpop.permute.xlu0 %25
  %v27 = vrot.slane %v24, 4
  %v28 = vrot.slane %v26, 4
  %vm29 = vcmask 637952
  %v30 = vsel %vm29, %v24, %v27
  %v31 = vsel %vm29, %v26, %v28
  %34 = vst [vmem:[#allocation2 + $0x8] sm:$0xf] %v30
  %35 = vst [vmem:[#allocation2 + $0xc] sm:$0xf] %v31
  %v36 = vld [vmem:[%s0] sm:$0xff]
  %v37 = vld [vmem:[%s0 + $0xc] sm:$0xff]
  %40 = vrot.lane.b32.xlu0 %v36, 127
  %v41 = vpop.permute.xlu0 %40
  %42 = vrot.lane.b32.xlu0 %v37, 127
  %v43 = vpop.permute.xlu0 %42
  %v44 = vrot.slane %v41, 4
  %v45 = vrot.slane %v43, 4
  %vm46 = vcmask 1039360
  %v47 = vsel %vm46, %v41, %v44
  %v48 = vsel %vm46, %v43, %v45
  %51 = vst [vmem:[#allocation2 + $0x10] sm:$0xf] %v47
  %52 = vst [vmem:[#allocation2 + $0x14] sm:$0xf] %v48
  %v53 = vld [vmem:[%s0] sm:$0xff]
  %v54 = vld [vmem:[%s0 + $0xc] sm:$0xff]
  %57 = vrot.lane.b32.xlu0 %v53, 28
  %v58 = vpop.permute.xlu0 %57
  %59 = vrot.lane.b32.xlu0 %v54, 28
  %v60 = vpop.permute.xlu0 %59
  %v61 = vrot.slane %v58, 4
  %v62 = vrot.slane %v60, 4
  %vm63 = vcmask 228352
  %v64 = vsel %vm63, %v58, %v61
  %v65 = vsel %vm63, %v60, %v62
  %68 = vst [vmem:[#allocation2 + $0x18] sm:$0xf] %v64
  %69 = vst [vmem:[#allocation2 + $0x1c] sm:$0xf] %v65
  %v70 = vld [vmem:[%s0 + $0x4] sm:$0xff]
  %v71 = vld [vmem:[%s0 + $0x10] sm:$0xff]
  %74 = vrot.lane.b32.xlu0 %v70, 106
  %v75 = vpop.permute.xlu0 %74
  %76 = vrot.lane.b32.xlu0 %v71, 106
  %v77 = vpop.permute.xlu0 %76
  %v78 = vrot.slane %v75, 4
  %v79 = vrot.slane %v77, 4
  %vm80 = vcmask 867328
  %v81 = vsel %vm80, %v75, %v78
  %v82 = vsel %vm80, %v77, %v79
  %85 = vst [vmem:[#allocation2 + $0x20] sm:$0xf] %v81
  %86 = vst [vmem:[#allocation2 + $0x24] sm:$0xf] %v82
  %v87 = vld [vmem:[%s0] sm:$0xff]
  %v88 = vld [vmem:[%s0 + $0xc] sm:$0xff]
  %91 = vrot.lane.b32.xlu0 %v87, 27
  %v92 = vpop.permute.xlu0 %91
  %93 = vrot.lane.b32.xlu0 %v88, 27
  %v94 = vpop.permute.xlu0 %93
  %v95 = vrot.slane %v92, 4
  %v96 = vrot.slane %v94, 4
  %vm97 = vcmask 220160
  %v98 = vsel %vm97, %v92, %v95
  %v99 = vsel %vm97, %v94, %v96
  %102 = vst [vmem:[#allocation2 + $0x28] sm:$0xf] %v98
  %103 = vst [vmem:[#allocation2 + $0x2c] sm:$0xf] %v99
  %v104 = vld [vmem:[%s0] sm:$0xff]
  %v105 = vld [vmem:[%s0 + $0xc] sm:$0xff]
  %108 = vrot.lane.b32.xlu0 %v104, 123
  %v109 = vpop.permute.xlu0 %108
  %110 = vrot.lane.b32.xlu0 %v105, 123
  %v111 = vpop.permute.xlu0 %110
  %v112 = vrot.slane %v109, 4
  %v113 = vrot.slane %v111, 4
  %vm114 = vcmask 1006592
  %v115 = vsel %vm114, %v109, %v112
  %v116 = vsel %vm114, %v111, %v113
  %119 = vst [vmem:[#allocation2 + $0x30] sm:$0xf] %v115
  %120 = vst [vmem:[#allocation2 + $0x34] sm:$0xf] %v116
  %v121 = vld [vmem:[%s0] sm:$0xff]
  %v122 = vld [vmem:[%s0 + $0xc] sm:$0xff]
  %125 = vrot.lane.b32.xlu0 %v121, 73
  %v126 = vpop.permute.xlu0 %125
  %127 = vrot.lane.b32.xlu0 %v122, 73
  %v128 = vpop.permute.xlu0 %127
  %v129 = vrot.slane %v126, 4
  %v130 = vrot.slane %v128, 4
  %vm131 = vcmask 596992
  %v132 = vsel %vm131, %v126, %v129
  %v133 = vsel %vm131, %v128, %v130
  %136 = vst [vmem:[#allocation2 + $0x38] sm:$0xf] %v132
  %137 = vst [vmem:[#allocation2 + $0x3c] sm:$0xf] %v133
  %v138 = vld [vmem:[%s0] sm:$0xff]
  %v139 = vld [vmem:[%s0 + $0xc] sm:$0xff]
  %142 = vrot.lane.b32.xlu0 %v138, 122
  %v143 = vpop.permute.xlu0 %142
  %144 = vrot.lane.b32.xlu0 %v139, 122
  %v145 = vpop.permute.xlu0 %144
  %v146 = vrot.slane %v143, 4
  %v147 = vrot.slane %v145, 4
  %vm148 = vcmask 998400
  %v149 = vsel %vm148, %v143, %v146
  %v150 = vsel %vm148, %v145, %v147
  %153 = vst [vmem:[#allocation2 + $0x40] sm:$0xf] %v149
  %154 = vst [vmem:[#allocation2 + $0x44] sm:$0xf] %v150
  %v155 = vld [vmem:[%s1] sm:$0xff]
  %v156 = vld [vmem:[%s1 + $0x8] sm:$0xff]
  %v157 = vld [vmem:[%s1 + $0x10] sm:$0xff]
  %v158 = vld [vmem:[%s1 + $0x18] sm:$0xff]
  %v159 = vld [vmem:[#allocation2] sm:$0xf]
  %v160 = vld [vmem:[#allocation2 + $0x4] sm:$0xf]
  %v161 = vld [vmem:[#allocation2 + $0x8] sm:$0xf]
  %v162 = vld [vmem:[#allocation2 + $0xc] sm:$0xf]
  %v163 = vld [vmem:[#allocation2 + $0x10] sm:$0xf]
  %v164 = vld [vmem:[#allocation2 + $0x14] sm:$0xf]
  %v165 = vld [vmem:[#allocation2 + $0x18] sm:$0xf]
  %v166 = vld [vmem:[#allocation2 + $0x1c] sm:$0xf]
  %v167 = vld [vmem:[#allocation2 + $0x20] sm:$0xf]
  %v168 = vld [vmem:[#allocation2 + $0x24] sm:$0xf]
  %v169 = vld [vmem:[#allocation2 + $0x28] sm:$0xf]
  %v170 = vld [vmem:[#allocation2 + $0x2c] sm:$0xf]
  %v171 = vld [vmem:[#allocation2 + $0x30] sm:$0xf]
  %v172 = vld [vmem:[#allocation2 + $0x34] sm:$0xf]
  %v173 = vld [vmem:[#allocation2 + $0x38] sm:$0xf]
  %v174 = vld [vmem:[#allocation2 + $0x3c] sm:$0xf]
  %v175 = vld [vmem:[#allocation2 + $0x40] sm:$0xf]
  %v176 = vld [vmem:[#allocation2 + $0x44] sm:$0xf]
  %v177 = vld [vmem:[%s2] sm:$0xff]
  %v178 = vld [vmem:[%s2 + $0x8] sm:$0xff]
  %v179 = vld [vmem:[%s2 + $0x10] sm:$0xff]
  %v180 = vld [vmem:[%s2 + $0x18] sm:$0xff]
  %182 = vset.pattern.permute.xlu0 0
  %183 = vperm.xlu0 %182, %v177
  %v184 = vpop.permute.xlu0 %183
  %187 = vset.pattern.permute.xlu0 0
  %188 = vperm.xlu0 %187, %v178
  %v189 = vpop.permute.xlu0 %188
  %192 = vset.pattern.permute.xlu0 0
  %193 = vperm.xlu0 %192, %v179
  %v194 = vpop.permute.xlu0 %193
  %197 = vset.pattern.permute.xlu0 0
  %198 = vperm.xlu0 %197, %v180
  %v199 = vpop.permute.xlu0 %198
  %v205 = vunpack.c.l.b16 %v155
  %v206 = vunpack.c.h.b16 %v155
  %v207 = vunpack.c.l.b16 %v156
  %v208 = vunpack.c.h.b16 %v156
  %v209 = vunpack.c.l.b16 %v157
  %v210 = vunpack.c.h.b16 %v157
  %v211 = vunpack.c.l.b16 %v158
  %v212 = vunpack.c.h.b16 %v158
  %v213 = vpack.c.b16 %v207, %v205
  %v214 = vpack.c.b16 %v208, %v206
  %v215 = vpack.c.b16 %v211, %v209
  %v216 = vpack.c.b16 %v212, %v210
  %v237 = vunpack.c.l.b16 %v159
  %v238 = vunpack.c.l.b16 %v160
  %v239 = vunpack.c.l.b16 %v161
  %v240 = vunpack.c.l.b16 %v162
  %v241 = vunpack.c.l.b16 %v163
  %v242 = vunpack.c.l.b16 %v164
  %v243 = vunpack.c.l.b16 %v165
  %v244 = vunpack.c.l.b16 %v166
  %v245 = vunpack.c.l.b16 %v167
  %v246 = vunpack.c.l.b16 %v168
  %v247 = vunpack.c.l.b16 %v169
  %v248 = vunpack.c.l.b16 %v170
  %v249 = vunpack.c.l.b16 %v171
  %v250 = vunpack.c.l.b16 %v172
  %v251 = vunpack.c.l.b16 %v173
  %v252 = vunpack.c.l.b16 %v174
  %v253 = vunpack.c.l.b16 %v175
  %v254 = vunpack.c.l.b16 %v176
  %v255 = vpack.c.b16 %v238, %v237
  %v256 = vpack.c.b16 %v240, %v239
  %v257 = vpack.c.b16 %v242, %v241
  %v258 = vpack.c.b16 %v244, %v243
  %v259 = vpack.c.b16 %v246, %v245
  %v260 = vpack.c.b16 %v248, %v247
  %v261 = vpack.c.b16 %v250, %v249
  %v262 = vpack.c.b16 %v252, %v251
  %v263 = vpack.c.b16 %v254, %v253
  %vm273 = vcmask 130048
  %v275 = vsel %vm273, %v214, 0
  %v278 = vsel %vm273, %v216, 0
  %280 = vmatpush.bf16.msra.mxu0 %v262
  %281 = vmatpush.bf16.msra.mxu0 %v261
  %282 = vmatpush.bf16.msra.mxu0 %v260
  %283 = vmatpush.bf16.msra.mxu0 %v259
  %284 = vmatpush.bf16.msra.mxu0 %v258
  %285 = vmatpush.bf16.msra.mxu0 %v257
  %286 = vmatpush.bf16.msra.mxu0 %v256
  %287 = vmatpush.bf16.msra.mxu0 %v255
  %288 = vmatmul.bf16.gmra.mxu0 %v213
  %v289 = vpop.f32.mrf.mxu0
  %v290 = vadd.f32 %v184, %v289
  %v291 = vpop.f32.mrf.mxu0
  %v292 = vadd.f32 %v189, %v291
  %293 = vmatmul.bf16.gmra.mxu0 %v215
  %v294 = vpop.f32.mrf.mxu0
  %v295 = vadd.f32 %v194, %v294
  %v296 = vpop.f32.mrf.mxu0
  %v297 = vadd.f32 %v199, %v296
  %298 = vdwg.mxu0
  %299 = vmatpush.bf16.msra.mxu0 0
  %300 = vmatpush.bf16.msra.mxu0 0
  %301 = vmatpush.bf16.msra.mxu0 0
  %302 = vmatpush.bf16.msra.mxu0 0
  %303 = vmatpush.bf16.msra.mxu0 0
  %304 = vmatpush.bf16.msra.mxu0 0
  %305 = vmatpush.bf16.msra.mxu0 0
  %306 = vmatpush.bf16.msra.mxu0 %v263
  %307 = vmatmul.bf16.gmra.mxu0 %v275
  %v308 = vpop.f32.mrf.mxu0
  %v309 = vadd.f32 %v290, %v308
  %v310 = vpop.f32.mrf.mxu0
  %v311 = vadd.f32 %v292, %v310
  %312 = vmatmul.bf16.gmra.mxu0 %v278
  %v313 = vpop.f32.mrf.mxu0
  %v314 = vadd.f32 %v295, %v313
  %v315 = vpop.f32.mrf.mxu0
  %v316 = vadd.f32 %v297, %v315
  %317 = vdwg.mxu0
  %v318 = vmax.f32 %v309, 0.0
  %v319 = vmax.f32 %v311, 0.0
  %v320 = vmax.f32 %v314, 0.0
  %v321 = vmax.f32 %v316, 0.0
  %v322 = vpack.c.bf16 %v318, %v318
  %v323 = vpack.c.bf16 %v319, %v319
  %v324 = vpack.c.bf16 %v320, %v320
  %v325 = vpack.c.bf16 %v321, %v321
  %326 = vst [vmem:[%s3] sm:$0xf] %v322
  %327 = vst [vmem:[%s3 + $0x4] sm:$0xf] %v323
  %328 = vst [vmem:[%s3 + $0x8] sm:$0xf] %v324
  %329 = vst [vmem:[%s3 + $0xc] sm:$0xf] %v325
  // Predicated region
  $region14: #{_lambda_.28} parent=0 // pred_check
    _
  $region15: #{_lambda_.28} parent=0 // pred_check_branch
    %331 = sbr.rel (0) target = $region17
  $region16: #{_lambda_.28} parent=0 // pred_region
    _
  $region17: #{_lambda_.28} parent=0 // pred_fallthru
    _
  // Predicated region
  $region18: #{_lambda_.28} parent=0 // pred_check
    _
  $region19: #{_lambda_.28} parent=0 // pred_check_branch
    %333 = sbr.rel (0) target = $region21
  $region20: #{_lambda_.28} parent=0 // pred_region
    _
  $region21: #{_lambda_.28} parent=0 // pred_fallthru
    _

// kernel: _lambda_.29
$region0: #{_lambda_.29}
  #allocation0 [shape = 'u32[]', space=smem, size = 0x4, offset = 0x4, fixed_abs, tag = 'smem constant byte address 0x4 - core index']
  #allocation1 [shape = 'u32[72,128]{1,0:T(1,128)}', space=vmem, size = 0x9000, scoped, tag = 'internal scratch']
  #allocation2 [shape = 'bf16[288,128]{1,0:T(8,128)(2,1)}', space=vmem, size = 0x12000, scoped, tag = 'scratch operand']
  %s0 = inlined_call_operand.vmem [shape: bf16[32,256], index: 0, kind: input, shape index: {}]
  %s1 = inlined_call_operand.vmem [shape: bf16[32,288], index: 1, kind: input, shape index: {}]
  %s2 = inlined_call_operand.vmem [shape: f32[32,1], index: 2, kind: input, shape index: {}]
  %s3 = inlined_call_operand.vmem [shape: bf16[32,128], index: 3, kind: output, shape index: {}]
  %s4 = sld [smem:[#allocation0]]
  $region22: #{_lambda_.29} parent=0
    _
  %s6 = ssub.s32 1, %s4
  %s7 = scalar_select 0, %s6, %s4
  // Predicated region
  $region2: #{_lambda_.29} parent=0 // pred_check
    _
  $region3: #{_lambda_.29} parent=0 // pred_check_branch
    %9 = sbr.rel (0) target = $region5
  $region4: #{_lambda_.29} parent=0 // pred_region
    _
  $region5: #{_lambda_.29} parent=0 // pred_fallthru
    _
  // Predicated region
  $region6: #{_lambda_.29} parent=0 // pred_check
    _
  $region7: #{_lambda_.29} parent=0 // pred_check_branch
    %11 = sbr.rel (0) target = $region9
  $region8: #{_lambda_.29} parent=0 // pred_region
    _
  $region9: #{_lambda_.29} parent=0 // pred_fallthru
    _
  // Predicated region
  $region10: #{_lambda_.29} parent=0 // pred_check
    _
  $region11: #{_lambda_.29} parent=0 // pred_check_branch
    %13 = sbr.rel (0) target = $region13
  $region12: #{_lambda_.29} parent=0 // pred_region
    _
  $region13: #{_lambda_.29} parent=0 // pred_fallthru
    _
  %v15 = vld [vmem:[%s0] sm:$0xf]
  %v16 = vld [vmem:[%s0 + $0x8] sm:$0xf]
  %v17 = vld [vmem:[%s0 + $0x10] sm:$0xf]
  %v18 = vld [vmem:[%s0 + $0x18] sm:$0xf]
  %19 = vst [vmem:[#allocation2] sm:$0xf] %v15
  %20 = vst [vmem:[#allocation2 + $0x4] sm:$0xf] %v16
  %21 = vst [vmem:[#allocation2 + $0x8] sm:$0xf] %v17
  %22 = vst [vmem:[#allocation2 + $0xc] sm:$0xf] %v18
  %v23 = vld [vmem:[%s0] sm:$0xff]
  %v24 = vld [vmem:[%s0 + $0x8] sm:$0xff]
  %v25 = vld [vmem:[%s0 + $0x10] sm:$0xff]
  %v26 = vld [vmem:[%s0 + $0x18] sm:$0xff]
  %31 = vrot.lane.b32.xlu0 %v23, 127
  %v32 = vpop.permute.xlu0 %31
  %33 = vrot.lane.b32.xlu0 %v24, 127
  %v34 = vpop.permute.xlu0 %33
  %35 = vrot.lane.b32.xlu0 %v25, 127
  %v36 = vpop.permute.xlu0 %35
  %37 = vrot.lane.b32.xlu0 %v26, 127
  %v38 = vpop.permute.xlu0 %37
  %v39 = vrot.slane %v32, 4
  %v40 = vrot.slane %v34, 4
  %v41 = vrot.slane %v36, 4
  %v42 = vrot.slane %v38, 4
  %vm43 = vcmask 1039360
  %v44 = vsel %vm43, %v32, %v39
  %v45 = vsel %vm43, %v34, %v40
  %v46 = vsel %vm43, %v36, %v41
  %v47 = vsel %vm43, %v38, %v42
  %52 = vst [vmem:[#allocation2 + $0x10] sm:$0xf] %v44
  %53 = vst [vmem:[#allocation2 + $0x14] sm:$0xf] %v45
  %54 = vst [vmem:[#allocation2 + $0x18] sm:$0xf] %v46
  %55 = vst [vmem:[#allocation2 + $0x1c] sm:$0xf] %v47
  %v56 = vld [vmem:[%s0] sm:$0xff]
  %v57 = vld [vmem:[%s0 + $0x8] sm:$0xff]
  %v58 = vld [vmem:[%s0 + $0x10] sm:$0xff]
  %v59 = vld [vmem:[%s0 + $0x18] sm:$0xff]
  %64 = vrot.lane.b32.xlu0 %v56, 126
  %v65 = vpop.permute.xlu0 %64
  %66 = vrot.lane.b32.xlu0 %v57, 126
  %v67 = vpop.permute.xlu0 %66
  %68 = vrot.lane.b32.xlu0 %v58, 126
  %v69 = vpop.permute.xlu0 %68
  %70 = vrot.lane.b32.xlu0 %v59, 126
  %v71 = vpop.permute.xlu0 %70
  %v72 = vrot.slane %v65, 4
  %v73 = vrot.slane %v67, 4
  %v74 = vrot.slane %v69, 4
  %v75 = vrot.slane %v71, 4
  %vm76 = vcmask 1031168
  %v77 = vsel %vm76, %v65, %v72
  %v78 = vsel %vm76, %v67, %v73
  %v79 = vsel %vm76, %v69, %v74
  %v80 = vsel %vm76, %v71, %v75
  %85 = vst [vmem:[#allocation2 + $0x20] sm:$0xf] %v77
  %86 = vst [vmem:[#allocation2 + $0x24] sm:$0xf] %v78
  %87 = vst [vmem:[#allocation2 + $0x28] sm:$0xf] %v79
  %88 = vst [vmem:[#allocation2 + $0x2c] sm:$0xf] %v80
  %v89 = vld [vmem:[%s0] sm:$0xff]
  %v90 = vld [vmem:[%s0 + $0x8] sm:$0xff]
  %v91 = vld [vmem:[%s0 + $0x10] sm:$0xff]
  %v92 = vld [vmem:[%s0 + $0x18] sm:$0xff]
  %97 = vrot.lane.b32.xlu0 %v89, 122
  %v98 = vpop.permute.xlu0 %97
  %99 = vrot.lane.b32.xlu0 %v90, 122
  %v100 = vpop.permute.xlu0 %99
  %101 = vrot.lane.b32.xlu0 %v91, 122
  %v102 = vpop.permute.xlu0 %101
  %103 = vrot.lane.b32.xlu0 %v92, 122
  %v104 = vpop.permute.xlu0 %103
  %v105 = vrot.slane %v98, 4
  %v106 = vrot.slane %v100, 4
  %v107 = vrot.slane %v102, 4
  %v108 = vrot.slane %v104, 4
  %vm109 = vcmask 998400
  %v110 = vsel %vm109, %v98, %v105
  %v111 = vsel %vm109, %v100, %v106
  %v112 = vsel %vm109, %v102, %v107
  %v113 = vsel %vm109, %v104, %v108
  %118 = vst [vmem:[#allocation2 + $0x30] sm:$0xf] %v110
  %119 = vst [vmem:[#allocation2 + $0x34] sm:$0xf] %v111
  %120 = vst [vmem:[#allocation2 + $0x38] sm:$0xf] %v112
  %121 = vst [vmem:[#allocation2 + $0x3c] sm:$0xf] %v113
  %v122 = vld [vmem:[%s0] sm:$0xff]
  %v123 = vld [vmem:[%s0 + $0x8] sm:$0xff]
  %v124 = vld [vmem:[%s0 + $0x10] sm:$0xff]
  %v125 = vld [vmem:[%s0 + $0x18] sm:$0xff]
  %130 = vrot.lane.b32.xlu0 %v122, 121
  %v131 = vpop.permute.xlu0 %130
  %132 = vrot.lane.b32.xlu0 %v123, 121
  %v133 = vpop.permute.xlu0 %132
  %134 = vrot.lane.b32.xlu0 %v124, 121
  %v135 = vpop.permute.xlu0 %134
  %136 = vrot.lane.b32.xlu0 %v125, 121
  %v137 = vpop.permute.xlu0 %136
  %v138 = vrot.slane %v131, 4
  %v139 = vrot.slane %v133, 4
  %v140 = vrot.slane %v135, 4
  %v141 = vrot.slane %v137, 4
  %vm142 = vcmask 990208
  %v143 = vsel %vm142, %v131, %v138
  %v144 = vsel %vm142, %v133, %v139
  %v145 = vsel %vm142, %v135, %v140
  %v146 = vsel %vm142, %v137, %v141
  %151 = vst [vmem:[#allocation2 + $0x40] sm:$0xf] %v143
  %152 = vst [vmem:[#allocation2 + $0x44] sm:$0xf] %v144
  %153 = vst [vmem:[#allocation2 + $0x48] sm:$0xf] %v145
  %154 = vst [vmem:[#allocation2 + $0x4c] sm:$0xf] %v146
  %v155 = vld [vmem:[%s0] sm:$0xff]
  %v156 = vld [vmem:[%s0 + $0x8] sm:$0xff]
  %v157 = vld [vmem:[%s0 + $0x10] sm:$0xff]
  %v158 = vld [vmem:[%s0 + $0x18] sm:$0xff]
  %163 = vrot.lane.b32.xlu0 %v155, 120
  %v164 = vpop.permute.xlu0 %163
  %165 = vrot.lane.b32.xlu0 %v156, 120
  %v166 = vpop.permute.xlu0 %165
  %167 = vrot.lane.b32.xlu0 %v157, 120
  %v168 = vpop.permute.xlu0 %167
  %169 = vrot.lane.b32.xlu0 %v158, 120
  %v170 = vpop.permute.xlu0 %169
  %v171 = vrot.slane %v164, 4
  %v172 = vrot.slane %v166, 4
  %v173 = vrot.slane %v168, 4
  %v174 = vrot.slane %v170, 4
  %vm175 = vcmask 982016
  %v176 = vsel %vm175, %v164, %v171
  %v177 = vsel %vm175, %v166, %v172
  %v178 = vsel %vm175, %v168, %v173
  %v179 = vsel %vm175, %v170, %v174
  %184 = vst [vmem:[#allocation2 + $0x50] sm:$0xf] %v176
  %185 = vst [vmem:[#allocation2 + $0x54] sm:$0xf] %v177
  %186 = vst [vmem:[#allocation2 + $0x58] sm:$0xf] %v178
  %187 = vst [vmem:[#allocation2 + $0x5c] sm:$0xf] %v179
  %v188 = vld [vmem:[%s0] sm:$0xff]
  %v189 = vld [vmem:[%s0 + $0x8] sm:$0xff]
  %v190 = vld [vmem:[%s0 + $0x10] sm:$0xff]
  %v191 = vld [vmem:[%s0 + $0x18] sm:$0xff]
  %196 = vrot.lane.b32.xlu0 %v188, 116
  %v197 = vpop.permute.xlu0 %196
  %198 = vrot.lane.b32.xlu0 %v189, 116
  %v199 = vpop.permute.xlu0 %198
  %200 = vrot.lane.b32.xlu0 %v190, 116
  %v201 = vpop.permute.xlu0 %200
  %202 = vrot.lane.b32.xlu0 %v191, 116
  %v203 = vpop.permute.xlu0 %202
  %v204 = vrot.slane %v197, 4
  %v205 = vrot.slane %v199, 4
  %v206 = vrot.slane %v201, 4
  %v207 = vrot.slane %v203, 4
  %vm208 = vcmask 949248
  %v209 = vsel %vm208, %v197, %v204
  %v210 = vsel %vm208, %v199, %v205
  %v211 = vsel %vm208, %v201, %v206
  %v212 = vsel %vm208, %v203, %v207
  %217 = vst [vmem:[#allocation2 + $0x60] sm:$0xf] %v209
  %218 = vst [vmem:[#allocation2 + $0x64] sm:$0xf] %v210
  %219 = vst [vmem:[#allocation2 + $0x68] sm:$0xf] %v211
  %220 = vst [vmem:[#allocation2 + $0x6c] sm:$0xf] %v212
  %v221 = vld [vmem:[%s0] sm:$0xff]
  %v222 = vld [vmem:[%s0 + $0x8] sm:$0xff]
  %v223 = vld [vmem:[%s0 + $0x10] sm:$0xff]
  %v224 = vld [vmem:[%s0 + $0x18] sm:$0xff]
  %229 = vrot.lane.b32.xlu0 %v221, 115
  %v230 = vpop.permute.xlu0 %229
  %231 = vrot.lane.b32.xlu0 %v222, 115
  %v232 = vpop.permute.xlu0 %231
  %233 = vrot.lane.b32.xlu0 %v223, 115
  %v234 = vpop.permute.xlu0 %233
  %235 = vrot.lane.b32.xlu0 %v224, 115
  %v236 = vpop.permute.xlu0 %235
  %v237 = vrot.slane %v230, 4
  %v238 = vrot.slane %v232, 4
  %v239 = vrot.slane %v234, 4
  %v240 = vrot.slane %v236, 4
  %vm241 = vcmask 941056
  %v242 = vsel %vm241, %v230, %v237
  %v243 = vsel %vm241, %v232, %v238
  %v244 = vsel %vm241, %v234, %v239
  %v245 = vsel %vm241, %v236, %v240
  %250 = vst [vmem:[#allocation2 + $0x70] sm:$0xf] %v242
  %251 = vst [vmem:[#allocation2 + $0x74] sm:$0xf] %v243
  %252 = vst [vmem:[#allocation2 + $0x78] sm:$0xf] %v244
  %253 = vst [vmem:[#allocation2 + $0x7c] sm:$0xf] %v245
  %v254 = vld [vmem:[%s0] sm:$0xff]
  %v255 = vld [vmem:[%s0 + $0x8] sm:$0xff]
  %v256 = vld [vmem:[%s0 + $0x10] sm:$0xff]
  %v257 = vld [vmem:[%s0 + $0x18] sm:$0xff]
  %262 = vrot.lane.b32.xlu0 %v254, 114
  %v263 = vpop.permute.xlu0 %262
  %264 = vrot.lane.b32.xlu0 %v255, 114
  %v265 = vpop.permute.xlu0 %264
  %266 = vrot.lane.b32.xlu0 %v256, 114
  %v267 = vpop.permute.xlu0 %266
  %268 = vrot.lane.b32.xlu0 %v257, 114
  %v269 = vpop.permute.xlu0 %268
  %v270 = vrot.slane %v263, 4
  %v271 = vrot.slane %v265, 4
  %v272 = vrot.slane %v267, 4
  %v273 = vrot.slane %v269, 4
  %vm274 = vcmask 932864
  %v275 = vsel %vm274, %v263, %v270
  %v276 = vsel %vm274, %v265, %v271
  %v277 = vsel %vm274, %v267, %v272
  %v278 = vsel %vm274, %v269, %v273
  %283 = vst [vmem:[#allocation2 + $0x80] sm:$0xf] %v275
  %284 = vst [vmem:[#allocation2 + $0x84] sm:$0xf] %v276
  %285 = vst [vmem:[#allocation2 + $0x88] sm:$0xf] %v277
  %286 = vst [vmem:[#allocation2 + $0x8c] sm:$0xf] %v278
  %v287 = vld [vmem:[%s1] sm:$0xff]
  %v288 = vld [vmem:[%s1 + $0x8] sm:$0xf]
  %v289 = vld [vmem:[%s1 + $0xc] sm:$0xff]
  %v290 = vld [vmem:[%s1 + $0x14] sm:$0xf]
  %v291 = vld [vmem:[%s1 + $0x18] sm:$0xff]
  %v292 = vld [vmem:[%s1 + $0x20] sm:$0xf]
  %v293 = vld [vmem:[%s1 + $0x24] sm:$0xff]
  %v294 = vld [vmem:[%s1 + $0x2c] sm:$0xf]
  %v295 = vld [vmem:[#allocation2] sm:$0xf]
  %v296 = vld [vmem:[#allocation2 + $0x4] sm:$0xf]
  %v297 = vld [vmem:[#allocation2 + $0x8] sm:$0xf]
  %v298 = vld [vmem:[#allocation2 + $0xc] sm:$0xf]
  %v299 = vld [vmem:[#allocation2 + $0x10] sm:$0xf]
  %v300 = vld [vmem:[#allocation2 + $0x14] sm:$0xf]
  %v301 = vld [vmem:[#allocation2 + $0x18] sm:$0xf]
  %v302 = vld [vmem:[#allocation2 + $0x1c] sm:$0xf]
  %v303 = vld [vmem:[#allocation2 + $0x20] sm:$0xf]
  %v304 = vld [vmem:[#allocation2 + $0x24] sm:$0xf]
  %v305 = vld [vmem:[#allocation2 + $0x28] sm:$0xf]
  %v306 = vld [vmem:[#allocation2 + $0x2c] sm:$0xf]
  %v307 = vld [vmem:[#allocation2 + $0x30] sm:$0xf]
  %v308 = vld [vmem:[#allocation2 + $0x34] sm:$0xf]
  %v309 = vld [vmem:[#allocation2 + $0x38] sm:$0xf]
  %v310 = vld [vmem:[#allocation2 + $0x3c] sm:$0xf]
  %v311 = vld [vmem:[#allocation2 + $0x40] sm:$0xf]
  %v312 = vld [vmem:[#allocation2 + $0x44] sm:$0xf]
  %v313 = vld [vmem:[#allocation2 + $0x48] sm:$0xf]
  %v314 = vld [vmem:[#allocation2 + $0x4c] sm:$0xf]
  %v315 = vld [vmem:[#allocation2 + $0x50] sm:$0xf]
  %v316 = vld [vmem:[#allocation2 + $0x54] sm:$0xf]
  %v317 = vld [vmem:[#allocation2 + $0x58] sm:$0xf]
  %v318 = vld [vmem:[#allocation2 + $0x5c] sm:$0xf]
  %v319 = vld [vmem:[#allocation2 + $0x60] sm:$0xf]
  %v320 = vld [vmem:[#allocation2 + $0x64] sm:$0xf]
  %v321 = vld [vmem:[#allocation2 + $0x68] sm:$0xf]
  %v322 = vld [vmem:[#allocation2 + $0x6c] sm:$0xf]
  %v323 = vld [vmem:[#allocation2 + $0x70] sm:$0xf]
  %v324 = vld [vmem:[#allocation2 + $0x74] sm:$0xf]
  %v325 = vld [vmem:[#allocation2 + $0x78] sm:$0xf]
  %v326 = vld [vmem:[#allocation2 + $0x7c] sm:$0xf]
  %v327 = vld [vmem:[#allocation2 + $0x80] sm:$0xf]
  %v328 = vld [vmem:[#allocation2 + $0x84] sm:$0xf]
  %v329 = vld [vmem:[#allocation2 + $0x88] sm:$0xf]
  %v330 = vld [vmem:[#allocation2 + $0x8c] sm:$0xf]
  %v331 = vld [vmem:[%s2] sm:$0xff]
  %v332 = vld [vmem:[%s2 + $0x8] sm:$0xff]
  %v333 = vld [vmem:[%s2 + $0x10] sm:$0xff]
  %v334 = vld [vmem:[%s2 + $0x18] sm:$0xff]
  %336 = vset.pattern.permute.xlu0 0
  %337 = vperm.xlu0 %336, %v331
  %v338 = vpop.permute.xlu0 %337
  %341 = vset.pattern.permute.xlu0 0
  %342 = vperm.xlu0 %341, %v332
  %v343 = vpop.permute.xlu0 %342
  %346 = vset.pattern.permute.xlu0 0
  %347 = vperm.xlu0 %346, %v333
  %v348 = vpop.permute.xlu0 %347
  %351 = vset.pattern.permute.xlu0 0
  %352 = vperm.xlu0 %351, %v334
  %v353 = vpop.permute.xlu0 %352
  %v363 = vunpack.c.l.b16 %v287
  %v364 = vunpack.c.h.b16 %v287
  %v365 = vunpack.c.l.b16 %v288
  %v366 = vunpack.c.l.b16 %v289
  %v367 = vunpack.c.h.b16 %v289
  %v368 = vunpack.c.l.b16 %v290
  %v369 = vunpack.c.l.b16 %v291
  %v370 = vunpack.c.h.b16 %v291
  %v371 = vunpack.c.l.b16 %v292
  %v372 = vunpack.c.l.b16 %v293
  %v373 = vunpack.c.h.b16 %v293
  %v374 = vunpack.c.l.b16 %v294
  %v375 = vpack.c.b16 %v366, %v363
  %v376 = vpack.c.b16 %v367, %v364
  %v377 = vpack.c.b16 %v368, %v365
  %v378 = vpack.c.b16 %v372, %v369
  %v379 = vpack.c.b16 %v373, %v370
  %v380 = vpack.c.b16 %v374, %v371
  %v421 = vunpack.c.l.b16 %v295
  %v422 = vunpack.c.l.b16 %v296
  %v423 = vunpack.c.l.b16 %v297
  %v424 = vunpack.c.l.b16 %v298
  %v425 = vunpack.c.l.b16 %v299
  %v426 = vunpack.c.l.b16 %v300
  %v427 = vunpack.c.l.b16 %v301
  %v428 = vunpack.c.l.b16 %v302
  %v429 = vunpack.c.l.b16 %v303
  %v430 = vunpack.c.l.b16 %v304
  %v431 = vunpack.c.l.b16 %v305
  %v432 = vunpack.c.l.b16 %v306
  %v433 = vunpack.c.l.b16 %v307
  %v434 = vunpack.c.l.b16 %v308
  %v435 = vunpack.c.l.b16 %v309
  %v436 = vunpack.c.l.b16 %v310
  %v437 = vunpack.c.l.b16 %v311
  %v438 = vunpack.c.l.b16 %v312
  %v439 = vunpack.c.l.b16 %v313
  %v440 = vunpack.c.l.b16 %v314
  %v441 = vunpack.c.l.b16 %v315
  %v442 = vunpack.c.l.b16 %v316
  %v443 = vunpack.c.l.b16 %v317
  %v444 = vunpack.c.l.b16 %v318
  %v445 = vunpack.c.l.b16 %v319
  %v446 = vunpack.c.l.b16 %v320
  %v447 = vunpack.c.l.b16 %v321
  %v448 = vunpack.c.l.b16 %v322
  %v449 = vunpack.c.l.b16 %v323
  %v450 = vunpack.c.l.b16 %v324
  %v451 = vunpack.c.l.b16 %v325
  %v452 = vunpack.c.l.b16 %v326
  %v453 = vunpack.c.l.b16 %v327
  %v454 = vunpack.c.l.b16 %v328
  %v455 = vunpack.c.l.b16 %v329
  %v456 = vunpack.c.l.b16 %v330
  %v457 = vpack.c.b16 %v422, %v421
  %v458 = vpack.c.b16 %v424, %v423
  %v459 = vpack.c.b16 %v426, %v425
  %v460 = vpack.c.b16 %v428, %v427
  %v461 = vpack.c.b16 %v430, %v429
  %v462 = vpack.c.b16 %v432, %v431
  %v463 = vpack.c.b16 %v434, %v433
  %v464 = vpack.c.b16 %v436, %v435
  %v465 = vpack.c.b16 %v438, %v437
  %v466 = vpack.c.b16 %v440, %v439
  %v467 = vpack.c.b16 %v442, %v441
  %v468 = vpack.c.b16 %v444, %v443
  %v469 = vpack.c.b16 %v446, %v445
  %v470 = vpack.c.b16 %v448, %v447
  %v471 = vpack.c.b16 %v450, %v449
  %v472 = vpack.c.b16 %v452, %v451
  %v473 = vpack.c.b16 %v454, %v453
  %v474 = vpack.c.b16 %v456, %v455
  %vm493 = vcmask 261120
  %v495 = vsel %vm493, %v377, 0
  %v498 = vsel %vm493, %v380, 0
  %500 = vmatpush.bf16.msra.mxu0 %v464
  %501 = vmatpush.bf16.msra.mxu0 %v463
  %502 = vmatpush.bf16.msra.mxu0 %v462
  %503 = vmatpush.bf16.msra.mxu0 %v461
  %504 = vmatpush.bf16.msra.mxu0 %v460
  %505 = vmatpush.bf16.msra.mxu0 %v459
  %506 = vmatpush.bf16.msra.mxu0 %v458
  %507 = vmatpush.bf16.msra.mxu0 %v457
  %508 = vmatmul.bf16.gmra.mxu0 %v375
  %v509 = vpop.f32.mrf.mxu0
  %v510 = vadd.f32 %v338, %v509
  %v511 = vpop.f32.mrf.mxu0
  %v512 = vadd.f32 %v343, %v511
  %513 = vmatmul.bf16.gmra.mxu0 %v378
  %v514 = vpop.f32.mrf.mxu0
  %v515 = vadd.f32 %v348, %v514
  %v516 = vpop.f32.mrf.mxu0
  %v517 = vadd.f32 %v353, %v516
  %518 = vdwg.mxu0
  %519 = vmatpush.bf16.msra.mxu0 %v472
  %520 = vmatpush.bf16.msra.mxu0 %v471
  %521 = vmatpush.bf16.msra.mxu0 %v470
  %522 = vmatpush.bf16.msra.mxu0 %v469
  %523 = vmatpush.bf16.msra.mxu0 %v468
  %524 = vmatpush.bf16.msra.mxu0 %v467
  %525 = vmatpush.bf16.msra.mxu0 %v466
  %526 = vmatpush.bf16.msra.mxu0 %v465
  %527 = vmatmul.bf16.gmra.mxu0 %v376
  %v528 = vpop.f32.mrf.mxu0
  %v529 = vadd.f32 %v510, %v528
  %v530 = vpop.f32.mrf.mxu0
  %v531 = vadd.f32 %v512, %v530
  %532 = vmatmul.bf16.gmra.mxu0 %v379
  %v533 = vpop.f32.mrf.mxu0
  %v534 = vadd.f32 %v515, %v533
  %v535 = vpop.f32.mrf.mxu0
  %v536 = vadd.f32 %v517, %v535
  %537 = vdwg.mxu0
  %538 = vmatpush.bf16.msra.mxu0 0
  %539 = vmatpush.bf16.msra.mxu0 0
  %540 = vmatpush.bf16.msra.mxu0 0
  %541 = vmatpush.bf16.msra.mxu0 0
  %542 = vmatpush.bf16.msra.mxu0 0
  %543 = vmatpush.bf16.msra.mxu0 0
  %544 = vmatpush.bf16.msra.mxu0 %v474
  %545 = vmatpush.bf16.msra.mxu0 %v473
  %546 = vmatmul.bf16.gmra.mxu0 %v495
  %v547 = vpop.f32.mrf.mxu0
  %v548 = vadd.f32 %v529, %v547
  %v549 = vpop.f32.mrf.mxu0
  %v550 = vadd.f32 %v531, %v549
  %551 = vmatmul.bf16.gmra.mxu0 %v498
  %v552 = vpop.f32.mrf.mxu0
  %v553 = vadd.f32 %v534, %v552
  %v554 = vpop.f32.mrf.mxu0
  %v555 = vadd.f32 %v536, %v554
  %556 = vdwg.mxu0
  %v557 = vlaneseq
  %v558 = vshrl.u32 %v557, 7
  %v559 = vadd.s32 %v558, 8
  %v560 = vadd.s32 %v558, 16
  %v561 = vadd.s32 %v558, 24
  %vm562 = vcmp.lt.s32.totalorder %v558, 8
  %vm563 = vcmp.lt.s32.totalorder %v559, 8
  %vm564 = vcmp.lt.s32.totalorder %v560, 8
  %vm565 = vcmp.lt.s32.totalorder %v561, 8
  %v566 = vmax.f32 %v548, 0.0
  %v567 = vmax.f32 %v550, 0.0
  %v568 = vmax.f32 %v553, 0.0
  %v569 = vmax.f32 %v555, 0.0
  %v570 = vsel %vm562, %v566, %v548
  %v571 = vsel %vm563, %v567, %v550
  %v572 = vsel %vm564, %v568, %v553
  %v573 = vsel %vm565, %v569, %v555
  %v574 = vpack.c.bf16 %v570, %v570
  %v575 = vpack.c.bf16 %v571, %v571
  %v576 = vpack.c.bf16 %v572, %v572
  %v577 = vpack.c.bf16 %v573, %v573
  %578 = vst [vmem:[%s3] sm:$0xf] %v574
  %579 = vst [vmem:[%s3 + $0x4] sm:$0xf] %v575
  %580 = vst [vmem:[%s3 + $0x8] sm:$0xf] %v576
  %581 = vst [vmem:[%s3 + $0xc] sm:$0xf] %v577
  // Predicated region
  $region14: #{_lambda_.29} parent=0 // pred_check
    _
  $region15: #{_lambda_.29} parent=0 // pred_check_branch
    %583 = sbr.rel (0) target = $region17
  $region16: #{_lambda_.29} parent=0 // pred_region
    _
  $region17: #{_lambda_.29} parent=0 // pred_fallthru
    _
  // Predicated region
  $region18: #{_lambda_.29} parent=0 // pred_check
    _
  $region19: #{_lambda_.29} parent=0 // pred_check_branch
    %585 = sbr.rel (0) target = $region21
  $region20: #{_lambda_.29} parent=0 // pred_region
    _
  $region21: #{_lambda_.29} parent=0 // pred_fallthru
    _

// kernel: _lambda_.30
$region0: #{_lambda_.30}
  #allocation0 [shape = 'u32[]', space=smem, size = 0x4, offset = 0x4, fixed_abs, tag = 'smem constant byte address 0x4 - core index']
  #allocation1 [shape = 'u32[72,128]{1,0:T(1,128)}', space=vmem, size = 0x9000, scoped, tag = 'internal scratch']
  %s0 = inlined_call_operand.vmem [shape: bf16[24,128], index: 0, kind: input, shape index: {}]
  %s1 = inlined_call_operand.vmem [shape: bf16[16,24], index: 1, kind: input, shape index: {}]
  %s2 = inlined_call_operand.vmem [shape: f32[16,1], index: 2, kind: input, shape index: {}]
  %s3 = inlined_call_operand.vmem [shape: bf16[16,128], index: 3, kind: output, shape index: {}]
  %s4 = sld [smem:[#allocation0]]
  $region22: #{_lambda_.30} parent=0
    _
  %s6 = ssub.s32 1, %s4
  %s7 = scalar_select 0, %s6, %s4
  // Predicated region
  $region2: #{_lambda_.30} parent=0 // pred_check
    _
  $region3: #{_lambda_.30} parent=0 // pred_check_branch
    %9 = sbr.rel (0) target = $region5
  $region4: #{_lambda_.30} parent=0 // pred_region
    _
  $region5: #{_lambda_.30} parent=0 // pred_fallthru
    _
  // Predicated region
  $region6: #{_lambda_.30} parent=0 // pred_check
    _
  $region7: #{_lambda_.30} parent=0 // pred_check_branch
    %11 = sbr.rel (0) target = $region9
  $region8: #{_lambda_.30} parent=0 // pred_region
    _
  $region9: #{_lambda_.30} parent=0 // pred_fallthru
    _
  // Predicated region
  $region10: #{_lambda_.30} parent=0 // pred_check
    _
  $region11: #{_lambda_.30} parent=0 // pred_check_branch
    %13 = sbr.rel (0) target = $region13
  $region12: #{_lambda_.30} parent=0 // pred_region
    _
  $region13: #{_lambda_.30} parent=0 // pred_fallthru
    _
  %v15 = vld [vmem:[%s0] sm:$0xf]
  %v16 = vld [vmem:[%s0 + $0x4] sm:$0xf]
  %v17 = vld [vmem:[%s0 + $0x8] sm:$0xf]
  %v18 = vld [vmem:[%s1] sm:$0xf]
  %v19 = vld [vmem:[%s1 + $0x4] sm:$0xf]
  %v20 = vld [vmem:[%s2] sm:$0xff]
  %v21 = vld [vmem:[%s2 + $0x8] sm:$0xff]
  %23 = vset.pattern.permute.xlu0 0
  %24 = vperm.xlu0 %23, %v20
  %v25 = vpop.permute.xlu0 %24
  %28 = vset.pattern.permute.xlu0 0
  %29 = vperm.xlu0 %28, %v21
  %v30 = vpop.permute.xlu0 %29
  %v34 = vunpack.c.l.b16 %v18
  %v35 = vunpack.c.l.b16 %v19
  %v36 = vpack.c.b16 %v35, %v34
  %v40 = vunpack.c.l.b16 %v15
  %v41 = vunpack.c.l.b16 %v16
  %v42 = vunpack.c.l.b16 %v17
  %v43 = vpack.c.b16 %v41, %v40
  %v44 = vpack.c.b16 %v42, %v42
  %vm46 = vcmask 195584
  %v48 = vsel %vm46, %v36, 0
  %vm50 = vcmask 1043456
  %v52 = vsel %vm50, %v44, 0
  %54 = vmatpush.bf16.msra.mxu0 0
  %55 = vmatpush.bf16.msra.mxu0 0
  %56 = vmatpush.bf16.msra.mxu0 0
  %57 = vmatpush.bf16.msra.mxu0 0
  %58 = vmatpush.bf16.msra.mxu0 0
  %59 = vmatpush.bf16.msra.mxu0 0
  %60 = vmatpush.bf16.msra.mxu0 %v52
  %61 = vmatpush.bf16.msra.mxu0 %v43
  %62 = vmatmul.bf16.gmra.mxu0 %v48
  %v63 = vpop.f32.mrf.mxu0
  %v64 = vadd.f32 %v25, %v63
  %v65 = vpop.f32.mrf.mxu0
  %v66 = vadd.f32 %v30, %v65
  %67 = vdwg.mxu0
  %v68 = vmax.f32 %v64, 0.0
  %v69 = vmax.f32 %v66, 0.0
  %v70 = vpack.c.bf16 %v68, %v68
  %v71 = vpack.c.bf16 %v69, %v69
  %72 = vst [vmem:[%s3] sm:$0xf] %v70
  %73 = vst [vmem:[%s3 + $0x4] sm:$0xf] %v71
  // Predicated region
  $region14: #{_lambda_.30} parent=0 // pred_check
    _
  $region15: #{_lambda_.30} parent=0 // pred_check_branch
    %75 = sbr.rel (0) target = $region17
  $region16: #{_lambda_.30} parent=0 // pred_region
    _
  $region17: #{_lambda_.30} parent=0 // pred_fallthru
    _
  // Predicated region
  $region18: #{_lambda_.30} parent=0 // pred_check
    _
  $region19: #{_lambda_.30} parent=0 // pred_check_branch
    %77 = sbr.rel (0) target = $region21
  $region20: #{_lambda_.30} parent=0 // pred_region
    _
  $region21: #{_lambda_.30} parent=0 // pred_fallthru
    _

// kernel: _lambda_.32
$region0: #{_lambda_.32}
  #allocation0 [shape = 'u32[]', space=smem, size = 0x4, offset = 0x4, fixed_abs, tag = 'smem constant byte address 0x4 - core index']
  #allocation1 [shape = 'u32[72,128]{1,0:T(1,128)}', space=vmem, size = 0x9000, scoped, tag = 'internal scratch']
  %s0 = inlined_call_operand.vmem [shape: bf16[24,128], index: 0, kind: input, shape index: {}]
  %s1 = inlined_call_operand.vmem [shape: bf16[24,24], index: 1, kind: input, shape index: {}]
  %s2 = inlined_call_operand.vmem [shape: f32[24,1], index: 2, kind: input, shape index: {}]
  %s3 = inlined_call_operand.vmem [shape: bf16[24,128], index: 3, kind: output, shape index: {}]
  %s4 = sld [smem:[#allocation0]]
  $region22: #{_lambda_.32} parent=0
    _
  %s6 = ssub.s32 1, %s4
  %s7 = scalar_select 0, %s6, %s4
  // Predicated region
  $region2: #{_lambda_.32} parent=0 // pred_check
    _
  $region3: #{_lambda_.32} parent=0 // pred_check_branch
    %9 = sbr.rel (0) target = $region5
  $region4: #{_lambda_.32} parent=0 // pred_region
    _
  $region5: #{_lambda_.32} parent=0 // pred_fallthru
    _
  // Predicated region
  $region6: #{_lambda_.32} parent=0 // pred_check
    _
  $region7: #{_lambda_.32} parent=0 // pred_check_branch
    %11 = sbr.rel (0) target = $region9
  $region8: #{_lambda_.32} parent=0 // pred_region
    _
  $region9: #{_lambda_.32} parent=0 // pred_fallthru
    _
  // Predicated region
  $region10: #{_lambda_.32} parent=0 // pred_check
    _
  $region11: #{_lambda_.32} parent=0 // pred_check_branch
    %13 = sbr.rel (0) target = $region13
  $region12: #{_lambda_.32} parent=0 // pred_region
    _
  $region13: #{_lambda_.32} parent=0 // pred_fallthru
    _
  %v15 = vld [vmem:[%s0] sm:$0xf]
  %v16 = vld [vmem:[%s0 + $0x4] sm:$0xf]
  %v17 = vld [vmem:[%s0 + $0x8] sm:$0xf]
  %v18 = vld [vmem:[%s1] sm:$0xf]
  %v19 = vld [vmem:[%s1 + $0x4] sm:$0xf]
  %v20 = vld [vmem:[%s1 + $0x8] sm:$0xf]
  %v21 = vld [vmem:[%s2] sm:$0xff]
  %v22 = vld [vmem:[%s2 + $0x8] sm:$0xff]
  %v23 = vld [vmem:[%s2 + $0x10] sm:$0xff]
  %25 = vset.pattern.permute.xlu0 0
  %26 = vperm.xlu0 %25, %v21
  %v27 = vpop.permute.xlu0 %26
  %30 = vset.pattern.permute.xlu0 0
  %31 = vperm.xlu0 %30, %v22
  %v32 = vpop.permute.xlu0 %31
  %35 = vset.pattern.permute.xlu0 0
  %36 = vperm.xlu0 %35, %v23
  %v37 = vpop.permute.xlu0 %36
  %v42 = vunpack.c.l.b16 %v18
  %v43 = vunpack.c.l.b16 %v19
  %v44 = vunpack.c.l.b16 %v20
  %v45 = vpack.c.b16 %v43, %v42
  %v46 = vpack.c.b16 %v44, %v44
  %v50 = vunpack.c.l.b16 %v15
  %v51 = vunpack.c.l.b16 %v16
  %v52 = vunpack.c.l.b16 %v17
  %v53 = vpack.c.b16 %v51, %v50
  %v54 = vpack.c.b16 %v52, %v52
  %vm56 = vcmask 195584
  %v58 = vsel %vm56, %v45, 0
  %v61 = vsel %vm56, %v46, 0
  %vm63 = vcmask 1043456
  %v65 = vsel %vm63, %v54, 0
  %67 = vmatpush.bf16.msra.mxu0 0
  %68 = vmatpush.bf16.msra.mxu0 0
  %69 = vmatpush.bf16.msra.mxu0 0
  %70 = vmatpush.bf16.msra.mxu0 0
  %71 = vmatpush.bf16.msra.mxu0 0
  %72 = vmatpush.bf16.msra.mxu0 0
  %73 = vmatpush.bf16.msra.mxu0 %v65
  %74 = vmatpush.bf16.msra.mxu0 %v53
  %75 = vmatmul.bf16.gmra.mxu0 %v58
  %v76 = vpop.f32.mrf.mxu0
  %v77 = vadd.f32 %v27, %v76
  %v78 = vpop.f32.mrf.mxu0
  %v79 = vadd.f32 %v32, %v78
  %80 = vmatmul.bf16.gmra.mxu0 %v61
  %v81 = vpop.f32.mrf.mxu0
  %v82 = vadd.f32 %v37, %v81
  %v83 = vpop.f32.mrf.mxu0
  %84 = vdwg.mxu0
  %v85 = vmax.f32 %v77, 0.0
  %v86 = vmax.f32 %v79, 0.0
  %v87 = vmax.f32 %v82, 0.0
  %v88 = vpack.c.bf16 %v85, %v85
  %v89 = vpack.c.bf16 %v86, %v86
  %v90 = vpack.c.bf16 %v87, %v87
  %91 = vst [vmem:[%s3] sm:$0xf] %v88
  %92 = vst [vmem:[%s3 + $0x4] sm:$0xf] %v89
  %93 = vst [vmem:[%s3 + $0x8] sm:$0xf] %v90
  // Predicated region
  $region14: #{_lambda_.32} parent=0 // pred_check
    _
  $region15: #{_lambda_.32} parent=0 // pred_check_branch
    %95 = sbr.rel (0) target = $region17
  $region16: #{_lambda_.32} parent=0 // pred_region
    _
  $region17: #{_lambda_.32} parent=0 // pred_fallthru
    _
  // Predicated region
  $region18: #{_lambda_.32} parent=0 // pred_check
    _
  $region19: #{_lambda_.32} parent=0 // pred_check_branch
    %97 = sbr.rel (0) target = $region21
  $region20: #{_lambda_.32} parent=0 // pred_region
    _
  $region21: #{_lambda_.32} parent=0 // pred_fallthru
    _

// kernel: _lambda_.33
$region0: #{_lambda_.33}
  #allocation0 [shape = 'u32[]', space=smem, size = 0x4, offset = 0x4, fixed_abs, tag = 'smem constant byte address 0x4 - core index']
  #allocation1 [shape = 'u32[72,128]{1,0:T(1,128)}', space=vmem, size = 0x9000, scoped, tag = 'internal scratch']
  %s0 = inlined_call_operand.vmem [shape: bf16[12,128], index: 0, kind: input, shape index: {}]
  %s1 = inlined_call_operand.vmem [shape: bf16[12,128], index: 1, kind: input, shape index: {}]
  %s2 = inlined_call_operand.vmem [shape: bf16[12,128], index: 2, kind: input, shape index: {}]
  %s3 = inlined_call_operand.vmem [shape: bf16[24,12], index: 3, kind: input, shape index: {}]
  %s4 = inlined_call_operand.vmem [shape: bf16[24,128], index: 4, kind: input, shape index: {}]
  %s5 = inlined_call_operand.vmem [shape: f32[24,1], index: 5, kind: input, shape index: {}]
  %s6 = inlined_call_operand.vmem [shape: bf16[24,128], index: 6, kind: output, shape index: {}]
  %s7 = sld [smem:[#allocation0]]
  $region34: #{_lambda_.33} parent=0
    _
  %s9 = ssub.s32 1, %s7
  %s10 = scalar_select 0, %s9, %s7
  // Predicated region
  $region2: #{_lambda_.33} parent=0 // pred_check
    _
  $region3: #{_lambda_.33} parent=0 // pred_check_branch
    %12 = sbr.rel (0) target = $region5
  $region4: #{_lambda_.33} parent=0 // pred_region
    _
  $region5: #{_lambda_.33} parent=0 // pred_fallthru
    _
  // Predicated region
  $region6: #{_lambda_.33} parent=0 // pred_check
    _
  $region7: #{_lambda_.33} parent=0 // pred_check_branch
    %14 = sbr.rel (0) target = $region9
  $region8: #{_lambda_.33} parent=0 // pred_region
    _
  $region9: #{_lambda_.33} parent=0 // pred_fallthru
    _
  // Predicated region
  $region10: #{_lambda_.33} parent=0 // pred_check
    _
  $region11: #{_lambda_.33} parent=0 // pred_check_branch
    %16 = sbr.rel (0) target = $region13
  $region12: #{_lambda_.33} parent=0 // pred_region
    _
  $region13: #{_lambda_.33} parent=0 // pred_fallthru
    _
  // Predicated region
  $region14: #{_lambda_.33} parent=0 // pred_check
    _
  $region15: #{_lambda_.33} parent=0 // pred_check_branch
    %18 = sbr.rel (0) target = $region17
  $region16: #{_lambda_.33} parent=0 // pred_region
    _
  $region17: #{_lambda_.33} parent=0 // pred_fallthru
    _
  // Predicated region
  $region18: #{_lambda_.33} parent=0 // pred_check
    _
  $region19: #{_lambda_.33} parent=0 // pred_check_branch
    %20 = sbr.rel (0) target = $region21
  $region20: #{_lambda_.33} parent=0 // pred_region
    _
  $region21: #{_lambda_.33} parent=0 // pred_fallthru
    _
  // Predicated region
  $region22: #{_lambda_.33} parent=0 // pred_check
    _
  $region23: #{_lambda_.33} parent=0 // pred_check_branch
    %22 = sbr.rel (0) target = $region25
  $region24: #{_lambda_.33} parent=0 // pred_region
    _
  $region25: #{_lambda_.33} parent=0 // pred_fallthru
    _
  %v24 = vld [vmem:[%s0] sm:$0xf]
  %v25 = vld [vmem:[%s0 + $0x4] sm:$0x3]
  %v26 = vunpack.c.l.bf16 %v24
  %v27 = vunpack.c.l.bf16 %v25
  %v28 = vld [vmem:[%s1] sm:$0xf]
  %v29 = vld [vmem:[%s1 + $0x4] sm:$0x3]
  %v30 = vunpack.c.l.bf16 %v28
  %v31 = vunpack.c.l.bf16 %v29
  %v32 = vadd.f32 %v26, %v30
  %v33 = vadd.f32 %v27, %v31
  %v34 = vld [vmem:[%s2] sm:$0xf]
  %v35 = vld [vmem:[%s2 + $0x4] sm:$0x3]
  %v36 = vunpack.c.l.bf16 %v34
  %v37 = vunpack.c.l.bf16 %v35
  %v38 = vadd.f32 %v32, %v36
  %v39 = vadd.f32 %v33, %v37
  %v40 = vpack.c.bf16 %v39, %v38
  %v41 = vld [vmem:[%s3] sm:$0xf]
  %v42 = vld [vmem:[%s3 + $0x4] sm:$0xf]
  %v43 = vld [vmem:[%s3 + $0x8] sm:$0xf]
  %v44 = vld [vmem:[%s4] sm:$0xf]
  %v45 = vld [vmem:[%s4 + $0x4] sm:$0xf]
  %v46 = vld [vmem:[%s4 + $0x8] sm:$0xf]
  %v47 = vunpack.c.l.bf16 %v44
  %v48 = vunpack.c.l.bf16 %v45
  %v49 = vunpack.c.l.bf16 %v46
  %v53 = vunpack.c.l.b16 %v41
  %v54 = vunpack.c.l.b16 %v42
  %v55 = vunpack.c.l.b16 %v43
  %v56 = vpack.c.b16 %v54, %v53
  %v57 = vpack.c.b16 %v55, %v55
  %vm58 = vcmask 97280
  %v60 = vsel %vm58, %v56, 0
  %v63 = vsel %vm58, %v57, 0
  %vm65 = vcmask 1045504
  %v67 = vsel %vm65, %v40, 0
  %69 = vmatpush.bf16.msra.mxu0 0
  %70 = vmatpush.bf16.msra.mxu0 0
  %71 = vmatpush.bf16.msra.mxu0 0
  %72 = vmatpush.bf16.msra.mxu0 0
  %73 = vmatpush.bf16.msra.mxu0 0
  %74 = vmatpush.bf16.msra.mxu0 0
  %75 = vmatpush.bf16.msra.mxu0 0
  %76 = vmatpush.bf16.msra.mxu0 %v67
  %77 = vmatmul.bf16.gmra.mxu0 %v60
  %v78 = vpop.f32.mrf.mxu0
  %v79 = vadd.f32 %v47, %v78
  %v80 = vpop.f32.mrf.mxu0
  %v81 = vadd.f32 %v48, %v80
  %82 = vmatmul.bf16.gmra.mxu0 %v63
  %v83 = vpop.f32.mrf.mxu0
  %v84 = vadd.f32 %v49, %v83
  %v85 = vpop.f32.mrf.mxu0
  %86 = vdwg.mxu0
  %v87 = vld [vmem:[%s5] sm:$0xff]
  %v88 = vld [vmem:[%s5 + $0x8] sm:$0xff]
  %v89 = vld [vmem:[%s5 + $0x10] sm:$0xff]
  %91 = vset.pattern.permute.xlu0 0
  %92 = vperm.xlu0 %91, %v87
  %v93 = vpop.permute.xlu0 %92
  %96 = vset.pattern.permute.xlu0 0
  %97 = vperm.xlu0 %96, %v88
  %v98 = vpop.permute.xlu0 %97
  %101 = vset.pattern.permute.xlu0 0
  %102 = vperm.xlu0 %101, %v89
  %v103 = vpop.permute.xlu0 %102
  %v105 = vadd.f32 %v79, %v93
  %v106 = vadd.f32 %v81, %v98
  %v107 = vadd.f32 %v84, %v103
  %v108 = vmax.f32 %v105, 0.0
  %v109 = vmax.f32 %v106, 0.0
  %v110 = vmax.f32 %v107, 0.0
  %v111 = vpack.c.bf16 %v108, %v108
  %v112 = vpack.c.bf16 %v109, %v109
  %v113 = vpack.c.bf16 %v110, %v110
  %114 = vst [vmem:[%s6] sm:$0xf] %v111
  %115 = vst [vmem:[%s6 + $0x4] sm:$0xf] %v112
  %116 = vst [vmem:[%s6 + $0x8] sm:$0xf] %v113
  // Predicated region
  $region26: #{_lambda_.33} parent=0 // pred_check
    _
  $region27: #{_lambda_.33} parent=0 // pred_check_branch
    %118 = sbr.rel (0) target = $region29
  $region28: #{_lambda_.33} parent=0 // pred_region
    _
  $region29: #{_lambda_.33} parent=0 // pred_fallthru
    _
  // Predicated region
  $region30: #{_lambda_.33} parent=0 // pred_check
    _
  $region31: #{_lambda_.33} parent=0 // pred_check_branch
    %120 = sbr.rel (0) target = $region33
  $region32: #{_lambda_.33} parent=0 // pred_region
    _
  $region33: #{_lambda_.33} parent=0 // pred_fallthru
    _

// kernel: _lambda_.49
$region0: #{_lambda_.49}
  #allocation0 [shape = 'u32[]', space=smem, size = 0x4, offset = 0x4, fixed_abs, tag = 'smem constant byte address 0x4 - core index']
  #allocation1 [shape = 'u32[72,128]{1,0:T(1,128)}', space=vmem, size = 0x9000, scoped, tag = 'internal scratch']
  #allocation2 [shape = 'bf16[128,128]{1,0:T(8,128)(2,1)}', space=vmem, size = 0x8000, scoped, tag = 'scratch operand']
  %s0 = inlined_call_operand.vmem [shape: bf16[32,256], index: 0, kind: input, shape index: {}]
  %s1 = inlined_call_operand.vmem [shape: bf16[64,128], index: 1, kind: input, shape index: {}]
  %s2 = inlined_call_operand.vmem [shape: f32[64,1], index: 2, kind: input, shape index: {}]
  %s3 = inlined_call_operand.vmem [shape: bf16[64,128], index: 3, kind: output, shape index: {}]
  %s4 = sld [smem:[#allocation0]]
  $region22: #{_lambda_.49} parent=0
    _
  %s6 = ssub.s32 1, %s4
  %s7 = scalar_select 0, %s6, %s4
  // Predicated region
  $region2: #{_lambda_.49} parent=0 // pred_check
    _
  $region3: #{_lambda_.49} parent=0 // pred_check_branch
    %9 = sbr.rel (0) target = $region5
  $region4: #{_lambda_.49} parent=0 // pred_region
    _
  $region5: #{_lambda_.49} parent=0 // pred_fallthru
    _
  // Predicated region
  $region6: #{_lambda_.49} parent=0 // pred_check
    _
  $region7: #{_lambda_.49} parent=0 // pred_check_branch
    %11 = sbr.rel (0) target = $region9
  $region8: #{_lambda_.49} parent=0 // pred_region
    _
  $region9: #{_lambda_.49} parent=0 // pred_fallthru
    _
  // Predicated region
  $region10: #{_lambda_.49} parent=0 // pred_check
    _
  $region11: #{_lambda_.49} parent=0 // pred_check_branch
    %13 = sbr.rel (0) target = $region13
  $region12: #{_lambda_.49} parent=0 // pred_region
    _
  $region13: #{_lambda_.49} parent=0 // pred_fallthru
    _
  %v14 = vld [vmem:[%s0] sm:$0xf]
  %v15 = vld [vmem:[%s0 + $0x8] sm:$0xf]
  %v16 = vld [vmem:[%s0 + $0x10] sm:$0xf]
  %v17 = vld [vmem:[%s0 + $0x18] sm:$0xf]
  %18 = vst [vmem:[#allocation2] sm:$0xf] %v14
  %19 = vst [vmem:[#allocation2 + $0x4] sm:$0xf] %v15
  %20 = vst [vmem:[#allocation2 + $0x8] sm:$0xf] %v16
  %21 = vst [vmem:[#allocation2 + $0xc] sm:$0xf] %v17
  %v22 = vld [vmem:[%s0] sm:$0xff]
  %v23 = vld [vmem:[%s0 + $0x8] sm:$0xff]
  %v24 = vld [vmem:[%s0 + $0x10] sm:$0xff]
  %v25 = vld [vmem:[%s0 + $0x18] sm:$0xff]
  %30 = vrot.lane.b32.xlu0 %v22, 127
  %v31 = vpop.permute.xlu0 %30
  %32 = vrot.lane.b32.xlu0 %v23, 127
  %v33 = vpop.permute.xlu0 %32
  %34 = vrot.lane.b32.xlu0 %v24, 127
  %v35 = vpop.permute.xlu0 %34
  %36 = vrot.lane.b32.xlu0 %v25, 127
  %v37 = vpop.permute.xlu0 %36
  %v38 = vrot.slane %v31, 4
  %v39 = vrot.slane %v33, 4
  %v40 = vrot.slane %v35, 4
  %v41 = vrot.slane %v37, 4
  %vm42 = vcmask 1039360
  %v43 = vsel %vm42, %v31, %v38
  %v44 = vsel %vm42, %v33, %v39
  %v45 = vsel %vm42, %v35, %v40
  %v46 = vsel %vm42, %v37, %v41
  %51 = vst [vmem:[#allocation2 + $0x10] sm:$0xf] %v43
  %52 = vst [vmem:[#allocation2 + $0x14] sm:$0xf] %v44
  %53 = vst [vmem:[#allocation2 + $0x18] sm:$0xf] %v45
  %54 = vst [vmem:[#allocation2 + $0x1c] sm:$0xf] %v46
  %v55 = vld [vmem:[%s0] sm:$0xff]
  %v56 = vld [vmem:[%s0 + $0x8] sm:$0xff]
  %v57 = vld [vmem:[%s0 + $0x10] sm:$0xff]
  %v58 = vld [vmem:[%s0 + $0x18] sm:$0xff]
  %63 = vrot.lane.b32.xlu0 %v55, 123
  %v64 = vpop.permute.xlu0 %63
  %65 = vrot.lane.b32.xlu0 %v56, 123
  %v66 = vpop.permute.xlu0 %65
  %67 = vrot.lane.b32.xlu0 %v57, 123
  %v68 = vpop.permute.xlu0 %67
  %69 = vrot.lane.b32.xlu0 %v58, 123
  %v70 = vpop.permute.xlu0 %69
  %v71 = vrot.slane %v64, 4
  %v72 = vrot.slane %v66, 4
  %v73 = vrot.slane %v68, 4
  %v74 = vrot.slane %v70, 4
  %vm75 = vcmask 1006592
  %v76 = vsel %vm75, %v64, %v71
  %v77 = vsel %vm75, %v66, %v72
  %v78 = vsel %vm75, %v68, %v73
  %v79 = vsel %vm75, %v70, %v74
  %84 = vst [vmem:[#allocation2 + $0x20] sm:$0xf] %v76
  %85 = vst [vmem:[#allocation2 + $0x24] sm:$0xf] %v77
  %86 = vst [vmem:[#allocation2 + $0x28] sm:$0xf] %v78
  %87 = vst [vmem:[#allocation2 + $0x2c] sm:$0xf] %v79
  %v88 = vld [vmem:[%s0] sm:$0xff]
  %v89 = vld [vmem:[%s0 + $0x8] sm:$0xff]
  %v90 = vld [vmem:[%s0 + $0x10] sm:$0xff]
  %v91 = vld [vmem:[%s0 + $0x18] sm:$0xff]
  %96 = vrot.lane.b32.xlu0 %v88, 122
  %v97 = vpop.permute.xlu0 %96
  %98 = vrot.lane.b32.xlu0 %v89, 122
  %v99 = vpop.permute.xlu0 %98
  %100 = vrot.lane.b32.xlu0 %v90, 122
  %v101 = vpop.permute.xlu0 %100
  %102 = vrot.lane.b32.xlu0 %v91, 122
  %v103 = vpop.permute.xlu0 %102
  %v104 = vrot.slane %v97, 4
  %v105 = vrot.slane %v99, 4
  %v106 = vrot.slane %v101, 4
  %v107 = vrot.slane %v103, 4
  %vm108 = vcmask 998400
  %v109 = vsel %vm108, %v97, %v104
  %v110 = vsel %vm108, %v99, %v105
  %v111 = vsel %vm108, %v101, %v106
  %v112 = vsel %vm108, %v103, %v107
  %117 = vst [vmem:[#allocation2 + $0x30] sm:$0xf] %v109
  %118 = vst [vmem:[#allocation2 + $0x34] sm:$0xf] %v110
  %119 = vst [vmem:[#allocation2 + $0x38] sm:$0xf] %v111
  %120 = vst [vmem:[#allocation2 + $0x3c] sm:$0xf] %v112
  %v121 = vld [vmem:[%s1] sm:$0xf]
  %v122 = vld [vmem:[%s1 + $0x4] sm:$0xf]
  %v123 = vld [vmem:[%s1 + $0x8] sm:$0xf]
  %v124 = vld [vmem:[%s1 + $0xc] sm:$0xf]
  %v125 = vld [vmem:[%s1 + $0x10] sm:$0xf]
  %v126 = vld [vmem:[%s1 + $0x14] sm:$0xf]
  %v127 = vld [vmem:[%s1 + $0x18] sm:$0xf]
  %v128 = vld [vmem:[%s1 + $0x1c] sm:$0xf]
  %v129 = vld [vmem:[#allocation2] sm:$0xf]
  %v130 = vld [vmem:[#allocation2 + $0x4] sm:$0xf]
  %v131 = vld [vmem:[#allocation2 + $0x8] sm:$0xf]
  %v132 = vld [vmem:[#allocation2 + $0xc] sm:$0xf]
  %v133 = vld [vmem:[#allocation2 + $0x10] sm:$0xf]
  %v134 = vld [vmem:[#allocation2 + $0x14] sm:$0xf]
  %v135 = vld [vmem:[#allocation2 + $0x18] sm:$0xf]
  %v136 = vld [vmem:[#allocation2 + $0x1c] sm:$0xf]
  %v137 = vld [vmem:[#allocation2 + $0x20] sm:$0xf]
  %v138 = vld [vmem:[#allocation2 + $0x24] sm:$0xf]
  %v139 = vld [vmem:[#allocation2 + $0x28] sm:$0xf]
  %v140 = vld [vmem:[#allocation2 + $0x2c] sm:$0xf]
  %v141 = vld [vmem:[#allocation2 + $0x30] sm:$0xf]
  %v142 = vld [vmem:[#allocation2 + $0x34] sm:$0xf]
  %v143 = vld [vmem:[#allocation2 + $0x38] sm:$0xf]
  %v144 = vld [vmem:[#allocation2 + $0x3c] sm:$0xf]
  %v145 = vld [vmem:[%s2] sm:$0xff]
  %v146 = vld [vmem:[%s2 + $0x8] sm:$0xff]
  %v147 = vld [vmem:[%s2 + $0x10] sm:$0xff]
  %v148 = vld [vmem:[%s2 + $0x18] sm:$0xff]
  %v149 = vld [vmem:[%s2 + $0x20] sm:$0xff]
  %v150 = vld [vmem:[%s2 + $0x28] sm:$0xff]
  %v151 = vld [vmem:[%s2 + $0x30] sm:$0xff]
  %v152 = vld [vmem:[%s2 + $0x38] sm:$0xff]
  %154 = vset.pattern.permute.xlu0 0
  %155 = vperm.xlu0 %154, %v145
  %v156 = vpop.permute.xlu0 %155
  %159 = vset.pattern.permute.xlu0 0
  %160 = vperm.xlu0 %159, %v146
  %v161 = vpop.permute.xlu0 %160
  %164 = vset.pattern.permute.xlu0 0
  %165 = vperm.xlu0 %164, %v147
  %v166 = vpop.permute.xlu0 %165
  %169 = vset.pattern.permute.xlu0 0
  %170 = vperm.xlu0 %169, %v148
  %v171 = vpop.permute.xlu0 %170
  %174 = vset.pattern.permute.xlu0 0
  %175 = vperm.xlu0 %174, %v149
  %v176 = vpop.permute.xlu0 %175
  %179 = vset.pattern.permute.xlu0 0
  %180 = vperm.xlu0 %179, %v150
  %v181 = vpop.permute.xlu0 %180
  %184 = vset.pattern.permute.xlu0 0
  %185 = vperm.xlu0 %184, %v151
  %v186 = vpop.permute.xlu0 %185
  %189 = vset.pattern.permute.xlu0 0
  %190 = vperm.xlu0 %189, %v152
  %v191 = vpop.permute.xlu0 %190
  %v201 = vunpack.c.l.b16 %v121
  %v202 = vunpack.c.l.b16 %v122
  %v203 = vunpack.c.l.b16 %v123
  %v204 = vunpack.c.l.b16 %v124
  %v205 = vunpack.c.l.b16 %v125
  %v206 = vunpack.c.l.b16 %v126
  %v207 = vunpack.c.l.b16 %v127
  %v208 = vunpack.c.l.b16 %v128
  %v209 = vpack.c.b16 %v202, %v201
  %v210 = vpack.c.b16 %v204, %v203
  %v211 = vpack.c.b16 %v206, %v205
  %v212 = vpack.c.b16 %v208, %v207
  %v233 = vunpack.c.l.b16 %v129
  %v234 = vunpack.c.l.b16 %v130
  %v235 = vunpack.c.l.b16 %v131
  %v236 = vunpack.c.l.b16 %v132
  %v237 = vunpack.c.l.b16 %v133
  %v238 = vunpack.c.l.b16 %v134
  %v239 = vunpack.c.l.b16 %v135
  %v240 = vunpack.c.l.b16 %v136
  %v241 = vunpack.c.l.b16 %v137
  %v242 = vunpack.c.l.b16 %v138
  %v243 = vunpack.c.l.b16 %v139
  %v244 = vunpack.c.l.b16 %v140
  %v245 = vunpack.c.l.b16 %v141
  %v246 = vunpack.c.l.b16 %v142
  %v247 = vunpack.c.l.b16 %v143
  %v248 = vunpack.c.l.b16 %v144
  %v249 = vpack.c.b16 %v234, %v233
  %v250 = vpack.c.b16 %v236, %v235
  %v251 = vpack.c.b16 %v238, %v237
  %v252 = vpack.c.b16 %v240, %v239
  %v253 = vpack.c.b16 %v242, %v241
  %v254 = vpack.c.b16 %v244, %v243
  %v255 = vpack.c.b16 %v246, %v245
  %v256 = vpack.c.b16 %v248, %v247
  %265 = vmatpush.bf16.msra.mxu0 %v256
  %266 = vmatpush.bf16.msra.mxu0 %v255
  %267 = vmatpush.bf16.msra.mxu0 %v254
  %268 = vmatpush.bf16.msra.mxu0 %v253
  %269 = vmatpush.bf16.msra.mxu0 %v252
  %270 = vmatpush.bf16.msra.mxu0 %v251
  %271 = vmatpush.bf16.msra.mxu0 %v250
  %272 = vmatpush.bf16.msra.mxu0 %v249
  %273 = vmatmul.bf16.gmra.mxu0 %v209
  %v274 = vpop.f32.mrf.mxu0
  %v275 = vadd.f32 %v156, %v274
  %v276 = vpop.f32.mrf.mxu0
  %v277 = vadd.f32 %v161, %v276
  %278 = vmatmul.bf16.gmra.mxu0 %v210
  %v279 = vpop.f32.mrf.mxu0
  %v280 = vadd.f32 %v166, %v279
  %v281 = vpop.f32.mrf.mxu0
  %v282 = vadd.f32 %v171, %v281
  %283 = vmatmul.bf16.gmra.mxu0 %v211
  %v284 = vpop.f32.mrf.mxu0
  %v285 = vadd.f32 %v176, %v284
  %v286 = vpop.f32.mrf.mxu0
  %v287 = vadd.f32 %v181, %v286
  %288 = vmatmul.bf16.gmra.mxu0 %v212
  %v289 = vpop.f32.mrf.mxu0
  %v290 = vadd.f32 %v186, %v289
  %v291 = vpop.f32.mrf.mxu0
  %v292 = vadd.f32 %v191, %v291
  %293 = vdwg.mxu0
  %v294 = vmax.f32 %v275, 0.0
  %v295 = vmax.f32 %v277, 0.0
  %v296 = vmax.f32 %v280, 0.0
  %v297 = vmax.f32 %v282, 0.0
  %v298 = vmax.f32 %v285, 0.0
  %v299 = vmax.f32 %v287, 0.0
  %v300 = vmax.f32 %v290, 0.0
  %v301 = vmax.f32 %v292, 0.0
  %v302 = vpack.c.bf16 %v294, %v294
  %v303 = vpack.c.bf16 %v295, %v295
  %v304 = vpack.c.bf16 %v296, %v296
  %v305 = vpack.c.bf16 %v297, %v297
  %v306 = vpack.c.bf16 %v298, %v298
  %v307 = vpack.c.bf16 %v299, %v299
  %v308 = vpack.c.bf16 %v300, %v300
  %v309 = vpack.c.bf16 %v301, %v301
  %310 = vst [vmem:[%s3] sm:$0xf] %v302
  %311 = vst [vmem:[%s3 + $0x4] sm:$0xf] %v303
  %312 = vst [vmem:[%s3 + $0x8] sm:$0xf] %v304
  %313 = vst [vmem:[%s3 + $0xc] sm:$0xf] %v305
  %314 = vst [vmem:[%s3 + $0x10] sm:$0xf] %v306
  %315 = vst [vmem:[%s3 + $0x14] sm:$0xf] %v307
  %316 = vst [vmem:[%s3 + $0x18] sm:$0xf] %v308
  %317 = vst [vmem:[%s3 + $0x1c] sm:$0xf] %v309
  // Predicated region
  $region14: #{_lambda_.49} parent=0 // pred_check
    _
  $region15: #{_lambda_.49} parent=0 // pred_check_branch
    %319 = sbr.rel (0) target = $region17
  $region16: #{_lambda_.49} parent=0 // pred_region
    _
  $region17: #{_lambda_.49} parent=0 // pred_fallthru
    _
  // Predicated region
  $region18: #{_lambda_.49} parent=0 // pred_check
    _
  $region19: #{_lambda_.49} parent=0 // pred_check_branch
    %321 = sbr.rel (0) target = $region21
  $region20: #{_lambda_.49} parent=0 // pred_region
    _
  $region21: #{_lambda_.49} parent=0 // pred_fallthru
    _

// kernel: _lambda_.50
$region0: #{_lambda_.50}
  #allocation0 [shape = 'u32[]', space=smem, size = 0x4, offset = 0x4, fixed_abs, tag = 'smem constant byte address 0x4 - core index']
  #allocation1 [shape = 'u32[72,128]{1,0:T(1,128)}', space=vmem, size = 0x9000, scoped, tag = 'internal scratch']
  #allocation2 [shape = 'bf16[64,256]{1,0:T(8,128)(2,1)}', space=vmem, size = 0x8000, scoped, tag = 'scratch operand']
  %s0 = inlined_call_operand.vmem [shape: bf16[16,384], index: 0, kind: input, shape index: {}]
  %s1 = inlined_call_operand.vmem [shape: bf16[32,64], index: 1, kind: input, shape index: {}]
  %s2 = inlined_call_operand.vmem [shape: f32[32,1], index: 2, kind: input, shape index: {}]
  %s3 = inlined_call_operand.vmem [shape: bf16[32,256], index: 3, kind: output, shape index: {}]
  %s4 = sld [smem:[#allocation0]]
  $region22: #{_lambda_.50} parent=0
    _
  %s6 = ssub.s32 1, %s4
  %s7 = scalar_select 0, %s6, %s4
  // Predicated region
  $region2: #{_lambda_.50} parent=0 // pred_check
    _
  $region3: #{_lambda_.50} parent=0 // pred_check_branch
    %9 = sbr.rel (0) target = $region5
  $region4: #{_lambda_.50} parent=0 // pred_region
    _
  $region5: #{_lambda_.50} parent=0 // pred_fallthru
    _
  // Predicated region
  $region6: #{_lambda_.50} parent=0 // pred_check
    _
  $region7: #{_lambda_.50} parent=0 // pred_check_branch
    %11 = sbr.rel (0) target = $region9
  $region8: #{_lambda_.50} parent=0 // pred_region
    _
  $region9: #{_lambda_.50} parent=0 // pred_fallthru
    _
  // Predicated region
  $region10: #{_lambda_.50} parent=0 // pred_check
    _
  $region11: #{_lambda_.50} parent=0 // pred_check_branch
    %13 = sbr.rel (0) target = $region13
  $region12: #{_lambda_.50} parent=0 // pred_region
    _
  $region13: #{_lambda_.50} parent=0 // pred_fallthru
    _
  %v15 = vld [vmem:[%s0] sm:$0xff]
  %v16 = vld [vmem:[%s0 + $0xc] sm:$0xff]
  %17 = vst [vmem:[#allocation2] sm:$0xff] %v15
  %18 = vst [vmem:[#allocation2 + $0x8] sm:$0xff] %v16
  %v19 = vld [vmem:[%s0] sm:$0xff]
  %v20 = vld [vmem:[%s0 + $0x8] sm:$0xf]
  %v21 = vld [vmem:[%s0 + $0xc] sm:$0xff]
  %v22 = vld [vmem:[%s0 + $0x14] sm:$0xf]
  %27 = vrot.lane.b32.xlu0 %v19, 127
  %v28 = vpop.permute.xlu0 %27
  %29 = vrot.lane.b32.xlu0 %v20, 127
  %v30 = vpop.permute.xlu0 %29
  %31 = vrot.lane.b32.xlu0 %v21, 127
  %v32 = vpop.permute.xlu0 %31
  %33 = vrot.lane.b32.xlu0 %v22, 127
  %v34 = vpop.permute.xlu0 %33
  %v35 = vrot.slane %v28, 4
  %v36 = vrot.slane %v30, 4
  %v37 = vrot.slane %v32, 4
  %v38 = vrot.slane %v34, 4
  %vm39 = vcmask 1043456
  %v40 = vsel %vm39, %v35, %v36
  %vm41 = vcmask 1039360
  %v42 = vsel %vm41, %v28, %v40
  %v43 = vsel %vm39, %v37, %v38
  %v44 = vsel %vm41, %v32, %v43
  %47 = vst [vmem:[#allocation2 + $0x10] sm:$0xff] %v42
  %48 = vst [vmem:[#allocation2 + $0x18] sm:$0xff] %v44
  %v49 = vld [vmem:[%s0] sm:$0xff]
  %v50 = vld [vmem:[%s0 + $0x8] sm:$0xf]
  %v51 = vld [vmem:[%s0 + $0xc] sm:$0xff]
  %v52 = vld [vmem:[%s0 + $0x14] sm:$0xf]
  %57 = vrot.lane.b32.xlu0 %v49, 119
  %v58 = vpop.permute.xlu0 %57
  %59 = vrot.lane.b32.xlu0 %v50, 119
  %v60 = vpop.permute.xlu0 %59
  %61 = vrot.lane.b32.xlu0 %v51, 119
  %v62 = vpop.permute.xlu0 %61
  %63 = vrot.lane.b32.xlu0 %v52, 119
  %v64 = vpop.permute.xlu0 %63
  %v65 = vrot.slane %v58, 4
  %v66 = vrot.slane %v60, 4
  %v67 = vrot.slane %v62, 4
  %v68 = vrot.slane %v64, 4
  %v69 = vsel %vm39, %v65, %v66
  %vm70 = vcmask 973824
  %v71 = vsel %vm70, %v58, %v69
  %v72 = vsel %vm39, %v67, %v68
  %v73 = vsel %vm70, %v62, %v72
  %76 = vst [vmem:[#allocation2 + $0x20] sm:$0xff] %v71
  %77 = vst [vmem:[#allocation2 + $0x28] sm:$0xff] %v73
  %v78 = vld [vmem:[%s0] sm:$0xff]
  %v79 = vld [vmem:[%s0 + $0x8] sm:$0xf]
  %v80 = vld [vmem:[%s0 + $0xc] sm:$0xff]
  %v81 = vld [vmem:[%s0 + $0x14] sm:$0xf]
  %86 = vrot.lane.b32.xlu0 %v78, 118
  %v87 = vpop.permute.xlu0 %86
  %88 = vrot.lane.b32.xlu0 %v79, 118
  %v89 = vpop.permute.xlu0 %88
  %90 = vrot.lane.b32.xlu0 %v80, 118
  %v91 = vpop.permute.xlu0 %90
  %92 = vrot.lane.b32.xlu0 %v81, 118
  %v93 = vpop.permute.xlu0 %92
  %v94 = vrot.slane %v87, 4
  %v95 = vrot.slane %v89, 4
  %v96 = vrot.slane %v91, 4
  %v97 = vrot.slane %v93, 4
  %v98 = vsel %vm39, %v94, %v95
  %vm99 = vcmask 965632
  %v100 = vsel %vm99, %v87, %v98
  %v101 = vsel %vm39, %v96, %v97
  %v102 = vsel %vm99, %v91, %v101
  %105 = vst [vmem:[#allocation2 + $0x30] sm:$0xff] %v100
  %106 = vst [vmem:[#allocation2 + $0x38] sm:$0xff] %v102
  %v107 = vld [vmem:[%s1] sm:$0xf]
  %v108 = vld [vmem:[%s1 + $0x4] sm:$0xf]
  %v109 = vld [vmem:[%s1 + $0x8] sm:$0xf]
  %v110 = vld [vmem:[%s1 + $0xc] sm:$0xf]
  %v111 = vld [vmem:[#allocation2] sm:$0xff]
  %v112 = vld [vmem:[#allocation2 + $0x8] sm:$0xff]
  %v113 = vld [vmem:[#allocation2 + $0x10] sm:$0xff]
  %v114 = vld [vmem:[#allocation2 + $0x18] sm:$0xff]
  %v115 = vld [vmem:[#allocation2 + $0x20] sm:$0xff]
  %v116 = vld [vmem:[#allocation2 + $0x28] sm:$0xff]
  %v117 = vld [vmem:[#allocation2 + $0x30] sm:$0xff]
  %v118 = vld [vmem:[#allocation2 + $0x38] sm:$0xff]
  %v119 = vld [vmem:[%s2] sm:$0xff]
  %v120 = vld [vmem:[%s2 + $0x8] sm:$0xff]
  %v121 = vld [vmem:[%s2 + $0x10] sm:$0xff]
  %v122 = vld [vmem:[%s2 + $0x18] sm:$0xff]
  %124 = vset.pattern.permute.xlu0 0
  %125 = vperm.xlu0 %124, %v119
  %v126 = vpop.permute.xlu0 %125
  %129 = vset.pattern.permute.xlu0 0
  %130 = vperm.xlu0 %129, %v120
  %v131 = vpop.permute.xlu0 %130
  %134 = vset.pattern.permute.xlu0 0
  %135 = vperm.xlu0 %134, %v121
  %v136 = vpop.permute.xlu0 %135
  %139 = vset.pattern.permute.xlu0 0
  %140 = vperm.xlu0 %139, %v122
  %v141 = vpop.permute.xlu0 %140
  %v147 = vunpack.c.l.b16 %v107
  %v148 = vunpack.c.l.b16 %v108
  %v149 = vunpack.c.l.b16 %v109
  %v150 = vunpack.c.l.b16 %v110
  %v151 = vpack.c.b16 %v148, %v147
  %v152 = vpack.c.b16 %v150, %v149
  %v161 = vunpack.c.l.b16 %v111
  %v162 = vunpack.c.h.b16 %v111
  %v163 = vunpack.c.l.b16 %v112
  %v164 = vunpack.c.h.b16 %v112
  %v165 = vunpack.c.l.b16 %v113
  %v166 = vunpack.c.h.b16 %v113
  %v167 = vunpack.c.l.b16 %v114
  %v168 = vunpack.c.h.b16 %v114
  %v169 = vunpack.c.l.b16 %v115
  %v170 = vunpack.c.h.b16 %v115
  %v171 = vunpack.c.l.b16 %v116
  %v172 = vunpack.c.h.b16 %v116
  %v173 = vunpack.c.l.b16 %v117
  %v174 = vunpack.c.h.b16 %v117
  %v175 = vunpack.c.l.b16 %v118
  %v176 = vunpack.c.h.b16 %v118
  %v177 = vpack.c.b16 %v163, %v161
  %v178 = vpack.c.b16 %v164, %v162
  %v179 = vpack.c.b16 %v167, %v165
  %v180 = vpack.c.b16 %v168, %v166
  %v181 = vpack.c.b16 %v171, %v169
  %v182 = vpack.c.b16 %v172, %v170
  %v183 = vpack.c.b16 %v175, %v173
  %v184 = vpack.c.b16 %v176, %v174
  %vm193 = vcmask 523264
  %v195 = vsel %vm193, %v151, 0
  %v198 = vsel %vm193, %v152, 0
  %200 = vmatpush.bf16.msra.mxu0 0
  %201 = vmatpush.bf16.msra.mxu0 0
  %202 = vmatpush.bf16.msra.mxu0 0
  %203 = vmatpush.bf16.msra.mxu0 0
  %204 = vmatpush.bf16.msra.mxu0 %v183
  %205 = vmatpush.bf16.msra.mxu0 %v181
  %206 = vmatpush.bf16.msra.mxu0 %v179
  %207 = vmatpush.bf16.msra.mxu0 %v177
  %208 = vmatmul.bf16.gmra.mxu0 %v195
  %v209 = vpop.f32.mrf.mxu0
  %v210 = vadd.f32 %v126, %v209
  %v211 = vpop.f32.mrf.mxu0
  %v212 = vadd.f32 %v131, %v211
  %213 = vmatmul.bf16.gmra.mxu0 %v198
  %v214 = vpop.f32.mrf.mxu0
  %v215 = vadd.f32 %v136, %v214
  %v216 = vpop.f32.mrf.mxu0
  %v217 = vadd.f32 %v141, %v216
  %218 = vdwg.mxu0
  %219 = vmatpush.bf16.msra.mxu0 0
  %220 = vmatpush.bf16.msra.mxu0 0
  %221 = vmatpush.bf16.msra.mxu0 0
  %222 = vmatpush.bf16.msra.mxu0 0
  %223 = vmatpush.bf16.msra.mxu0 %v184
  %224 = vmatpush.bf16.msra.mxu0 %v182
  %225 = vmatpush.bf16.msra.mxu0 %v180
  %226 = vmatpush.bf16.msra.mxu0 %v178
  %227 = vmatmul.bf16.gmra.mxu0 %v195
  %v228 = vpop.f32.mrf.mxu0
  %v229 = vadd.f32 %v126, %v228
  %v230 = vpop.f32.mrf.mxu0
  %v231 = vadd.f32 %v131, %v230
  %232 = vmatmul.bf16.gmra.mxu0 %v198
  %v233 = vpop.f32.mrf.mxu0
  %v234 = vadd.f32 %v136, %v233
  %v235 = vpop.f32.mrf.mxu0
  %v236 = vadd.f32 %v141, %v235
  %237 = vdwg.mxu0
  %v238 = vmax.f32 %v210, 0.0
  %v239 = vmax.f32 %v229, 0.0
  %v240 = vmax.f32 %v212, 0.0
  %v241 = vmax.f32 %v231, 0.0
  %v242 = vmax.f32 %v215, 0.0
  %v243 = vmax.f32 %v234, 0.0
  %v244 = vmax.f32 %v217, 0.0
  %v245 = vmax.f32 %v236, 0.0
  %v246 = vpack.c.bf16 %v239, %v238
  %v247 = vpack.c.bf16 %v241, %v240
  %v248 = vpack.c.bf16 %v243, %v242
  %v249 = vpack.c.bf16 %v245, %v244
  %250 = vst [vmem:[%s3] sm:$0xff] %v246
  %251 = vst [vmem:[%s3 + $0x8] sm:$0xff] %v247
  %252 = vst [vmem:[%s3 + $0x10] sm:$0xff] %v248
  %253 = vst [vmem:[%s3 + $0x18] sm:$0xff] %v249
  // Predicated region
  $region14: #{_lambda_.50} parent=0 // pred_check
    _
  $region15: #{_lambda_.50} parent=0 // pred_check_branch
    %255 = sbr.rel (0) target = $region17
  $region16: #{_lambda_.50} parent=0 // pred_region
    _
  $region17: #{_lambda_.50} parent=0 // pred_fallthru
    _
  // Predicated region
  $region18: #{_lambda_.50} parent=0 // pred_check
    _
  $region19: #{_lambda_.50} parent=0 // pred_check_branch
    %257 = sbr.rel (0) target = $region21
  $region20: #{_lambda_.50} parent=0 // pred_region
    _
  $region21: #{_lambda_.50} parent=0 // pred_fallthru
    _

// kernel: _lambda_.51
$region0: #{_lambda_.51}
  #allocation0 [shape = 'u32[]', space=smem, size = 0x4, offset = 0x4, fixed_abs, tag = 'smem constant byte address 0x4 - core index']
  #allocation1 [shape = 'u32[72,128]{1,0:T(1,128)}', space=vmem, size = 0x9000, scoped, tag = 'internal scratch']
  #allocation2 [shape = 'bf16[392,1024]{1,0:T(8,128)(2,1)}', space=vmem, size = 0xc4000, scoped, tag = 'scratch operand']
  %s0 = inlined_call_operand.vmem [shape: bf16[8,1280], index: 0, kind: input, shape index: {}]
  %s1 = inlined_call_operand.vmem [shape: bf16[8,392], index: 1, kind: input, shape index: {}]
  %s2 = inlined_call_operand.vmem [shape: f32[8,1], index: 2, kind: input, shape index: {}]
  %s3 = inlined_call_operand.vmem [shape: f32[8,1024], index: 3, kind: output, shape index: {}]
  %s4 = sld [smem:[#allocation0]]
  $region22: #{_lambda_.51} parent=0
    _
  %s6 = ssub.s32 1, %s4
  %s7 = scalar_select 0, %s6, %s4
  // Predicated region
  $region2: #{_lambda_.51} parent=0 // pred_check
    _
  $region3: #{_lambda_.51} parent=0 // pred_check_branch
    %9 = sbr.rel (0) target = $region5
  $region4: #{_lambda_.51} parent=0 // pred_region
    _
  $region5: #{_lambda_.51} parent=0 // pred_fallthru
    _
  // Predicated region
  $region6: #{_lambda_.51} parent=0 // pred_check
    _
  $region7: #{_lambda_.51} parent=0 // pred_check_branch
    %11 = sbr.rel (0) target = $region9
  $region8: #{_lambda_.51} parent=0 // pred_region
    _
  $region9: #{_lambda_.51} parent=0 // pred_fallthru
    _
  // Predicated region
  $region10: #{_lambda_.51} parent=0 // pred_check
    _
  $region11: #{_lambda_.51} parent=0 // pred_check_branch
    %13 = sbr.rel (0) target = $region13
  $region12: #{_lambda_.51} parent=0 // pred_region
    _
  $region13: #{_lambda_.51} parent=0 // pred_fallthru
    _
  %v15 = vld [vmem:[%s0] sm:$0xff]
  %v16 = vld [vmem:[%s0 + $0x8] sm:$0xff]
  %v17 = vld [vmem:[%s0 + $0x10] sm:$0xff]
  %v18 = vld [vmem:[%s0 + $0x18] sm:$0xff]
  %19 = vst [vmem:[#allocation2] sm:$0xff] %v15
  %20 = vst [vmem:[#allocation2 + $0x8] sm:$0xff] %v16
  %21 = vst [vmem:[#allocation2 + $0x10] sm:$0xff] %v17
  %22 = vst [vmem:[#allocation2 + $0x18] sm:$0xff] %v18
  %v23 = vld [vmem:[%s0] sm:$0xff]
  %v24 = vld [vmem:[%s0 + $0x8] sm:$0xff]
  %v25 = vld [vmem:[%s0 + $0x10] sm:$0xff]
  %v26 = vld [vmem:[%s0 + $0x18] sm:$0xff]
  %v27 = vld [vmem:[%s0 + $0x20] sm:$0xf]
  %33 = vrot.lane.b32.xlu0 %v23, 127
  %v34 = vpop.permute.xlu0 %33
  %35 = vrot.lane.b32.xlu0 %v24, 127
  %v36 = vpop.permute.xlu0 %35
  %37 = vrot.lane.b32.xlu0 %v25, 127
  %v38 = vpop.permute.xlu0 %37
  %39 = vrot.lane.b32.xlu0 %v26, 127
  %v40 = vpop.permute.xlu0 %39
  %41 = vrot.lane.b32.xlu0 %v27, 127
  %v42 = vpop.permute.xlu0 %41
  %v43 = vrot.slane %v34, 4
  %v44 = vrot.slane %v36, 4
  %v45 = vrot.slane %v38, 4
  %v46 = vrot.slane %v40, 4
  %v47 = vrot.slane %v42, 4
  %vm48 = vcmask 1043456
  %v49 = vsel %vm48, %v43, %v44
  %vm50 = vcmask 1039360
  %v51 = vsel %vm50, %v34, %v49
  %v52 = vsel %vm48, %v44, %v45
  %v53 = vsel %vm50, %v36, %v52
  %v54 = vsel %vm48, %v45, %v46
  %v55 = vsel %vm50, %v38, %v54
  %v56 = vsel %vm48, %v46, %v47
  %v57 = vsel %vm50, %v40, %v56
  %62 = vst [vmem:[#allocation2 + $0x20] sm:$0xff] %v51
  %63 = vst [vmem:[#allocation2 + $0x28] sm:$0xff] %v53
  %64 = vst [vmem:[#allocation2 + $0x30] sm:$0xff] %v55
  %65 = vst [vmem:[#allocation2 + $0x38] sm:$0xff] %v57
  %v66 = vld [vmem:[%s0] sm:$0xff]
  %v67 = vld [vmem:[%s0 + $0x8] sm:$0xff]
  %v68 = vld [vmem:[%s0 + $0x10] sm:$0xff]
  %v69 = vld [vmem:[%s0 + $0x18] sm:$0xff]
  %v70 = vld [vmem:[%s0 + $0x20] sm:$0xf]
  %76 = vrot.lane.b32.xlu0 %v66, 126
  %v77 = vpop.permute.xlu0 %76
  %78 = vrot.lane.b32.xlu0 %v67, 126
  %v79 = vpop.permute.xlu0 %78
  %80 = vrot.lane.b32.xlu0 %v68, 126
  %v81 = vpop.permute.xlu0 %80
  %82 = vrot.lane.b32.xlu0 %v69, 126
  %v83 = vpop.permute.xlu0 %82
  %84 = vrot.lane.b32.xlu0 %v70, 126
  %v85 = vpop.permute.xlu0 %84
  %v86 = vrot.slane %v77, 4
  %v87 = vrot.slane %v79, 4
  %v88 = vrot.slane %v81, 4
  %v89 = vrot.slane %v83, 4
  %v90 = vrot.slane %v85, 4
  %v91 = vsel %vm48, %v86, %v87
  %vm92 = vcmask 1031168
  %v93 = vsel %vm92, %v77, %v91
  %v94 = vsel %vm48, %v87, %v88
  %v95 = vsel %vm92, %v79, %v94
  %v96 = vsel %vm48, %v88, %v89
  %v97 = vsel %vm92, %v81, %v96
  %v98 = vsel %vm48, %v89, %v90
  %v99 = vsel %vm92, %v83, %v98
  %104 = vst [vmem:[#allocation2 + $0x40] sm:$0xff] %v93
  %105 = vst [vmem:[#allocation2 + $0x48] sm:$0xff] %v95
  %106 = vst [vmem:[#allocation2 + $0x50] sm:$0xff] %v97
  %107 = vst [vmem:[#allocation2 + $0x58] sm:$0xff] %v99
  %v108 = vld [vmem:[%s0] sm:$0xff]
  %v109 = vld [vmem:[%s0 + $0x8] sm:$0xff]
  %v110 = vld [vmem:[%s0 + $0x10] sm:$0xff]
  %v111 = vld [vmem:[%s0 + $0x18] sm:$0xff]
  %v112 = vld [vmem:[%s0 + $0x20] sm:$0xf]
  %118 = vrot.lane.b32.xlu0 %v108, 125
  %v119 = vpop.permute.xlu0 %118
  %120 = vrot.lane.b32.xlu0 %v109, 125
  %v121 = vpop.permute.xlu0 %120
  %122 = vrot.lane.b32.xlu0 %v110, 125
  %v123 = vpop.permute.xlu0 %122
  %124 = vrot.lane.b32.xlu0 %v111, 125
  %v125 = vpop.permute.xlu0 %124
  %126 = vrot.lane.b32.xlu0 %v112, 125
  %v127 = vpop.permute.xlu0 %126
  %v128 = vrot.slane %v119, 4
  %v129 = vrot.slane %v121, 4
  %v130 = vrot.slane %v123, 4
  %v131 = vrot.slane %v125, 4
  %v132 = vrot.slane %v127, 4
  %v133 = vsel %vm48, %v128, %v129
  %vm134 = vcmask 1022976
  %v135 = vsel %vm134, %v119, %v133
  %v136 = vsel %vm48, %v129, %v130
  %v137 = vsel %vm134, %v121, %v136
  %v138 = vsel %vm48, %v130, %v131
  %v139 = vsel %vm134, %v123, %v138
  %v140 = vsel %vm48, %v131, %v132
  %v141 = vsel %vm134, %v125, %v140
  %146 = vst [vmem:[#allocation2 + $0x60] sm:$0xff] %v135
  %147 = vst [vmem:[#allocation2 + $0x68] sm:$0xff] %v137
  %148 = vst [vmem:[#allocation2 + $0x70] sm:$0xff] %v139
  %149 = vst [vmem:[#allocation2 + $0x78] sm:$0xff] %v141
  %v150 = vld [vmem:[%s0] sm:$0xff]
  %v151 = vld [vmem:[%s0 + $0x8] sm:$0xff]
  %v152 = vld [vmem:[%s0 + $0x10] sm:$0xff]
  %v153 = vld [vmem:[%s0 + $0x18] sm:$0xff]
  %v154 = vld [vmem:[%s0 + $0x20] sm:$0xf]
  %160 = vrot.lane.b32.xlu0 %v150, 124
  %v161 = vpop.permute.xlu0 %160
  %162 = vrot.lane.b32.xlu0 %v151, 124
  %v163 = vpop.permute.xlu0 %162
  %164 = vrot.lane.b32.xlu0 %v152, 124
  %v165 = vpop.permute.xlu0 %164
  %166 = vrot.lane.b32.xlu0 %v153, 124
  %v167 = vpop.permute.xlu0 %166
  %168 = vrot.lane.b32.xlu0 %v154, 124
  %v169 = vpop.permute.xlu0 %168
  %v170 = vrot.slane %v161, 4
  %v171 = vrot.slane %v163, 4
  %v172 = vrot.slane %v165, 4
  %v173 = vrot.slane %v167, 4
  %v174 = vrot.slane %v169, 4
  %v175 = vsel %vm48, %v170, %v171
  %vm176 = vcmask 1014784
  %v177 = vsel %vm176, %v161, %v175
  %v178 = vsel %vm48, %v171, %v172
  %v179 = vsel %vm176, %v163, %v178
  %v180 = vsel %vm48, %v172, %v173
  %v181 = vsel %vm176, %v165, %v180
  %v182 = vsel %vm48, %v173, %v174
  %v183 = vsel %vm176, %v167, %v182
  %188 = vst [vmem:[#allocation2 + $0x80] sm:$0xff] %v177
  %189 = vst [vmem:[#allocation2 + $0x88] sm:$0xff] %v179
  %190 = vst [vmem:[#allocation2 + $0x90] sm:$0xff] %v181
  %191 = vst [vmem:[#allocation2 + $0x98] sm:$0xff] %v183
  %v192 = vld [vmem:[%s0] sm:$0xff]
  %v193 = vld [vmem:[%s0 + $0x8] sm:$0xff]
  %v194 = vld [vmem:[%s0 + $0x10] sm:$0xff]
  %v195 = vld [vmem:[%s0 + $0x18] sm:$0xff]
  %v196 = vld [vmem:[%s0 + $0x20] sm:$0xf]
  %202 = vrot.lane.b32.xlu0 %v192, 123
  %v203 = vpop.permute.xlu0 %202
  %204 = vrot.lane.b32.xlu0 %v193, 123
  %v205 = vpop.permute.xlu0 %204
  %206 = vrot.lane.b32.xlu0 %v194, 123
  %v207 = vpop.permute.xlu0 %206
  %208 = vrot.lane.b32.xlu0 %v195, 123
  %v209 = vpop.permute.xlu0 %208
  %210 = vrot.lane.b32.xlu0 %v196, 123
  %v211 = vpop.permute.xlu0 %210
  %v212 = vrot.slane %v203, 4
  %v213 = vrot.slane %v205, 4
  %v214 = vrot.slane %v207, 4
  %v215 = vrot.slane %v209, 4
  %v216 = vrot.slane %v211, 4
  %v217 = vsel %vm48, %v212, %v213
  %vm218 = vcmask 1006592
  %v219 = vsel %vm218, %v203, %v217
  %v220 = vsel %vm48, %v213, %v214
  %v221 = vsel %vm218, %v205, %v220
  %v222 = vsel %vm48, %v214, %v215
  %v223 = vsel %vm218, %v207, %v222
  %v224 = vsel %vm48, %v215, %v216
  %v225 = vsel %vm218, %v209, %v224
  %230 = vst [vmem:[#allocation2 + $0xa0] sm:$0xff] %v219
  %231 = vst [vmem:[#allocation2 + $0xa8] sm:$0xff] %v221
  %232 = vst [vmem:[#allocation2 + $0xb0] sm:$0xff] %v223
  %233 = vst [vmem:[#allocation2 + $0xb8] sm:$0xff] %v225
  %v234 = vld [vmem:[%s0] sm:$0xff]
  %v235 = vld [vmem:[%s0 + $0x8] sm:$0xff]
  %v236 = vld [vmem:[%s0 + $0x10] sm:$0xff]
  %v237 = vld [vmem:[%s0 + $0x18] sm:$0xff]
  %v238 = vld [vmem:[%s0 + $0x20] sm:$0xf]
  %244 = vrot.lane.b32.xlu0 %v234, 122
  %v245 = vpop.permute.xlu0 %244
  %246 = vrot.lane.b32.xlu0 %v235, 122
  %v247 = vpop.permute.xlu0 %246
  %248 = vrot.lane.b32.xlu0 %v236, 122
  %v249 = vpop.permute.xlu0 %248
  %250 = vrot.lane.b32.xlu0 %v237, 122
  %v251 = vpop.permute.xlu0 %250
  %252 = vrot.lane.b32.xlu0 %v238, 122
  %v253 = vpop.permute.xlu0 %252
  %v254 = vrot.slane %v245, 4
  %v255 = vrot.slane %v247, 4
  %v256 = vrot.slane %v249, 4
  %v257 = vrot.slane %v251, 4
  %v258 = vrot.slane %v253, 4
  %v259 = vsel %vm48, %v254, %v255
  %vm260 = vcmask 998400
  %v261 = vsel %vm260, %v245, %v259
  %v262 = vsel %vm48, %v255, %v256
  %v263 = vsel %vm260, %v247, %v262
  %v264 = vsel %vm48, %v256, %v257
  %v265 = vsel %vm260, %v249, %v264
  %v266 = vsel %vm48, %v257, %v258
  %v267 = vsel %vm260, %v251, %v266
  %272 = vst [vmem:[#allocation2 + $0xc0] sm:$0xff] %v261
  %273 = vst [vmem:[#allocation2 + $0xc8] sm:$0xff] %v263
  %274 = vst [vmem:[#allocation2 + $0xd0] sm:$0xff] %v265
  %275 = vst [vmem:[#allocation2 + $0xd8] sm:$0xff] %v267
  %v276 = vld [vmem:[%s0] sm:$0xff]
  %v277 = vld [vmem:[%s0 + $0x8] sm:$0xff]
  %v278 = vld [vmem:[%s0 + $0x10] sm:$0xff]
  %v279 = vld [vmem:[%s0 + $0x18] sm:$0xff]
  %v280 = vld [vmem:[%s0 + $0x20] sm:$0xf]
  %286 = vrot.lane.b32.xlu0 %v276, 106
  %v287 = vpop.permute.xlu0 %286
  %288 = vrot.lane.b32.xlu0 %v277, 106
  %v289 = vpop.permute.xlu0 %288
  %290 = vrot.lane.b32.xlu0 %v278, 106
  %v291 = vpop.permute.xlu0 %290
  %292 = vrot.lane.b32.xlu0 %v279, 106
  %v293 = vpop.permute.xlu0 %292
  %294 = vrot.lane.b32.xlu0 %v280, 106
  %v295 = vpop.permute.xlu0 %294
  %v296 = vrot.slane %v287, 4
  %v297 = vrot.slane %v289, 4
  %v298 = vrot.slane %v291, 4
  %v299 = vrot.slane %v293, 4
  %v300 = vrot.slane %v295, 4
  %v301 = vsel %vm48, %v296, %v297
  %vm302 = vcmask 867328
  %v303 = vsel %vm302, %v287, %v301
  %v304 = vsel %vm48, %v297, %v298
  %v305 = vsel %vm302, %v289, %v304
  %v306 = vsel %vm48, %v298, %v299
  %v307 = vsel %vm302, %v291, %v306
  %v308 = vsel %vm48, %v299, %v300
  %v309 = vsel %vm302, %v293, %v308
  %314 = vst [vmem:[#allocation2 + $0xe0] sm:$0xff] %v303
  %315 = vst [vmem:[#allocation2 + $0xe8] sm:$0xff] %v305
  %316 = vst [vmem:[#allocation2 + $0xf0] sm:$0xff] %v307
  %317 = vst [vmem:[#allocation2 + $0xf8] sm:$0xff] %v309
  %v318 = vld [vmem:[%s0] sm:$0xff]
  %v319 = vld [vmem:[%s0 + $0x8] sm:$0xff]
  %v320 = vld [vmem:[%s0 + $0x10] sm:$0xff]
  %v321 = vld [vmem:[%s0 + $0x18] sm:$0xff]
  %v322 = vld [vmem:[%s0 + $0x20] sm:$0xf]
  %328 = vrot.lane.b32.xlu0 %v318, 105
  %v329 = vpop.permute.xlu0 %328
  %330 = vrot.lane.b32.xlu0 %v319, 105
  %v331 = vpop.permute.xlu0 %330
  %332 = vrot.lane.b32.xlu0 %v320, 105
  %v333 = vpop.permute.xlu0 %332
  %334 = vrot.lane.b32.xlu0 %v321, 105
  %v335 = vpop.permute.xlu0 %334
  %336 = vrot.lane.b32.xlu0 %v322, 105
  %v337 = vpop.permute.xlu0 %336
  %v338 = vrot.slane %v329, 4
  %v339 = vrot.slane %v331, 4
  %v340 = vrot.slane %v333, 4
  %v341 = vrot.slane %v335, 4
  %v342 = vrot.slane %v337, 4
  %v343 = vsel %vm48, %v338, %v339
  %vm344 = vcmask 859136
  %v345 = vsel %vm344, %v329, %v343
  %v346 = vsel %vm48, %v339, %v340
  %v347 = vsel %vm344, %v331, %v346
  %v348 = vsel %vm48, %v340, %v341
  %v349 = vsel %vm344, %v333, %v348
  %v350 = vsel %vm48, %v341, %v342
  %v351 = vsel %vm344, %v335, %v350
  %356 = vst [vmem:[#allocation2 + $0x100] sm:$0xff] %v345
  %357 = vst [vmem:[#allocation2 + $0x108] sm:$0xff] %v347
  %358 = vst [vmem:[#allocation2 + $0x110] sm:$0xff] %v349
  %359 = vst [vmem:[#allocation2 + $0x118] sm:$0xff] %v351
  %v360 = vld [vmem:[%s0] sm:$0xff]
  %v361 = vld [vmem:[%s0 + $0x8] sm:$0xff]
  %v362 = vld [vmem:[%s0 + $0x10] sm:$0xff]
  %v363 = vld [vmem:[%s0 + $0x18] sm:$0xff]
  %v364 = vld [vmem:[%s0 + $0x20] sm:$0xf]
  %370 = vrot.lane.b32.xlu0 %v360, 104
  %v371 = vpop.permute.xlu0 %370
  %372 = vrot.lane.b32.xlu0 %v361, 104
  %v373 = vpop.permute.xlu0 %372
  %374 = vrot.lane.b32.xlu0 %v362, 104
  %v375 = vpop.permute.xlu0 %374
  %376 = vrot.lane.b32.xlu0 %v363, 104
  %v377 = vpop.permute.xlu0 %376
  %378 = vrot.lane.b32.xlu0 %v364, 104
  %v379 = vpop.permute.xlu0 %378
  %v380 = vrot.slane %v371, 4
  %v381 = vrot.slane %v373, 4
  %v382 = vrot.slane %v375, 4
  %v383 = vrot.slane %v377, 4
  %v384 = vrot.slane %v379, 4
  %v385 = vsel %vm48, %v380, %v381
  %vm386 = vcmask 850944
  %v387 = vsel %vm386, %v371, %v385
  %v388 = vsel %vm48, %v381, %v382
  %v389 = vsel %vm386, %v373, %v388
  %v390 = vsel %vm48, %v382, %v383
  %v391 = vsel %vm386, %v375, %v390
  %v392 = vsel %vm48, %v383, %v384
  %v393 = vsel %vm386, %v377, %v392
  %398 = vst [vmem:[#allocation2 + $0x120] sm:$0xff] %v387
  %399 = vst [vmem:[#allocation2 + $0x128] sm:$0xff] %v389
  %400 = vst [vmem:[#allocation2 + $0x130] sm:$0xff] %v391
  %401 = vst [vmem:[#allocation2 + $0x138] sm:$0xff] %v393
  %v402 = vld [vmem:[%s0] sm:$0xff]
  %v403 = vld [vmem:[%s0 + $0x8] sm:$0xff]
  %v404 = vld [vmem:[%s0 + $0x10] sm:$0xff]
  %v405 = vld [vmem:[%s0 + $0x18] sm:$0xff]
  %v406 = vld [vmem:[%s0 + $0x20] sm:$0xf]
  %412 = vrot.lane.b32.xlu0 %v402, 103
  %v413 = vpop.permute.xlu0 %412
  %414 = vrot.lane.b32.xlu0 %v403, 103
  %v415 = vpop.permute.xlu0 %414
  %416 = vrot.lane.b32.xlu0 %v404, 103
  %v417 = vpop.permute.xlu0 %416
  %418 = vrot.lane.b32.xlu0 %v405, 103
  %v419 = vpop.permute.xlu0 %418
  %420 = vrot.lane.b32.xlu0 %v406, 103
  %v421 = vpop.permute.xlu0 %420
  %v422 = vrot.slane %v413, 4
  %v423 = vrot.slane %v415, 4
  %v424 = vrot.slane %v417, 4
  %v425 = vrot.slane %v419, 4
  %v426 = vrot.slane %v421, 4
  %v427 = vsel %vm48, %v422, %v423
  %vm428 = vcmask 842752
  %v429 = vsel %vm428, %v413, %v427
  %v430 = vsel %vm48, %v423, %v424
  %v431 = vsel %vm428, %v415, %v430
  %v432 = vsel %vm48, %v424, %v425
  %v433 = vsel %vm428, %v417, %v432
  %v434 = vsel %vm48, %v425, %v426
  %v435 = vsel %vm428, %v419, %v434
  %440 = vst [vmem:[#allocation2 + $0x140] sm:$0xff] %v429
  %441 = vst [vmem:[#allocation2 + $0x148] sm:$0xff] %v431
  %442 = vst [vmem:[#allocation2 + $0x150] sm:$0xff] %v433
  %443 = vst [vmem:[#allocation2 + $0x158] sm:$0xff] %v435
  %v444 = vld [vmem:[%s0] sm:$0xff]
  %v445 = vld [vmem:[%s0 + $0x8] sm:$0xff]
  %v446 = vld [vmem:[%s0 + $0x10] sm:$0xff]
  %v447 = vld [vmem:[%s0 + $0x18] sm:$0xff]
  %v448 = vld [vmem:[%s0 + $0x20] sm:$0xf]
  %454 = vrot.lane.b32.xlu0 %v444, 102
  %v455 = vpop.permute.xlu0 %454
  %456 = vrot.lane.b32.xlu0 %v445, 102
  %v457 = vpop.permute.xlu0 %456
  %458 = vrot.lane.b32.xlu0 %v446, 102
  %v459 = vpop.permute.xlu0 %458
  %460 = vrot.lane.b32.xlu0 %v447, 102
  %v461 = vpop.permute.xlu0 %460
  %462 = vrot.lane.b32.xlu0 %v448, 102
  %v463 = vpop.permute.xlu0 %462
  %v464 = vrot.slane %v455, 4
  %v465 = vrot.slane %v457, 4
  %v466 = vrot.slane %v459, 4
  %v467 = vrot.slane %v461, 4
  %v468 = vrot.slane %v463, 4
  %v469 = vsel %vm48, %v464, %v465
  %vm470 = vcmask 834560
  %v471 = vsel %vm470, %v455, %v469
  %v472 = vsel %vm48, %v465, %v466
  %v473 = vsel %vm470, %v457, %v472
  %v474 = vsel %vm48, %v466, %v467
  %v475 = vsel %vm470, %v459, %v474
  %v476 = vsel %vm48, %v467, %v468
  %v477 = vsel %vm470, %v461, %v476
  %482 = vst [vmem:[#allocation2 + $0x160] sm:$0xff] %v471
  %483 = vst [vmem:[#allocation2 + $0x168] sm:$0xff] %v473
  %484 = vst [vmem:[#allocation2 + $0x170] sm:$0xff] %v475
  %485 = vst [vmem:[#allocation2 + $0x178] sm:$0xff] %v477
  %v486 = vld [vmem:[%s0] sm:$0xff]
  %v487 = vld [vmem:[%s0 + $0x8] sm:$0xff]
  %v488 = vld [vmem:[%s0 + $0x10] sm:$0xff]
  %v489 = vld [vmem:[%s0 + $0x18] sm:$0xff]
  %v490 = vld [vmem:[%s0 + $0x20] sm:$0xf]
  %496 = vrot.lane.b32.xlu0 %v486, 101
  %v497 = vpop.permute.xlu0 %496
  %498 = vrot.lane.b32.xlu0 %v487, 101
  %v499 = vpop.permute.xlu0 %498
  %500 = vrot.lane.b32.xlu0 %v488, 101
  %v501 = vpop.permute.xlu0 %500
  %502 = vrot.lane.b32.xlu0 %v489, 101
  %v503 = vpop.permute.xlu0 %502
  %504 = vrot.lane.b32.xlu0 %v490, 101
  %v505 = vpop.permute.xlu0 %504
  %v506 = vrot.slane %v497, 4
  %v507 = vrot.slane %v499, 4
  %v508 = vrot.slane %v501, 4
  %v509 = vrot.slane %v503, 4
  %v510 = vrot.slane %v505, 4
  %v511 = vsel %vm48, %v506, %v507
  %vm512 = vcmask 826368
  %v513 = vsel %vm512, %v497, %v511
  %v514 = vsel %vm48, %v507, %v508
  %v515 = vsel %vm512, %v499, %v514
  %v516 = vsel %vm48, %v508, %v509
  %v517 = vsel %vm512, %v501, %v516
  %v518 = vsel %vm48, %v509, %v510
  %v519 = vsel %vm512, %v503, %v518
  %524 = vst [vmem:[#allocation2 + $0x180] sm:$0xff] %v513
  %525 = vst [vmem:[#allocation2 + $0x188] sm:$0xff] %v515
  %526 = vst [vmem:[#allocation2 + $0x190] sm:$0xff] %v517
  %527 = vst [vmem:[#allocation2 + $0x198] sm:$0xff] %v519
  %v528 = vld [vmem:[%s0] sm:$0xff]
  %v529 = vld [vmem:[%s0 + $0x8] sm:$0xff]
  %v530 = vld [vmem:[%s0 + $0x10] sm:$0xff]
  %v531 = vld [vmem:[%s0 + $0x18] sm:$0xff]
  %v532 = vld [vmem:[%s0 + $0x20] sm:$0xf]
  %538 = vrot.lane.b32.xlu0 %v528, 100
  %v539 = vpop.permute.xlu0 %538
  %540 = vrot.lane.b32.xlu0 %v529, 100
  %v541 = vpop.permute.xlu0 %540
  %542 = vrot.lane.b32.xlu0 %v530, 100
  %v543 = vpop.permute.xlu0 %542
  %544 = vrot.lane.b32.xlu0 %v531, 100
  %v545 = vpop.permute.xlu0 %544
  %546 = vrot.lane.b32.xlu0 %v532, 100
  %v547 = vpop.permute.xlu0 %546
  %v548 = vrot.slane %v539, 4
  %v549 = vrot.slane %v541, 4
  %v550 = vrot.slane %v543, 4
  %v551 = vrot.slane %v545, 4
  %v552 = vrot.slane %v547, 4
  %v553 = vsel %vm48, %v548, %v549
  %vm554 = vcmask 818176
  %v555 = vsel %vm554, %v539, %v553
  %v556 = vsel %vm48, %v549, %v550
  %v557 = vsel %vm554, %v541, %v556
  %v558 = vsel %vm48, %v550, %v551
  %v559 = vsel %vm554, %v543, %v558
  %v560 = vsel %vm48, %v551, %v552
  %v561 = vsel %vm554, %v545, %v560
  %566 = vst [vmem:[#allocation2 + $0x1a0] sm:$0xff] %v555
  %567 = vst [vmem:[#allocation2 + $0x1a8] sm:$0xff] %v557
  %568 = vst [vmem:[#allocation2 + $0x1b0] sm:$0xff] %v559
  %569 = vst [vmem:[#allocation2 + $0x1b8] sm:$0xff] %v561
  %v570 = vld [vmem:[%s0] sm:$0xff]
  %v571 = vld [vmem:[%s0 + $0x8] sm:$0xff]
  %v572 = vld [vmem:[%s0 + $0x10] sm:$0xff]
  %v573 = vld [vmem:[%s0 + $0x18] sm:$0xff]
  %v574 = vld [vmem:[%s0 + $0x20] sm:$0xf]
  %580 = vrot.lane.b32.xlu0 %v570, 84
  %v581 = vpop.permute.xlu0 %580
  %582 = vrot.lane.b32.xlu0 %v571, 84
  %v583 = vpop.permute.xlu0 %582
  %584 = vrot.lane.b32.xlu0 %v572, 84
  %v585 = vpop.permute.xlu0 %584
  %586 = vrot.lane.b32.xlu0 %v573, 84
  %v587 = vpop.permute.xlu0 %586
  %588 = vrot.lane.b32.xlu0 %v574, 84
  %v589 = vpop.permute.xlu0 %588
  %v590 = vrot.slane %v581, 4
  %v591 = vrot.slane %v583, 4
  %v592 = vrot.slane %v585, 4
  %v593 = vrot.slane %v587, 4
  %v594 = vrot.slane %v589, 4
  %v595 = vsel %vm48, %v590, %v591
  %vm596 = vcmask 687104
  %v597 = vsel %vm596, %v581, %v595
  %v598 = vsel %vm48, %v591, %v592
  %v599 = vsel %vm596, %v583, %v598
  %v600 = vsel %vm48, %v592, %v593
  %v601 = vsel %vm596, %v585, %v600
  %v602 = vsel %vm48, %v593, %v594
  %v603 = vsel %vm596, %v587, %v602
  %608 = vst [vmem:[#allocation2 + $0x1c0] sm:$0xff] %v597
  %609 = vst [vmem:[#allocation2 + $0x1c8] sm:$0xff] %v599
  %610 = vst [vmem:[#allocation2 + $0x1d0] sm:$0xff] %v601
  %611 = vst [vmem:[#allocation2 + $0x1d8] sm:$0xff] %v603
  %v612 = vld [vmem:[%s0] sm:$0xff]
  %v613 = vld [vmem:[%s0 + $0x8] sm:$0xff]
  %v614 = vld [vmem:[%s0 + $0x10] sm:$0xff]
  %v615 = vld [vmem:[%s0 + $0x18] sm:$0xff]
  %v616 = vld [vmem:[%s0 + $0x20] sm:$0xf]
  %622 = vrot.lane.b32.xlu0 %v612, 83
  %v623 = vpop.permute.xlu0 %622
  %624 = vrot.lane.b32.xlu0 %v613, 83
  %v625 = vpop.permute.xlu0 %624
  %626 = vrot.lane.b32.xlu0 %v614, 83
  %v627 = vpop.permute.xlu0 %626
  %628 = vrot.lane.b32.xlu0 %v615, 83
  %v629 = vpop.permute.xlu0 %628
  %630 = vrot.lane.b32.xlu0 %v616, 83
  %v631 = vpop.permute.xlu0 %630
  %v632 = vrot.slane %v623, 4
  %v633 = vrot.slane %v625, 4
  %v634 = vrot.slane %v627, 4
  %v635 = vrot.slane %v629, 4
  %v636 = vrot.slane %v631, 4
  %v637 = vsel %vm48, %v632, %v633
  %vm638 = vcmask 678912
  %v639 = vsel %vm638, %v623, %v637
  %v640 = vsel %vm48, %v633, %v634
  %v641 = vsel %vm638, %v625, %v640
  %v642 = vsel %vm48, %v634, %v635
  %v643 = vsel %vm638, %v627, %v642
  %v644 = vsel %vm48, %v635, %v636
  %v645 = vsel %vm638, %v629, %v644
  %650 = vst [vmem:[#allocation2 + $0x1e0] sm:$0xff] %v639
  %651 = vst [vmem:[#allocation2 + $0x1e8] sm:$0xff] %v641
  %652 = vst [vmem:[#allocation2 + $0x1f0] sm:$0xff] %v643
  %653 = vst [vmem:[#allocation2 + $0x1f8] sm:$0xff] %v645
  %v654 = vld [vmem:[%s0] sm:$0xff]
  %v655 = vld [vmem:[%s0 + $0x8] sm:$0xff]
  %v656 = vld [vmem:[%s0 + $0x10] sm:$0xff]
  %v657 = vld [vmem:[%s0 + $0x18] sm:$0xff]
  %v658 = vld [vmem:[%s0 + $0x20] sm:$0xf]
  %664 = vrot.lane.b32.xlu0 %v654, 82
  %v665 = vpop.permute.xlu0 %664
  %666 = vrot.lane.b32.xlu0 %v655, 82
  %v667 = vpop.permute.xlu0 %666
  %668 = vrot.lane.b32.xlu0 %v656, 82
  %v669 = vpop.permute.xlu0 %668
  %670 = vrot.lane.b32.xlu0 %v657, 82
  %v671 = vpop.permute.xlu0 %670
  %672 = vrot.lane.b32.xlu0 %v658, 82
  %v673 = vpop.permute.xlu0 %672
  %v674 = vrot.slane %v665, 4
  %v675 = vrot.slane %v667, 4
  %v676 = vrot.slane %v669, 4
  %v677 = vrot.slane %v671, 4
  %v678 = vrot.slane %v673, 4
  %v679 = vsel %vm48, %v674, %v675
  %vm680 = vcmask 670720
  %v681 = vsel %vm680, %v665, %v679
  %v682 = vsel %vm48, %v675, %v676
  %v683 = vsel %vm680, %v667, %v682
  %v684 = vsel %vm48, %v676, %v677
  %v685 = vsel %vm680, %v669, %v684
  %v686 = vsel %vm48, %v677, %v678
  %v687 = vsel %vm680, %v671, %v686
  %692 = vst [vmem:[#allocation2 + $0x200] sm:$0xff] %v681
  %693 = vst [vmem:[#allocation2 + $0x208] sm:$0xff] %v683
  %694 = vst [vmem:[#allocation2 + $0x210] sm:$0xff] %v685
  %695 = vst [vmem:[#allocation2 + $0x218] sm:$0xff] %v687
  %v696 = vld [vmem:[%s0] sm:$0xff]
  %v697 = vld [vmem:[%s0 + $0x8] sm:$0xff]
  %v698 = vld [vmem:[%s0 + $0x10] sm:$0xff]
  %v699 = vld [vmem:[%s0 + $0x18] sm:$0xff]
  %v700 = vld [vmem:[%s0 + $0x20] sm:$0xf]
  %706 = vrot.lane.b32.xlu0 %v696, 81
  %v707 = vpop.permute.xlu0 %706
  %708 = vrot.lane.b32.xlu0 %v697, 81
  %v709 = vpop.permute.xlu0 %708
  %710 = vrot.lane.b32.xlu0 %v698, 81
  %v711 = vpop.permute.xlu0 %710
  %712 = vrot.lane.b32.xlu0 %v699, 81
  %v713 = vpop.permute.xlu0 %712
  %714 = vrot.lane.b32.xlu0 %v700, 81
  %v715 = vpop.permute.xlu0 %714
  %v716 = vrot.slane %v707, 4
  %v717 = vrot.slane %v709, 4
  %v718 = vrot.slane %v711, 4
  %v719 = vrot.slane %v713, 4
  %v720 = vrot.slane %v715, 4
  %v721 = vsel %vm48, %v716, %v717
  %vm722 = vcmask 662528
  %v723 = vsel %vm722, %v707, %v721
  %v724 = vsel %vm48, %v717, %v718
  %v725 = vsel %vm722, %v709, %v724
  %v726 = vsel %vm48, %v718, %v719
  %v727 = vsel %vm722, %v711, %v726
  %v728 = vsel %vm48, %v719, %v720
  %v729 = vsel %vm722, %v713, %v728
  %734 = vst [vmem:[#allocation2 + $0x220] sm:$0xff] %v723
  %735 = vst [vmem:[#allocation2 + $0x228] sm:$0xff] %v725
  %736 = vst [vmem:[#allocation2 + $0x230] sm:$0xff] %v727
  %737 = vst [vmem:[#allocation2 + $0x238] sm:$0xff] %v729
  %v738 = vld [vmem:[%s0] sm:$0xff]
  %v739 = vld [vmem:[%s0 + $0x8] sm:$0xff]
  %v740 = vld [vmem:[%s0 + $0x10] sm:$0xff]
  %v741 = vld [vmem:[%s0 + $0x18] sm:$0xff]
  %v742 = vld [vmem:[%s0 + $0x20] sm:$0xf]
  %748 = vrot.lane.b32.xlu0 %v738, 80
  %v749 = vpop.permute.xlu0 %748
  %750 = vrot.lane.b32.xlu0 %v739, 80
  %v751 = vpop.permute.xlu0 %750
  %752 = vrot.lane.b32.xlu0 %v740, 80
  %v753 = vpop.permute.xlu0 %752
  %754 = vrot.lane.b32.xlu0 %v741, 80
  %v755 = vpop.permute.xlu0 %754
  %756 = vrot.lane.b32.xlu0 %v742, 80
  %v757 = vpop.permute.xlu0 %756
  %v758 = vrot.slane %v749, 4
  %v759 = vrot.slane %v751, 4
  %v760 = vrot.slane %v753, 4
  %v761 = vrot.slane %v755, 4
  %v762 = vrot.slane %v757, 4
  %v763 = vsel %vm48, %v758, %v759
  %vm764 = vcmask 654336
  %v765 = vsel %vm764, %v749, %v763
  %v766 = vsel %vm48, %v759, %v760
  %v767 = vsel %vm764, %v751, %v766
  %v768 = vsel %vm48, %v760, %v761
  %v769 = vsel %vm764, %v753, %v768
  %v770 = vsel %vm48, %v761, %v762
  %v771 = vsel %vm764, %v755, %v770
  %776 = vst [vmem:[#allocation2 + $0x240] sm:$0xff] %v765
  %777 = vst [vmem:[#allocation2 + $0x248] sm:$0xff] %v767
  %778 = vst [vmem:[#allocation2 + $0x250] sm:$0xff] %v769
  %779 = vst [vmem:[#allocation2 + $0x258] sm:$0xff] %v771
  %v780 = vld [vmem:[%s0] sm:$0xff]
  %v781 = vld [vmem:[%s0 + $0x8] sm:$0xff]
  %v782 = vld [vmem:[%s0 + $0x10] sm:$0xff]
  %v783 = vld [vmem:[%s0 + $0x18] sm:$0xff]
  %v784 = vld [vmem:[%s0 + $0x20] sm:$0xf]
  %790 = vrot.lane.b32.xlu0 %v780, 79
  %v791 = vpop.permute.xlu0 %790
  %792 = vrot.lane.b32.xlu0 %v781, 79
  %v793 = vpop.permute.xlu0 %792
  %794 = vrot.lane.b32.xlu0 %v782, 79
  %v795 = vpop.permute.xlu0 %794
  %796 = vrot.lane.b32.xlu0 %v783, 79
  %v797 = vpop.permute.xlu0 %796
  %798 = vrot.lane.b32.xlu0 %v784, 79
  %v799 = vpop.permute.xlu0 %798
  %v800 = vrot.slane %v791, 4
  %v801 = vrot.slane %v793, 4
  %v802 = vrot.slane %v795, 4
  %v803 = vrot.slane %v797, 4
  %v804 = vrot.slane %v799, 4
  %v805 = vsel %vm48, %v800, %v801
  %vm806 = vcmask 646144
  %v807 = vsel %vm806, %v791, %v805
  %v808 = vsel %vm48, %v801, %v802
  %v809 = vsel %vm806, %v793, %v808
  %v810 = vsel %vm48, %v802, %v803
  %v811 = vsel %vm806, %v795, %v810
  %v812 = vsel %vm48, %v803, %v804
  %v813 = vsel %vm806, %v797, %v812
  %818 = vst [vmem:[#allocation2 + $0x260] sm:$0xff] %v807
  %819 = vst [vmem:[#allocation2 + $0x268] sm:$0xff] %v809
  %820 = vst [vmem:[#allocation2 + $0x270] sm:$0xff] %v811
  %821 = vst [vmem:[#allocation2 + $0x278] sm:$0xff] %v813
  %v822 = vld [vmem:[%s0] sm:$0xff]
  %v823 = vld [vmem:[%s0 + $0x8] sm:$0xff]
  %v824 = vld [vmem:[%s0 + $0x10] sm:$0xff]
  %v825 = vld [vmem:[%s0 + $0x18] sm:$0xff]
  %v826 = vld [vmem:[%s0 + $0x20] sm:$0xf]
  %832 = vrot.lane.b32.xlu0 %v822, 78
  %v833 = vpop.permute.xlu0 %832
  %834 = vrot.lane.b32.xlu0 %v823, 78
  %v835 = vpop.permute.xlu0 %834
  %836 = vrot.lane.b32.xlu0 %v824, 78
  %v837 = vpop.permute.xlu0 %836
  %838 = vrot.lane.b32.xlu0 %v825, 78
  %v839 = vpop.permute.xlu0 %838
  %840 = vrot.lane.b32.xlu0 %v826, 78
  %v841 = vpop.permute.xlu0 %840
  %v842 = vrot.slane %v833, 4
  %v843 = vrot.slane %v835, 4
  %v844 = vrot.slane %v837, 4
  %v845 = vrot.slane %v839, 4
  %v846 = vrot.slane %v841, 4
  %v847 = vsel %vm48, %v842, %v843
  %vm848 = vcmask 637952
  %v849 = vsel %vm848, %v833, %v847
  %v850 = vsel %vm48, %v843, %v844
  %v851 = vsel %vm848, %v835, %v850
  %v852 = vsel %vm48, %v844, %v845
  %v853 = vsel %vm848, %v837, %v852
  %v854 = vsel %vm48, %v845, %v846
  %v855 = vsel %vm848, %v839, %v854
  %860 = vst [vmem:[#allocation2 + $0x280] sm:$0xff] %v849
  %861 = vst [vmem:[#allocation2 + $0x288] sm:$0xff] %v851
  %862 = vst [vmem:[#allocation2 + $0x290] sm:$0xff] %v853
  %863 = vst [vmem:[#allocation2 + $0x298] sm:$0xff] %v855
  %v864 = vld [vmem:[%s0] sm:$0xff]
  %v865 = vld [vmem:[%s0 + $0x8] sm:$0xff]
  %v866 = vld [vmem:[%s0 + $0x10] sm:$0xff]
  %v867 = vld [vmem:[%s0 + $0x18] sm:$0xff]
  %v868 = vld [vmem:[%s0 + $0x20] sm:$0xf]
  %874 = vrot.lane.b32.xlu0 %v864, 62
  %v875 = vpop.permute.xlu0 %874
  %876 = vrot.lane.b32.xlu0 %v865, 62
  %v877 = vpop.permute.xlu0 %876
  %878 = vrot.lane.b32.xlu0 %v866, 62
  %v879 = vpop.permute.xlu0 %878
  %880 = vrot.lane.b32.xlu0 %v867, 62
  %v881 = vpop.permute.xlu0 %880
  %882 = vrot.lane.b32.xlu0 %v868, 62
  %v883 = vpop.permute.xlu0 %882
  %v884 = vrot.slane %v875, 4
  %v885 = vrot.slane %v877, 4
  %v886 = vrot.slane %v879, 4
  %v887 = vrot.slane %v881, 4
  %v888 = vrot.slane %v883, 4
  %v889 = vsel %vm48, %v884, %v885
  %vm890 = vcmask 506880
  %v891 = vsel %vm890, %v875, %v889
  %v892 = vsel %vm48, %v885, %v886
  %v893 = vsel %vm890, %v877, %v892
  %v894 = vsel %vm48, %v886, %v887
  %v895 = vsel %vm890, %v879, %v894
  %v896 = vsel %vm48, %v887, %v888
  %v897 = vsel %vm890, %v881, %v896
  %902 = vst [vmem:[#allocation2 + $0x2a0] sm:$0xff] %v891
  %903 = vst [vmem:[#allocation2 + $0x2a8] sm:$0xff] %v893
  %904 = vst [vmem:[#allocation2 + $0x2b0] sm:$0xff] %v895
  %905 = vst [vmem:[#allocation2 + $0x2b8] sm:$0xff] %v897
  %v906 = vld [vmem:[%s0] sm:$0xff]
  %v907 = vld [vmem:[%s0 + $0x8] sm:$0xff]
  %v908 = vld [vmem:[%s0 + $0x10] sm:$0xff]
  %v909 = vld [vmem:[%s0 + $0x18] sm:$0xff]
  %v910 = vld [vmem:[%s0 + $0x20] sm:$0xf]
  %916 = vrot.lane.b32.xlu0 %v906, 61
  %v917 = vpop.permute.xlu0 %916
  %918 = vrot.lane.b32.xlu0 %v907, 61
  %v919 = vpop.permute.xlu0 %918
  %920 = vrot.lane.b32.xlu0 %v908, 61
  %v921 = vpop.permute.xlu0 %920
  %922 = vrot.lane.b32.xlu0 %v909, 61
  %v923 = vpop.permute.xlu0 %922
  %924 = vrot.lane.b32.xlu0 %v910, 61
  %v925 = vpop.permute.xlu0 %924
  %v926 = vrot.slane %v917, 4
  %v927 = vrot.slane %v919, 4
  %v928 = vrot.slane %v921, 4
  %v929 = vrot.slane %v923, 4
  %v930 = vrot.slane %v925, 4
  %v931 = vsel %vm48, %v926, %v927
  %vm932 = vcmask 498688
  %v933 = vsel %vm932, %v917, %v931
  %v934 = vsel %vm48, %v927, %v928
  %v935 = vsel %vm932, %v919, %v934
  %v936 = vsel %vm48, %v928, %v929
  %v937 = vsel %vm932, %v921, %v936
  %v938 = vsel %vm48, %v929, %v930
  %v939 = vsel %vm932, %v923, %v938
  %944 = vst [vmem:[#allocation2 + $0x2c0] sm:$0xff] %v933
  %945 = vst [vmem:[#allocation2 + $0x2c8] sm:$0xff] %v935
  %946 = vst [vmem:[#allocation2 + $0x2d0] sm:$0xff] %v937
  %947 = vst [vmem:[#allocation2 + $0x2d8] sm:$0xff] %v939
  %v948 = vld [vmem:[%s0] sm:$0xff]
  %v949 = vld [vmem:[%s0 + $0x8] sm:$0xff]
  %v950 = vld [vmem:[%s0 + $0x10] sm:$0xff]
  %v951 = vld [vmem:[%s0 + $0x18] sm:$0xff]
  %v952 = vld [vmem:[%s0 + $0x20] sm:$0xf]
  %958 = vrot.lane.b32.xlu0 %v948, 60
  %v959 = vpop.permute.xlu0 %958
  %960 = vrot.lane.b32.xlu0 %v949, 60
  %v961 = vpop.permute.xlu0 %960
  %962 = vrot.lane.b32.xlu0 %v950, 60
  %v963 = vpop.permute.xlu0 %962
  %964 = vrot.lane.b32.xlu0 %v951, 60
  %v965 = vpop.permute.xlu0 %964
  %966 = vrot.lane.b32.xlu0 %v952, 60
  %v967 = vpop.permute.xlu0 %966
  %v968 = vrot.slane %v959, 4
  %v969 = vrot.slane %v961, 4
  %v970 = vrot.slane %v963, 4
  %v971 = vrot.slane %v965, 4
  %v972 = vrot.slane %v967, 4
  %v973 = vsel %vm48, %v968, %v969
  %vm974 = vcmask 490496
  %v975 = vsel %vm974, %v959, %v973
  %v976 = vsel %vm48, %v969, %v970
  %v977 = vsel %vm974, %v961, %v976
  %v978 = vsel %vm48, %v970, %v971
  %v979 = vsel %vm974, %v963, %v978
  %v980 = vsel %vm48, %v971, %v972
  %v981 = vsel %vm974, %v965, %v980
  %986 = vst [vmem:[#allocation2 + $0x2e0] sm:$0xff] %v975
  %987 = vst [vmem:[#allocation2 + $0x2e8] sm:$0xff] %v977
  %988 = vst [vmem:[#allocation2 + $0x2f0] sm:$0xff] %v979
  %989 = vst [vmem:[#allocation2 + $0x2f8] sm:$0xff] %v981
  %v990 = vld [vmem:[%s0] sm:$0xff]
  %v991 = vld [vmem:[%s0 + $0x8] sm:$0xff]
  %v992 = vld [vmem:[%s0 + $0x10] sm:$0xff]
  %v993 = vld [vmem:[%s0 + $0x18] sm:$0xff]
  %v994 = vld [vmem:[%s0 + $0x20] sm:$0xf]
  %1000 = vrot.lane.b32.xlu0 %v990, 59
  %v1001 = vpop.permute.xlu0 %1000
  %1002 = vrot.lane.b32.xlu0 %v991, 59
  %v1003 = vpop.permute.xlu0 %1002
  %1004 = vrot.lane.b32.xlu0 %v992, 59
  %v1005 = vpop.permute.xlu0 %1004
  %1006 = vrot.lane.b32.xlu0 %v993, 59
  %v1007 = vpop.permute.xlu0 %1006
  %1008 = vrot.lane.b32.xlu0 %v994, 59
  %v1009 = vpop.permute.xlu0 %1008
  %v1010 = vrot.slane %v1001, 4
  %v1011 = vrot.slane %v1003, 4
  %v1012 = vrot.slane %v1005, 4
  %v1013 = vrot.slane %v1007, 4
  %v1014 = vrot.slane %v1009, 4
  %v1015 = vsel %vm48, %v1010, %v1011
  %vm1016 = vcmask 482304
  %v1017 = vsel %vm1016, %v1001, %v1015
  %v1018 = vsel %vm48, %v1011, %v1012
  %v1019 = vsel %vm1016, %v1003, %v1018
  %v1020 = vsel %vm48, %v1012, %v1013
  %v1021 = vsel %vm1016, %v1005, %v1020
  %v1022 = vsel %vm48, %v1013, %v1014
  %v1023 = vsel %vm1016, %v1007, %v1022
  %1028 = vst [vmem:[#allocation2 + $0x300] sm:$0xff] %v1017
  %1029 = vst [vmem:[#allocation2 + $0x308] sm:$0xff] %v1019
  %1030 = vst [vmem:[#allocation2 + $0x310] sm:$0xff] %v1021
  %1031 = vst [vmem:[#allocation2 + $0x318] sm:$0xff] %v1023
  %v1032 = vld [vmem:[%s0] sm:$0xff]
  %v1033 = vld [vmem:[%s0 + $0x8] sm:$0xff]
  %v1034 = vld [vmem:[%s0 + $0x10] sm:$0xff]
  %v1035 = vld [vmem:[%s0 + $0x18] sm:$0xff]
  %v1036 = vld [vmem:[%s0 + $0x20] sm:$0xf]
  %1042 = vrot.lane.b32.xlu0 %v1032, 58
  %v1043 = vpop.permute.xlu0 %1042
  %1044 = vrot.lane.b32.xlu0 %v1033, 58
  %v1045 = vpop.permute.xlu0 %1044
  %1046 = vrot.lane.b32.xlu0 %v1034, 58
  %v1047 = vpop.permute.xlu0 %1046
  %1048 = vrot.lane.b32.xlu0 %v1035, 58
  %v1049 = vpop.permute.xlu0 %1048
  %1050 = vrot.lane.b32.xlu0 %v1036, 58
  %v1051 = vpop.permute.xlu0 %1050
  %v1052 = vrot.slane %v1043, 4
  %v1053 = vrot.slane %v1045, 4
  %v1054 = vrot.slane %v1047, 4
  %v1055 = vrot.slane %v1049, 4
  %v1056 = vrot.slane %v1051, 4
  %v1057 = vsel %vm48, %v1052, %v1053
  %vm1058 = vcmask 474112
  %v1059 = vsel %vm1058, %v1043, %v1057
  %v1060 = vsel %vm48, %v1053, %v1054
  %v1061 = vsel %vm1058, %v1045, %v1060
  %v1062 = vsel %vm48, %v1054, %v1055
  %v1063 = vsel %vm1058, %v1047, %v1062
  %v1064 = vsel %vm48, %v1055, %v1056
  %v1065 = vsel %vm1058, %v1049, %v1064
  %1070 = vst [vmem:[#allocation2 + $0x320] sm:$0xff] %v1059
  %1071 = vst [vmem:[#allocation2 + $0x328] sm:$0xff] %v1061
  %1072 = vst [vmem:[#allocation2 + $0x330] sm:$0xff] %v1063
  %1073 = vst [vmem:[#allocation2 + $0x338] sm:$0xff] %v1065
  %v1074 = vld [vmem:[%s0] sm:$0xff]
  %v1075 = vld [vmem:[%s0 + $0x8] sm:$0xff]
  %v1076 = vld [vmem:[%s0 + $0x10] sm:$0xff]
  %v1077 = vld [vmem:[%s0 + $0x18] sm:$0xff]
  %v1078 = vld [vmem:[%s0 + $0x20] sm:$0xf]
  %1084 = vrot.lane.b32.xlu0 %v1074, 57
  %v1085 = vpop.permute.xlu0 %1084
  %1086 = vrot.lane.b32.xlu0 %v1075, 57
  %v1087 = vpop.permute.xlu0 %1086
  %1088 = vrot.lane.b32.xlu0 %v1076, 57
  %v1089 = vpop.permute.xlu0 %1088
  %1090 = vrot.lane.b32.xlu0 %v1077, 57
  %v1091 = vpop.permute.xlu0 %1090
  %1092 = vrot.lane.b32.xlu0 %v1078, 57
  %v1093 = vpop.permute.xlu0 %1092
  %v1094 = vrot.slane %v1085, 4
  %v1095 = vrot.slane %v1087, 4
  %v1096 = vrot.slane %v1089, 4
  %v1097 = vrot.slane %v1091, 4
  %v1098 = vrot.slane %v1093, 4
  %v1099 = vsel %vm48, %v1094, %v1095
  %vm1100 = vcmask 465920
  %v1101 = vsel %vm1100, %v1085, %v1099
  %v1102 = vsel %vm48, %v1095, %v1096
  %v1103 = vsel %vm1100, %v1087, %v1102
  %v1104 = vsel %vm48, %v1096, %v1097
  %v1105 = vsel %vm1100, %v1089, %v1104
  %v1106 = vsel %vm48, %v1097, %v1098
  %v1107 = vsel %vm1100, %v1091, %v1106
  %1112 = vst [vmem:[#allocation2 + $0x340] sm:$0xff] %v1101
  %1113 = vst [vmem:[#allocation2 + $0x348] sm:$0xff] %v1103
  %1114 = vst [vmem:[#allocation2 + $0x350] sm:$0xff] %v1105
  %1115 = vst [vmem:[#allocation2 + $0x358] sm:$0xff] %v1107
  %v1116 = vld [vmem:[%s0] sm:$0xff]
  %v1117 = vld [vmem:[%s0 + $0x8] sm:$0xff]
  %v1118 = vld [vmem:[%s0 + $0x10] sm:$0xff]
  %v1119 = vld [vmem:[%s0 + $0x18] sm:$0xff]
  %v1120 = vld [vmem:[%s0 + $0x20] sm:$0xf]
  %1126 = vrot.lane.b32.xlu0 %v1116, 56
  %v1127 = vpop.permute.xlu0 %1126
  %1128 = vrot.lane.b32.xlu0 %v1117, 56
  %v1129 = vpop.permute.xlu0 %1128
  %1130 = vrot.lane.b32.xlu0 %v1118, 56
  %v1131 = vpop.permute.xlu0 %1130
  %1132 = vrot.lane.b32.xlu0 %v1119, 56
  %v1133 = vpop.permute.xlu0 %1132
  %1134 = vrot.lane.b32.xlu0 %v1120, 56
  %v1135 = vpop.permute.xlu0 %1134
  %v1136 = vrot.slane %v1127, 4
  %v1137 = vrot.slane %v1129, 4
  %v1138 = vrot.slane %v1131, 4
  %v1139 = vrot.slane %v1133, 4
  %v1140 = vrot.slane %v1135, 4
  %v1141 = vsel %vm48, %v1136, %v1137
  %vm1142 = vcmask 457728
  %v1143 = vsel %vm1142, %v1127, %v1141
  %v1144 = vsel %vm48, %v1137, %v1138
  %v1145 = vsel %vm1142, %v1129, %v1144
  %v1146 = vsel %vm48, %v1138, %v1139
  %v1147 = vsel %vm1142, %v1131, %v1146
  %v1148 = vsel %vm48, %v1139, %v1140
  %v1149 = vsel %vm1142, %v1133, %v1148
  %1154 = vst [vmem:[#allocation2 + $0x360] sm:$0xff] %v1143
  %1155 = vst [vmem:[#allocation2 + $0x368] sm:$0xff] %v1145
  %1156 = vst [vmem:[#allocation2 + $0x370] sm:$0xff] %v1147
  %1157 = vst [vmem:[#allocation2 + $0x378] sm:$0xff] %v1149
  %v1158 = vld [vmem:[%s0] sm:$0xff]
  %v1159 = vld [vmem:[%s0 + $0x8] sm:$0xff]
  %v1160 = vld [vmem:[%s0 + $0x10] sm:$0xff]
  %v1161 = vld [vmem:[%s0 + $0x18] sm:$0xff]
  %v1162 = vld [vmem:[%s0 + $0x20] sm:$0xf]
  %1168 = vrot.lane.b32.xlu0 %v1158, 40
  %v1169 = vpop.permute.xlu0 %1168
  %1170 = vrot.lane.b32.xlu0 %v1159, 40
  %v1171 = vpop.permute.xlu0 %1170
  %1172 = vrot.lane.b32.xlu0 %v1160, 40
  %v1173 = vpop.permute.xlu0 %1172
  %1174 = vrot.lane.b32.xlu0 %v1161, 40
  %v1175 = vpop.permute.xlu0 %1174
  %1176 = vrot.lane.b32.xlu0 %v1162, 40
  %v1177 = vpop.permute.xlu0 %1176
  %v1178 = vrot.slane %v1169, 4
  %v1179 = vrot.slane %v1171, 4
  %v1180 = vrot.slane %v1173, 4
  %v1181 = vrot.slane %v1175, 4
  %v1182 = vrot.slane %v1177, 4
  %v1183 = vsel %vm48, %v1178, %v1179
  %vm1184 = vcmask 326656
  %v1185 = vsel %vm1184, %v1169, %v1183
  %v1186 = vsel %vm48, %v1179, %v1180
  %v1187 = vsel %vm1184, %v1171, %v1186
  %v1188 = vsel %vm48, %v1180, %v1181
  %v1189 = vsel %vm1184, %v1173, %v1188
  %v1190 = vsel %vm48, %v1181, %v1182
  %v1191 = vsel %vm1184, %v1175, %v1190
  %1196 = vst [vmem:[#allocation2 + $0x380] sm:$0xff] %v1185
  %1197 = vst [vmem:[#allocation2 + $0x388] sm:$0xff] %v1187
  %1198 = vst [vmem:[#allocation2 + $0x390] sm:$0xff] %v1189
  %1199 = vst [vmem:[#allocation2 + $0x398] sm:$0xff] %v1191
  %v1200 = vld [vmem:[%s0] sm:$0xff]
  %v1201 = vld [vmem:[%s0 + $0x8] sm:$0xff]
  %v1202 = vld [vmem:[%s0 + $0x10] sm:$0xff]
  %v1203 = vld [vmem:[%s0 + $0x18] sm:$0xff]
  %v1204 = vld [vmem:[%s0 + $0x20] sm:$0xf]
  %1210 = vrot.lane.b32.xlu0 %v1200, 39
  %v1211 = vpop.permute.xlu0 %1210
  %1212 = vrot.lane.b32.xlu0 %v1201, 39
  %v1213 = vpop.permute.xlu0 %1212
  %1214 = vrot.lane.b32.xlu0 %v1202, 39
  %v1215 = vpop.permute.xlu0 %1214
  %1216 = vrot.lane.b32.xlu0 %v1203, 39
  %v1217 = vpop.permute.xlu0 %1216
  %1218 = vrot.lane.b32.xlu0 %v1204, 39
  %v1219 = vpop.permute.xlu0 %1218
  %v1220 = vrot.slane %v1211, 4
  %v1221 = vrot.slane %v1213, 4
  %v1222 = vrot.slane %v1215, 4
  %v1223 = vrot.slane %v1217, 4
  %v1224 = vrot.slane %v1219, 4
  %v1225 = vsel %vm48, %v1220, %v1221
  %vm1226 = vcmask 318464
  %v1227 = vsel %vm1226, %v1211, %v1225
  %v1228 = vsel %vm48, %v1221, %v1222
  %v1229 = vsel %vm1226, %v1213, %v1228
  %v1230 = vsel %vm48, %v1222, %v1223
  %v1231 = vsel %vm1226, %v1215, %v1230
  %v1232 = vsel %vm48, %v1223, %v1224
  %v1233 = vsel %vm1226, %v1217, %v1232
  %1238 = vst [vmem:[#allocation2 + $0x3a0] sm:$0xff] %v1227
  %1239 = vst [vmem:[#allocation2 + $0x3a8] sm:$0xff] %v1229
  %1240 = vst [vmem:[#allocation2 + $0x3b0] sm:$0xff] %v1231
  %1241 = vst [vmem:[#allocation2 + $0x3b8] sm:$0xff] %v1233
  %v1242 = vld [vmem:[%s0] sm:$0xff]
  %v1243 = vld [vmem:[%s0 + $0x8] sm:$0xff]
  %v1244 = vld [vmem:[%s0 + $0x10] sm:$0xff]
  %v1245 = vld [vmem:[%s0 + $0x18] sm:$0xff]
  %v1246 = vld [vmem:[%s0 + $0x20] sm:$0xf]
  %1252 = vrot.lane.b32.xlu0 %v1242, 38
  %v1253 = vpop.permute.xlu0 %1252
  %1254 = vrot.lane.b32.xlu0 %v1243, 38
  %v1255 = vpop.permute.xlu0 %1254
  %1256 = vrot.lane.b32.xlu0 %v1244, 38
  %v1257 = vpop.permute.xlu0 %1256
  %1258 = vrot.lane.b32.xlu0 %v1245, 38
  %v1259 = vpop.permute.xlu0 %1258
  %1260 = vrot.lane.b32.xlu0 %v1246, 38
  %v1261 = vpop.permute.xlu0 %1260
  %v1262 = vrot.slane %v1253, 4
  %v1263 = vrot.slane %v1255, 4
  %v1264 = vrot.slane %v1257, 4
  %v1265 = vrot.slane %v1259, 4
  %v1266 = vrot.slane %v1261, 4
  %v1267 = vsel %vm48, %v1262, %v1263
  %vm1268 = vcmask 310272
  %v1269 = vsel %vm1268, %v1253, %v1267
  %v1270 = vsel %vm48, %v1263, %v1264
  %v1271 = vsel %vm1268, %v1255, %v1270
  %v1272 = vsel %vm48, %v1264, %v1265
  %v1273 = vsel %vm1268, %v1257, %v1272
  %v1274 = vsel %vm48, %v1265, %v1266
  %v1275 = vsel %vm1268, %v1259, %v1274
  %1280 = vst [vmem:[#allocation2 + $0x3c0] sm:$0xff] %v1269
  %1281 = vst [vmem:[#allocation2 + $0x3c8] sm:$0xff] %v1271
  %1282 = vst [vmem:[#allocation2 + $0x3d0] sm:$0xff] %v1273
  %1283 = vst [vmem:[#allocation2 + $0x3d8] sm:$0xff] %v1275
  %v1284 = vld [vmem:[%s0] sm:$0xff]
  %v1285 = vld [vmem:[%s0 + $0x8] sm:$0xff]
  %v1286 = vld [vmem:[%s0 + $0x10] sm:$0xff]
  %v1287 = vld [vmem:[%s0 + $0x18] sm:$0xff]
  %v1288 = vld [vmem:[%s0 + $0x20] sm:$0xf]
  %1294 = vrot.lane.b32.xlu0 %v1284, 37
  %v1295 = vpop.permute.xlu0 %1294
  %1296 = vrot.lane.b32.xlu0 %v1285, 37
  %v1297 = vpop.permute.xlu0 %1296
  %1298 = vrot.lane.b32.xlu0 %v1286, 37
  %v1299 = vpop.permute.xlu0 %1298
  %1300 = vrot.lane.b32.xlu0 %v1287, 37
  %v1301 = vpop.permute.xlu0 %1300
  %1302 = vrot.lane.b32.xlu0 %v1288, 37
  %v1303 = vpop.permute.xlu0 %1302
  %v1304 = vrot.slane %v1295, 4
  %v1305 = vrot.slane %v1297, 4
  %v1306 = vrot.slane %v1299, 4
  %v1307 = vrot.slane %v1301, 4
  %v1308 = vrot.slane %v1303, 4
  %v1309 = vsel %vm48, %v1304, %v1305
  %vm1310 = vcmask 302080
  %v1311 = vsel %vm1310, %v1295, %v1309
  %v1312 = vsel %vm48, %v1305, %v1306
  %v1313 = vsel %vm1310, %v1297, %v1312
  %v1314 = vsel %vm48, %v1306, %v1307
  %v1315 = vsel %vm1310, %v1299, %v1314
  %v1316 = vsel %vm48, %v1307, %v1308
  %v1317 = vsel %vm1310, %v1301, %v1316
  %1322 = vst [vmem:[#allocation2 + $0x3e0] sm:$0xff] %v1311
  %1323 = vst [vmem:[#allocation2 + $0x3e8] sm:$0xff] %v1313
  %1324 = vst [vmem:[#allocation2 + $0x3f0] sm:$0xff] %v1315
  %1325 = vst [vmem:[#allocation2 + $0x3f8] sm:$0xff] %v1317
  %v1326 = vld [vmem:[%s0] sm:$0xff]
  %v1327 = vld [vmem:[%s0 + $0x8] sm:$0xff]
  %v1328 = vld [vmem:[%s0 + $0x10] sm:$0xff]
  %v1329 = vld [vmem:[%s0 + $0x18] sm:$0xff]
  %v1330 = vld [vmem:[%s0 + $0x20] sm:$0xf]
  %1336 = vrot.lane.b32.xlu0 %v1326, 36
  %v1337 = vpop.permute.xlu0 %1336
  %1338 = vrot.lane.b32.xlu0 %v1327, 36
  %v1339 = vpop.permute.xlu0 %1338
  %1340 = vrot.lane.b32.xlu0 %v1328, 36
  %v1341 = vpop.permute.xlu0 %1340
  %1342 = vrot.lane.b32.xlu0 %v1329, 36
  %v1343 = vpop.permute.xlu0 %1342
  %1344 = vrot.lane.b32.xlu0 %v1330, 36
  %v1345 = vpop.permute.xlu0 %1344
  %v1346 = vrot.slane %v1337, 4
  %v1347 = vrot.slane %v1339, 4
  %v1348 = vrot.slane %v1341, 4
  %v1349 = vrot.slane %v1343, 4
  %v1350 = vrot.slane %v1345, 4
  %v1351 = vsel %vm48, %v1346, %v1347
  %vm1352 = vcmask 293888
  %v1353 = vsel %vm1352, %v1337, %v1351
  %v1354 = vsel %vm48, %v1347, %v1348
  %v1355 = vsel %vm1352, %v1339, %v1354
  %v1356 = vsel %vm48, %v1348, %v1349
  %v1357 = vsel %vm1352, %v1341, %v1356
  %v1358 = vsel %vm48, %v1349, %v1350
  %v1359 = vsel %vm1352, %v1343, %v1358
  %1364 = vst [vmem:[#allocation2 + $0x400] sm:$0xff] %v1353
  %1365 = vst [vmem:[#allocation2 + $0x408] sm:$0xff] %v1355
  %1366 = vst [vmem:[#allocation2 + $0x410] sm:$0xff] %v1357
  %1367 = vst [vmem:[#allocation2 + $0x418] sm:$0xff] %v1359
  %v1368 = vld [vmem:[%s0] sm:$0xff]
  %v1369 = vld [vmem:[%s0 + $0x8] sm:$0xff]
  %v1370 = vld [vmem:[%s0 + $0x10] sm:$0xff]
  %v1371 = vld [vmem:[%s0 + $0x18] sm:$0xff]
  %v1372 = vld [vmem:[%s0 + $0x20] sm:$0xf]
  %1378 = vrot.lane.b32.xlu0 %v1368, 35
  %v1379 = vpop.permute.xlu0 %1378
  %1380 = vrot.lane.b32.xlu0 %v1369, 35
  %v1381 = vpop.permute.xlu0 %1380
  %1382 = vrot.lane.b32.xlu0 %v1370, 35
  %v1383 = vpop.permute.xlu0 %1382
  %1384 = vrot.lane.b32.xlu0 %v1371, 35
  %v1385 = vpop.permute.xlu0 %1384
  %1386 = vrot.lane.b32.xlu0 %v1372, 35
  %v1387 = vpop.permute.xlu0 %1386
  %v1388 = vrot.slane %v1379, 4
  %v1389 = vrot.slane %v1381, 4
  %v1390 = vrot.slane %v1383, 4
  %v1391 = vrot.slane %v1385, 4
  %v1392 = vrot.slane %v1387, 4
  %v1393 = vsel %vm48, %v1388, %v1389
  %vm1394 = vcmask 285696
  %v1395 = vsel %vm1394, %v1379, %v1393
  %v1396 = vsel %vm48, %v1389, %v1390
  %v1397 = vsel %vm1394, %v1381, %v1396
  %v1398 = vsel %vm48, %v1390, %v1391
  %v1399 = vsel %vm1394, %v1383, %v1398
  %v1400 = vsel %vm48, %v1391, %v1392
  %v1401 = vsel %vm1394, %v1385, %v1400
  %1406 = vst [vmem:[#allocation2 + $0x420] sm:$0xff] %v1395
  %1407 = vst [vmem:[#allocation2 + $0x428] sm:$0xff] %v1397
  %1408 = vst [vmem:[#allocation2 + $0x430] sm:$0xff] %v1399
  %1409 = vst [vmem:[#allocation2 + $0x438] sm:$0xff] %v1401
  %v1410 = vld [vmem:[%s0] sm:$0xff]
  %v1411 = vld [vmem:[%s0 + $0x8] sm:$0xff]
  %v1412 = vld [vmem:[%s0 + $0x10] sm:$0xff]
  %v1413 = vld [vmem:[%s0 + $0x18] sm:$0xff]
  %v1414 = vld [vmem:[%s0 + $0x20] sm:$0xf]
  %1420 = vrot.lane.b32.xlu0 %v1410, 34
  %v1421 = vpop.permute.xlu0 %1420
  %1422 = vrot.lane.b32.xlu0 %v1411, 34
  %v1423 = vpop.permute.xlu0 %1422
  %1424 = vrot.lane.b32.xlu0 %v1412, 34
  %v1425 = vpop.permute.xlu0 %1424
  %1426 = vrot.lane.b32.xlu0 %v1413, 34
  %v1427 = vpop.permute.xlu0 %1426
  %1428 = vrot.lane.b32.xlu0 %v1414, 34
  %v1429 = vpop.permute.xlu0 %1428
  %v1430 = vrot.slane %v1421, 4
  %v1431 = vrot.slane %v1423, 4
  %v1432 = vrot.slane %v1425, 4
  %v1433 = vrot.slane %v1427, 4
  %v1434 = vrot.slane %v1429, 4
  %v1435 = vsel %vm48, %v1430, %v1431
  %vm1436 = vcmask 277504
  %v1437 = vsel %vm1436, %v1421, %v1435
  %v1438 = vsel %vm48, %v1431, %v1432
  %v1439 = vsel %vm1436, %v1423, %v1438
  %v1440 = vsel %vm48, %v1432, %v1433
  %v1441 = vsel %vm1436, %v1425, %v1440
  %v1442 = vsel %vm48, %v1433, %v1434
  %v1443 = vsel %vm1436, %v1427, %v1442
  %1448 = vst [vmem:[#allocation2 + $0x440] sm:$0xff] %v1437
  %1449 = vst [vmem:[#allocation2 + $0x448] sm:$0xff] %v1439
  %1450 = vst [vmem:[#allocation2 + $0x450] sm:$0xff] %v1441
  %1451 = vst [vmem:[#allocation2 + $0x458] sm:$0xff] %v1443
  %v1452 = vld [vmem:[%s0] sm:$0xff]
  %v1453 = vld [vmem:[%s0 + $0x8] sm:$0xff]
  %v1454 = vld [vmem:[%s0 + $0x10] sm:$0xff]
  %v1455 = vld [vmem:[%s0 + $0x18] sm:$0xff]
  %v1456 = vld [vmem:[%s0 + $0x20] sm:$0xf]
  %1462 = vrot.lane.b32.xlu0 %v1452, 18
  %v1463 = vpop.permute.xlu0 %1462
  %1464 = vrot.lane.b32.xlu0 %v1453, 18
  %v1465 = vpop.permute.xlu0 %1464
  %1466 = vrot.lane.b32.xlu0 %v1454, 18
  %v1467 = vpop.permute.xlu0 %1466
  %1468 = vrot.lane.b32.xlu0 %v1455, 18
  %v1469 = vpop.permute.xlu0 %1468
  %1470 = vrot.lane.b32.xlu0 %v1456, 18
  %v1471 = vpop.permute.xlu0 %1470
  %v1472 = vrot.slane %v1463, 4
  %v1473 = vrot.slane %v1465, 4
  %v1474 = vrot.slane %v1467, 4
  %v1475 = vrot.slane %v1469, 4
  %v1476 = vrot.slane %v1471, 4
  %v1477 = vsel %vm48, %v1472, %v1473
  %vm1478 = vcmask 146432
  %v1479 = vsel %vm1478, %v1463, %v1477
  %v1480 = vsel %vm48, %v1473, %v1474
  %v1481 = vsel %vm1478, %v1465, %v1480
  %v1482 = vsel %vm48, %v1474, %v1475
  %v1483 = vsel %vm1478, %v1467, %v1482
  %v1484 = vsel %vm48, %v1475, %v1476
  %v1485 = vsel %vm1478, %v1469, %v1484
  %1490 = vst [vmem:[#allocation2 + $0x460] sm:$0xff] %v1479
  %1491 = vst [vmem:[#allocation2 + $0x468] sm:$0xff] %v1481
  %1492 = vst [vmem:[#allocation2 + $0x470] sm:$0xff] %v1483
  %1493 = vst [vmem:[#allocation2 + $0x478] sm:$0xff] %v1485
  %v1494 = vld [vmem:[%s0] sm:$0xff]
  %v1495 = vld [vmem:[%s0 + $0x8] sm:$0xff]
  %v1496 = vld [vmem:[%s0 + $0x10] sm:$0xff]
  %v1497 = vld [vmem:[%s0 + $0x18] sm:$0xff]
  %v1498 = vld [vmem:[%s0 + $0x20] sm:$0xf]
  %1504 = vrot.lane.b32.xlu0 %v1494, 17
  %v1505 = vpop.permute.xlu0 %1504
  %1506 = vrot.lane.b32.xlu0 %v1495, 17
  %v1507 = vpop.permute.xlu0 %1506
  %1508 = vrot.lane.b32.xlu0 %v1496, 17
  %v1509 = vpop.permute.xlu0 %1508
  %1510 = vrot.lane.b32.xlu0 %v1497, 17
  %v1511 = vpop.permute.xlu0 %1510
  %1512 = vrot.lane.b32.xlu0 %v1498, 17
  %v1513 = vpop.permute.xlu0 %1512
  %v1514 = vrot.slane %v1505, 4
  %v1515 = vrot.slane %v1507, 4
  %v1516 = vrot.slane %v1509, 4
  %v1517 = vrot.slane %v1511, 4
  %v1518 = vrot.slane %v1513, 4
  %v1519 = vsel %vm48, %v1514, %v1515
  %vm1520 = vcmask 138240
  %v1521 = vsel %vm1520, %v1505, %v1519
  %v1522 = vsel %vm48, %v1515, %v1516
  %v1523 = vsel %vm1520, %v1507, %v1522
  %v1524 = vsel %vm48, %v1516, %v1517
  %v1525 = vsel %vm1520, %v1509, %v1524
  %v1526 = vsel %vm48, %v1517, %v1518
  %v1527 = vsel %vm1520, %v1511, %v1526
  %1532 = vst [vmem:[#allocation2 + $0x480] sm:$0xff] %v1521
  %1533 = vst [vmem:[#allocation2 + $0x488] sm:$0xff] %v1523
  %1534 = vst [vmem:[#allocation2 + $0x490] sm:$0xff] %v1525
  %1535 = vst [vmem:[#allocation2 + $0x498] sm:$0xff] %v1527
  %v1536 = vld [vmem:[%s0] sm:$0xff]
  %v1537 = vld [vmem:[%s0 + $0x8] sm:$0xff]
  %v1538 = vld [vmem:[%s0 + $0x10] sm:$0xff]
  %v1539 = vld [vmem:[%s0 + $0x18] sm:$0xff]
  %v1540 = vld [vmem:[%s0 + $0x20] sm:$0xf]
  %1546 = vrot.lane.b32.xlu0 %v1536, 16
  %v1547 = vpop.permute.xlu0 %1546
  %1548 = vrot.lane.b32.xlu0 %v1537, 16
  %v1549 = vpop.permute.xlu0 %1548
  %1550 = vrot.lane.b32.xlu0 %v1538, 16
  %v1551 = vpop.permute.xlu0 %1550
  %1552 = vrot.lane.b32.xlu0 %v1539, 16
  %v1553 = vpop.permute.xlu0 %1552
  %1554 = vrot.lane.b32.xlu0 %v1540, 16
  %v1555 = vpop.permute.xlu0 %1554
  %v1556 = vrot.slane %v1547, 4
  %v1557 = vrot.slane %v1549, 4
  %v1558 = vrot.slane %v1551, 4
  %v1559 = vrot.slane %v1553, 4
  %v1560 = vrot.slane %v1555, 4
  %v1561 = vsel %vm48, %v1556, %v1557
  %vm1562 = vcmask 130048
  %v1563 = vsel %vm1562, %v1547, %v1561
  %v1564 = vsel %vm48, %v1557, %v1558
  %v1565 = vsel %vm1562, %v1549, %v1564
  %v1566 = vsel %vm48, %v1558, %v1559
  %v1567 = vsel %vm1562, %v1551, %v1566
  %v1568 = vsel %vm48, %v1559, %v1560
  %v1569 = vsel %vm1562, %v1553, %v1568
  %1574 = vst [vmem:[#allocation2 + $0x4a0] sm:$0xff] %v1563
  %1575 = vst [vmem:[#allocation2 + $0x4a8] sm:$0xff] %v1565
  %1576 = vst [vmem:[#allocation2 + $0x4b0] sm:$0xff] %v1567
  %1577 = vst [vmem:[#allocation2 + $0x4b8] sm:$0xff] %v1569
  %v1578 = vld [vmem:[%s0] sm:$0xff]
  %v1579 = vld [vmem:[%s0 + $0x8] sm:$0xff]
  %v1580 = vld [vmem:[%s0 + $0x10] sm:$0xff]
  %v1581 = vld [vmem:[%s0 + $0x18] sm:$0xff]
  %v1582 = vld [vmem:[%s0 + $0x20] sm:$0xf]
  %1588 = vrot.lane.b32.xlu0 %v1578, 15
  %v1589 = vpop.permute.xlu0 %1588
  %1590 = vrot.lane.b32.xlu0 %v1579, 15
  %v1591 = vpop.permute.xlu0 %1590
  %1592 = vrot.lane.b32.xlu0 %v1580, 15
  %v1593 = vpop.permute.xlu0 %1592
  %1594 = vrot.lane.b32.xlu0 %v1581, 15
  %v1595 = vpop.permute.xlu0 %1594
  %1596 = vrot.lane.b32.xlu0 %v1582, 15
  %v1597 = vpop.permute.xlu0 %1596
  %v1598 = vrot.slane %v1589, 4
  %v1599 = vrot.slane %v1591, 4
  %v1600 = vrot.slane %v1593, 4
  %v1601 = vrot.slane %v1595, 4
  %v1602 = vrot.slane %v1597, 4
  %v1603 = vsel %vm48, %v1598, %v1599
  %vm1604 = vcmask 121856
  %v1605 = vsel %vm1604, %v1589, %v1603
  %v1606 = vsel %vm48, %v1599, %v1600
  %v1607 = vsel %vm1604, %v1591, %v1606
  %v1608 = vsel %vm48, %v1600, %v1601
  %v1609 = vsel %vm1604, %v1593, %v1608
  %v1610 = vsel %vm48, %v1601, %v1602
  %v1611 = vsel %vm1604, %v1595, %v1610
  %1616 = vst [vmem:[#allocation2 + $0x4c0] sm:$0xff] %v1605
  %1617 = vst [vmem:[#allocation2 + $0x4c8] sm:$0xff] %v1607
  %1618 = vst [vmem:[#allocation2 + $0x4d0] sm:$0xff] %v1609
  %1619 = vst [vmem:[#allocation2 + $0x4d8] sm:$0xff] %v1611
  %v1620 = vld [vmem:[%s0] sm:$0xff]
  %v1621 = vld [vmem:[%s0 + $0x8] sm:$0xff]
  %v1622 = vld [vmem:[%s0 + $0x10] sm:$0xff]
  %v1623 = vld [vmem:[%s0 + $0x18] sm:$0xff]
  %v1624 = vld [vmem:[%s0 + $0x20] sm:$0xf]
  %1630 = vrot.lane.b32.xlu0 %v1620, 14
  %v1631 = vpop.permute.xlu0 %1630
  %1632 = vrot.lane.b32.xlu0 %v1621, 14
  %v1633 = vpop.permute.xlu0 %1632
  %1634 = vrot.lane.b32.xlu0 %v1622, 14
  %v1635 = vpop.permute.xlu0 %1634
  %1636 = vrot.lane.b32.xlu0 %v1623, 14
  %v1637 = vpop.permute.xlu0 %1636
  %1638 = vrot.lane.b32.xlu0 %v1624, 14
  %v1639 = vpop.permute.xlu0 %1638
  %v1640 = vrot.slane %v1631, 4
  %v1641 = vrot.slane %v1633, 4
  %v1642 = vrot.slane %v1635, 4
  %v1643 = vrot.slane %v1637, 4
  %v1644 = vrot.slane %v1639, 4
  %v1645 = vsel %vm48, %v1640, %v1641
  %vm1646 = vcmask 113664
  %v1647 = vsel %vm1646, %v1631, %v1645
  %v1648 = vsel %vm48, %v1641, %v1642
  %v1649 = vsel %vm1646, %v1633, %v1648
  %v1650 = vsel %vm48, %v1642, %v1643
  %v1651 = vsel %vm1646, %v1635, %v1650
  %v1652 = vsel %vm48, %v1643, %v1644
  %v1653 = vsel %vm1646, %v1637, %v1652
  %1658 = vst [vmem:[#allocation2 + $0x4e0] sm:$0xff] %v1647
  %1659 = vst [vmem:[#allocation2 + $0x4e8] sm:$0xff] %v1649
  %1660 = vst [vmem:[#allocation2 + $0x4f0] sm:$0xff] %v1651
  %1661 = vst [vmem:[#allocation2 + $0x4f8] sm:$0xff] %v1653
  %v1662 = vld [vmem:[%s0] sm:$0xff]
  %v1663 = vld [vmem:[%s0 + $0x8] sm:$0xff]
  %v1664 = vld [vmem:[%s0 + $0x10] sm:$0xff]
  %v1665 = vld [vmem:[%s0 + $0x18] sm:$0xff]
  %v1666 = vld [vmem:[%s0 + $0x20] sm:$0xf]
  %1672 = vrot.lane.b32.xlu0 %v1662, 13
  %v1673 = vpop.permute.xlu0 %1672
  %1674 = vrot.lane.b32.xlu0 %v1663, 13
  %v1675 = vpop.permute.xlu0 %1674
  %1676 = vrot.lane.b32.xlu0 %v1664, 13
  %v1677 = vpop.permute.xlu0 %1676
  %1678 = vrot.lane.b32.xlu0 %v1665, 13
  %v1679 = vpop.permute.xlu0 %1678
  %1680 = vrot.lane.b32.xlu0 %v1666, 13
  %v1681 = vpop.permute.xlu0 %1680
  %v1682 = vrot.slane %v1673, 4
  %v1683 = vrot.slane %v1675, 4
  %v1684 = vrot.slane %v1677, 4
  %v1685 = vrot.slane %v1679, 4
  %v1686 = vrot.slane %v1681, 4
  %v1687 = vsel %vm48, %v1682, %v1683
  %vm1688 = vcmask 105472
  %v1689 = vsel %vm1688, %v1673, %v1687
  %v1690 = vsel %vm48, %v1683, %v1684
  %v1691 = vsel %vm1688, %v1675, %v1690
  %v1692 = vsel %vm48, %v1684, %v1685
  %v1693 = vsel %vm1688, %v1677, %v1692
  %v1694 = vsel %vm48, %v1685, %v1686
  %v1695 = vsel %vm1688, %v1679, %v1694
  %1700 = vst [vmem:[#allocation2 + $0x500] sm:$0xff] %v1689
  %1701 = vst [vmem:[#allocation2 + $0x508] sm:$0xff] %v1691
  %1702 = vst [vmem:[#allocation2 + $0x510] sm:$0xff] %v1693
  %1703 = vst [vmem:[#allocation2 + $0x518] sm:$0xff] %v1695
  %v1704 = vld [vmem:[%s0] sm:$0xff]
  %v1705 = vld [vmem:[%s0 + $0x8] sm:$0xff]
  %v1706 = vld [vmem:[%s0 + $0x10] sm:$0xff]
  %v1707 = vld [vmem:[%s0 + $0x18] sm:$0xff]
  %v1708 = vld [vmem:[%s0 + $0x20] sm:$0xf]
  %1714 = vrot.lane.b32.xlu0 %v1704, 12
  %v1715 = vpop.permute.xlu0 %1714
  %1716 = vrot.lane.b32.xlu0 %v1705, 12
  %v1717 = vpop.permute.xlu0 %1716
  %1718 = vrot.lane.b32.xlu0 %v1706, 12
  %v1719 = vpop.permute.xlu0 %1718
  %1720 = vrot.lane.b32.xlu0 %v1707, 12
  %v1721 = vpop.permute.xlu0 %1720
  %1722 = vrot.lane.b32.xlu0 %v1708, 12
  %v1723 = vpop.permute.xlu0 %1722
  %v1724 = vrot.slane %v1715, 4
  %v1725 = vrot.slane %v1717, 4
  %v1726 = vrot.slane %v1719, 4
  %v1727 = vrot.slane %v1721, 4
  %v1728 = vrot.slane %v1723, 4
  %v1729 = vsel %vm48, %v1724, %v1725
  %vm1730 = vcmask 97280
  %v1731 = vsel %vm1730, %v1715, %v1729
  %v1732 = vsel %vm48, %v1725, %v1726
  %v1733 = vsel %vm1730, %v1717, %v1732
  %v1734 = vsel %vm48, %v1726, %v1727
  %v1735 = vsel %vm1730, %v1719, %v1734
  %v1736 = vsel %vm48, %v1727, %v1728
  %v1737 = vsel %vm1730, %v1721, %v1736
  %1742 = vst [vmem:[#allocation2 + $0x520] sm:$0xff] %v1731
  %1743 = vst [vmem:[#allocation2 + $0x528] sm:$0xff] %v1733
  %1744 = vst [vmem:[#allocation2 + $0x530] sm:$0xff] %v1735
  %1745 = vst [vmem:[#allocation2 + $0x538] sm:$0xff] %v1737
  %v1746 = vld [vmem:[%s0 + $0x4] sm:$0xff]
  %v1747 = vld [vmem:[%s0 + $0xc] sm:$0xff]
  %v1748 = vld [vmem:[%s0 + $0x14] sm:$0xff]
  %v1749 = vld [vmem:[%s0 + $0x1c] sm:$0xff]
  %v1750 = vld [vmem:[%s0 + $0x24] sm:$0xf]
  %1756 = vrot.lane.b32.xlu0 %v1746, 124
  %v1757 = vpop.permute.xlu0 %1756
  %1758 = vrot.lane.b32.xlu0 %v1747, 124
  %v1759 = vpop.permute.xlu0 %1758
  %1760 = vrot.lane.b32.xlu0 %v1748, 124
  %v1761 = vpop.permute.xlu0 %1760
  %1762 = vrot.lane.b32.xlu0 %v1749, 124
  %v1763 = vpop.permute.xlu0 %1762
  %1764 = vrot.lane.b32.xlu0 %v1750, 124
  %v1765 = vpop.permute.xlu0 %1764
  %v1766 = vrot.slane %v1757, 4
  %v1767 = vrot.slane %v1759, 4
  %v1768 = vrot.slane %v1761, 4
  %v1769 = vrot.slane %v1763, 4
  %v1770 = vrot.slane %v1765, 4
  %v1771 = vsel %vm48, %v1766, %v1767
  %v1772 = vsel %vm176, %v1757, %v1771
  %v1773 = vsel %vm48, %v1767, %v1768
  %v1774 = vsel %vm176, %v1759, %v1773
  %v1775 = vsel %vm48, %v1768, %v1769
  %v1776 = vsel %vm176, %v1761, %v1775
  %v1777 = vsel %vm48, %v1769, %v1770
  %v1778 = vsel %vm176, %v1763, %v1777
  %1783 = vst [vmem:[#allocation2 + $0x540] sm:$0xff] %v1772
  %1784 = vst [vmem:[#allocation2 + $0x548] sm:$0xff] %v1774
  %1785 = vst [vmem:[#allocation2 + $0x550] sm:$0xff] %v1776
  %1786 = vst [vmem:[#allocation2 + $0x558] sm:$0xff] %v1778
  %v1787 = vld [vmem:[%s0 + $0x4] sm:$0xff]
  %v1788 = vld [vmem:[%s0 + $0xc] sm:$0xff]
  %v1789 = vld [vmem:[%s0 + $0x14] sm:$0xff]
  %v1790 = vld [vmem:[%s0 + $0x1c] sm:$0xff]
  %v1791 = vld [vmem:[%s0 + $0x24] sm:$0xf]
  %1797 = vrot.lane.b32.xlu0 %v1787, 123
  %v1798 = vpop.permute.xlu0 %1797
  %1799 = vrot.lane.b32.xlu0 %v1788, 123
  %v1800 = vpop.permute.xlu0 %1799
  %1801 = vrot.lane.b32.xlu0 %v1789, 123
  %v1802 = vpop.permute.xlu0 %1801
  %1803 = vrot.lane.b32.xlu0 %v1790, 123
  %v1804 = vpop.permute.xlu0 %1803
  %1805 = vrot.lane.b32.xlu0 %v1791, 123
  %v1806 = vpop.permute.xlu0 %1805
  %v1807 = vrot.slane %v1798, 4
  %v1808 = vrot.slane %v1800, 4
  %v1809 = vrot.slane %v1802, 4
  %v1810 = vrot.slane %v1804, 4
  %v1811 = vrot.slane %v1806, 4
  %v1812 = vsel %vm48, %v1807, %v1808
  %v1813 = vsel %vm218, %v1798, %v1812
  %v1814 = vsel %vm48, %v1808, %v1809
  %v1815 = vsel %vm218, %v1800, %v1814
  %v1816 = vsel %vm48, %v1809, %v1810
  %v1817 = vsel %vm218, %v1802, %v1816
  %v1818 = vsel %vm48, %v1810, %v1811
  %v1819 = vsel %vm218, %v1804, %v1818
  %1824 = vst [vmem:[#allocation2 + $0x560] sm:$0xff] %v1813
  %1825 = vst [vmem:[#allocation2 + $0x568] sm:$0xff] %v1815
  %1826 = vst [vmem:[#allocation2 + $0x570] sm:$0xff] %v1817
  %1827 = vst [vmem:[#allocation2 + $0x578] sm:$0xff] %v1819
  %v1828 = vld [vmem:[%s0 + $0x4] sm:$0xff]
  %v1829 = vld [vmem:[%s0 + $0xc] sm:$0xff]
  %v1830 = vld [vmem:[%s0 + $0x14] sm:$0xff]
  %v1831 = vld [vmem:[%s0 + $0x1c] sm:$0xff]
  %v1832 = vld [vmem:[%s0 + $0x24] sm:$0xf]
  %1838 = vrot.lane.b32.xlu0 %v1828, 122
  %v1839 = vpop.permute.xlu0 %1838
  %1840 = vrot.lane.b32.xlu0 %v1829, 122
  %v1841 = vpop.permute.xlu0 %1840
  %1842 = vrot.lane.b32.xlu0 %v1830, 122
  %v1843 = vpop.permute.xlu0 %1842
  %1844 = vrot.lane.b32.xlu0 %v1831, 122
  %v1845 = vpop.permute.xlu0 %1844
  %1846 = vrot.lane.b32.xlu0 %v1832, 122
  %v1847 = vpop.permute.xlu0 %1846
  %v1848 = vrot.slane %v1839, 4
  %v1849 = vrot.slane %v1841, 4
  %v1850 = vrot.slane %v1843, 4
  %v1851 = vrot.slane %v1845, 4
  %v1852 = vrot.slane %v1847, 4
  %v1853 = vsel %vm48, %v1848, %v1849
  %v1854 = vsel %vm260, %v1839, %v1853
  %v1855 = vsel %vm48, %v1849, %v1850
  %v1856 = vsel %vm260, %v1841, %v1855
  %v1857 = vsel %vm48, %v1850, %v1851
  %v1858 = vsel %vm260, %v1843, %v1857
  %v1859 = vsel %vm48, %v1851, %v1852
  %v1860 = vsel %vm260, %v1845, %v1859
  %1865 = vst [vmem:[#allocation2 + $0x580] sm:$0xff] %v1854
  %1866 = vst [vmem:[#allocation2 + $0x588] sm:$0xff] %v1856
  %1867 = vst [vmem:[#allocation2 + $0x590] sm:$0xff] %v1858
  %1868 = vst [vmem:[#allocation2 + $0x598] sm:$0xff] %v1860
  %v1869 = vld [vmem:[%s0 + $0x4] sm:$0xff]
  %v1870 = vld [vmem:[%s0 + $0xc] sm:$0xff]
  %v1871 = vld [vmem:[%s0 + $0x14] sm:$0xff]
  %v1872 = vld [vmem:[%s0 + $0x1c] sm:$0xff]
  %v1873 = vld [vmem:[%s0 + $0x24] sm:$0xf]
  %1879 = vrot.lane.b32.xlu0 %v1869, 121
  %v1880 = vpop.permute.xlu0 %1879
  %1881 = vrot.lane.b32.xlu0 %v1870, 121
  %v1882 = vpop.permute.xlu0 %1881
  %1883 = vrot.lane.b32.xlu0 %v1871, 121
  %v1884 = vpop.permute.xlu0 %1883
  %1885 = vrot.lane.b32.xlu0 %v1872, 121
  %v1886 = vpop.permute.xlu0 %1885
  %1887 = vrot.lane.b32.xlu0 %v1873, 121
  %v1888 = vpop.permute.xlu0 %1887
  %v1889 = vrot.slane %v1880, 4
  %v1890 = vrot.slane %v1882, 4
  %v1891 = vrot.slane %v1884, 4
  %v1892 = vrot.slane %v1886, 4
  %v1893 = vrot.slane %v1888, 4
  %v1894 = vsel %vm48, %v1889, %v1890
  %vm1895 = vcmask 990208
  %v1896 = vsel %vm1895, %v1880, %v1894
  %v1897 = vsel %vm48, %v1890, %v1891
  %v1898 = vsel %vm1895, %v1882, %v1897
  %v1899 = vsel %vm48, %v1891, %v1892
  %v1900 = vsel %vm1895, %v1884, %v1899
  %v1901 = vsel %vm48, %v1892, %v1893
  %v1902 = vsel %vm1895, %v1886, %v1901
  %1907 = vst [vmem:[#allocation2 + $0x5a0] sm:$0xff] %v1896
  %1908 = vst [vmem:[#allocation2 + $0x5a8] sm:$0xff] %v1898
  %1909 = vst [vmem:[#allocation2 + $0x5b0] sm:$0xff] %v1900
  %1910 = vst [vmem:[#allocation2 + $0x5b8] sm:$0xff] %v1902
  %v1911 = vld [vmem:[%s0 + $0x4] sm:$0xff]
  %v1912 = vld [vmem:[%s0 + $0xc] sm:$0xff]
  %v1913 = vld [vmem:[%s0 + $0x14] sm:$0xff]
  %v1914 = vld [vmem:[%s0 + $0x1c] sm:$0xff]
  %v1915 = vld [vmem:[%s0 + $0x24] sm:$0xf]
  %1921 = vrot.lane.b32.xlu0 %v1911, 120
  %v1922 = vpop.permute.xlu0 %1921
  %1923 = vrot.lane.b32.xlu0 %v1912, 120
  %v1924 = vpop.permute.xlu0 %1923
  %1925 = vrot.lane.b32.xlu0 %v1913, 120
  %v1926 = vpop.permute.xlu0 %1925
  %1927 = vrot.lane.b32.xlu0 %v1914, 120
  %v1928 = vpop.permute.xlu0 %1927
  %1929 = vrot.lane.b32.xlu0 %v1915, 120
  %v1930 = vpop.permute.xlu0 %1929
  %v1931 = vrot.slane %v1922, 4
  %v1932 = vrot.slane %v1924, 4
  %v1933 = vrot.slane %v1926, 4
  %v1934 = vrot.slane %v1928, 4
  %v1935 = vrot.slane %v1930, 4
  %v1936 = vsel %vm48, %v1931, %v1932
  %vm1937 = vcmask 982016
  %v1938 = vsel %vm1937, %v1922, %v1936
  %v1939 = vsel %vm48, %v1932, %v1933
  %v1940 = vsel %vm1937, %v1924, %v1939
  %v1941 = vsel %vm48, %v1933, %v1934
  %v1942 = vsel %vm1937, %v1926, %v1941
  %v1943 = vsel %vm48, %v1934, %v1935
  %v1944 = vsel %vm1937, %v1928, %v1943
  %1949 = vst [vmem:[#allocation2 + $0x5c0] sm:$0xff] %v1938
  %1950 = vst [vmem:[#allocation2 + $0x5c8] sm:$0xff] %v1940
  %1951 = vst [vmem:[#allocation2 + $0x5d0] sm:$0xff] %v1942
  %1952 = vst [vmem:[#allocation2 + $0x5d8] sm:$0xff] %v1944
  %v1953 = vld [vmem:[%s0 + $0x4] sm:$0xff]
  %v1954 = vld [vmem:[%s0 + $0xc] sm:$0xff]
  %v1955 = vld [vmem:[%s0 + $0x14] sm:$0xff]
  %v1956 = vld [vmem:[%s0 + $0x1c] sm:$0xff]
  %v1957 = vld [vmem:[%s0 + $0x24] sm:$0xf]
  %1963 = vrot.lane.b32.xlu0 %v1953, 119
  %v1964 = vpop.permute.xlu0 %1963
  %1965 = vrot.lane.b32.xlu0 %v1954, 119
  %v1966 = vpop.permute.xlu0 %1965
  %1967 = vrot.lane.b32.xlu0 %v1955, 119
  %v1968 = vpop.permute.xlu0 %1967
  %1969 = vrot.lane.b32.xlu0 %v1956, 119
  %v1970 = vpop.permute.xlu0 %1969
  %1971 = vrot.lane.b32.xlu0 %v1957, 119
  %v1972 = vpop.permute.xlu0 %1971
  %v1973 = vrot.slane %v1964, 4
  %v1974 = vrot.slane %v1966, 4
  %v1975 = vrot.slane %v1968, 4
  %v1976 = vrot.slane %v1970, 4
  %v1977 = vrot.slane %v1972, 4
  %v1978 = vsel %vm48, %v1973, %v1974
  %vm1979 = vcmask 973824
  %v1980 = vsel %vm1979, %v1964, %v1978
  %v1981 = vsel %vm48, %v1974, %v1975
  %v1982 = vsel %vm1979, %v1966, %v1981
  %v1983 = vsel %vm48, %v1975, %v1976
  %v1984 = vsel %vm1979, %v1968, %v1983
  %v1985 = vsel %vm48, %v1976, %v1977
  %v1986 = vsel %vm1979, %v1970, %v1985
  %1991 = vst [vmem:[#allocation2 + $0x5e0] sm:$0xff] %v1980
  %1992 = vst [vmem:[#allocation2 + $0x5e8] sm:$0xff] %v1982
  %1993 = vst [vmem:[#allocation2 + $0x5f0] sm:$0xff] %v1984
  %1994 = vst [vmem:[#allocation2 + $0x5f8] sm:$0xff] %v1986
  %v1995 = vld [vmem:[%s0 + $0x4] sm:$0xff]
  %v1996 = vld [vmem:[%s0 + $0xc] sm:$0xff]
  %v1997 = vld [vmem:[%s0 + $0x14] sm:$0xff]
  %v1998 = vld [vmem:[%s0 + $0x1c] sm:$0xff]
  %v1999 = vld [vmem:[%s0 + $0x24] sm:$0xf]
  %2005 = vrot.lane.b32.xlu0 %v1995, 118
  %v2006 = vpop.permute.xlu0 %2005
  %2007 = vrot.lane.b32.xlu0 %v1996, 118
  %v2008 = vpop.permute.xlu0 %2007
  %2009 = vrot.lane.b32.xlu0 %v1997, 118
  %v2010 = vpop.permute.xlu0 %2009
  %2011 = vrot.lane.b32.xlu0 %v1998, 118
  %v2012 = vpop.permute.xlu0 %2011
  %2013 = vrot.lane.b32.xlu0 %v1999, 118
  %v2014 = vpop.permute.xlu0 %2013
  %v2015 = vrot.slane %v2006, 4
  %v2016 = vrot.slane %v2008, 4
  %v2017 = vrot.slane %v2010, 4
  %v2018 = vrot.slane %v2012, 4
  %v2019 = vrot.slane %v2014, 4
  %v2020 = vsel %vm48, %v2015, %v2016
  %vm2021 = vcmask 965632
  %v2022 = vsel %vm2021, %v2006, %v2020
  %v2023 = vsel %vm48, %v2016, %v2017
  %v2024 = vsel %vm2021, %v2008, %v2023
  %v2025 = vsel %vm48, %v2017, %v2018
  %v2026 = vsel %vm2021, %v2010, %v2025
  %v2027 = vsel %vm48, %v2018, %v2019
  %v2028 = vsel %vm2021, %v2012, %v2027
  %2033 = vst [vmem:[#allocation2 + $0x600] sm:$0xff] %v2022
  %2034 = vst [vmem:[#allocation2 + $0x608] sm:$0xff] %v2024
  %2035 = vst [vmem:[#allocation2 + $0x610] sm:$0xff] %v2026
  %2036 = vst [vmem:[#allocation2 + $0x618] sm:$0xff] %v2028
  %v2037 = vld [vmem:[%s1] sm:$0xff]
  %v2038 = vld [vmem:[%s1 + $0x8] sm:$0xff]
  %v2039 = vld [vmem:[#allocation2] sm:$0xff]
  %v2040 = vld [vmem:[#allocation2 + $0x8] sm:$0xff]
  %v2041 = vld [vmem:[#allocation2 + $0x10] sm:$0xff]
  %v2042 = vld [vmem:[#allocation2 + $0x18] sm:$0xff]
  %v2043 = vld [vmem:[#allocation2 + $0x20] sm:$0xff]
  %v2044 = vld [vmem:[#allocation2 + $0x28] sm:$0xff]
  %v2045 = vld [vmem:[#allocation2 + $0x30] sm:$0xff]
  %v2046 = vld [vmem:[#allocation2 + $0x38] sm:$0xff]
  %v2047 = vld [vmem:[#allocation2 + $0x40] sm:$0xff]
  %v2048 = vld [vmem:[#allocation2 + $0x48] sm:$0xff]
  %v2049 = vld [vmem:[#allocation2 + $0x50] sm:$0xff]
  %v2050 = vld [vmem:[#allocation2 + $0x58] sm:$0xff]
  %v2051 = vld [vmem:[#allocation2 + $0x60] sm:$0xff]
  %v2052 = vld [vmem:[#allocation2 + $0x68] sm:$0xff]
  %v2053 = vld [vmem:[#allocation2 + $0x70] sm:$0xff]
  %v2054 = vld [vmem:[#allocation2 + $0x78] sm:$0xff]
  %v2055 = vld [vmem:[#allocation2 + $0x80] sm:$0xff]
  %v2056 = vld [vmem:[#allocation2 + $0x88] sm:$0xff]
  %v2057 = vld [vmem:[#allocation2 + $0x90] sm:$0xff]
  %v2058 = vld [vmem:[#allocation2 + $0x98] sm:$0xff]
  %v2059 = vld [vmem:[#allocation2 + $0xa0] sm:$0xff]
  %v2060 = vld [vmem:[#allocation2 + $0xa8] sm:$0xff]
  %v2061 = vld [vmem:[#allocation2 + $0xb0] sm:$0xff]
  %v2062 = vld [vmem:[#allocation2 + $0xb8] sm:$0xff]
  %v2063 = vld [vmem:[#allocation2 + $0xc0] sm:$0xff]
  %v2064 = vld [vmem:[#allocation2 + $0xc8] sm:$0xff]
  %v2065 = vld [vmem:[#allocation2 + $0xd0] sm:$0xff]
  %v2066 = vld [vmem:[#allocation2 + $0xd8] sm:$0xff]
  %v2067 = vld [vmem:[#allocation2 + $0xe0] sm:$0xff]
  %v2068 = vld [vmem:[#allocation2 + $0xe8] sm:$0xff]
  %v2069 = vld [vmem:[#allocation2 + $0xf0] sm:$0xff]
  %v2070 = vld [vmem:[#allocation2 + $0xf8] sm:$0xff]
  %v2071 = vld [vmem:[#allocation2 + $0x100] sm:$0xff]
  %v2072 = vld [vmem:[#allocation2 + $0x108] sm:$0xff]
  %v2073 = vld [vmem:[#allocation2 + $0x110] sm:$0xff]
  %v2074 = vld [vmem:[#allocation2 + $0x118] sm:$0xff]
  %v2075 = vld [vmem:[#allocation2 + $0x120] sm:$0xff]
  %v2076 = vld [vmem:[#allocation2 + $0x128] sm:$0xff]
  %v2077 = vld [vmem:[#allocation2 + $0x130] sm:$0xff]
  %v2078 = vld [vmem:[#allocation2 + $0x138] sm:$0xff]
  %v2079 = vld [vmem:[#allocation2 + $0x140] sm:$0xff]
  %v2080 = vld [vmem:[#allocation2 + $0x148] sm:$0xff]
  %v2081 = vld [vmem:[#allocation2 + $0x150] sm:$0xff]
  %v2082 = vld [vmem:[#allocation2 + $0x158] sm:$0xff]
  %v2083 = vld [vmem:[#allocation2 + $0x160] sm:$0xff]
  %v2084 = vld [vmem:[#allocation2 + $0x168] sm:$0xff]
  %v2085 = vld [vmem:[#allocation2 + $0x170] sm:$0xff]
  %v2086 = vld [vmem:[#allocation2 + $0x178] sm:$0xff]
  %v2087 = vld [vmem:[#allocation2 + $0x180] sm:$0xff]
  %v2088 = vld [vmem:[#allocation2 + $0x188] sm:$0xff]
  %v2089 = vld [vmem:[#allocation2 + $0x190] sm:$0xff]
  %v2090 = vld [vmem:[#allocation2 + $0x198] sm:$0xff]
  %v2091 = vld [vmem:[#allocation2 + $0x1a0] sm:$0xff]
  %v2092 = vld [vmem:[#allocation2 + $0x1a8] sm:$0xff]
  %v2093 = vld [vmem:[#allocation2 + $0x1b0] sm:$0xff]
  %v2094 = vld [vmem:[#allocation2 + $0x1b8] sm:$0xff]
  %v2095 = vld [vmem:[#allocation2 + $0x1c0] sm:$0xff]
  %v2096 = vld [vmem:[#allocation2 + $0x1c8] sm:$0xff]
  %v2097 = vld [vmem:[#allocation2 + $0x1d0] sm:$0xff]
  %v2098 = vld [vmem:[#allocation2 + $0x1d8] sm:$0xff]
  %v2099 = vld [vmem:[#allocation2 + $0x1e0] sm:$0xff]
  %v2100 = vld [vmem:[#allocation2 + $0x1e8] sm:$0xff]
  %v2101 = vld [vmem:[#allocation2 + $0x1f0] sm:$0xff]
  %v2102 = vld [vmem:[#allocation2 + $0x1f8] sm:$0xff]
  %v2103 = vld [vmem:[#allocation2 + $0x200] sm:$0xff]
  %v2104 = vld [vmem:[#allocation2 + $0x208] sm:$0xff]
  %v2105 = vld [vmem:[#allocation2 + $0x210] sm:$0xff]
  %v2106 = vld [vmem:[#allocation2 + $0x218] sm:$0xff]
  %v2107 = vld [vmem:[#allocation2 + $0x220] sm:$0xff]
  %v2108 = vld [vmem:[#allocation2 + $0x228] sm:$0xff]
  %v2109 = vld [vmem:[#allocation2 + $0x230] sm:$0xff]
  %v2110 = vld [vmem:[#allocation2 + $0x238] sm:$0xff]
  %v2111 = vld [vmem:[#allocation2 + $0x240] sm:$0xff]
  %v2112 = vld [vmem:[#allocation2 + $0x248] sm:$0xff]
  %v2113 = vld [vmem:[#allocation2 + $0x250] sm:$0xff]
  %v2114 = vld [vmem:[#allocation2 + $0x258] sm:$0xff]
  %v2115 = vld [vmem:[#allocation2 + $0x260] sm:$0xff]
  %v2116 = vld [vmem:[#allocation2 + $0x268] sm:$0xff]
  %v2117 = vld [vmem:[#allocation2 + $0x270] sm:$0xff]
  %v2118 = vld [vmem:[#allocation2 + $0x278] sm:$0xff]
  %v2119 = vld [vmem:[#allocation2 + $0x280] sm:$0xff]
  %v2120 = vld [vmem:[#allocation2 + $0x288] sm:$0xff]
  %v2121 = vld [vmem:[#allocation2 + $0x290] sm:$0xff]
  %v2122 = vld [vmem:[#allocation2 + $0x298] sm:$0xff]
  %v2123 = vld [vmem:[#allocation2 + $0x2a0] sm:$0xff]
  %v2124 = vld [vmem:[#allocation2 + $0x2a8] sm:$0xff]
  %v2125 = vld [vmem:[#allocation2 + $0x2b0] sm:$0xff]
  %v2126 = vld [vmem:[#allocation2 + $0x2b8] sm:$0xff]
  %v2127 = vld [vmem:[#allocation2 + $0x2c0] sm:$0xff]
  %v2128 = vld [vmem:[#allocation2 + $0x2c8] sm:$0xff]
  %v2129 = vld [vmem:[#allocation2 + $0x2d0] sm:$0xff]
  %v2130 = vld [vmem:[#allocation2 + $0x2d8] sm:$0xff]
  %v2131 = vld [vmem:[#allocation2 + $0x2e0] sm:$0xff]
  %v2132 = vld [vmem:[#allocation2 + $0x2e8] sm:$0xff]
  %v2133 = vld [vmem:[#allocation2 + $0x2f0] sm:$0xff]
  %v2134 = vld [vmem:[#allocation2 + $0x2f8] sm:$0xff]
  %v2135 = vld [vmem:[#allocation2 + $0x300] sm:$0xff]
  %v2136 = vld [vmem:[#allocation2 + $0x308] sm:$0xff]
  %v2137 = vld [vmem:[#allocation2 + $0x310] sm:$0xff]
  %v2138 = vld [vmem:[#allocation2 + $0x318] sm:$0xff]
  %v2139 = vld [vmem:[#allocation2 + $0x320] sm:$0xff]
  %v2140 = vld [vmem:[#allocation2 + $0x328] sm:$0xff]
  %v2141 = vld [vmem:[#allocation2 + $0x330] sm:$0xff]
  %v2142 = vld [vmem:[#allocation2 + $0x338] sm:$0xff]
  %v2143 = vld [vmem:[#allocation2 + $0x340] sm:$0xff]
  %v2144 = vld [vmem:[#allocation2 + $0x348] sm:$0xff]
  %v2145 = vld [vmem:[#allocation2 + $0x350] sm:$0xff]
  %v2146 = vld [vmem:[#allocation2 + $0x358] sm:$0xff]
  %v2147 = vld [vmem:[#allocation2 + $0x360] sm:$0xff]
  %v2148 = vld [vmem:[#allocation2 + $0x368] sm:$0xff]
  %v2149 = vld [vmem:[#allocation2 + $0x370] sm:$0xff]
  %v2150 = vld [vmem:[#allocation2 + $0x378] sm:$0xff]
  %v2151 = vld [vmem:[#allocation2 + $0x380] sm:$0xff]
  %v2152 = vld [vmem:[#allocation2 + $0x388] sm:$0xff]
  %v2153 = vld [vmem:[#allocation2 + $0x390] sm:$0xff]
  %v2154 = vld [vmem:[#allocation2 + $0x398] sm:$0xff]
  %v2155 = vld [vmem:[#allocation2 + $0x3a0] sm:$0xff]
  %v2156 = vld [vmem:[#allocation2 + $0x3a8] sm:$0xff]
  %v2157 = vld [vmem:[#allocation2 + $0x3b0] sm:$0xff]
  %v2158 = vld [vmem:[#allocation2 + $0x3b8] sm:$0xff]
  %v2159 = vld [vmem:[#allocation2 + $0x3c0] sm:$0xff]
  %v2160 = vld [vmem:[#allocation2 + $0x3c8] sm:$0xff]
  %v2161 = vld [vmem:[#allocation2 + $0x3d0] sm:$0xff]
  %v2162 = vld [vmem:[#allocation2 + $0x3d8] sm:$0xff]
  %v2163 = vld [vmem:[#allocation2 + $0x3e0] sm:$0xff]
  %v2164 = vld [vmem:[#allocation2 + $0x3e8] sm:$0xff]
  %v2165 = vld [vmem:[#allocation2 + $0x3f0] sm:$0xff]
  %v2166 = vld [vmem:[#allocation2 + $0x3f8] sm:$0xff]
  %v2167 = vld [vmem:[#allocation2 + $0x400] sm:$0xff]
  %v2168 = vld [vmem:[#allocation2 + $0x408] sm:$0xff]
  %v2169 = vld [vmem:[#allocation2 + $0x410] sm:$0xff]
  %v2170 = vld [vmem:[#allocation2 + $0x418] sm:$0xff]
  %v2171 = vld [vmem:[#allocation2 + $0x420] sm:$0xff]
  %v2172 = vld [vmem:[#allocation2 + $0x428] sm:$0xff]
  %v2173 = vld [vmem:[#allocation2 + $0x430] sm:$0xff]
  %v2174 = vld [vmem:[#allocation2 + $0x438] sm:$0xff]
  %v2175 = vld [vmem:[#allocation2 + $0x440] sm:$0xff]
  %v2176 = vld [vmem:[#allocation2 + $0x448] sm:$0xff]
  %v2177 = vld [vmem:[#allocation2 + $0x450] sm:$0xff]
  %v2178 = vld [vmem:[#allocation2 + $0x458] sm:$0xff]
  %v2179 = vld [vmem:[#allocation2 + $0x460] sm:$0xff]
  %v2180 = vld [vmem:[#allocation2 + $0x468] sm:$0xff]
  %v2181 = vld [vmem:[#allocation2 + $0x470] sm:$0xff]
  %v2182 = vld [vmem:[#allocation2 + $0x478] sm:$0xff]
  %v2183 = vld [vmem:[#allocation2 + $0x480] sm:$0xff]
  %v2184 = vld [vmem:[#allocation2 + $0x488] sm:$0xff]
  %v2185 = vld [vmem:[#allocation2 + $0x490] sm:$0xff]
  %v2186 = vld [vmem:[#allocation2 + $0x498] sm:$0xff]
  %v2187 = vld [vmem:[#allocation2 + $0x4a0] sm:$0xff]
  %v2188 = vld [vmem:[#allocation2 + $0x4a8] sm:$0xff]
  %v2189 = vld [vmem:[#allocation2 + $0x4b0] sm:$0xff]
  %v2190 = vld [vmem:[#allocation2 + $0x4b8] sm:$0xff]
  %v2191 = vld [vmem:[#allocation2 + $0x4c0] sm:$0xff]
  %v2192 = vld [vmem:[#allocation2 + $0x4c8] sm:$0xff]
  %v2193 = vld [vmem:[#allocation2 + $0x4d0] sm:$0xff]
  %v2194 = vld [vmem:[#allocation2 + $0x4d8] sm:$0xff]
  %v2195 = vld [vmem:[#allocation2 + $0x4e0] sm:$0xff]
  %v2196 = vld [vmem:[#allocation2 + $0x4e8] sm:$0xff]
  %v2197 = vld [vmem:[#allocation2 + $0x4f0] sm:$0xff]
  %v2198 = vld [vmem:[#allocation2 + $0x4f8] sm:$0xff]
  %v2199 = vld [vmem:[#allocation2 + $0x500] sm:$0xff]
  %v2200 = vld [vmem:[#allocation2 + $0x508] sm:$0xff]
  %v2201 = vld [vmem:[#allocation2 + $0x510] sm:$0xff]
  %v2202 = vld [vmem:[#allocation2 + $0x518] sm:$0xff]
  %v2203 = vld [vmem:[#allocation2 + $0x520] sm:$0xff]
  %v2204 = vld [vmem:[#allocation2 + $0x528] sm:$0xff]
  %v2205 = vld [vmem:[#allocation2 + $0x530] sm:$0xff]
  %v2206 = vld [vmem:[#allocation2 + $0x538] sm:$0xff]
  %v2207 = vld [vmem:[#allocation2 + $0x540] sm:$0xff]
  %v2208 = vld [vmem:[#allocation2 + $0x548] sm:$0xff]
  %v2209 = vld [vmem:[#allocation2 + $0x550] sm:$0xff]
  %v2210 = vld [vmem:[#allocation2 + $0x558] sm:$0xff]
  %v2211 = vld [vmem:[#allocation2 + $0x560] sm:$0xff]
  %v2212 = vld [vmem:[#allocation2 + $0x568] sm:$0xff]
  %v2213 = vld [vmem:[#allocation2 + $0x570] sm:$0xff]
  %v2214 = vld [vmem:[#allocation2 + $0x578] sm:$0xff]
  %v2215 = vld [vmem:[#allocation2 + $0x580] sm:$0xff]
  %v2216 = vld [vmem:[#allocation2 + $0x588] sm:$0xff]
  %v2217 = vld [vmem:[#allocation2 + $0x590] sm:$0xff]
  %v2218 = vld [vmem:[#allocation2 + $0x598] sm:$0xff]
  %v2219 = vld [vmem:[#allocation2 + $0x5a0] sm:$0xff]
  %v2220 = vld [vmem:[#allocation2 + $0x5a8] sm:$0xff]
  %v2221 = vld [vmem:[#allocation2 + $0x5b0] sm:$0xff]
  %v2222 = vld [vmem:[#allocation2 + $0x5b8] sm:$0xff]
  %v2223 = vld [vmem:[#allocation2 + $0x5c0] sm:$0xff]
  %v2224 = vld [vmem:[#allocation2 + $0x5c8] sm:$0xff]
  %v2225 = vld [vmem:[#allocation2 + $0x5d0] sm:$0xff]
  %v2226 = vld [vmem:[#allocation2 + $0x5d8] sm:$0xff]
  %v2227 = vld [vmem:[#allocation2 + $0x5e0] sm:$0xff]
  %v2228 = vld [vmem:[#allocation2 + $0x5e8] sm:$0xff]
  %v2229 = vld [vmem:[#allocation2 + $0x5f0] sm:$0xff]
  %v2230 = vld [vmem:[#allocation2 + $0x5f8] sm:$0xff]
  %v2231 = vld [vmem:[#allocation2 + $0x600] sm:$0xff]
  %v2232 = vld [vmem:[#allocation2 + $0x608] sm:$0xff]
  %v2233 = vld [vmem:[#allocation2 + $0x610] sm:$0xff]
  %v2234 = vld [vmem:[#allocation2 + $0x618] sm:$0xff]
  %v2235 = vld [vmem:[%s2] sm:$0xff]
  %2237 = vset.pattern.permute.xlu0 0
  %2238 = vperm.xlu0 %2237, %v2235
  %v2239 = vpop.permute.xlu0 %2238
  %v2243 = vunpack.c.l.b16 %v2037
  %v2244 = vunpack.c.h.b16 %v2037
  %v2245 = vunpack.c.l.b16 %v2038
  %v2246 = vunpack.c.h.b16 %v2038
  %v2247 = vpack.c.b16 %v2243, %v2243
  %v2248 = vpack.c.b16 %v2244, %v2244
  %v2249 = vpack.c.b16 %v2245, %v2245
  %v2250 = vpack.c.b16 %v2246, %v2246
  %v2450 = vunpack.c.l.b16 %v2039
  %v2451 = vunpack.c.h.b16 %v2039
  %v2452 = vunpack.c.l.b16 %v2040
  %v2453 = vunpack.c.h.b16 %v2040
  %v2454 = vunpack.c.l.b16 %v2041
  %v2455 = vunpack.c.h.b16 %v2041
  %v2456 = vunpack.c.l.b16 %v2042
  %v2457 = vunpack.c.h.b16 %v2042
  %v2458 = vunpack.c.l.b16 %v2043
  %v2459 = vunpack.c.h.b16 %v2043
  %v2460 = vunpack.c.l.b16 %v2044
  %v2461 = vunpack.c.h.b16 %v2044
  %v2462 = vunpack.c.l.b16 %v2045
  %v2463 = vunpack.c.h.b16 %v2045
  %v2464 = vunpack.c.l.b16 %v2046
  %v2465 = vunpack.c.h.b16 %v2046
  %v2466 = vunpack.c.l.b16 %v2047
  %v2467 = vunpack.c.h.b16 %v2047
  %v2468 = vunpack.c.l.b16 %v2048
  %v2469 = vunpack.c.h.b16 %v2048
  %v2470 = vunpack.c.l.b16 %v2049
  %v2471 = vunpack.c.h.b16 %v2049
  %v2472 = vunpack.c.l.b16 %v2050
  %v2473 = vunpack.c.h.b16 %v2050
  %v2474 = vunpack.c.l.b16 %v2051
  %v2475 = vunpack.c.h.b16 %v2051
  %v2476 = vunpack.c.l.b16 %v2052
  %v2477 = vunpack.c.h.b16 %v2052
  %v2478 = vunpack.c.l.b16 %v2053
  %v2479 = vunpack.c.h.b16 %v2053
  %v2480 = vunpack.c.l.b16 %v2054
  %v2481 = vunpack.c.h.b16 %v2054
  %v2482 = vunpack.c.l.b16 %v2055
  %v2483 = vunpack.c.h.b16 %v2055
  %v2484 = vunpack.c.l.b16 %v2056
  %v2485 = vunpack.c.h.b16 %v2056
  %v2486 = vunpack.c.l.b16 %v2057
  %v2487 = vunpack.c.h.b16 %v2057
  %v2488 = vunpack.c.l.b16 %v2058
  %v2489 = vunpack.c.h.b16 %v2058
  %v2490 = vunpack.c.l.b16 %v2059
  %v2491 = vunpack.c.h.b16 %v2059
  %v2492 = vunpack.c.l.b16 %v2060
  %v2493 = vunpack.c.h.b16 %v2060
  %v2494 = vunpack.c.l.b16 %v2061
  %v2495 = vunpack.c.h.b16 %v2061
  %v2496 = vunpack.c.l.b16 %v2062
  %v2497 = vunpack.c.h.b16 %v2062
  %v2498 = vunpack.c.l.b16 %v2063
  %v2499 = vunpack.c.h.b16 %v2063
  %v2500 = vunpack.c.l.b16 %v2064
  %v2501 = vunpack.c.h.b16 %v2064
  %v2502 = vunpack.c.l.b16 %v2065
  %v2503 = vunpack.c.h.b16 %v2065
  %v2504 = vunpack.c.l.b16 %v2066
  %v2505 = vunpack.c.h.b16 %v2066
  %v2506 = vunpack.c.l.b16 %v2067
  %v2507 = vunpack.c.h.b16 %v2067
  %v2508 = vunpack.c.l.b16 %v2068
  %v2509 = vunpack.c.h.b16 %v2068
  %v2510 = vunpack.c.l.b16 %v2069
  %v2511 = vunpack.c.h.b16 %v2069
  %v2512 = vunpack.c.l.b16 %v2070
  %v2513 = vunpack.c.h.b16 %v2070
  %v2514 = vunpack.c.l.b16 %v2071
  %v2515 = vunpack.c.h.b16 %v2071
  %v2516 = vunpack.c.l.b16 %v2072
  %v2517 = vunpack.c.h.b16 %v2072
  %v2518 = vunpack.c.l.b16 %v2073
  %v2519 = vunpack.c.h.b16 %v2073
  %v2520 = vunpack.c.l.b16 %v2074
  %v2521 = vunpack.c.h.b16 %v2074
  %v2522 = vunpack.c.l.b16 %v2075
  %v2523 = vunpack.c.h.b16 %v2075
  %v2524 = vunpack.c.l.b16 %v2076
  %v2525 = vunpack.c.h.b16 %v2076
  %v2526 = vunpack.c.l.b16 %v2077
  %v2527 = vunpack.c.h.b16 %v2077
  %v2528 = vunpack.c.l.b16 %v2078
  %v2529 = vunpack.c.h.b16 %v2078
  %v2530 = vunpack.c.l.b16 %v2079
  %v2531 = vunpack.c.h.b16 %v2079
  %v2532 = vunpack.c.l.b16 %v2080
  %v2533 = vunpack.c.h.b16 %v2080
  %v2534 = vunpack.c.l.b16 %v2081
  %v2535 = vunpack.c.h.b16 %v2081
  %v2536 = vunpack.c.l.b16 %v2082
  %v2537 = vunpack.c.h.b16 %v2082
  %v2538 = vunpack.c.l.b16 %v2083
  %v2539 = vunpack.c.h.b16 %v2083
  %v2540 = vunpack.c.l.b16 %v2084
  %v2541 = vunpack.c.h.b16 %v2084
  %v2542 = vunpack.c.l.b16 %v2085
  %v2543 = vunpack.c.h.b16 %v2085
  %v2544 = vunpack.c.l.b16 %v2086
  %v2545 = vunpack.c.h.b16 %v2086
  %v2546 = vunpack.c.l.b16 %v2087
  %v2547 = vunpack.c.h.b16 %v2087
  %v2548 = vunpack.c.l.b16 %v2088
  %v2549 = vunpack.c.h.b16 %v2088
  %v2550 = vunpack.c.l.b16 %v2089
  %v2551 = vunpack.c.h.b16 %v2089
  %v2552 = vunpack.c.l.b16 %v2090
  %v2553 = vunpack.c.h.b16 %v2090
  %v2554 = vunpack.c.l.b16 %v2091
  %v2555 = vunpack.c.h.b16 %v2091
  %v2556 = vunpack.c.l.b16 %v2092
  %v2557 = vunpack.c.h.b16 %v2092
  %v2558 = vunpack.c.l.b16 %v2093
  %v2559 = vunpack.c.h.b16 %v2093
  %v2560 = vunpack.c.l.b16 %v2094
  %v2561 = vunpack.c.h.b16 %v2094
  %v2562 = vunpack.c.l.b16 %v2095
  %v2563 = vunpack.c.h.b16 %v2095
  %v2564 = vunpack.c.l.b16 %v2096
  %v2565 = vunpack.c.h.b16 %v2096
  %v2566 = vunpack.c.l.b16 %v2097
  %v2567 = vunpack.c.h.b16 %v2097
  %v2568 = vunpack.c.l.b16 %v2098
  %v2569 = vunpack.c.h.b16 %v2098
  %v2570 = vunpack.c.l.b16 %v2099
  %v2571 = vunpack.c.h.b16 %v2099
  %v2572 = vunpack.c.l.b16 %v2100
  %v2573 = vunpack.c.h.b16 %v2100
  %v2574 = vunpack.c.l.b16 %v2101
  %v2575 = vunpack.c.h.b16 %v2101
  %v2576 = vunpack.c.l.b16 %v2102
  %v2577 = vunpack.c.h.b16 %v2102
  %v2578 = vunpack.c.l.b16 %v2103
  %v2579 = vunpack.c.h.b16 %v2103
  %v2580 = vunpack.c.l.b16 %v2104
  %v2581 = vunpack.c.h.b16 %v2104
  %v2582 = vunpack.c.l.b16 %v2105
  %v2583 = vunpack.c.h.b16 %v2105
  %v2584 = vunpack.c.l.b16 %v2106
  %v2585 = vunpack.c.h.b16 %v2106
  %v2586 = vunpack.c.l.b16 %v2107
  %v2587 = vunpack.c.h.b16 %v2107
  %v2588 = vunpack.c.l.b16 %v2108
  %v2589 = vunpack.c.h.b16 %v2108
  %v2590 = vunpack.c.l.b16 %v2109
  %v2591 = vunpack.c.h.b16 %v2109
  %v2592 = vunpack.c.l.b16 %v2110
  %v2593 = vunpack.c.h.b16 %v2110
  %v2594 = vunpack.c.l.b16 %v2111
  %v2595 = vunpack.c.h.b16 %v2111
  %v2596 = vunpack.c.l.b16 %v2112
  %v2597 = vunpack.c.h.b16 %v2112
  %v2598 = vunpack.c.l.b16 %v2113
  %v2599 = vunpack.c.h.b16 %v2113
  %v2600 = vunpack.c.l.b16 %v2114
  %v2601 = vunpack.c.h.b16 %v2114
  %v2602 = vunpack.c.l.b16 %v2115
  %v2603 = vunpack.c.h.b16 %v2115
  %v2604 = vunpack.c.l.b16 %v2116
  %v2605 = vunpack.c.h.b16 %v2116
  %v2606 = vunpack.c.l.b16 %v2117
  %v2607 = vunpack.c.h.b16 %v2117
  %v2608 = vunpack.c.l.b16 %v2118
  %v2609 = vunpack.c.h.b16 %v2118
  %v2610 = vunpack.c.l.b16 %v2119
  %v2611 = vunpack.c.h.b16 %v2119
  %v2612 = vunpack.c.l.b16 %v2120
  %v2613 = vunpack.c.h.b16 %v2120
  %v2614 = vunpack.c.l.b16 %v2121
  %v2615 = vunpack.c.h.b16 %v2121
  %v2616 = vunpack.c.l.b16 %v2122
  %v2617 = vunpack.c.h.b16 %v2122
  %v2618 = vunpack.c.l.b16 %v2123
  %v2619 = vunpack.c.h.b16 %v2123
  %v2620 = vunpack.c.l.b16 %v2124
  %v2621 = vunpack.c.h.b16 %v2124
  %v2622 = vunpack.c.l.b16 %v2125
  %v2623 = vunpack.c.h.b16 %v2125
  %v2624 = vunpack.c.l.b16 %v2126
  %v2625 = vunpack.c.h.b16 %v2126
  %v2626 = vunpack.c.l.b16 %v2127
  %v2627 = vunpack.c.h.b16 %v2127
  %v2628 = vunpack.c.l.b16 %v2128
  %v2629 = vunpack.c.h.b16 %v2128
  %v2630 = vunpack.c.l.b16 %v2129
  %v2631 = vunpack.c.h.b16 %v2129
  %v2632 = vunpack.c.l.b16 %v2130
  %v2633 = vunpack.c.h.b16 %v2130
  %v2634 = vunpack.c.l.b16 %v2131
  %v2635 = vunpack.c.h.b16 %v2131
  %v2636 = vunpack.c.l.b16 %v2132
  %v2637 = vunpack.c.h.b16 %v2132
  %v2638 = vunpack.c.l.b16 %v2133
  %v2639 = vunpack.c.h.b16 %v2133
  %v2640 = vunpack.c.l.b16 %v2134
  %v2641 = vunpack.c.h.b16 %v2134
  %v2642 = vunpack.c.l.b16 %v2135
  %v2643 = vunpack.c.h.b16 %v2135
  %v2644 = vunpack.c.l.b16 %v2136
  %v2645 = vunpack.c.h.b16 %v2136
  %v2646 = vunpack.c.l.b16 %v2137
  %v2647 = vunpack.c.h.b16 %v2137
  %v2648 = vunpack.c.l.b16 %v2138
  %v2649 = vunpack.c.h.b16 %v2138
  %v2650 = vunpack.c.l.b16 %v2139
  %v2651 = vunpack.c.h.b16 %v2139
  %v2652 = vunpack.c.l.b16 %v2140
  %v2653 = vunpack.c.h.b16 %v2140
  %v2654 = vunpack.c.l.b16 %v2141
  %v2655 = vunpack.c.h.b16 %v2141
  %v2656 = vunpack.c.l.b16 %v2142
  %v2657 = vunpack.c.h.b16 %v2142
  %v2658 = vunpack.c.l.b16 %v2143
  %v2659 = vunpack.c.h.b16 %v2143
  %v2660 = vunpack.c.l.b16 %v2144
  %v2661 = vunpack.c.h.b16 %v2144
  %v2662 = vunpack.c.l.b16 %v2145
  %v2663 = vunpack.c.h.b16 %v2145
  %v2664 = vunpack.c.l.b16 %v2146
  %v2665 = vunpack.c.h.b16 %v2146
  %v2666 = vunpack.c.l.b16 %v2147
  %v2667 = vunpack.c.h.b16 %v2147
  %v2668 = vunpack.c.l.b16 %v2148
  %v2669 = vunpack.c.h.b16 %v2148
  %v2670 = vunpack.c.l.b16 %v2149
  %v2671 = vunpack.c.h.b16 %v2149
  %v2672 = vunpack.c.l.b16 %v2150
  %v2673 = vunpack.c.h.b16 %v2150
  %v2674 = vunpack.c.l.b16 %v2151
  %v2675 = vunpack.c.h.b16 %v2151
  %v2676 = vunpack.c.l.b16 %v2152
  %v2677 = vunpack.c.h.b16 %v2152
  %v2678 = vunpack.c.l.b16 %v2153
  %v2679 = vunpack.c.h.b16 %v2153
  %v2680 = vunpack.c.l.b16 %v2154
  %v2681 = vunpack.c.h.b16 %v2154
  %v2682 = vunpack.c.l.b16 %v2155
  %v2683 = vunpack.c.h.b16 %v2155
  %v2684 = vunpack.c.l.b16 %v2156
  %v2685 = vunpack.c.h.b16 %v2156
  %v2686 = vunpack.c.l.b16 %v2157
  %v2687 = vunpack.c.h.b16 %v2157
  %v2688 = vunpack.c.l.b16 %v2158
  %v2689 = vunpack.c.h.b16 %v2158
  %v2690 = vunpack.c.l.b16 %v2159
  %v2691 = vunpack.c.h.b16 %v2159
  %v2692 = vunpack.c.l.b16 %v2160
  %v2693 = vunpack.c.h.b16 %v2160
  %v2694 = vunpack.c.l.b16 %v2161
  %v2695 = vunpack.c.h.b16 %v2161
  %v2696 = vunpack.c.l.b16 %v2162
  %v2697 = vunpack.c.h.b16 %v2162
  %v2698 = vunpack.c.l.b16 %v2163
  %v2699 = vunpack.c.h.b16 %v2163
  %v2700 = vunpack.c.l.b16 %v2164
  %v2701 = vunpack.c.h.b16 %v2164
  %v2702 = vunpack.c.l.b16 %v2165
  %v2703 = vunpack.c.h.b16 %v2165
  %v2704 = vunpack.c.l.b16 %v2166
  %v2705 = vunpack.c.h.b16 %v2166
  %v2706 = vunpack.c.l.b16 %v2167
  %v2707 = vunpack.c.h.b16 %v2167
  %v2708 = vunpack.c.l.b16 %v2168
  %v2709 = vunpack.c.h.b16 %v2168
  %v2710 = vunpack.c.l.b16 %v2169
  %v2711 = vunpack.c.h.b16 %v2169
  %v2712 = vunpack.c.l.b16 %v2170
  %v2713 = vunpack.c.h.b16 %v2170
  %v2714 = vunpack.c.l.b16 %v2171
  %v2715 = vunpack.c.h.b16 %v2171
  %v2716 = vunpack.c.l.b16 %v2172
  %v2717 = vunpack.c.h.b16 %v2172
  %v2718 = vunpack.c.l.b16 %v2173
  %v2719 = vunpack.c.h.b16 %v2173
  %v2720 = vunpack.c.l.b16 %v2174
  %v2721 = vunpack.c.h.b16 %v2174
  %v2722 = vunpack.c.l.b16 %v2175
  %v2723 = vunpack.c.h.b16 %v2175
  %v2724 = vunpack.c.l.b16 %v2176
  %v2725 = vunpack.c.h.b16 %v2176
  %v2726 = vunpack.c.l.b16 %v2177
  %v2727 = vunpack.c.h.b16 %v2177
  %v2728 = vunpack.c.l.b16 %v2178
  %v2729 = vunpack.c.h.b16 %v2178
  %v2730 = vunpack.c.l.b16 %v2179
  %v2731 = vunpack.c.h.b16 %v2179
  %v2732 = vunpack.c.l.b16 %v2180
  %v2733 = vunpack.c.h.b16 %v2180
  %v2734 = vunpack.c.l.b16 %v2181
  %v2735 = vunpack.c.h.b16 %v2181
  %v2736 = vunpack.c.l.b16 %v2182
  %v2737 = vunpack.c.h.b16 %v2182
  %v2738 = vunpack.c.l.b16 %v2183
  %v2739 = vunpack.c.h.b16 %v2183
  %v2740 = vunpack.c.l.b16 %v2184
  %v2741 = vunpack.c.h.b16 %v2184
  %v2742 = vunpack.c.l.b16 %v2185
  %v2743 = vunpack.c.h.b16 %v2185
  %v2744 = vunpack.c.l.b16 %v2186
  %v2745 = vunpack.c.h.b16 %v2186
  %v2746 = vunpack.c.l.b16 %v2187
  %v2747 = vunpack.c.h.b16 %v2187
  %v2748 = vunpack.c.l.b16 %v2188
  %v2749 = vunpack.c.h.b16 %v2188
  %v2750 = vunpack.c.l.b16 %v2189
  %v2751 = vunpack.c.h.b16 %v2189
  %v2752 = vunpack.c.l.b16 %v2190
  %v2753 = vunpack.c.h.b16 %v2190
  %v2754 = vunpack.c.l.b16 %v2191
  %v2755 = vunpack.c.h.b16 %v2191
  %v2756 = vunpack.c.l.b16 %v2192
  %v2757 = vunpack.c.h.b16 %v2192
  %v2758 = vunpack.c.l.b16 %v2193
  %v2759 = vunpack.c.h.b16 %v2193
  %v2760 = vunpack.c.l.b16 %v2194
  %v2761 = vunpack.c.h.b16 %v2194
  %v2762 = vunpack.c.l.b16 %v2195
  %v2763 = vunpack.c.h.b16 %v2195
  %v2764 = vunpack.c.l.b16 %v2196
  %v2765 = vunpack.c.h.b16 %v2196
  %v2766 = vunpack.c.l.b16 %v2197
  %v2767 = vunpack.c.h.b16 %v2197
  %v2768 = vunpack.c.l.b16 %v2198
  %v2769 = vunpack.c.h.b16 %v2198
  %v2770 = vunpack.c.l.b16 %v2199
  %v2771 = vunpack.c.h.b16 %v2199
  %v2772 = vunpack.c.l.b16 %v2200
  %v2773 = vunpack.c.h.b16 %v2200
  %v2774 = vunpack.c.l.b16 %v2201
  %v2775 = vunpack.c.h.b16 %v2201
  %v2776 = vunpack.c.l.b16 %v2202
  %v2777 = vunpack.c.h.b16 %v2202
  %v2778 = vunpack.c.l.b16 %v2203
  %v2779 = vunpack.c.h.b16 %v2203
  %v2780 = vunpack.c.l.b16 %v2204
  %v2781 = vunpack.c.h.b16 %v2204
  %v2782 = vunpack.c.l.b16 %v2205
  %v2783 = vunpack.c.h.b16 %v2205
  %v2784 = vunpack.c.l.b16 %v2206
  %v2785 = vunpack.c.h.b16 %v2206
  %v2786 = vunpack.c.l.b16 %v2207
  %v2787 = vunpack.c.h.b16 %v2207
  %v2788 = vunpack.c.l.b16 %v2208
  %v2789 = vunpack.c.h.b16 %v2208
  %v2790 = vunpack.c.l.b16 %v2209
  %v2791 = vunpack.c.h.b16 %v2209
  %v2792 = vunpack.c.l.b16 %v2210
  %v2793 = vunpack.c.h.b16 %v2210
  %v2794 = vunpack.c.l.b16 %v2211
  %v2795 = vunpack.c.h.b16 %v2211
  %v2796 = vunpack.c.l.b16 %v2212
  %v2797 = vunpack.c.h.b16 %v2212
  %v2798 = vunpack.c.l.b16 %v2213
  %v2799 = vunpack.c.h.b16 %v2213
  %v2800 = vunpack.c.l.b16 %v2214
  %v2801 = vunpack.c.h.b16 %v2214
  %v2802 = vunpack.c.l.b16 %v2215
  %v2803 = vunpack.c.h.b16 %v2215
  %v2804 = vunpack.c.l.b16 %v2216
  %v2805 = vunpack.c.h.b16 %v2216
  %v2806 = vunpack.c.l.b16 %v2217
  %v2807 = vunpack.c.h.b16 %v2217
  %v2808 = vunpack.c.l.b16 %v2218
  %v2809 = vunpack.c.h.b16 %v2218
  %v2810 = vunpack.c.l.b16 %v2219
  %v2811 = vunpack.c.h.b16 %v2219
  %v2812 = vunpack.c.l.b16 %v2220
  %v2813 = vunpack.c.h.b16 %v2220
  %v2814 = vunpack.c.l.b16 %v2221
  %v2815 = vunpack.c.h.b16 %v2221
  %v2816 = vunpack.c.l.b16 %v2222
  %v2817 = vunpack.c.h.b16 %v2222
  %v2818 = vunpack.c.l.b16 %v2223
  %v2819 = vunpack.c.h.b16 %v2223
  %v2820 = vunpack.c.l.b16 %v2224
  %v2821 = vunpack.c.h.b16 %v2224
  %v2822 = vunpack.c.l.b16 %v2225
  %v2823 = vunpack.c.h.b16 %v2225
  %v2824 = vunpack.c.l.b16 %v2226
  %v2825 = vunpack.c.h.b16 %v2226
  %v2826 = vunpack.c.l.b16 %v2227
  %v2827 = vunpack.c.h.b16 %v2227
  %v2828 = vunpack.c.l.b16 %v2228
  %v2829 = vunpack.c.h.b16 %v2228
  %v2830 = vunpack.c.l.b16 %v2229
  %v2831 = vunpack.c.h.b16 %v2229
  %v2832 = vunpack.c.l.b16 %v2230
  %v2833 = vunpack.c.h.b16 %v2230
  %v2834 = vunpack.c.l.b16 %v2231
  %v2835 = vunpack.c.h.b16 %v2231
  %v2836 = vunpack.c.l.b16 %v2232
  %v2837 = vunpack.c.h.b16 %v2232
  %v2838 = vunpack.c.l.b16 %v2233
  %v2839 = vunpack.c.h.b16 %v2233
  %v2840 = vunpack.c.l.b16 %v2234
  %v2841 = vunpack.c.h.b16 %v2234
  %v2842 = vpack.c.b16 %v2458, %v2450
  %v2843 = vpack.c.b16 %v2459, %v2451
  %v2844 = vpack.c.b16 %v2460, %v2452
  %v2845 = vpack.c.b16 %v2461, %v2453
  %v2846 = vpack.c.b16 %v2462, %v2454
  %v2847 = vpack.c.b16 %v2463, %v2455
  %v2848 = vpack.c.b16 %v2464, %v2456
  %v2849 = vpack.c.b16 %v2465, %v2457
  %v2850 = vpack.c.b16 %v2474, %v2466
  %v2851 = vpack.c.b16 %v2475, %v2467
  %v2852 = vpack.c.b16 %v2476, %v2468
  %v2853 = vpack.c.b16 %v2477, %v2469
  %v2854 = vpack.c.b16 %v2478, %v2470
  %v2855 = vpack.c.b16 %v2479, %v2471
  %v2856 = vpack.c.b16 %v2480, %v2472
  %v2857 = vpack.c.b16 %v2481, %v2473
  %v2858 = vpack.c.b16 %v2490, %v2482
  %v2859 = vpack.c.b16 %v2491, %v2483
  %v2860 = vpack.c.b16 %v2492, %v2484
  %v2861 = vpack.c.b16 %v2493, %v2485
  %v2862 = vpack.c.b16 %v2494, %v2486
  %v2863 = vpack.c.b16 %v2495, %v2487
  %v2864 = vpack.c.b16 %v2496, %v2488
  %v2865 = vpack.c.b16 %v2497, %v2489
  %v2866 = vpack.c.b16 %v2506, %v2498
  %v2867 = vpack.c.b16 %v2507, %v2499
  %v2868 = vpack.c.b16 %v2508, %v2500
  %v2869 = vpack.c.b16 %v2509, %v2501
  %v2870 = vpack.c.b16 %v2510, %v2502
  %v2871 = vpack.c.b16 %v2511, %v2503
  %v2872 = vpack.c.b16 %v2512, %v2504
  %v2873 = vpack.c.b16 %v2513, %v2505
  %v2874 = vpack.c.b16 %v2522, %v2514
  %v2875 = vpack.c.b16 %v2523, %v2515
  %v2876 = vpack.c.b16 %v2524, %v2516
  %v2877 = vpack.c.b16 %v2525, %v2517
  %v2878 = vpack.c.b16 %v2526, %v2518
  %v2879 = vpack.c.b16 %v2527, %v2519
  %v2880 = vpack.c.b16 %v2528, %v2520
  %v2881 = vpack.c.b16 %v2529, %v2521
  %v2882 = vpack.c.b16 %v2538, %v2530
  %v2883 = vpack.c.b16 %v2539, %v2531
  %v2884 = vpack.c.b16 %v2540, %v2532
  %v2885 = vpack.c.b16 %v2541, %v2533
  %v2886 = vpack.c.b16 %v2542, %v2534
  %v2887 = vpack.c.b16 %v2543, %v2535
  %v2888 = vpack.c.b16 %v2544, %v2536
  %v2889 = vpack.c.b16 %v2545, %v2537
  %v2890 = vpack.c.b16 %v2554, %v2546
  %v2891 = vpack.c.b16 %v2555, %v2547
  %v2892 = vpack.c.b16 %v2556, %v2548
  %v2893 = vpack.c.b16 %v2557, %v2549
  %v2894 = vpack.c.b16 %v2558, %v2550
  %v2895 = vpack.c.b16 %v2559, %v2551
  %v2896 = vpack.c.b16 %v2560, %v2552
  %v2897 = vpack.c.b16 %v2561, %v2553
  %v2898 = vpack.c.b16 %v2570, %v2562
  %v2899 = vpack.c.b16 %v2571, %v2563
  %v2900 = vpack.c.b16 %v2572, %v2564
  %v2901 = vpack.c.b16 %v2573, %v2565
  %v2902 = vpack.c.b16 %v2574, %v2566
  %v2903 = vpack.c.b16 %v2575, %v2567
  %v2904 = vpack.c.b16 %v2576, %v2568
  %v2905 = vpack.c.b16 %v2577, %v2569
  %v2906 = vpack.c.b16 %v2586, %v2578
  %v2907 = vpack.c.b16 %v2587, %v2579
  %v2908 = vpack.c.b16 %v2588, %v2580
  %v2909 = vpack.c.b16 %v2589, %v2581
  %v2910 = vpack.c.b16 %v2590, %v2582
  %v2911 = vpack.c.b16 %v2591, %v2583
  %v2912 = vpack.c.b16 %v2592, %v2584
  %v2913 = vpack.c.b16 %v2593, %v2585
  %v2914 = vpack.c.b16 %v2602, %v2594
  %v2915 = vpack.c.b16 %v2603, %v2595
  %v2916 = vpack.c.b16 %v2604, %v2596
  %v2917 = vpack.c.b16 %v2605, %v2597
  %v2918 = vpack.c.b16 %v2606, %v2598
  %v2919 = vpack.c.b16 %v2607, %v2599
  %v2920 = vpack.c.b16 %v2608, %v2600
  %v2921 = vpack.c.b16 %v2609, %v2601
  %v2922 = vpack.c.b16 %v2618, %v2610
  %v2923 = vpack.c.b16 %v2619, %v2611
  %v2924 = vpack.c.b16 %v2620, %v2612
  %v2925 = vpack.c.b16 %v2621, %v2613
  %v2926 = vpack.c.b16 %v2622, %v2614
  %v2927 = vpack.c.b16 %v2623, %v2615
  %v2928 = vpack.c.b16 %v2624, %v2616
  %v2929 = vpack.c.b16 %v2625, %v2617
  %v2930 = vpack.c.b16 %v2634, %v2626
  %v2931 = vpack.c.b16 %v2635, %v2627
  %v2932 = vpack.c.b16 %v2636, %v2628
  %v2933 = vpack.c.b16 %v2637, %v2629
  %v2934 = vpack.c.b16 %v2638, %v2630
  %v2935 = vpack.c.b16 %v2639, %v2631
  %v2936 = vpack.c.b16 %v2640, %v2632
  %v2937 = vpack.c.b16 %v2641, %v2633
  %v2938 = vpack.c.b16 %v2650, %v2642
  %v2939 = vpack.c.b16 %v2651, %v2643
  %v2940 = vpack.c.b16 %v2652, %v2644
  %v2941 = vpack.c.b16 %v2653, %v2645
  %v2942 = vpack.c.b16 %v2654, %v2646
  %v2943 = vpack.c.b16 %v2655, %v2647
  %v2944 = vpack.c.b16 %v2656, %v2648
  %v2945 = vpack.c.b16 %v2657, %v2649
  %v2946 = vpack.c.b16 %v2666, %v2658
  %v2947 = vpack.c.b16 %v2667, %v2659
  %v2948 = vpack.c.b16 %v2668, %v2660
  %v2949 = vpack.c.b16 %v2669, %v2661
  %v2950 = vpack.c.b16 %v2670, %v2662
  %v2951 = vpack.c.b16 %v2671, %v2663
  %v2952 = vpack.c.b16 %v2672, %v2664
  %v2953 = vpack.c.b16 %v2673, %v2665
  %v2954 = vpack.c.b16 %v2682, %v2674
  %v2955 = vpack.c.b16 %v2683, %v2675
  %v2956 = vpack.c.b16 %v2684, %v2676
  %v2957 = vpack.c.b16 %v2685, %v2677
  %v2958 = vpack.c.b16 %v2686, %v2678
  %v2959 = vpack.c.b16 %v2687, %v2679
  %v2960 = vpack.c.b16 %v2688, %v2680
  %v2961 = vpack.c.b16 %v2689, %v2681
  %v2962 = vpack.c.b16 %v2698, %v2690
  %v2963 = vpack.c.b16 %v2699, %v2691
  %v2964 = vpack.c.b16 %v2700, %v2692
  %v2965 = vpack.c.b16 %v2701, %v2693
  %v2966 = vpack.c.b16 %v2702, %v2694
  %v2967 = vpack.c.b16 %v2703, %v2695
  %v2968 = vpack.c.b16 %v2704, %v2696
  %v2969 = vpack.c.b16 %v2705, %v2697
  %v2970 = vpack.c.b16 %v2714, %v2706
  %v2971 = vpack.c.b16 %v2715, %v2707
  %v2972 = vpack.c.b16 %v2716, %v2708
  %v2973 = vpack.c.b16 %v2717, %v2709
  %v2974 = vpack.c.b16 %v2718, %v2710
  %v2975 = vpack.c.b16 %v2719, %v2711
  %v2976 = vpack.c.b16 %v2720, %v2712
  %v2977 = vpack.c.b16 %v2721, %v2713
  %v2978 = vpack.c.b16 %v2730, %v2722
  %v2979 = vpack.c.b16 %v2731, %v2723
  %v2980 = vpack.c.b16 %v2732, %v2724
  %v2981 = vpack.c.b16 %v2733, %v2725
  %v2982 = vpack.c.b16 %v2734, %v2726
  %v2983 = vpack.c.b16 %v2735, %v2727
  %v2984 = vpack.c.b16 %v2736, %v2728
  %v2985 = vpack.c.b16 %v2737, %v2729
  %v2986 = vpack.c.b16 %v2746, %v2738
  %v2987 = vpack.c.b16 %v2747, %v2739
  %v2988 = vpack.c.b16 %v2748, %v2740
  %v2989 = vpack.c.b16 %v2749, %v2741
  %v2990 = vpack.c.b16 %v2750, %v2742
  %v2991 = vpack.c.b16 %v2751, %v2743
  %v2992 = vpack.c.b16 %v2752, %v2744
  %v2993 = vpack.c.b16 %v2753, %v2745
  %v2994 = vpack.c.b16 %v2762, %v2754
  %v2995 = vpack.c.b16 %v2763, %v2755
  %v2996 = vpack.c.b16 %v2764, %v2756
  %v2997 = vpack.c.b16 %v2765, %v2757
  %v2998 = vpack.c.b16 %v2766, %v2758
  %v2999 = vpack.c.b16 %v2767, %v2759
  %v3000 = vpack.c.b16 %v2768, %v2760
  %v3001 = vpack.c.b16 %v2769, %v2761
  %v3002 = vpack.c.b16 %v2778, %v2770
  %v3003 = vpack.c.b16 %v2779, %v2771
  %v3004 = vpack.c.b16 %v2780, %v2772
  %v3005 = vpack.c.b16 %v2781, %v2773
  %v3006 = vpack.c.b16 %v2782, %v2774
  %v3007 = vpack.c.b16 %v2783, %v2775
  %v3008 = vpack.c.b16 %v2784, %v2776
  %v3009 = vpack.c.b16 %v2785, %v2777
  %v3010 = vpack.c.b16 %v2794, %v2786
  %v3011 = vpack.c.b16 %v2795, %v2787
  %v3012 = vpack.c.b16 %v2796, %v2788
  %v3013 = vpack.c.b16 %v2797, %v2789
  %v3014 = vpack.c.b16 %v2798, %v2790
  %v3015 = vpack.c.b16 %v2799, %v2791
  %v3016 = vpack.c.b16 %v2800, %v2792
  %v3017 = vpack.c.b16 %v2801, %v2793
  %v3018 = vpack.c.b16 %v2810, %v2802
  %v3019 = vpack.c.b16 %v2811, %v2803
  %v3020 = vpack.c.b16 %v2812, %v2804
  %v3021 = vpack.c.b16 %v2813, %v2805
  %v3022 = vpack.c.b16 %v2814, %v2806
  %v3023 = vpack.c.b16 %v2815, %v2807
  %v3024 = vpack.c.b16 %v2816, %v2808
  %v3025 = vpack.c.b16 %v2817, %v2809
  %v3026 = vpack.c.b16 %v2826, %v2818
  %v3027 = vpack.c.b16 %v2827, %v2819
  %v3028 = vpack.c.b16 %v2828, %v2820
  %v3029 = vpack.c.b16 %v2829, %v2821
  %v3030 = vpack.c.b16 %v2830, %v2822
  %v3031 = vpack.c.b16 %v2831, %v2823
  %v3032 = vpack.c.b16 %v2832, %v2824
  %v3033 = vpack.c.b16 %v2833, %v2825
  %v3034 = vpack.c.b16 %v2834, %v2834
  %v3035 = vpack.c.b16 %v2835, %v2835
  %v3036 = vpack.c.b16 %v2836, %v2836
  %v3037 = vpack.c.b16 %v2837, %v2837
  %v3038 = vpack.c.b16 %v2838, %v2838
  %v3039 = vpack.c.b16 %v2839, %v2839
  %v3040 = vpack.c.b16 %v2840, %v2840
  %v3041 = vpack.c.b16 %v2841, %v2841
  %vm3234 = vcmask 64512
  %v3236 = vsel %vm3234, %v2250, 0
  %vm3238 = vcmask 1043456
  %v3240 = vsel %vm3238, %v3034, 0
  %v3243 = vsel %vm3238, %v3035, 0
  %v3246 = vsel %vm3238, %v3036, 0
  %v3249 = vsel %vm3238, %v3037, 0
  %v3252 = vsel %vm3238, %v3038, 0
  %v3255 = vsel %vm3238, %v3039, 0
  %v3258 = vsel %vm3238, %v3040, 0
  %v3261 = vsel %vm3238, %v3041, 0
  %3263 = vmatpush.bf16.msra.mxu0 %v2898
  %3264 = vmatpush.bf16.msra.mxu0 %v2890
  %3265 = vmatpush.bf16.msra.mxu0 %v2882
  %3266 = vmatpush.bf16.msra.mxu0 %v2874
  %3267 = vmatpush.bf16.msra.mxu0 %v2866
  %3268 = vmatpush.bf16.msra.mxu0 %v2858
  %3269 = vmatpush.bf16.msra.mxu0 %v2850
  %3270 = vmatpush.bf16.msra.mxu0 %v2842
  %3271 = vmatmul.bf16.gmra.mxu0 %v2247
  %v3272 = vpop.f32.mrf.mxu0
  %v3273 = vadd.f32 %v2239, %v3272
  %v3274 = vpop.f32.mrf.mxu0
  %3275 = vdwg.mxu0
  %3276 = vmatpush.bf16.msra.mxu0 %v2962
  %3277 = vmatpush.bf16.msra.mxu0 %v2954
  %3278 = vmatpush.bf16.msra.mxu0 %v2946
  %3279 = vmatpush.bf16.msra.mxu0 %v2938
  %3280 = vmatpush.bf16.msra.mxu0 %v2930
  %3281 = vmatpush.bf16.msra.mxu0 %v2922
  %3282 = vmatpush.bf16.msra.mxu0 %v2914
  %3283 = vmatpush.bf16.msra.mxu0 %v2906
  %3284 = vmatmul.bf16.gmra.mxu0 %v2248
  %v3285 = vpop.f32.mrf.mxu0
  %v3286 = vadd.f32 %v3273, %v3285
  %v3287 = vpop.f32.mrf.mxu0
  %3288 = vdwg.mxu0
  %3289 = vmatpush.bf16.msra.mxu0 %v3026
  %3290 = vmatpush.bf16.msra.mxu0 %v3018
  %3291 = vmatpush.bf16.msra.mxu0 %v3010
  %3292 = vmatpush.bf16.msra.mxu0 %v3002
  %3293 = vmatpush.bf16.msra.mxu0 %v2994
  %3294 = vmatpush.bf16.msra.mxu0 %v2986
  %3295 = vmatpush.bf16.msra.mxu0 %v2978
  %3296 = vmatpush.bf16.msra.mxu0 %v2970
  %3297 = vmatmul.bf16.gmra.mxu0 %v2249
  %v3298 = vpop.f32.mrf.mxu0
  %v3299 = vadd.f32 %v3286, %v3298
  %v3300 = vpop.f32.mrf.mxu0
  %3301 = vdwg.mxu0
  %3302 = vmatpush.bf16.msra.mxu0 0
  %3303 = vmatpush.bf16.msra.mxu0 0
  %3304 = vmatpush.bf16.msra.mxu0 0
  %3305 = vmatpush.bf16.msra.mxu0 0
  %3306 = vmatpush.bf16.msra.mxu0 0
  %3307 = vmatpush.bf16.msra.mxu0 0
  %3308 = vmatpush.bf16.msra.mxu0 0
  %3309 = vmatpush.bf16.msra.mxu0 %v3240
  %3310 = vmatmul.bf16.gmra.mxu0 %v3236
  %v3311 = vpop.f32.mrf.mxu0
  %v3312 = vadd.f32 %v3299, %v3311
  %v3313 = vpop.f32.mrf.mxu0
  %3314 = vdwg.mxu0
  %3315 = vmatpush.bf16.msra.mxu0 %v2899
  %3316 = vmatpush.bf16.msra.mxu0 %v2891
  %3317 = vmatpush.bf16.msra.mxu0 %v2883
  %3318 = vmatpush.bf16.msra.mxu0 %v2875
  %3319 = vmatpush.bf16.msra.mxu0 %v2867
  %3320 = vmatpush.bf16.msra.mxu0 %v2859
  %3321 = vmatpush.bf16.msra.mxu0 %v2851
  %3322 = vmatpush.bf16.msra.mxu0 %v2843
  %3323 = vmatmul.bf16.gmra.mxu0 %v2247
  %v3324 = vpop.f32.mrf.mxu0
  %v3325 = vadd.f32 %v2239, %v3324
  %v3326 = vpop.f32.mrf.mxu0
  %3327 = vdwg.mxu0
  %3328 = vmatpush.bf16.msra.mxu0 %v2963
  %3329 = vmatpush.bf16.msra.mxu0 %v2955
  %3330 = vmatpush.bf16.msra.mxu0 %v2947
  %3331 = vmatpush.bf16.msra.mxu0 %v2939
  %3332 = vmatpush.bf16.msra.mxu0 %v2931
  %3333 = vmatpush.bf16.msra.mxu0 %v2923
  %3334 = vmatpush.bf16.msra.mxu0 %v2915
  %3335 = vmatpush.bf16.msra.mxu0 %v2907
  %3336 = vmatmul.bf16.gmra.mxu0 %v2248
  %v3337 = vpop.f32.mrf.mxu0
  %v3338 = vadd.f32 %v3325, %v3337
  %v3339 = vpop.f32.mrf.mxu0
  %3340 = vdwg.mxu0
  %3341 = vmatpush.bf16.msra.mxu0 %v3027
  %3342 = vmatpush.bf16.msra.mxu0 %v3019
  %3343 = vmatpush.bf16.msra.mxu0 %v3011
  %3344 = vmatpush.bf16.msra.mxu0 %v3003
  %3345 = vmatpush.bf16.msra.mxu0 %v2995
  %3346 = vmatpush.bf16.msra.mxu0 %v2987
  %3347 = vmatpush.bf16.msra.mxu0 %v2979
  %3348 = vmatpush.bf16.msra.mxu0 %v2971
  %3349 = vmatmul.bf16.gmra.mxu0 %v2249
  %v3350 = vpop.f32.mrf.mxu0
  %v3351 = vadd.f32 %v3338, %v3350
  %v3352 = vpop.f32.mrf.mxu0
  %3353 = vdwg.mxu0
  %3354 = vmatpush.bf16.msra.mxu0 0
  %3355 = vmatpush.bf16.msra.mxu0 0
  %3356 = vmatpush.bf16.msra.mxu0 0
  %3357 = vmatpush.bf16.msra.mxu0 0
  %3358 = vmatpush.bf16.msra.mxu0 0
  %3359 = vmatpush.bf16.msra.mxu0 0
  %3360 = vmatpush.bf16.msra.mxu0 0
  %3361 = vmatpush.bf16.msra.mxu0 %v3243
  %3362 = vmatmul.bf16.gmra.mxu0 %v3236
  %v3363 = vpop.f32.mrf.mxu0
  %v3364 = vadd.f32 %v3351, %v3363
  %v3365 = vpop.f32.mrf.mxu0
  %3366 = vdwg.mxu0
  %3367 = vmatpush.bf16.msra.mxu0 %v2900
  %3368 = vmatpush.bf16.msra.mxu0 %v2892
  %3369 = vmatpush.bf16.msra.mxu0 %v2884
  %3370 = vmatpush.bf16.msra.mxu0 %v2876
  %3371 = vmatpush.bf16.msra.mxu0 %v2868
  %3372 = vmatpush.bf16.msra.mxu0 %v2860
  %3373 = vmatpush.bf16.msra.mxu0 %v2852
  %3374 = vmatpush.bf16.msra.mxu0 %v2844
  %3375 = vmatmul.bf16.gmra.mxu0 %v2247
  %v3376 = vpop.f32.mrf.mxu0
  %v3377 = vadd.f32 %v2239, %v3376
  %v3378 = vpop.f32.mrf.mxu0
  %3379 = vdwg.mxu0
  %3380 = vmatpush.bf16.msra.mxu0 %v2964
  %3381 = vmatpush.bf16.msra.mxu0 %v2956
  %3382 = vmatpush.bf16.msra.mxu0 %v2948
  %3383 = vmatpush.bf16.msra.mxu0 %v2940
  %3384 = vmatpush.bf16.msra.mxu0 %v2932
  %3385 = vmatpush.bf16.msra.mxu0 %v2924
  %3386 = vmatpush.bf16.msra.mxu0 %v2916
  %3387 = vmatpush.bf16.msra.mxu0 %v2908
  %3388 = vmatmul.bf16.gmra.mxu0 %v2248
  %v3389 = vpop.f32.mrf.mxu0
  %v3390 = vadd.f32 %v3377, %v3389
  %v3391 = vpop.f32.mrf.mxu0
  %3392 = vdwg.mxu0
  %3393 = vmatpush.bf16.msra.mxu0 %v3028
  %3394 = vmatpush.bf16.msra.mxu0 %v3020
  %3395 = vmatpush.bf16.msra.mxu0 %v3012
  %3396 = vmatpush.bf16.msra.mxu0 %v3004
  %3397 = vmatpush.bf16.msra.mxu0 %v2996
  %3398 = vmatpush.bf16.msra.mxu0 %v2988
  %3399 = vmatpush.bf16.msra.mxu0 %v2980
  %3400 = vmatpush.bf16.msra.mxu0 %v2972
  %3401 = vmatmul.bf16.gmra.mxu0 %v2249
  %v3402 = vpop.f32.mrf.mxu0
  %v3403 = vadd.f32 %v3390, %v3402
  %v3404 = vpop.f32.mrf.mxu0
  %3405 = vdwg.mxu0
  %3406 = vmatpush.bf16.msra.mxu0 0
  %3407 = vmatpush.bf16.msra.mxu0 0
  %3408 = vmatpush.bf16.msra.mxu0 0
  %3409 = vmatpush.bf16.msra.mxu0 0
  %3410 = vmatpush.bf16.msra.mxu0 0
  %3411 = vmatpush.bf16.msra.mxu0 0
  %3412 = vmatpush.bf16.msra.mxu0 0
  %3413 = vmatpush.bf16.msra.mxu0 %v3246
  %3414 = vmatmul.bf16.gmra.mxu0 %v3236
  %v3415 = vpop.f32.mrf.mxu0
  %v3416 = vadd.f32 %v3403, %v3415
  %v3417 = vpop.f32.mrf.mxu0
  %3418 = vdwg.mxu0
  %3419 = vmatpush.bf16.msra.mxu0 %v2901
  %3420 = vmatpush.bf16.msra.mxu0 %v2893
  %3421 = vmatpush.bf16.msra.mxu0 %v2885
  %3422 = vmatpush.bf16.msra.mxu0 %v2877
  %3423 = vmatpush.bf16.msra.mxu0 %v2869
  %3424 = vmatpush.bf16.msra.mxu0 %v2861
  %3425 = vmatpush.bf16.msra.mxu0 %v2853
  %3426 = vmatpush.bf16.msra.mxu0 %v2845
  %3427 = vmatmul.bf16.gmra.mxu0 %v2247
  %v3428 = vpop.f32.mrf.mxu0
  %v3429 = vadd.f32 %v2239, %v3428
  %v3430 = vpop.f32.mrf.mxu0
  %3431 = vdwg.mxu0
  %3432 = vmatpush.bf16.msra.mxu0 %v2965
  %3433 = vmatpush.bf16.msra.mxu0 %v2957
  %3434 = vmatpush.bf16.msra.mxu0 %v2949
  %3435 = vmatpush.bf16.msra.mxu0 %v2941
  %3436 = vmatpush.bf16.msra.mxu0 %v2933
  %3437 = vmatpush.bf16.msra.mxu0 %v2925
  %3438 = vmatpush.bf16.msra.mxu0 %v2917
  %3439 = vmatpush.bf16.msra.mxu0 %v2909
  %3440 = vmatmul.bf16.gmra.mxu0 %v2248
  %v3441 = vpop.f32.mrf.mxu0
  %v3442 = vadd.f32 %v3429, %v3441
  %v3443 = vpop.f32.mrf.mxu0
  %3444 = vdwg.mxu0
  %3445 = vmatpush.bf16.msra.mxu0 %v3029
  %3446 = vmatpush.bf16.msra.mxu0 %v3021
  %3447 = vmatpush.bf16.msra.mxu0 %v3013
  %3448 = vmatpush.bf16.msra.mxu0 %v3005
  %3449 = vmatpush.bf16.msra.mxu0 %v2997
  %3450 = vmatpush.bf16.msra.mxu0 %v2989
  %3451 = vmatpush.bf16.msra.mxu0 %v2981
  %3452 = vmatpush.bf16.msra.mxu0 %v2973
  %3453 = vmatmul.bf16.gmra.mxu0 %v2249
  %v3454 = vpop.f32.mrf.mxu0
  %v3455 = vadd.f32 %v3442, %v3454
  %v3456 = vpop.f32.mrf.mxu0
  %3457 = vdwg.mxu0
  %3458 = vmatpush.bf16.msra.mxu0 0
  %3459 = vmatpush.bf16.msra.mxu0 0
  %3460 = vmatpush.bf16.msra.mxu0 0
  %3461 = vmatpush.bf16.msra.mxu0 0
  %3462 = vmatpush.bf16.msra.mxu0 0
  %3463 = vmatpush.bf16.msra.mxu0 0
  %3464 = vmatpush.bf16.msra.mxu0 0
  %3465 = vmatpush.bf16.msra.mxu0 %v3249
  %3466 = vmatmul.bf16.gmra.mxu0 %v3236
  %v3467 = vpop.f32.mrf.mxu0
  %v3468 = vadd.f32 %v3455, %v3467
  %v3469 = vpop.f32.mrf.mxu0
  %3470 = vdwg.mxu0
  %3471 = vmatpush.bf16.msra.mxu0 %v2902
  %3472 = vmatpush.bf16.msra.mxu0 %v2894
  %3473 = vmatpush.bf16.msra.mxu0 %v2886
  %3474 = vmatpush.bf16.msra.mxu0 %v2878
  %3475 = vmatpush.bf16.msra.mxu0 %v2870
  %3476 = vmatpush.bf16.msra.mxu0 %v2862
  %3477 = vmatpush.bf16.msra.mxu0 %v2854
  %3478 = vmatpush.bf16.msra.mxu0 %v2846
  %3479 = vmatmul.bf16.gmra.mxu0 %v2247
  %v3480 = vpop.f32.mrf.mxu0
  %v3481 = vadd.f32 %v2239, %v3480
  %v3482 = vpop.f32.mrf.mxu0
  %3483 = vdwg.mxu0
  %3484 = vmatpush.bf16.msra.mxu0 %v2966
  %3485 = vmatpush.bf16.msra.mxu0 %v2958
  %3486 = vmatpush.bf16.msra.mxu0 %v2950
  %3487 = vmatpush.bf16.msra.mxu0 %v2942
  %3488 = vmatpush.bf16.msra.mxu0 %v2934
  %3489 = vmatpush.bf16.msra.mxu0 %v2926
  %3490 = vmatpush.bf16.msra.mxu0 %v2918
  %3491 = vmatpush.bf16.msra.mxu0 %v2910
  %3492 = vmatmul.bf16.gmra.mxu0 %v2248
  %v3493 = vpop.f32.mrf.mxu0
  %v3494 = vadd.f32 %v3481, %v3493
  %v3495 = vpop.f32.mrf.mxu0
  %3496 = vdwg.mxu0
  %3497 = vmatpush.bf16.msra.mxu0 %v3030
  %3498 = vmatpush.bf16.msra.mxu0 %v3022
  %3499 = vmatpush.bf16.msra.mxu0 %v3014
  %3500 = vmatpush.bf16.msra.mxu0 %v3006
  %3501 = vmatpush.bf16.msra.mxu0 %v2998
  %3502 = vmatpush.bf16.msra.mxu0 %v2990
  %3503 = vmatpush.bf16.msra.mxu0 %v2982
  %3504 = vmatpush.bf16.msra.mxu0 %v2974
  %3505 = vmatmul.bf16.gmra.mxu0 %v2249
  %v3506 = vpop.f32.mrf.mxu0
  %v3507 = vadd.f32 %v3494, %v3506
  %v3508 = vpop.f32.mrf.mxu0
  %3509 = vdwg.mxu0
  %3510 = vmatpush.bf16.msra.mxu0 0
  %3511 = vmatpush.bf16.msra.mxu0 0
  %3512 = vmatpush.bf16.msra.mxu0 0
  %3513 = vmatpush.bf16.msra.mxu0 0
  %3514 = vmatpush.bf16.msra.mxu0 0
  %3515 = vmatpush.bf16.msra.mxu0 0
  %3516 = vmatpush.bf16.msra.mxu0 0
  %3517 = vmatpush.bf16.msra.mxu0 %v3252
  %3518 = vmatmul.bf16.gmra.mxu0 %v3236
  %v3519 = vpop.f32.mrf.mxu0
  %v3520 = vadd.f32 %v3507, %v3519
  %v3521 = vpop.f32.mrf.mxu0
  %3522 = vdwg.mxu0
  %3523 = vmatpush.bf16.msra.mxu0 %v2903
  %3524 = vmatpush.bf16.msra.mxu0 %v2895
  %3525 = vmatpush.bf16.msra.mxu0 %v2887
  %3526 = vmatpush.bf16.msra.mxu0 %v2879
  %3527 = vmatpush.bf16.msra.mxu0 %v2871
  %3528 = vmatpush.bf16.msra.mxu0 %v2863
  %3529 = vmatpush.bf16.msra.mxu0 %v2855
  %3530 = vmatpush.bf16.msra.mxu0 %v2847
  %3531 = vmatmul.bf16.gmra.mxu0 %v2247
  %v3532 = vpop.f32.mrf.mxu0
  %v3533 = vadd.f32 %v2239, %v3532
  %v3534 = vpop.f32.mrf.mxu0
  %3535 = vdwg.mxu0
  %3536 = vmatpush.bf16.msra.mxu0 %v2967
  %3537 = vmatpush.bf16.msra.mxu0 %v2959
  %3538 = vmatpush.bf16.msra.mxu0 %v2951
  %3539 = vmatpush.bf16.msra.mxu0 %v2943
  %3540 = vmatpush.bf16.msra.mxu0 %v2935
  %3541 = vmatpush.bf16.msra.mxu0 %v2927
  %3542 = vmatpush.bf16.msra.mxu0 %v2919
  %3543 = vmatpush.bf16.msra.mxu0 %v2911
  %3544 = vmatmul.bf16.gmra.mxu0 %v2248
  %v3545 = vpop.f32.mrf.mxu0
  %v3546 = vadd.f32 %v3533, %v3545
  %v3547 = vpop.f32.mrf.mxu0
  %3548 = vdwg.mxu0
  %3549 = vmatpush.bf16.msra.mxu0 %v3031
  %3550 = vmatpush.bf16.msra.mxu0 %v3023
  %3551 = vmatpush.bf16.msra.mxu0 %v3015
  %3552 = vmatpush.bf16.msra.mxu0 %v3007
  %3553 = vmatpush.bf16.msra.mxu0 %v2999
  %3554 = vmatpush.bf16.msra.mxu0 %v2991
  %3555 = vmatpush.bf16.msra.mxu0 %v2983
  %3556 = vmatpush.bf16.msra.mxu0 %v2975
  %3557 = vmatmul.bf16.gmra.mxu0 %v2249
  %v3558 = vpop.f32.mrf.mxu0
  %v3559 = vadd.f32 %v3546, %v3558
  %v3560 = vpop.f32.mrf.mxu0
  %3561 = vdwg.mxu0
  %3562 = vmatpush.bf16.msra.mxu0 0
  %3563 = vmatpush.bf16.msra.mxu0 0
  %3564 = vmatpush.bf16.msra.mxu0 0
  %3565 = vmatpush.bf16.msra.mxu0 0
  %3566 = vmatpush.bf16.msra.mxu0 0
  %3567 = vmatpush.bf16.msra.mxu0 0
  %3568 = vmatpush.bf16.msra.mxu0 0
  %3569 = vmatpush.bf16.msra.mxu0 %v3255
  %3570 = vmatmul.bf16.gmra.mxu0 %v3236
  %v3571 = vpop.f32.mrf.mxu0
  %v3572 = vadd.f32 %v3559, %v3571
  %v3573 = vpop.f32.mrf.mxu0
  %3574 = vdwg.mxu0
  %3575 = vmatpush.bf16.msra.mxu0 %v2904
  %3576 = vmatpush.bf16.msra.mxu0 %v2896
  %3577 = vmatpush.bf16.msra.mxu0 %v2888
  %3578 = vmatpush.bf16.msra.mxu0 %v2880
  %3579 = vmatpush.bf16.msra.mxu0 %v2872
  %3580 = vmatpush.bf16.msra.mxu0 %v2864
  %3581 = vmatpush.bf16.msra.mxu0 %v2856
  %3582 = vmatpush.bf16.msra.mxu0 %v2848
  %3583 = vmatmul.bf16.gmra.mxu0 %v2247
  %v3584 = vpop.f32.mrf.mxu0
  %v3585 = vadd.f32 %v2239, %v3584
  %v3586 = vpop.f32.mrf.mxu0
  %3587 = vdwg.mxu0
  %3588 = vmatpush.bf16.msra.mxu0 %v2968
  %3589 = vmatpush.bf16.msra.mxu0 %v2960
  %3590 = vmatpush.bf16.msra.mxu0 %v2952
  %3591 = vmatpush.bf16.msra.mxu0 %v2944
  %3592 = vmatpush.bf16.msra.mxu0 %v2936
  %3593 = vmatpush.bf16.msra.mxu0 %v2928
  %3594 = vmatpush.bf16.msra.mxu0 %v2920
  %3595 = vmatpush.bf16.msra.mxu0 %v2912
  %3596 = vmatmul.bf16.gmra.mxu0 %v2248
  %v3597 = vpop.f32.mrf.mxu0
  %v3598 = vadd.f32 %v3585, %v3597
  %v3599 = vpop.f32.mrf.mxu0
  %3600 = vdwg.mxu0
  %3601 = vmatpush.bf16.msra.mxu0 %v3032
  %3602 = vmatpush.bf16.msra.mxu0 %v3024
  %3603 = vmatpush.bf16.msra.mxu0 %v3016
  %3604 = vmatpush.bf16.msra.mxu0 %v3008
  %3605 = vmatpush.bf16.msra.mxu0 %v3000
  %3606 = vmatpush.bf16.msra.mxu0 %v2992
  %3607 = vmatpush.bf16.msra.mxu0 %v2984
  %3608 = vmatpush.bf16.msra.mxu0 %v2976
  %3609 = vmatmul.bf16.gmra.mxu0 %v2249
  %v3610 = vpop.f32.mrf.mxu0
  %v3611 = vadd.f32 %v3598, %v3610
  %v3612 = vpop.f32.mrf.mxu0
  %3613 = vdwg.mxu0
  %3614 = vmatpush.bf16.msra.mxu0 0
  %3615 = vmatpush.bf16.msra.mxu0 0
  %3616 = vmatpush.bf16.msra.mxu0 0
  %3617 = vmatpush.bf16.msra.mxu0 0
  %3618 = vmatpush.bf16.msra.mxu0 0
  %3619 = vmatpush.bf16.msra.mxu0 0
  %3620 = vmatpush.bf16.msra.mxu0 0
  %3621 = vmatpush.bf16.msra.mxu0 %v3258
  %3622 = vmatmul.bf16.gmra.mxu0 %v3236
  %v3623 = vpop.f32.mrf.mxu0
  %v3624 = vadd.f32 %v3611, %v3623
  %v3625 = vpop.f32.mrf.mxu0
  %3626 = vdwg.mxu0
  %3627 = vmatpush.bf16.msra.mxu0 %v2905
  %3628 = vmatpush.bf16.msra.mxu0 %v2897
  %3629 = vmatpush.bf16.msra.mxu0 %v2889
  %3630 = vmatpush.bf16.msra.mxu0 %v2881
  %3631 = vmatpush.bf16.msra.mxu0 %v2873
  %3632 = vmatpush.bf16.msra.mxu0 %v2865
  %3633 = vmatpush.bf16.msra.mxu0 %v2857
  %3634 = vmatpush.bf16.msra.mxu0 %v2849
  %3635 = vmatmul.bf16.gmra.mxu0 %v2247
  %v3636 = vpop.f32.mrf.mxu0
  %v3637 = vadd.f32 %v2239, %v3636
  %v3638 = vpop.f32.mrf.mxu0
  %3639 = vdwg.mxu0
  %3640 = vmatpush.bf16.msra.mxu0 %v2969
  %3641 = vmatpush.bf16.msra.mxu0 %v2961
  %3642 = vmatpush.bf16.msra.mxu0 %v2953
  %3643 = vmatpush.bf16.msra.mxu0 %v2945
  %3644 = vmatpush.bf16.msra.mxu0 %v2937
  %3645 = vmatpush.bf16.msra.mxu0 %v2929
  %3646 = vmatpush.bf16.msra.mxu0 %v2921
  %3647 = vmatpush.bf16.msra.mxu0 %v2913
  %3648 = vmatmul.bf16.gmra.mxu0 %v2248
  %v3649 = vpop.f32.mrf.mxu0
  %v3650 = vadd.f32 %v3637, %v3649
  %v3651 = vpop.f32.mrf.mxu0
  %3652 = vdwg.mxu0
  %3653 = vmatpush.bf16.msra.mxu0 %v3033
  %3654 = vmatpush.bf16.msra.mxu0 %v3025
  %3655 = vmatpush.bf16.msra.mxu0 %v3017
  %3656 = vmatpush.bf16.msra.mxu0 %v3009
  %3657 = vmatpush.bf16.msra.mxu0 %v3001
  %3658 = vmatpush.bf16.msra.mxu0 %v2993
  %3659 = vmatpush.bf16.msra.mxu0 %v2985
  %3660 = vmatpush.bf16.msra.mxu0 %v2977
  %3661 = vmatmul.bf16.gmra.mxu0 %v2249
  %v3662 = vpop.f32.mrf.mxu0
  %v3663 = vadd.f32 %v3650, %v3662
  %v3664 = vpop.f32.mrf.mxu0
  %3665 = vdwg.mxu0
  %3666 = vmatpush.bf16.msra.mxu0 0
  %3667 = vmatpush.bf16.msra.mxu0 0
  %3668 = vmatpush.bf16.msra.mxu0 0
  %3669 = vmatpush.bf16.msra.mxu0 0
  %3670 = vmatpush.bf16.msra.mxu0 0
  %3671 = vmatpush.bf16.msra.mxu0 0
  %3672 = vmatpush.bf16.msra.mxu0 0
  %3673 = vmatpush.bf16.msra.mxu0 %v3261
  %3674 = vmatmul.bf16.gmra.mxu0 %v3236
  %v3675 = vpop.f32.mrf.mxu0
  %v3676 = vadd.f32 %v3663, %v3675
  %v3677 = vpop.f32.mrf.mxu0
  %3678 = vdwg.mxu0
  %v3679 = vtanh.pop %v3312
  %v3680 = vtanh.pop %v3364
  %v3681 = vtanh.pop %v3416
  %v3682 = vtanh.pop %v3468
  %v3683 = vtanh.pop %v3520
  %v3684 = vtanh.pop %v3572
  %v3685 = vtanh.pop %v3624
  %v3686 = vtanh.pop %v3676
  %3687 = vst [vmem:[%s3] sm:$0xff] %v3679
  %3688 = vst [vmem:[%s3 + $0x8] sm:$0xff] %v3680
  %3689 = vst [vmem:[%s3 + $0x10] sm:$0xff] %v3681
  %3690 = vst [vmem:[%s3 + $0x18] sm:$0xff] %v3682
  %3691 = vst [vmem:[%s3 + $0x20] sm:$0xff] %v3683
  %3692 = vst [vmem:[%s3 + $0x28] sm:$0xff] %v3684
  %3693 = vst [vmem:[%s3 + $0x30] sm:$0xff] %v3685
  %3694 = vst [vmem:[%s3 + $0x38] sm:$0xff] %v3686
  // Predicated region
  $region14: #{_lambda_.51} parent=0 // pred_check
    _
  $region15: #{_lambda_.51} parent=0 // pred_check_branch
    %3696 = sbr.rel (0) target = $region17
  $region16: #{_lambda_.51} parent=0 // pred_region
    _
  $region17: #{_lambda_.51} parent=0 // pred_fallthru
    _
  // Predicated region
  $region18: #{_lambda_.51} parent=0 // pred_check
    _
  $region19: #{_lambda_.51} parent=0 // pred_check_branch
    %3698 = sbr.rel (0) target = $region21
  $region20: #{_lambda_.51} parent=0 // pred_region
    _
  $region21: #{_lambda_.51} parent=0 // pred_fallthru
    _

</llo_original>
